<compile_context>
chip_gen: v7x
topology: tpu7x:2x2x1
jax: 0.10.0
libtpu: 0.0.40
codegen_flags: <defaults>
</compile_context>

<pallas_src>
import math
import functools

import numpy as np
import jax
import jax.numpy as jnp
from jax import lax
from jax.experimental import pallas as pl
from jax.experimental.pallas import tpu as pltpu


_SQRT_HALF = 1.0 / math.sqrt(2.0)
_NEG_BIG = -1e30


def _gelu_exact(x):
    # matches torch.nn.functional.gelu (erf form)
    return 0.5 * x * (1.0 + lax.erf(x * (1.0 / math.sqrt(2.0))))


# ----------------------------------------------------------------------------
# Fused kernel: the whole ResAttentionBlock forward for one batch element.
# ----------------------------------------------------------------------------
def _res_block_kernel(s_ref, t_ref, bias_d_ref, bias_n_ref,
                      wt_ref, bt_ref, wdn_ref, bdn_ref,
                      wqd_ref, bqd_ref, wqn_ref, bqn_ref,
                      wod_ref, won_ref, bo_ref,
                      skip_ref, *, n_layers, num_heads, hidden):
    bf16 = jnp.bfloat16
    f32 = jnp.float32
    H = hidden
    dm = 2 * H
    nd = s_ref.shape[1]                         # N * D rows per batch element
    depth = dm // num_heads
    scale = 1.0 / math.sqrt(depth)

    # additive block-diagonal sequence masks (0 = attend, -1e30 = masked), layer-invariant
    bias_d = bias_d_ref[...]                    # [nd, nd]: attend within same n
    bias_n = bias_n_ref[...]                    # [nd, nd]: attend within same d

    # t-projection for ALL layers in one matmul: [1, n_layers*H]
    tp_all = (jnp.dot(t_ref[0].astype(bf16), wt_ref[...],
                      preferred_element_type=f32) + bt_ref[...])

    res = s_ref[0]                              # [nd, H] f32, carried residual
    skip_acc = jnp.zeros((nd, H), f32)

    for l in range(n_layers):
        tp = tp_all[:, l * H:(l + 1) * H]       # [1, H]
        y = (res + tp).astype(bf16)             # broadcast add over rows

        # fused linear_d || linear_n  ->  lane-dense [nd, 4H=128]
        ydn = (jnp.dot(y, wdn_ref[l], preferred_element_type=f32)
               + bdn_ref[l]).astype(bf16)
        yd = ydn[:, :dm]
        yn = ydn[:, dm:]

        # fused QKV projections, one matmul per branch: [nd, 3*dm]
        qkv_d = (jnp.dot(yd, wqd_ref[l], preferred_element_type=f32)
                 + bqd_ref[l]).astype(bf16)
        qkv_n = (jnp.dot(yn, wqn_ref[l], preferred_element_type=f32)
                 + bqn_ref[l]).astype(bf16)

        # attention: both branches on the same (n, d) row order; sequence membership is
        # enforced by the additive masks, so no row reordering / transposes are needed.
        # Per (branch, head) the attention output is accumulated directly into the
        # output-dense projection -> no head concatenation is ever materialized.
        y_sum = jnp.zeros((nd, dm), f32)
        for qkv, wo_ref, mbias in ((qkv_d, wod_ref, bias_d),
                                   (qkv_n, won_ref, bias_n)):
            wo = wo_ref[l]                      # [dm, dm] bf16
            for h in range(num_heads):
                lo = h * depth
                q = qkv[:, lo:lo + depth]
                k = qkv[:, dm + lo:dm + lo + depth]
                v = qkv[:, 2 * dm + lo:2 * dm + lo + depth]
                s_sc = jnp.einsum("qd,kd->qk", q, k,
                                  preferred_element_type=f32) * scale + mbias
                m = jnp.max(s_sc, axis=-1, keepdims=True)
                e = jnp.exp(s_sc - m)
                # exact division keeps the bf16-mirror correctness check tight
                p = (e / jnp.sum(e, axis=-1, keepdims=True)).astype(bf16)
                o = jnp.dot(p, v, preferred_element_type=f32).astype(bf16)
                y_sum = y_sum + jnp.dot(o, wo[lo:lo + depth, :],
                                        preferred_element_type=f32)
        y_sum = y_sum + bo_ref[l]               # combined dense_d + dense_n bias

        g = _gelu_exact(y_sum)                  # one GELU over the full [nd, 2H]
        res = (res + g[:, :H]) * _SQRT_HALF
        skip_acc = skip_acc + g[:, H:]

    skip_ref[0] = skip_acc
    # TODO(synk): group_norm1 / group_norm2 from __init__ are never used in the PyTorch
    # forward, so they are intentionally not implemented.


# ----------------------------------------------------------------------------
# Module forward (Pallas-backed): one pallas_call for the whole stack of layers.
# ----------------------------------------------------------------------------
def res_attention_block(params_list, s, t, num_heads):
    B, N, D, H = s.shape
    L = len(params_list)
    nd = N * D
    bf = lambda x: x.astype(jnp.bfloat16)

    # ---- pack / stack per-layer weights (pure data movement, fused by XLA) ----
    wt = bf(jnp.concatenate([p["lt_w"] for p in params_list], axis=1))       # [H, L*H]
    bt = jnp.concatenate([p["lt_b"] for p in params_list], axis=1)           # [1, L*H]
    wdn = bf(jnp.stack([jnp.concatenate([p["ld_w"], p["ln_w"]], axis=1)
                        for p in params_list]))                              # [L, H, 4H]
    bdn = jnp.stack([jnp.concatenate([p["ld_b"], p["ln_b"]], axis=1)
                     for p in params_list])                                  # [L, 1, 4H]

    def pack_qkv(m):
        w = jnp.concatenate([m["wq_w"], m["wk_w"], m["wv_w"]], axis=1)       # [2H, 6H]
        b = jnp.concatenate([m["wq_b"], m["wk_b"], m["wv_b"]], axis=1)       # [1, 6H]
        return w, b

    wqd = bf(jnp.stack([pack_qkv(p["attn_d"])[0] for p in params_list]))
    bqd = jnp.stack([pack_qkv(p["attn_d"])[1] for p in params_list])
    wqn = bf(jnp.stack([pack_qkv(p["attn_n"])[0] for p in params_list]))
    bqn = jnp.stack([pack_qkv(p["attn_n"])[1] for p in params_list])
    wod = bf(jnp.stack([p["attn_d"]["dense_w"] for p in params_list]))       # [L, 2H, 2H]
    won = bf(jnp.stack([p["attn_n"]["dense_w"] for p in params_list]))       # [L, 2H, 2H]
    bo = jnp.stack([p["attn_d"]["dense_b"] + p["attn_n"]["dense_b"]
                    for p in params_list])                                   # [L, 1, 2H]

    # additive block-diagonal sequence masks on the flattened (n, d) row order
    rows = np.arange(nd)
    same_n = (rows[:, None] // D) == (rows[None, :] // D)
    same_d = (rows[:, None] % D) == (rows[None, :] % D)
    bias_d = jnp.asarray(np.where(same_n, 0.0, _NEG_BIG), jnp.float32)       # [nd, nd]
    bias_n = jnp.asarray(np.where(same_d, 0.0, _NEG_BIG), jnp.float32)       # [nd, nd]

    s3 = s.reshape(B, nd, H)
    t3 = t.reshape(B, 1, H)

    kern = functools.partial(_res_block_kernel, n_layers=L,
                             num_heads=num_heads, hidden=H)

    def wspec(a):
        # full-array block (weights / masks), constant index map under the B grid
        return pl.BlockSpec(a.shape, lambda b: (0,) * a.ndim)

    skip = pl.pallas_call(
        kern,
        out_shape=jax.ShapeDtypeStruct((B, nd, H), jnp.float32),
        grid=(B,),
        in_specs=[
            pl.BlockSpec((1, nd, H), lambda b: (b, 0, 0)),
            pl.BlockSpec((1, 1, H), lambda b: (b, 0, 0)),
            wspec(bias_d), wspec(bias_n),
            wspec(wt), wspec(bt), wspec(wdn), wspec(bdn),
            wspec(wqd), wspec(bqd), wspec(wqn), wspec(bqn),
            wspec(wod), wspec(won), wspec(bo),
        ],
        out_specs=pl.BlockSpec((1, nd, H), lambda b: (b, 0, 0)),
        compiler_params=pltpu.CompilerParams(dimension_semantics=("parallel",)),
    )(s3, t3, bias_d, bias_n, wt, bt, wdn, bdn, wqd, bqd, wqn, bqn, wod, won, bo)

    return skip.reshape(B, N, D, H)


# ----------------------------------------------------------------------------
# Pure-JAX reference.  `cast` lets the same code serve two purposes:
#   cast = identity        -> exact f32 reference of the PyTorch module
#   cast = astype(bf16)    -> mirrors the kernel's bf16 operand rounding
# ----------------------------------------------------------------------------
def _reference(params_list, s, t, num_heads, cast):
    c = cast
    f32 = jnp.float32

    def dot(a, b):
        return jnp.dot(c(a), c(b), preferred_element_type=f32)

    def mha(x, p):
        BT, Lq, dm = x.shape
        depth = dm // num_heads
        q = c(dot(x, p["wq_w"]) + p["wq_b"])
        k = c(dot(x, p["wk_w"]) + p["wk_b"])
        v = c(dot(x, p["wv_w"]) + p["wv_b"])
        heads = lambda a: a.reshape(BT, Lq, num_heads, depth).transpose(0, 2, 1, 3)
        qh, kh, vh = heads(q), heads(k), heads(v)
        scores = jnp.einsum("bhqd,bhkd->bhqk", qh, kh,
                            preferred_element_type=f32) * (1.0 / math.sqrt(depth))
        m = jnp.max(scores, axis=-1, keepdims=True)
        e = jnp.exp(scores - m)
        pattn = e / jnp.sum(e, axis=-1, keepdims=True)
        o = jnp.einsum("bhqk,bhkd->bhqd", c(pattn), vh, preferred_element_type=f32)
        o = o.transpose(0, 2, 1, 3).reshape(BT, Lq, dm)
        return dot(o, p["dense_w"]) + p["dense_b"]

    def block(p, s_, t_):
        B, N, D, H = s_.shape
        tp = dot(t_, p["lt_w"]) + p["lt_b"]
        y = s_ + tp[:, None, None, :]
        yd = dot(y, p["ld_w"]) + p["ld_b"]
        yn = dot(y, p["ln_w"]) + p["ln_b"]
        yd3 = yd.reshape(B * N, D, 2 * H)
        yn3 = jnp.transpose(yn, (0, 2, 1, 3)).reshape(B * D, N, 2 * H)
        ad = mha(yd3, p["attn_d"]).reshape(B, N, D, 2 * H)
        an = jnp.transpose(mha(yn3, p["attn_n"]).reshape(B, D, N, 2 * H), (0, 2, 1, 3))
        ysum = ad + an
        residual = _gelu_exact(ysum[..., :H])
        skip = _gelu_exact(ysum[..., H:])
        return (s_ + residual) * _SQRT_HALF, skip

    res, skip = block(params_list[0], s, t)
    for p in params_list[1:]:
        res, skip_c = block(p, res, t)
        skip = skip_c + skip
    return skip


# ----------------------------------------------------------------------------
# Deterministic parameter init (PyTorch Linear shapes, weights stored [in, out])
# ----------------------------------------------------------------------------
def init_linear(key, in_dim, out_dim):
    k1, k2 = jax.random.split(key)
    w = jax.random.normal(k1, (in_dim, out_dim), jnp.float32) * (1.0 / math.sqrt(in_dim))
    b = jax.random.normal(k2, (1, out_dim), jnp.float32) * 0.02
    return w, b


def init_mha(key, d_model):
    keys = jax.random.split(key, 4)
    p = {}
    for k, name in zip(keys, ["wq", "wk", "wv", "dense"]):
        w, b = init_linear(k, d_model, d_model)
        p[name + "_w"] = w
        p[name + "_b"] = b
    return p


def init_block(key, hidden_dim, num_heads):
    keys = jax.random.split(key, 5)
    p = {}
    p["lt_w"], p["lt_b"] = init_linear(keys[0], hidden_dim, hidden_dim)
    p["ld_w"], p["ld_b"] = init_linear(keys[1], hidden_dim, 2 * hidden_dim)
    p["ln_w"], p["ln_b"] = init_linear(keys[2], hidden_dim, 2 * hidden_dim)
    p["attn_d"] = init_mha(keys[3], 2 * hidden_dim)
    p["attn_n"] = init_mha(keys[4], 2 * hidden_dim)
    return p


# ----------------------------------------------------------------------------
# Main
# ----------------------------------------------------------------------------
if __name__ == "__main__":
    B, N, D, H = 2, 8, 4, 32
    num_heads = 4
    n_layers = 2  # ResAttentionBlock => 1 first_layer + n_layers attn_layers

    key = jax.random.PRNGKey(0)
    k_s, k_t, k_p = jax.random.split(key, 3)
    s = jax.random.normal(k_s, (B, N, D, H), jnp.float32)
    t = jax.random.normal(k_t, (B, H), jnp.float32)

    block_keys = jax.random.split(k_p, n_layers + 1)
    params = [init_block(bk, H, num_heads) for bk in block_keys]

    fwd = jax.jit(lambda p_, s_, t_: res_attention_block(p_, s_, t_, num_heads))
    out = jax.block_until_ready(fwd(params, s, t))
    assert out.shape == (B, N, D, H)

    cast_bf16 = lambda x: x.astype(jnp.bfloat16)
    identity = lambda x: x
    ref_mirror = _reference(params, s, t, num_heads, cast_bf16)  # same bf16 rounding
    ref_f32 = _reference(params, s, t, num_heads, identity)      # pure f32 truth

    err_mirror = float(jnp.max(jnp.abs(out - ref_mirror)))
    err_f32 = float(jnp.max(jnp.abs(out - ref_f32)))
    # Tight structural check vs the bf16-operand mirror; loose fidelity check vs f32.
    assert jnp.allclose(out, ref_mirror, rtol=5e-3, atol=5e-3), err_mirror
    assert jnp.allclose(out, ref_f32, rtol=1e-1, atol=5e-1), err_f32
    print("KERNEL_OK")
</pallas_src>

<mosaic_0001>
module attributes {stable_mosaic.version = 11 : i64} {
  func.func @_res_block_kernel(%arg0: i32, %arg1: memref<1x32x32xf32, #tpu.memory_space<vmem>>, %arg2: memref<1x1x32xf32, #tpu.memory_space<vmem>>, %arg3: memref<32x32xf32, #tpu.memory_space<vmem>>, %arg4: memref<32x32xf32, #tpu.memory_space<vmem>>, %arg5: memref<32x96xbf16, #tpu.memory_space<vmem>>, %arg6: memref<1x96xf32, #tpu.memory_space<vmem>>, %arg7: memref<3x32x128xbf16, #tpu.memory_space<vmem>>, %arg8: memref<3x1x128xf32, #tpu.memory_space<vmem>>, %arg9: memref<3x64x192xbf16, #tpu.memory_space<vmem>>, %arg10: memref<3x1x192xf32, #tpu.memory_space<vmem>>, %arg11: memref<3x64x192xbf16, #tpu.memory_space<vmem>>, %arg12: memref<3x1x192xf32, #tpu.memory_space<vmem>>, %arg13: memref<3x64x64xbf16, #tpu.memory_space<vmem>>, %arg14: memref<3x64x64xbf16, #tpu.memory_space<vmem>>, %arg15: memref<3x1x64xf32, #tpu.memory_space<vmem>>, %arg16: memref<1x32x32xf32, #tpu.memory_space<vmem>>) attributes {dimension_semantics = [#tpu.dimension_semantics<parallel>], iteration_bounds = array<i64: 2>, scalar_prefetch = 0 : i64, scratch_operands = 0 : i64, tpu.core_type = #tpu.core_type<tc>, window_params = [{transform_indices = @transform_0, window_bounds = array<i64: 1, 32, 32>}, {transform_indices = @transform_1, window_bounds = array<i64: 1, 1, 32>}, {pipeline_mode = #tpu.pipeline_mode<synchronous>, transform_indices = @transform_2, window_bounds = array<i64: 32, 32>}, {pipeline_mode = #tpu.pipeline_mode<synchronous>, transform_indices = @transform_3, window_bounds = array<i64: 32, 32>}, {pipeline_mode = #tpu.pipeline_mode<synchronous>, transform_indices = @transform_4, window_bounds = array<i64: 32, 96>}, {pipeline_mode = #tpu.pipeline_mode<synchronous>, transform_indices = @transform_5, window_bounds = array<i64: 1, 96>}, {pipeline_mode = #tpu.pipeline_mode<synchronous>, transform_indices = @transform_6, window_bounds = array<i64: 3, 32, 128>}, {pipeline_mode = #tpu.pipeline_mode<synchronous>, transform_indices = @transform_7, window_bounds = array<i64: 3, 1, 128>}, {pipeline_mode = #tpu.pipeline_mode<synchronous>, transform_indices = @transform_8, window_bounds = array<i64: 3, 64, 192>}, {pipeline_mode = #tpu.pipeline_mode<synchronous>, transform_indices = @transform_9, window_bounds = array<i64: 3, 1, 192>}, {pipeline_mode = #tpu.pipeline_mode<synchronous>, transform_indices = @transform_10, window_bounds = array<i64: 3, 64, 192>}, {pipeline_mode = #tpu.pipeline_mode<synchronous>, transform_indices = @transform_11, window_bounds = array<i64: 3, 1, 192>}, {pipeline_mode = #tpu.pipeline_mode<synchronous>, transform_indices = @transform_12, window_bounds = array<i64: 3, 64, 64>}, {pipeline_mode = #tpu.pipeline_mode<synchronous>, transform_indices = @transform_13, window_bounds = array<i64: 3, 64, 64>}, {pipeline_mode = #tpu.pipeline_mode<synchronous>, transform_indices = @transform_14, window_bounds = array<i64: 3, 1, 64>}, {transform_indices = @transform_15, window_bounds = array<i64: 1, 32, 32>}]} {
    %c0 = arith.constant 0 : index
    %c0_0 = arith.constant 0 : index
    %0 = vector.load %arg3[%c0, %c0_0] : memref<32x32xf32, #tpu.memory_space<vmem>>, vector<32x32xf32>
    %c0_1 = arith.constant 0 : index
    %c0_2 = arith.constant 0 : index
    %1 = vector.load %arg4[%c0_1, %c0_2] : memref<32x32xf32, #tpu.memory_space<vmem>>, vector<32x32xf32>
    %c0_3 = arith.constant 0 : index
    %c0_4 = arith.constant 0 : index
    %c0_5 = arith.constant 0 : index
    %2 = vector.load %arg2[%c0_3, %c0_4, %c0_5] : memref<1x1x32xf32, #tpu.memory_space<vmem>>, vector<1x1x32xf32>
    %3 = vector.shape_cast %2 : vector<1x1x32xf32> to vector<1x32xf32>
    %4 = arith.truncf %3 : vector<1x32xf32> to vector<1x32xbf16>
    %c0_6 = arith.constant 0 : index
    %c0_7 = arith.constant 0 : index
    %5 = vector.load %arg5[%c0_6, %c0_7] : memref<32x96xbf16, #tpu.memory_space<vmem>>, vector<32x96xbf16>
    %cst = arith.constant dense<0.000000e+00> : vector<1x96xf32>
    %6 = tpu.matmul %4, %5, %cst {dimension_numbers = #tpu.dot_dimension_numbers<[1], [0], [0], [1], [0, 0, 1, 1], [], []>} : vector<1x32xbf16>, vector<32x96xbf16>, vector<1x96xf32> -> vector<1x96xf32>
    %c0_8 = arith.constant 0 : index
    %c0_9 = arith.constant 0 : index
    %7 = vector.load %arg6[%c0_8, %c0_9] : memref<1x96xf32, #tpu.memory_space<vmem>>, vector<1x96xf32>
    %8 = arith.addf %6, %7 : vector<1x96xf32>
    %c0_10 = arith.constant 0 : index
    %c0_11 = arith.constant 0 : index
    %c0_12 = arith.constant 0 : index
    %9 = vector.load %arg1[%c0_10, %c0_11, %c0_12] : memref<1x32x32xf32, #tpu.memory_space<vmem>>, vector<1x32x32xf32>
    %10 = vector.shape_cast %9 : vector<1x32x32xf32> to vector<32x32xf32>
    %cst_13 = arith.constant 0.000000e+00 : f32
    %11 = vector.broadcast %cst_13 : f32 to vector<32x32xf32>
    %12 = vector.extract_strided_slice %8 {offsets = [0, 0], sizes = [1, 32], strides = [1, 1]} : vector<1x96xf32> to vector<1x32xf32>
    %13 = vector.broadcast %12 : vector<1x32xf32> to vector<32x32xf32>
    %14 = arith.addf %10, %13 : vector<32x32xf32>
    %15 = arith.truncf %14 : vector<32x32xf32> to vector<32x32xbf16>
    %c0_14 = arith.constant 0 : index
    %c0_15 = arith.constant 0 : index
    %c0_16 = arith.constant 0 : index
    %16 = vector.load %arg7[%c0_14, %c0_15, %c0_16] : memref<3x32x128xbf16, #tpu.memory_space<vmem>>, vector<1x32x128xbf16>
    %17 = vector.shape_cast %16 : vector<1x32x128xbf16> to vector<32x128xbf16>
    %cst_17 = arith.constant dense<0.000000e+00> : vector<32x128xf32>
    %18 = tpu.matmul %15, %17, %cst_17 {dimension_numbers = #tpu.dot_dimension_numbers<[1], [0], [0], [1], [0, 0, 1, 1], [], []>} : vector<32x32xbf16>, vector<32x128xbf16>, vector<32x128xf32> -> vector<32x128xf32>
    %c0_18 = arith.constant 0 : index
    %c0_19 = arith.constant 0 : index
    %c0_20 = arith.constant 0 : index
    %19 = vector.load %arg8[%c0_18, %c0_19, %c0_20] : memref<3x1x128xf32, #tpu.memory_space<vmem>>, vector<1x1x128xf32>
    %20 = vector.shape_cast %19 : vector<1x1x128xf32> to vector<1x128xf32>
    %21 = vector.broadcast %20 : vector<1x128xf32> to vector<32x128xf32>
    %22 = arith.addf %18, %21 : vector<32x128xf32>
    %23 = arith.truncf %22 : vector<32x128xf32> to vector<32x128xbf16>
    %24 = vector.extract_strided_slice %23 {offsets = [0, 0], sizes = [32, 64], strides = [1, 1]} : vector<32x128xbf16> to vector<32x64xbf16>
    %25 = vector.extract_strided_slice %23 {offsets = [0, 64], sizes = [32, 64], strides = [1, 1]} : vector<32x128xbf16> to vector<32x64xbf16>
    %c0_21 = arith.constant 0 : index
    %c0_22 = arith.constant 0 : index
    %c0_23 = arith.constant 0 : index
    %26 = vector.load %arg9[%c0_21, %c0_22, %c0_23] : memref<3x64x192xbf16, #tpu.memory_space<vmem>>, vector<1x64x192xbf16>
    %27 = vector.shape_cast %26 : vector<1x64x192xbf16> to vector<64x192xbf16>
    %cst_24 = arith.constant dense<0.000000e+00> : vector<32x192xf32>
    %28 = tpu.matmul %24, %27, %cst_24 {dimension_numbers = #tpu.dot_dimension_numbers<[1], [0], [0], [1], [0, 0, 1, 1], [], []>} : vector<32x64xbf16>, vector<64x192xbf16>, vector<32x192xf32> -> vector<32x192xf32>
    %c0_25 = arith.constant 0 : index
    %c0_26 = arith.constant 0 : index
    %c0_27 = arith.constant 0 : index
    %29 = vector.load %arg10[%c0_25, %c0_26, %c0_27] : memref<3x1x192xf32, #tpu.memory_space<vmem>>, vector<1x1x192xf32>
    %30 = vector.shape_cast %29 : vector<1x1x192xf32> to vector<1x192xf32>
    %31 = vector.broadcast %30 : vector<1x192xf32> to vector<32x192xf32>
    %32 = arith.addf %28, %31 : vector<32x192xf32>
    %33 = arith.truncf %32 : vector<32x192xf32> to vector<32x192xbf16>
    %c0_28 = arith.constant 0 : index
    %c0_29 = arith.constant 0 : index
    %c0_30 = arith.constant 0 : index
    %34 = vector.load %arg11[%c0_28, %c0_29, %c0_30] : memref<3x64x192xbf16, #tpu.memory_space<vmem>>, vector<1x64x192xbf16>
    %35 = vector.shape_cast %34 : vector<1x64x192xbf16> to vector<64x192xbf16>
    %cst_31 = arith.constant dense<0.000000e+00> : vector<32x192xf32>
    %36 = tpu.matmul %25, %35, %cst_31 {dimension_numbers = #tpu.dot_dimension_numbers<[1], [0], [0], [1], [0, 0, 1, 1], [], []>} : vector<32x64xbf16>, vector<64x192xbf16>, vector<32x192xf32> -> vector<32x192xf32>
    %c0_32 = arith.constant 0 : index
    %c0_33 = arith.constant 0 : index
    %c0_34 = arith.constant 0 : index
    %37 = vector.load %arg12[%c0_32, %c0_33, %c0_34] : memref<3x1x192xf32, #tpu.memory_space<vmem>>, vector<1x1x192xf32>
    %38 = vector.shape_cast %37 : vector<1x1x192xf32> to vector<1x192xf32>
    %39 = vector.broadcast %38 : vector<1x192xf32> to vector<32x192xf32>
    %40 = arith.addf %36, %39 : vector<32x192xf32>
    %41 = arith.truncf %40 : vector<32x192xf32> to vector<32x192xbf16>
    %cst_35 = arith.constant 0.000000e+00 : f32
    %42 = vector.broadcast %cst_35 : f32 to vector<32x64xf32>
    %c0_36 = arith.constant 0 : index
    %c0_37 = arith.constant 0 : index
    %c0_38 = arith.constant 0 : index
    %43 = vector.load %arg13[%c0_36, %c0_37, %c0_38] : memref<3x64x64xbf16, #tpu.memory_space<vmem>>, vector<1x64x64xbf16>
    %44 = vector.shape_cast %43 : vector<1x64x64xbf16> to vector<64x64xbf16>
    %45 = vector.extract_strided_slice %33 {offsets = [0, 0], sizes = [32, 16], strides = [1, 1]} : vector<32x192xbf16> to vector<32x16xbf16>
    %46 = vector.extract_strided_slice %33 {offsets = [0, 64], sizes = [32, 16], strides = [1, 1]} : vector<32x192xbf16> to vector<32x16xbf16>
    %47 = vector.extract_strided_slice %33 {offsets = [0, 128], sizes = [32, 16], strides = [1, 1]} : vector<32x192xbf16> to vector<32x16xbf16>
    "tpu.trace_start"() <{level = 10 : i32, message = "qd,kd->qk"}> : () -> ()
    %cst_39 = arith.constant dense<0.000000e+00> : vector<32x32xf32>
    %48 = tpu.matmul %45, %46, %cst_39 {dimension_numbers = #tpu.dot_dimension_numbers<[1], [1], [0], [0], [0, 0, 1, 0], [], []>} : vector<32x16xbf16>, vector<32x16xbf16>, vector<32x32xf32> -> vector<32x32xf32>
    "tpu.trace_stop"() : () -> ()
    %cst_40 = arith.constant 2.500000e-01 : f32
    %49 = vector.broadcast %cst_40 : f32 to vector<32x32xf32>
    %50 = arith.mulf %48, %49 : vector<32x32xf32>
    %51 = arith.addf %50, %0 : vector<32x32xf32>
    %cst_41 = arith.constant dense<0xFF800000> : vector<32xf32>
    %52 = vector.multi_reduction <maximumf>, %51, %cst_41 [1] : vector<32x32xf32> to vector<32xf32>
    %53 = vector.shape_cast %52 : vector<32xf32> to vector<32x1xf32>
    %54 = vector.broadcast %53 : vector<32x1xf32> to vector<32x32xf32>
    %55 = arith.subf %51, %54 : vector<32x32xf32>
    %56 = math.exp %55 : vector<32x32xf32>
    %cst_42 = arith.constant dense<0.000000e+00> : vector<32xf32>
    %57 = vector.multi_reduction <add>, %56, %cst_42 [1] : vector<32x32xf32> to vector<32xf32>
    %58 = vector.shape_cast %57 : vector<32xf32> to vector<32x1xf32>
    %59 = vector.broadcast %58 : vector<32x1xf32> to vector<32x32xf32>
    %60 = arith.divf %56, %59 : vector<32x32xf32>
    %61 = arith.truncf %60 : vector<32x32xf32> to vector<32x32xbf16>
    %cst_43 = arith.constant dense<0.000000e+00> : vector<32x16xf32>
    %62 = tpu.matmul %61, %47, %cst_43 {dimension_numbers = #tpu.dot_dimension_numbers<[1], [0], [0], [1], [0, 0, 1, 1], [], []>} : vector<32x32xbf16>, vector<32x16xbf16>, vector<32x16xf32> -> vector<32x16xf32>
    %63 = arith.truncf %62 : vector<32x16xf32> to vector<32x16xbf16>
    %64 = vector.extract_strided_slice %44 {offsets = [0, 0], sizes = [16, 64], strides = [1, 1]} : vector<64x64xbf16> to vector<16x64xbf16>
    %cst_44 = arith.constant dense<0.000000e+00> : vector<32x64xf32>
    %65 = tpu.matmul %63, %64, %cst_44 {dimension_numbers = #tpu.dot_dimension_numbers<[1], [0], [0], [1], [0, 0, 1, 1], [], []>} : vector<32x16xbf16>, vector<16x64xbf16>, vector<32x64xf32> -> vector<32x64xf32>
    %66 = arith.addf %42, %65 : vector<32x64xf32>
    %67 = vector.extract_strided_slice %33 {offsets = [0, 16], sizes = [32, 16], strides = [1, 1]} : vector<32x192xbf16> to vector<32x16xbf16>
    %68 = vector.extract_strided_slice %33 {offsets = [0, 80], sizes = [32, 16], strides = [1, 1]} : vector<32x192xbf16> to vector<32x16xbf16>
    %69 = vector.extract_strided_slice %33 {offsets = [0, 144], sizes = [32, 16], strides = [1, 1]} : vector<32x192xbf16> to vector<32x16xbf16>
    "tpu.trace_start"() <{level = 10 : i32, message = "qd,kd->qk"}> : () -> ()
    %cst_45 = arith.constant dense<0.000000e+00> : vector<32x32xf32>
    %70 = tpu.matmul %67, %68, %cst_45 {dimension_numbers = #tpu.dot_dimension_numbers<[1], [1], [0], [0], [0, 0, 1, 0], [], []>} : vector<32x16xbf16>, vector<32x16xbf16>, vector<32x32xf32> -> vector<32x32xf32>
    "tpu.trace_stop"() : () -> ()
    %cst_46 = arith.constant 2.500000e-01 : f32
    %71 = vector.broadcast %cst_46 : f32 to vector<32x32xf32>
    %72 = arith.mulf %70, %71 : vector<32x32xf32>
    %73 = arith.addf %72, %0 : vector<32x32xf32>
    %cst_47 = arith.constant dense<0xFF800000> : vector<32xf32>
    %74 = vector.multi_reduction <maximumf>, %73, %cst_47 [1] : vector<32x32xf32> to vector<32xf32>
    %75 = vector.shape_cast %74 : vector<32xf32> to vector<32x1xf32>
    %76 = vector.broadcast %75 : vector<32x1xf32> to vector<32x32xf32>
    %77 = arith.subf %73, %76 : vector<32x32xf32>
    %78 = math.exp %77 : vector<32x32xf32>
    %cst_48 = arith.constant dense<0.000000e+00> : vector<32xf32>
    %79 = vector.multi_reduction <add>, %78, %cst_48 [1] : vector<32x32xf32> to vector<32xf32>
    %80 = vector.shape_cast %79 : vector<32xf32> to vector<32x1xf32>
    %81 = vector.broadcast %80 : vector<32x1xf32> to vector<32x32xf32>
    %82 = arith.divf %78, %81 : vector<32x32xf32>
    %83 = arith.truncf %82 : vector<32x32xf32> to vector<32x32xbf16>
    %cst_49 = arith.constant dense<0.000000e+00> : vector<32x16xf32>
    %84 = tpu.matmul %83, %69, %cst_49 {dimension_numbers = #tpu.dot_dimension_numbers<[1], [0], [0], [1], [0, 0, 1, 1], [], []>} : vector<32x32xbf16>, vector<32x16xbf16>, vector<32x16xf32> -> vector<32x16xf32>
    %85 = arith.truncf %84 : vector<32x16xf32> to vector<32x16xbf16>
    %86 = vector.extract_strided_slice %44 {offsets = [16, 0], sizes = [16, 64], strides = [1, 1]} : vector<64x64xbf16> to vector<16x64xbf16>
    %cst_50 = arith.constant dense<0.000000e+00> : vector<32x64xf32>
    %87 = tpu.matmul %85, %86, %cst_50 {dimension_numbers = #tpu.dot_dimension_numbers<[1], [0], [0], [1], [0, 0, 1, 1], [], []>} : vector<32x16xbf16>, vector<16x64xbf16>, vector<32x64xf32> -> vector<32x64xf32>
    %88 = arith.addf %66, %87 : vector<32x64xf32>
    %89 = vector.extract_strided_slice %33 {offsets = [0, 32], sizes = [32, 16], strides = [1, 1]} : vector<32x192xbf16> to vector<32x16xbf16>
    %90 = vector.extract_strided_slice %33 {offsets = [0, 96], sizes = [32, 16], strides = [1, 1]} : vector<32x192xbf16> to vector<32x16xbf16>
    %91 = vector.extract_strided_slice %33 {offsets = [0, 160], sizes = [32, 16], strides = [1, 1]} : vector<32x192xbf16> to vector<32x16xbf16>
    "tpu.trace_start"() <{level = 10 : i32, message = "qd,kd->qk"}> : () -> ()
    %cst_51 = arith.constant dense<0.000000e+00> : vector<32x32xf32>
    %92 = tpu.matmul %89, %90, %cst_51 {dimension_numbers = #tpu.dot_dimension_numbers<[1], [1], [0], [0], [0, 0, 1, 0], [], []>} : vector<32x16xbf16>, vector<32x16xbf16>, vector<32x32xf32> -> vector<32x32xf32>
    "tpu.trace_stop"() : () -> ()
    %cst_52 = arith.constant 2.500000e-01 : f32
    %93 = vector.broadcast %cst_52 : f32 to vector<32x32xf32>
    %94 = arith.mulf %92, %93 : vector<32x32xf32>
    %95 = arith.addf %94, %0 : vector<32x32xf32>
    %cst_53 = arith.constant dense<0xFF800000> : vector<32xf32>
    %96 = vector.multi_reduction <maximumf>, %95, %cst_53 [1] : vector<32x32xf32> to vector<32xf32>
    %97 = vector.shape_cast %96 : vector<32xf32> to vector<32x1xf32>
    %98 = vector.broadcast %97 : vector<32x1xf32> to vector<32x32xf32>
    %99 = arith.subf %95, %98 : vector<32x32xf32>
    %100 = math.exp %99 : vector<32x32xf32>
    %cst_54 = arith.constant dense<0.000000e+00> : vector<32xf32>
    %101 = vector.multi_reduction <add>, %100, %cst_54 [1] : vector<32x32xf32> to vector<32xf32>
    %102 = vector.shape_cast %101 : vector<32xf32> to vector<32x1xf32>
    %103 = vector.broadcast %102 : vector<32x1xf32> to vector<32x32xf32>
    %104 = arith.divf %100, %103 : vector<32x32xf32>
    %105 = arith.truncf %104 : vector<32x32xf32> to vector<32x32xbf16>
    %cst_55 = arith.constant dense<0.000000e+00> : vector<32x16xf32>
    %106 = tpu.matmul %105, %91, %cst_55 {dimension_numbers = #tpu.dot_dimension_numbers<[1], [0], [0], [1], [0, 0, 1, 1], [], []>} : vector<32x32xbf16>, vector<32x16xbf16>, vector<32x16xf32> -> vector<32x16xf32>
    %107 = arith.truncf %106 : vector<32x16xf32> to vector<32x16xbf16>
    %108 = vector.extract_strided_slice %44 {offsets = [32, 0], sizes = [16, 64], strides = [1, 1]} : vector<64x64xbf16> to vector<16x64xbf16>
    %cst_56 = arith.constant dense<0.000000e+00> : vector<32x64xf32>
    %109 = tpu.matmul %107, %108, %cst_56 {dimension_numbers = #tpu.dot_dimension_numbers<[1], [0], [0], [1], [0, 0, 1, 1], [], []>} : vector<32x16xbf16>, vector<16x64xbf16>, vector<32x64xf32> -> vector<32x64xf32>
    %110 = arith.addf %88, %109 : vector<32x64xf32>
    %111 = vector.extract_strided_slice %33 {offsets = [0, 48], sizes = [32, 16], strides = [1, 1]} : vector<32x192xbf16> to vector<32x16xbf16>
    %112 = vector.extract_strided_slice %33 {offsets = [0, 112], sizes = [32, 16], strides = [1, 1]} : vector<32x192xbf16> to vector<32x16xbf16>
    %113 = vector.extract_strided_slice %33 {offsets = [0, 176], sizes = [32, 16], strides = [1, 1]} : vector<32x192xbf16> to vector<32x16xbf16>
    "tpu.trace_start"() <{level = 10 : i32, message = "qd,kd->qk"}> : () -> ()
    %cst_57 = arith.constant dense<0.000000e+00> : vector<32x32xf32>
    %114 = tpu.matmul %111, %112, %cst_57 {dimension_numbers = #tpu.dot_dimension_numbers<[1], [1], [0], [0], [0, 0, 1, 0], [], []>} : vector<32x16xbf16>, vector<32x16xbf16>, vector<32x32xf32> -> vector<32x32xf32>
    "tpu.trace_stop"() : () -> ()
    %cst_58 = arith.constant 2.500000e-01 : f32
    %115 = vector.broadcast %cst_58 : f32 to vector<32x32xf32>
    %116 = arith.mulf %114, %115 : vector<32x32xf32>
    %117 = arith.addf %116, %0 : vector<32x32xf32>
    %cst_59 = arith.constant dense<0xFF800000> : vector<32xf32>
    %118 = vector.multi_reduction <maximumf>, %117, %cst_59 [1] : vector<32x32xf32> to vector<32xf32>
    %119 = vector.shape_cast %118 : vector<32xf32> to vector<32x1xf32>
    %120 = vector.broadcast %119 : vector<32x1xf32> to vector<32x32xf32>
    %121 = arith.subf %117, %120 : vector<32x32xf32>
    %122 = math.exp %121 : vector<32x32xf32>
    %cst_60 = arith.constant dense<0.000000e+00> : vector<32xf32>
    %123 = vector.multi_reduction <add>, %122, %cst_60 [1] : vector<32x32xf32> to vector<32xf32>
    %124 = vector.shape_cast %123 : vector<32xf32> to vector<32x1xf32>
    %125 = vector.broadcast %124 : vector<32x1xf32> to vector<32x32xf32>
    %126 = arith.divf %122, %125 : vector<32x32xf32>
    %127 = arith.truncf %126 : vector<32x32xf32> to vector<32x32xbf16>
    %cst_61 = arith.constant dense<0.000000e+00> : vector<32x16xf32>
    %128 = tpu.matmul %127, %113, %cst_61 {dimension_numbers = #tpu.dot_dimension_numbers<[1], [0], [0], [1], [0, 0, 1, 1], [], []>} : vector<32x32xbf16>, vector<32x16xbf16>, vector<32x16xf32> -> vector<32x16xf32>
    %129 = arith.truncf %128 : vector<32x16xf32> to vector<32x16xbf16>
    %130 = vector.extract_strided_slice %44 {offsets = [48, 0], sizes = [16, 64], strides = [1, 1]} : vector<64x64xbf16> to vector<16x64xbf16>
    %cst_62 = arith.constant dense<0.000000e+00> : vector<32x64xf32>
    %131 = tpu.matmul %129, %130, %cst_62 {dimension_numbers = #tpu.dot_dimension_numbers<[1], [0], [0], [1], [0, 0, 1, 1], [], []>} : vector<32x16xbf16>, vector<16x64xbf16>, vector<32x64xf32> -> vector<32x64xf32>
    %132 = arith.addf %110, %131 : vector<32x64xf32>
    %c0_63 = arith.constant 0 : index
    %c0_64 = arith.constant 0 : index
    %c0_65 = arith.constant 0 : index
    %133 = vector.load %arg14[%c0_63, %c0_64, %c0_65] : memref<3x64x64xbf16, #tpu.memory_space<vmem>>, vector<1x64x64xbf16>
    %134 = vector.shape_cast %133 : vector<1x64x64xbf16> to vector<64x64xbf16>
    %135 = vector.extract_strided_slice %41 {offsets = [0, 0], sizes = [32, 16], strides = [1, 1]} : vector<32x192xbf16> to vector<32x16xbf16>
    %136 = vector.extract_strided_slice %41 {offsets = [0, 64], sizes = [32, 16], strides = [1, 1]} : vector<32x192xbf16> to vector<32x16xbf16>
    %137 = vector.extract_strided_slice %41 {offsets = [0, 128], sizes = [32, 16], strides = [1, 1]} : vector<32x192xbf16> to vector<32x16xbf16>
    "tpu.trace_start"() <{level = 10 : i32, message = "qd,kd->qk"}> : () -> ()
    %cst_66 = arith.constant dense<0.000000e+00> : vector<32x32xf32>
    %138 = tpu.matmul %135, %136, %cst_66 {dimension_numbers = #tpu.dot_dimension_numbers<[1], [1], [0], [0], [0, 0, 1, 0], [], []>} : vector<32x16xbf16>, vector<32x16xbf16>, vector<32x32xf32> -> vector<32x32xf32>
    "tpu.trace_stop"() : () -> ()
    %cst_67 = arith.constant 2.500000e-01 : f32
    %139 = vector.broadcast %cst_67 : f32 to vector<32x32xf32>
    %140 = arith.mulf %138, %139 : vector<32x32xf32>
    %141 = arith.addf %140, %1 : vector<32x32xf32>
    %cst_68 = arith.constant dense<0xFF800000> : vector<32xf32>
    %142 = vector.multi_reduction <maximumf>, %141, %cst_68 [1] : vector<32x32xf32> to vector<32xf32>
    %143 = vector.shape_cast %142 : vector<32xf32> to vector<32x1xf32>
    %144 = vector.broadcast %143 : vector<32x1xf32> to vector<32x32xf32>
    %145 = arith.subf %141, %144 : vector<32x32xf32>
    %146 = math.exp %145 : vector<32x32xf32>
    %cst_69 = arith.constant dense<0.000000e+00> : vector<32xf32>
    %147 = vector.multi_reduction <add>, %146, %cst_69 [1] : vector<32x32xf32> to vector<32xf32>
    %148 = vector.shape_cast %147 : vector<32xf32> to vector<32x1xf32>
    %149 = vector.broadcast %148 : vector<32x1xf32> to vector<32x32xf32>
    %150 = arith.divf %146, %149 : vector<32x32xf32>
    %151 = arith.truncf %150 : vector<32x32xf32> to vector<32x32xbf16>
    %cst_70 = arith.constant dense<0.000000e+00> : vector<32x16xf32>
    %152 = tpu.matmul %151, %137, %cst_70 {dimension_numbers = #tpu.dot_dimension_numbers<[1], [0], [0], [1], [0, 0, 1, 1], [], []>} : vector<32x32xbf16>, vector<32x16xbf16>, vector<32x16xf32> -> vector<32x16xf32>
    %153 = arith.truncf %152 : vector<32x16xf32> to vector<32x16xbf16>
    %154 = vector.extract_strided_slice %134 {offsets = [0, 0], sizes = [16, 64], strides = [1, 1]} : vector<64x64xbf16> to vector<16x64xbf16>
    %cst_71 = arith.constant dense<0.000000e+00> : vector<32x64xf32>
    %155 = tpu.matmul %153, %154, %cst_71 {dimension_numbers = #tpu.dot_dimension_numbers<[1], [0], [0], [1], [0, 0, 1, 1], [], []>} : vector<32x16xbf16>, vector<16x64xbf16>, vector<32x64xf32> -> vector<32x64xf32>
    %156 = arith.addf %132, %155 : vector<32x64xf32>
    %157 = vector.extract_strided_slice %41 {offsets = [0, 16], sizes = [32, 16], strides = [1, 1]} : vector<32x192xbf16> to vector<32x16xbf16>
    %158 = vector.extract_strided_slice %41 {offsets = [0, 80], sizes = [32, 16], strides = [1, 1]} : vector<32x192xbf16> to vector<32x16xbf16>
    %159 = vector.extract_strided_slice %41 {offsets = [0, 144], sizes = [32, 16], strides = [1, 1]} : vector<32x192xbf16> to vector<32x16xbf16>
    "tpu.trace_start"() <{level = 10 : i32, message = "qd,kd->qk"}> : () -> ()
    %cst_72 = arith.constant dense<0.000000e+00> : vector<32x32xf32>
    %160 = tpu.matmul %157, %158, %cst_72 {dimension_numbers = #tpu.dot_dimension_numbers<[1], [1], [0], [0], [0, 0, 1, 0], [], []>} : vector<32x16xbf16>, vector<32x16xbf16>, vector<32x32xf32> -> vector<32x32xf32>
    "tpu.trace_stop"() : () -> ()
    %cst_73 = arith.constant 2.500000e-01 : f32
    %161 = vector.broadcast %cst_73 : f32 to vector<32x32xf32>
    %162 = arith.mulf %160, %161 : vector<32x32xf32>
    %163 = arith.addf %162, %1 : vector<32x32xf32>
    %cst_74 = arith.constant dense<0xFF800000> : vector<32xf32>
    %164 = vector.multi_reduction <maximumf>, %163, %cst_74 [1] : vector<32x32xf32> to vector<32xf32>
    %165 = vector.shape_cast %164 : vector<32xf32> to vector<32x1xf32>
    %166 = vector.broadcast %165 : vector<32x1xf32> to vector<32x32xf32>
    %167 = arith.subf %163, %166 : vector<32x32xf32>
    %168 = math.exp %167 : vector<32x32xf32>
    %cst_75 = arith.constant dense<0.000000e+00> : vector<32xf32>
    %169 = vector.multi_reduction <add>, %168, %cst_75 [1] : vector<32x32xf32> to vector<32xf32>
    %170 = vector.shape_cast %169 : vector<32xf32> to vector<32x1xf32>
    %171 = vector.broadcast %170 : vector<32x1xf32> to vector<32x32xf32>
    %172 = arith.divf %168, %171 : vector<32x32xf32>
    %173 = arith.truncf %172 : vector<32x32xf32> to vector<32x32xbf16>
    %cst_76 = arith.constant dense<0.000000e+00> : vector<32x16xf32>
    %174 = tpu.matmul %173, %159, %cst_76 {dimension_numbers = #tpu.dot_dimension_numbers<[1], [0], [0], [1], [0, 0, 1, 1], [], []>} : vector<32x32xbf16>, vector<32x16xbf16>, vector<32x16xf32> -> vector<32x16xf32>
    %175 = arith.truncf %174 : vector<32x16xf32> to vector<32x16xbf16>
    %176 = vector.extract_strided_slice %134 {offsets = [16, 0], sizes = [16, 64], strides = [1, 1]} : vector<64x64xbf16> to vector<16x64xbf16>
    %cst_77 = arith.constant dense<0.000000e+00> : vector<32x64xf32>
    %177 = tpu.matmul %175, %176, %cst_77 {dimension_numbers = #tpu.dot_dimension_numbers<[1], [0], [0], [1], [0, 0, 1, 1], [], []>} : vector<32x16xbf16>, vector<16x64xbf16>, vector<32x64xf32> -> vector<32x64xf32>
    %178 = arith.addf %156, %177 : vector<32x64xf32>
    %179 = vector.extract_strided_slice %41 {offsets = [0, 32], sizes = [32, 16], strides = [1, 1]} : vector<32x192xbf16> to vector<32x16xbf16>
    %180 = vector.extract_strided_slice %41 {offsets = [0, 96], sizes = [32, 16], strides = [1, 1]} : vector<32x192xbf16> to vector<32x16xbf16>
    %181 = vector.extract_strided_slice %41 {offsets = [0, 160], sizes = [32, 16], strides = [1, 1]} : vector<32x192xbf16> to vector<32x16xbf16>
    "tpu.trace_start"() <{level = 10 : i32, message = "qd,kd->qk"}> : () -> ()
    %cst_78 = arith.constant dense<0.000000e+00> : vector<32x32xf32>
    %182 = tpu.matmul %179, %180, %cst_78 {dimension_numbers = #tpu.dot_dimension_numbers<[1], [1], [0], [0], [0, 0, 1, 0], [], []>} : vector<32x16xbf16>, vector<32x16xbf16>, vector<32x32xf32> -> vector<32x32xf32>
    "tpu.trace_stop"() : () -> ()
    %cst_79 = arith.constant 2.500000e-01 : f32
    %183 = vector.broadcast %cst_79 : f32 to vector<32x32xf32>
    %184 = arith.mulf %182, %183 : vector<32x32xf32>
    %185 = arith.addf %184, %1 : vector<32x32xf32>
    %cst_80 = arith.constant dense<0xFF800000> : vector<32xf32>
    %186 = vector.multi_reduction <maximumf>, %185, %cst_80 [1] : vector<32x32xf32> to vector<32xf32>
    %187 = vector.shape_cast %186 : vector<32xf32> to vector<32x1xf32>
    %188 = vector.broadcast %187 : vector<32x1xf32> to vector<32x32xf32>
    %189 = arith.subf %185, %188 : vector<32x32xf32>
    %190 = math.exp %189 : vector<32x32xf32>
    %cst_81 = arith.constant dense<0.000000e+00> : vector<32xf32>
    %191 = vector.multi_reduction <add>, %190, %cst_81 [1] : vector<32x32xf32> to vector<32xf32>
    %192 = vector.shape_cast %191 : vector<32xf32> to vector<32x1xf32>
    %193 = vector.broadcast %192 : vector<32x1xf32> to vector<32x32xf32>
    %194 = arith.divf %190, %193 : vector<32x32xf32>
    %195 = arith.truncf %194 : vector<32x32xf32> to vector<32x32xbf16>
    %cst_82 = arith.constant dense<0.000000e+00> : vector<32x16xf32>
    %196 = tpu.matmul %195, %181, %cst_82 {dimension_numbers = #tpu.dot_dimension_numbers<[1], [0], [0], [1], [0, 0, 1, 1], [], []>} : vector<32x32xbf16>, vector<32x16xbf16>, vector<32x16xf32> -> vector<32x16xf32>
    %197 = arith.truncf %196 : vector<32x16xf32> to vector<32x16xbf16>
    %198 = vector.extract_strided_slice %134 {offsets = [32, 0], sizes = [16, 64], strides = [1, 1]} : vector<64x64xbf16> to vector<16x64xbf16>
    %cst_83 = arith.constant dense<0.000000e+00> : vector<32x64xf32>
    %199 = tpu.matmul %197, %198, %cst_83 {dimension_numbers = #tpu.dot_dimension_numbers<[1], [0], [0], [1], [0, 0, 1, 1], [], []>} : vector<32x16xbf16>, vector<16x64xbf16>, vector<32x64xf32> -> vector<32x64xf32>
    %200 = arith.addf %178, %199 : vector<32x64xf32>
    %201 = vector.extract_strided_slice %41 {offsets = [0, 48], sizes = [32, 16], strides = [1, 1]} : vector<32x192xbf16> to vector<32x16xbf16>
    %202 = vector.extract_strided_slice %41 {offsets = [0, 112], sizes = [32, 16], strides = [1, 1]} : vector<32x192xbf16> to vector<32x16xbf16>
    %203 = vector.extract_strided_slice %41 {offsets = [0, 176], sizes = [32, 16], strides = [1, 1]} : vector<32x192xbf16> to vector<32x16xbf16>
    "tpu.trace_start"() <{level = 10 : i32, message = "qd,kd->qk"}> : () -> ()
    %cst_84 = arith.constant dense<0.000000e+00> : vector<32x32xf32>
    %204 = tpu.matmul %201, %202, %cst_84 {dimension_numbers = #tpu.dot_dimension_numbers<[1], [1], [0], [0], [0, 0, 1, 0], [], []>} : vector<32x16xbf16>, vector<32x16xbf16>, vector<32x32xf32> -> vector<32x32xf32>
    "tpu.trace_stop"() : () -> ()
    %cst_85 = arith.constant 2.500000e-01 : f32
    %205 = vector.broadcast %cst_85 : f32 to vector<32x32xf32>
    %206 = arith.mulf %204, %205 : vector<32x32xf32>
    %207 = arith.addf %206, %1 : vector<32x32xf32>
    %cst_86 = arith.constant dense<0xFF800000> : vector<32xf32>
    %208 = vector.multi_reduction <maximumf>, %207, %cst_86 [1] : vector<32x32xf32> to vector<32xf32>
    %209 = vector.shape_cast %208 : vector<32xf32> to vector<32x1xf32>
    %210 = vector.broadcast %209 : vector<32x1xf32> to vector<32x32xf32>
    %211 = arith.subf %207, %210 : vector<32x32xf32>
    %212 = math.exp %211 : vector<32x32xf32>
    %cst_87 = arith.constant dense<0.000000e+00> : vector<32xf32>
    %213 = vector.multi_reduction <add>, %212, %cst_87 [1] : vector<32x32xf32> to vector<32xf32>
    %214 = vector.shape_cast %213 : vector<32xf32> to vector<32x1xf32>
    %215 = vector.broadcast %214 : vector<32x1xf32> to vector<32x32xf32>
    %216 = arith.divf %212, %215 : vector<32x32xf32>
    %217 = arith.truncf %216 : vector<32x32xf32> to vector<32x32xbf16>
    %cst_88 = arith.constant dense<0.000000e+00> : vector<32x16xf32>
    %218 = tpu.matmul %217, %203, %cst_88 {dimension_numbers = #tpu.dot_dimension_numbers<[1], [0], [0], [1], [0, 0, 1, 1], [], []>} : vector<32x32xbf16>, vector<32x16xbf16>, vector<32x16xf32> -> vector<32x16xf32>
    %219 = arith.truncf %218 : vector<32x16xf32> to vector<32x16xbf16>
    %220 = vector.extract_strided_slice %134 {offsets = [48, 0], sizes = [16, 64], strides = [1, 1]} : vector<64x64xbf16> to vector<16x64xbf16>
    %cst_89 = arith.constant dense<0.000000e+00> : vector<32x64xf32>
    %221 = tpu.matmul %219, %220, %cst_89 {dimension_numbers = #tpu.dot_dimension_numbers<[1], [0], [0], [1], [0, 0, 1, 1], [], []>} : vector<32x16xbf16>, vector<16x64xbf16>, vector<32x64xf32> -> vector<32x64xf32>
    %222 = arith.addf %200, %221 : vector<32x64xf32>
    %c0_90 = arith.constant 0 : index
    %c0_91 = arith.constant 0 : index
    %c0_92 = arith.constant 0 : index
    %223 = vector.load %arg15[%c0_90, %c0_91, %c0_92] : memref<3x1x64xf32, #tpu.memory_space<vmem>>, vector<1x1x64xf32>
    %224 = vector.shape_cast %223 : vector<1x1x64xf32> to vector<1x64xf32>
    %225 = vector.broadcast %224 : vector<1x64xf32> to vector<32x64xf32>
    %226 = arith.addf %222, %225 : vector<32x64xf32>
    %cst_93 = arith.constant 5.000000e-01 : f32
    %227 = vector.broadcast %cst_93 : f32 to vector<32x64xf32>
    %228 = arith.mulf %227, %226 : vector<32x64xf32>
    %cst_94 = arith.constant 0.707106769 : f32
    %229 = vector.broadcast %cst_94 : f32 to vector<32x64xf32>
    %230 = arith.mulf %226, %229 : vector<32x64xf32>
    %231 = math.erf %230 : vector<32x64xf32>
    %cst_95 = arith.constant 1.000000e+00 : f32
    %232 = vector.broadcast %cst_95 : f32 to vector<32x64xf32>
    %233 = arith.addf %232, %231 : vector<32x64xf32>
    %234 = arith.mulf %228, %233 : vector<32x64xf32>
    %235 = vector.extract_strided_slice %234 {offsets = [0, 0], sizes = [32, 32], strides = [1, 1]} : vector<32x64xf32> to vector<32x32xf32>
    %236 = arith.addf %10, %235 : vector<32x32xf32>
    %cst_96 = arith.constant 0.707106769 : f32
    %237 = vector.broadcast %cst_96 : f32 to vector<32x32xf32>
    %238 = arith.mulf %236, %237 : vector<32x32xf32>
    %239 = vector.extract_strided_slice %234 {offsets = [0, 32], sizes = [32, 32], strides = [1, 1]} : vector<32x64xf32> to vector<32x32xf32>
    %240 = arith.addf %11, %239 : vector<32x32xf32>
    %241 = vector.extract_strided_slice %8 {offsets = [0, 32], sizes = [1, 32], strides = [1, 1]} : vector<1x96xf32> to vector<1x32xf32>
    %242 = vector.broadcast %241 : vector<1x32xf32> to vector<32x32xf32>
    %243 = arith.addf %238, %242 : vector<32x32xf32>
    %244 = arith.truncf %243 : vector<32x32xf32> to vector<32x32xbf16>
    %c1 = arith.constant 1 : index
    %c0_97 = arith.constant 0 : index
    %c0_98 = arith.constant 0 : index
    %245 = vector.load %arg7[%c1, %c0_97, %c0_98] : memref<3x32x128xbf16, #tpu.memory_space<vmem>>, vector<1x32x128xbf16>
    %246 = vector.shape_cast %245 : vector<1x32x128xbf16> to vector<32x128xbf16>
    %cst_99 = arith.constant dense<0.000000e+00> : vector<32x128xf32>
    %247 = tpu.matmul %244, %246, %cst_99 {dimension_numbers = #tpu.dot_dimension_numbers<[1], [0], [0], [1], [0, 0, 1, 1], [], []>} : vector<32x32xbf16>, vector<32x128xbf16>, vector<32x128xf32> -> vector<32x128xf32>
    %c1_100 = arith.constant 1 : index
    %c0_101 = arith.constant 0 : index
    %c0_102 = arith.constant 0 : index
    %248 = vector.load %arg8[%c1_100, %c0_101, %c0_102] : memref<3x1x128xf32, #tpu.memory_space<vmem>>, vector<1x1x128xf32>
    %249 = vector.shape_cast %248 : vector<1x1x128xf32> to vector<1x128xf32>
    %250 = vector.broadcast %249 : vector<1x128xf32> to vector<32x128xf32>
    %251 = arith.addf %247, %250 : vector<32x128xf32>
    %252 = arith.truncf %251 : vector<32x128xf32> to vector<32x128xbf16>
    %253 = vector.extract_strided_slice %252 {offsets = [0, 0], sizes = [32, 64], strides = [1, 1]} : vector<32x128xbf16> to vector<32x64xbf16>
    %254 = vector.extract_strided_slice %252 {offsets = [0, 64], sizes = [32, 64], strides = [1, 1]} : vector<32x128xbf16> to vector<32x64xbf16>
    %c1_103 = arith.constant 1 : index
    %c0_104 = arith.constant 0 : index
    %c0_105 = arith.constant 0 : index
    %255 = vector.load %arg9[%c1_103, %c0_104, %c0_105] : memref<3x64x192xbf16, #tpu.memory_space<vmem>>, vector<1x64x192xbf16>
    %256 = vector.shape_cast %255 : vector<1x64x192xbf16> to vector<64x192xbf16>
    %cst_106 = arith.constant dense<0.000000e+00> : vector<32x192xf32>
    %257 = tpu.matmul %253, %256, %cst_106 {dimension_numbers = #tpu.dot_dimension_numbers<[1], [0], [0], [1], [0, 0, 1, 1], [], []>} : vector<32x64xbf16>, vector<64x192xbf16>, vector<32x192xf32> -> vector<32x192xf32>
    %c1_107 = arith.constant 1 : index
    %c0_108 = arith.constant 0 : index
    %c0_109 = arith.constant 0 : index
    %258 = vector.load %arg10[%c1_107, %c0_108, %c0_109] : memref<3x1x192xf32, #tpu.memory_space<vmem>>, vector<1x1x192xf32>
    %259 = vector.shape_cast %258 : vector<1x1x192xf32> to vector<1x192xf32>
    %260 = vector.broadcast %259 : vector<1x192xf32> to vector<32x192xf32>
    %261 = arith.addf %257, %260 : vector<32x192xf32>
    %262 = arith.truncf %261 : vector<32x192xf32> to vector<32x192xbf16>
    %c1_110 = arith.constant 1 : index
    %c0_111 = arith.constant 0 : index
    %c0_112 = arith.constant 0 : index
    %263 = vector.load %arg11[%c1_110, %c0_111, %c0_112] : memref<3x64x192xbf16, #tpu.memory_space<vmem>>, vector<1x64x192xbf16>
    %264 = vector.shape_cast %263 : vector<1x64x192xbf16> to vector<64x192xbf16>
    %cst_113 = arith.constant dense<0.000000e+00> : vector<32x192xf32>
    %265 = tpu.matmul %254, %264, %cst_113 {dimension_numbers = #tpu.dot_dimension_numbers<[1], [0], [0], [1], [0, 0, 1, 1], [], []>} : vector<32x64xbf16>, vector<64x192xbf16>, vector<32x192xf32> -> vector<32x192xf32>
    %c1_114 = arith.constant 1 : index
    %c0_115 = arith.constant 0 : index
    %c0_116 = arith.constant 0 : index
    %266 = vector.load %arg12[%c1_114, %c0_115, %c0_116] : memref<3x1x192xf32, #tpu.memory_space<vmem>>, vector<1x1x192xf32>
    %267 = vector.shape_cast %266 : vector<1x1x192xf32> to vector<1x192xf32>
    %268 = vector.broadcast %267 : vector<1x192xf32> to vector<32x192xf32>
    %269 = arith.addf %265, %268 : vector<32x192xf32>
    %270 = arith.truncf %269 : vector<32x192xf32> to vector<32x192xbf16>
    %cst_117 = arith.constant 0.000000e+00 : f32
    %271 = vector.broadcast %cst_117 : f32 to vector<32x64xf32>
    %c1_118 = arith.constant 1 : index
    %c0_119 = arith.constant 0 : index
    %c0_120 = arith.constant 0 : index
    %272 = vector.load %arg13[%c1_118, %c0_119, %c0_120] : memref<3x64x64xbf16, #tpu.memory_space<vmem>>, vector<1x64x64xbf16>
    %273 = vector.shape_cast %272 : vector<1x64x64xbf16> to vector<64x64xbf16>
    %274 = vector.extract_strided_slice %262 {offsets = [0, 0], sizes = [32, 16], strides = [1, 1]} : vector<32x192xbf16> to vector<32x16xbf16>
    %275 = vector.extract_strided_slice %262 {offsets = [0, 64], sizes = [32, 16], strides = [1, 1]} : vector<32x192xbf16> to vector<32x16xbf16>
    %276 = vector.extract_strided_slice %262 {offsets = [0, 128], sizes = [32, 16], strides = [1, 1]} : vector<32x192xbf16> to vector<32x16xbf16>
    "tpu.trace_start"() <{level = 10 : i32, message = "qd,kd->qk"}> : () -> ()
    %cst_121 = arith.constant dense<0.000000e+00> : vector<32x32xf32>
    %277 = tpu.matmul %274, %275, %cst_121 {dimension_numbers = #tpu.dot_dimension_numbers<[1], [1], [0], [0], [0, 0, 1, 0], [], []>} : vector<32x16xbf16>, vector<32x16xbf16>, vector<32x32xf32> -> vector<32x32xf32>
    "tpu.trace_stop"() : () -> ()
    %cst_122 = arith.constant 2.500000e-01 : f32
    %278 = vector.broadcast %cst_122 : f32 to vector<32x32xf32>
    %279 = arith.mulf %277, %278 : vector<32x32xf32>
    %280 = arith.addf %279, %0 : vector<32x32xf32>
    %cst_123 = arith.constant dense<0xFF800000> : vector<32xf32>
    %281 = vector.multi_reduction <maximumf>, %280, %cst_123 [1] : vector<32x32xf32> to vector<32xf32>
    %282 = vector.shape_cast %281 : vector<32xf32> to vector<32x1xf32>
    %283 = vector.broadcast %282 : vector<32x1xf32> to vector<32x32xf32>
    %284 = arith.subf %280, %283 : vector<32x32xf32>
    %285 = math.exp %284 : vector<32x32xf32>
    %cst_124 = arith.constant dense<0.000000e+00> : vector<32xf32>
    %286 = vector.multi_reduction <add>, %285, %cst_124 [1] : vector<32x32xf32> to vector<32xf32>
    %287 = vector.shape_cast %286 : vector<32xf32> to vector<32x1xf32>
    %288 = vector.broadcast %287 : vector<32x1xf32> to vector<32x32xf32>
    %289 = arith.divf %285, %288 : vector<32x32xf32>
    %290 = arith.truncf %289 : vector<32x32xf32> to vector<32x32xbf16>
    %cst_125 = arith.constant dense<0.000000e+00> : vector<32x16xf32>
    %291 = tpu.matmul %290, %276, %cst_125 {dimension_numbers = #tpu.dot_dimension_numbers<[1], [0], [0], [1], [0, 0, 1, 1], [], []>} : vector<32x32xbf16>, vector<32x16xbf16>, vector<32x16xf32> -> vector<32x16xf32>
    %292 = arith.truncf %291 : vector<32x16xf32> to vector<32x16xbf16>
    %293 = vector.extract_strided_slice %273 {offsets = [0, 0], sizes = [16, 64], strides = [1, 1]} : vector<64x64xbf16> to vector<16x64xbf16>
    %cst_126 = arith.constant dense<0.000000e+00> : vector<32x64xf32>
    %294 = tpu.matmul %292, %293, %cst_126 {dimension_numbers = #tpu.dot_dimension_numbers<[1], [0], [0], [1], [0, 0, 1, 1], [], []>} : vector<32x16xbf16>, vector<16x64xbf16>, vector<32x64xf32> -> vector<32x64xf32>
    %295 = arith.addf %271, %294 : vector<32x64xf32>
    %296 = vector.extract_strided_slice %262 {offsets = [0, 16], sizes = [32, 16], strides = [1, 1]} : vector<32x192xbf16> to vector<32x16xbf16>
    %297 = vector.extract_strided_slice %262 {offsets = [0, 80], sizes = [32, 16], strides = [1, 1]} : vector<32x192xbf16> to vector<32x16xbf16>
    %298 = vector.extract_strided_slice %262 {offsets = [0, 144], sizes = [32, 16], strides = [1, 1]} : vector<32x192xbf16> to vector<32x16xbf16>
    "tpu.trace_start"() <{level = 10 : i32, message = "qd,kd->qk"}> : () -> ()
    %cst_127 = arith.constant dense<0.000000e+00> : vector<32x32xf32>
    %299 = tpu.matmul %296, %297, %cst_127 {dimension_numbers = #tpu.dot_dimension_numbers<[1], [1], [0], [0], [0, 0, 1, 0], [], []>} : vector<32x16xbf16>, vector<32x16xbf16>, vector<32x32xf32> -> vector<32x32xf32>
    "tpu.trace_stop"() : () -> ()
    %cst_128 = arith.constant 2.500000e-01 : f32
    %300 = vector.broadcast %cst_128 : f32 to vector<32x32xf32>
    %301 = arith.mulf %299, %300 : vector<32x32xf32>
    %302 = arith.addf %301, %0 : vector<32x32xf32>
    %cst_129 = arith.constant dense<0xFF800000> : vector<32xf32>
    %303 = vector.multi_reduction <maximumf>, %302, %cst_129 [1] : vector<32x32xf32> to vector<32xf32>
    %304 = vector.shape_cast %303 : vector<32xf32> to vector<32x1xf32>
    %305 = vector.broadcast %304 : vector<32x1xf32> to vector<32x32xf32>
    %306 = arith.subf %302, %305 : vector<32x32xf32>
    %307 = math.exp %306 : vector<32x32xf32>
    %cst_130 = arith.constant dense<0.000000e+00> : vector<32xf32>
    %308 = vector.multi_reduction <add>, %307, %cst_130 [1] : vector<32x32xf32> to vector<32xf32>
    %309 = vector.shape_cast %308 : vector<32xf32> to vector<32x1xf32>
    %310 = vector.broadcast %309 : vector<32x1xf32> to vector<32x32xf32>
    %311 = arith.divf %307, %310 : vector<32x32xf32>
    %312 = arith.truncf %311 : vector<32x32xf32> to vector<32x32xbf16>
    %cst_131 = arith.constant dense<0.000000e+00> : vector<32x16xf32>
    %313 = tpu.matmul %312, %298, %cst_131 {dimension_numbers = #tpu.dot_dimension_numbers<[1], [0], [0], [1], [0, 0, 1, 1], [], []>} : vector<32x32xbf16>, vector<32x16xbf16>, vector<32x16xf32> -> vector<32x16xf32>
    %314 = arith.truncf %313 : vector<32x16xf32> to vector<32x16xbf16>
    %315 = vector.extract_strided_slice %273 {offsets = [16, 0], sizes = [16, 64], strides = [1, 1]} : vector<64x64xbf16> to vector<16x64xbf16>
    %cst_132 = arith.constant dense<0.000000e+00> : vector<32x64xf32>
    %316 = tpu.matmul %314, %315, %cst_132 {dimension_numbers = #tpu.dot_dimension_numbers<[1], [0], [0], [1], [0, 0, 1, 1], [], []>} : vector<32x16xbf16>, vector<16x64xbf16>, vector<32x64xf32> -> vector<32x64xf32>
    %317 = arith.addf %295, %316 : vector<32x64xf32>
    %318 = vector.extract_strided_slice %262 {offsets = [0, 32], sizes = [32, 16], strides = [1, 1]} : vector<32x192xbf16> to vector<32x16xbf16>
    %319 = vector.extract_strided_slice %262 {offsets = [0, 96], sizes = [32, 16], strides = [1, 1]} : vector<32x192xbf16> to vector<32x16xbf16>
    %320 = vector.extract_strided_slice %262 {offsets = [0, 160], sizes = [32, 16], strides = [1, 1]} : vector<32x192xbf16> to vector<32x16xbf16>
    "tpu.trace_start"() <{level = 10 : i32, message = "qd,kd->qk"}> : () -> ()
    %cst_133 = arith.constant dense<0.000000e+00> : vector<32x32xf32>
    %321 = tpu.matmul %318, %319, %cst_133 {dimension_numbers = #tpu.dot_dimension_numbers<[1], [1], [0], [0], [0, 0, 1, 0], [], []>} : vector<32x16xbf16>, vector<32x16xbf16>, vector<32x32xf32> -> vector<32x32xf32>
    "tpu.trace_stop"() : () -> ()
    %cst_134 = arith.constant 2.500000e-01 : f32
    %322 = vector.broadcast %cst_134 : f32 to vector<32x32xf32>
    %323 = arith.mulf %321, %322 : vector<32x32xf32>
    %324 = arith.addf %323, %0 : vector<32x32xf32>
    %cst_135 = arith.constant dense<0xFF800000> : vector<32xf32>
    %325 = vector.multi_reduction <maximumf>, %324, %cst_135 [1] : vector<32x32xf32> to vector<32xf32>
    %326 = vector.shape_cast %325 : vector<32xf32> to vector<32x1xf32>
    %327 = vector.broadcast %326 : vector<32x1xf32> to vector<32x32xf32>
    %328 = arith.subf %324, %327 : vector<32x32xf32>
    %329 = math.exp %328 : vector<32x32xf32>
    %cst_136 = arith.constant dense<0.000000e+00> : vector<32xf32>
    %330 = vector.multi_reduction <add>, %329, %cst_136 [1] : vector<32x32xf32> to vector<32xf32>
    %331 = vector.shape_cast %330 : vector<32xf32> to vector<32x1xf32>
    %332 = vector.broadcast %331 : vector<32x1xf32> to vector<32x32xf32>
    %333 = arith.divf %329, %332 : vector<32x32xf32>
    %334 = arith.truncf %333 : vector<32x32xf32> to vector<32x32xbf16>
    %cst_137 = arith.constant dense<0.000000e+00> : vector<32x16xf32>
    %335 = tpu.matmul %334, %320, %cst_137 {dimension_numbers = #tpu.dot_dimension_numbers<[1], [0], [0], [1], [0, 0, 1, 1], [], []>} : vector<32x32xbf16>, vector<32x16xbf16>, vector<32x16xf32> -> vector<32x16xf32>
    %336 = arith.truncf %335 : vector<32x16xf32> to vector<32x16xbf16>
    %337 = vector.extract_strided_slice %273 {offsets = [32, 0], sizes = [16, 64], strides = [1, 1]} : vector<64x64xbf16> to vector<16x64xbf16>
    %cst_138 = arith.constant dense<0.000000e+00> : vector<32x64xf32>
    %338 = tpu.matmul %336, %337, %cst_138 {dimension_numbers = #tpu.dot_dimension_numbers<[1], [0], [0], [1], [0, 0, 1, 1], [], []>} : vector<32x16xbf16>, vector<16x64xbf16>, vector<32x64xf32> -> vector<32x64xf32>
    %339 = arith.addf %317, %338 : vector<32x64xf32>
    %340 = vector.extract_strided_slice %262 {offsets = [0, 48], sizes = [32, 16], strides = [1, 1]} : vector<32x192xbf16> to vector<32x16xbf16>
    %341 = vector.extract_strided_slice %262 {offsets = [0, 112], sizes = [32, 16], strides = [1, 1]} : vector<32x192xbf16> to vector<32x16xbf16>
    %342 = vector.extract_strided_slice %262 {offsets = [0, 176], sizes = [32, 16], strides = [1, 1]} : vector<32x192xbf16> to vector<32x16xbf16>
    "tpu.trace_start"() <{level = 10 : i32, message = "qd,kd->qk"}> : () -> ()
    %cst_139 = arith.constant dense<0.000000e+00> : vector<32x32xf32>
    %343 = tpu.matmul %340, %341, %cst_139 {dimension_numbers = #tpu.dot_dimension_numbers<[1], [1], [0], [0], [0, 0, 1, 0], [], []>} : vector<32x16xbf16>, vector<32x16xbf16>, vector<32x32xf32> -> vector<32x32xf32>
    "tpu.trace_stop"() : () -> ()
    %cst_140 = arith.constant 2.500000e-01 : f32
    %344 = vector.broadcast %cst_140 : f32 to vector<32x32xf32>
    %345 = arith.mulf %343, %344 : vector<32x32xf32>
    %346 = arith.addf %345, %0 : vector<32x32xf32>
    %cst_141 = arith.constant dense<0xFF800000> : vector<32xf32>
    %347 = vector.multi_reduction <maximumf>, %346, %cst_141 [1] : vector<32x32xf32> to vector<32xf32>
    %348 = vector.shape_cast %347 : vector<32xf32> to vector<32x1xf32>
    %349 = vector.broadcast %348 : vector<32x1xf32> to vector<32x32xf32>
    %350 = arith.subf %346, %349 : vector<32x32xf32>
    %351 = math.exp %350 : vector<32x32xf32>
    %cst_142 = arith.constant dense<0.000000e+00> : vector<32xf32>
    %352 = vector.multi_reduction <add>, %351, %cst_142 [1] : vector<32x32xf32> to vector<32xf32>
    %353 = vector.shape_cast %352 : vector<32xf32> to vector<32x1xf32>
    %354 = vector.broadcast %353 : vector<32x1xf32> to vector<32x32xf32>
    %355 = arith.divf %351, %354 : vector<32x32xf32>
    %356 = arith.truncf %355 : vector<32x32xf32> to vector<32x32xbf16>
    %cst_143 = arith.constant dense<0.000000e+00> : vector<32x16xf32>
    %357 = tpu.matmul %356, %342, %cst_143 {dimension_numbers = #tpu.dot_dimension_numbers<[1], [0], [0], [1], [0, 0, 1, 1], [], []>} : vector<32x32xbf16>, vector<32x16xbf16>, vector<32x16xf32> -> vector<32x16xf32>
    %358 = arith.truncf %357 : vector<32x16xf32> to vector<32x16xbf16>
    %359 = vector.extract_strided_slice %273 {offsets = [48, 0], sizes = [16, 64], strides = [1, 1]} : vector<64x64xbf16> to vector<16x64xbf16>
    %cst_144 = arith.constant dense<0.000000e+00> : vector<32x64xf32>
    %360 = tpu.matmul %358, %359, %cst_144 {dimension_numbers = #tpu.dot_dimension_numbers<[1], [0], [0], [1], [0, 0, 1, 1], [], []>} : vector<32x16xbf16>, vector<16x64xbf16>, vector<32x64xf32> -> vector<32x64xf32>
    %361 = arith.addf %339, %360 : vector<32x64xf32>
    %c1_145 = arith.constant 1 : index
    %c0_146 = arith.constant 0 : index
    %c0_147 = arith.constant 0 : index
    %362 = vector.load %arg14[%c1_145, %c0_146, %c0_147] : memref<3x64x64xbf16, #tpu.memory_space<vmem>>, vector<1x64x64xbf16>
    %363 = vector.shape_cast %362 : vector<1x64x64xbf16> to vector<64x64xbf16>
    %364 = vector.extract_strided_slice %270 {offsets = [0, 0], sizes = [32, 16], strides = [1, 1]} : vector<32x192xbf16> to vector<32x16xbf16>
    %365 = vector.extract_strided_slice %270 {offsets = [0, 64], sizes = [32, 16], strides = [1, 1]} : vector<32x192xbf16> to vector<32x16xbf16>
    %366 = vector.extract_strided_slice %270 {offsets = [0, 128], sizes = [32, 16], strides = [1, 1]} : vector<32x192xbf16> to vector<32x16xbf16>
    "tpu.trace_start"() <{level = 10 : i32, message = "qd,kd->qk"}> : () -> ()
    %cst_148 = arith.constant dense<0.000000e+00> : vector<32x32xf32>
    %367 = tpu.matmul %364, %365, %cst_148 {dimension_numbers = #tpu.dot_dimension_numbers<[1], [1], [0], [0], [0, 0, 1, 0], [], []>} : vector<32x16xbf16>, vector<32x16xbf16>, vector<32x32xf32> -> vector<32x32xf32>
    "tpu.trace_stop"() : () -> ()
    %cst_149 = arith.constant 2.500000e-01 : f32
    %368 = vector.broadcast %cst_149 : f32 to vector<32x32xf32>
    %369 = arith.mulf %367, %368 : vector<32x32xf32>
    %370 = arith.addf %369, %1 : vector<32x32xf32>
    %cst_150 = arith.constant dense<0xFF800000> : vector<32xf32>
    %371 = vector.multi_reduction <maximumf>, %370, %cst_150 [1] : vector<32x32xf32> to vector<32xf32>
    %372 = vector.shape_cast %371 : vector<32xf32> to vector<32x1xf32>
    %373 = vector.broadcast %372 : vector<32x1xf32> to vector<32x32xf32>
    %374 = arith.subf %370, %373 : vector<32x32xf32>
    %375 = math.exp %374 : vector<32x32xf32>
    %cst_151 = arith.constant dense<0.000000e+00> : vector<32xf32>
    %376 = vector.multi_reduction <add>, %375, %cst_151 [1] : vector<32x32xf32> to vector<32xf32>
    %377 = vector.shape_cast %376 : vector<32xf32> to vector<32x1xf32>
    %378 = vector.broadcast %377 : vector<32x1xf32> to vector<32x32xf32>
    %379 = arith.divf %375, %378 : vector<32x32xf32>
    %380 = arith.truncf %379 : vector<32x32xf32> to vector<32x32xbf16>
    %cst_152 = arith.constant dense<0.000000e+00> : vector<32x16xf32>
    %381 = tpu.matmul %380, %366, %cst_152 {dimension_numbers = #tpu.dot_dimension_numbers<[1], [0], [0], [1], [0, 0, 1, 1], [], []>} : vector<32x32xbf16>, vector<32x16xbf16>, vector<32x16xf32> -> vector<32x16xf32>
    %382 = arith.truncf %381 : vector<32x16xf32> to vector<32x16xbf16>
    %383 = vector.extract_strided_slice %363 {offsets = [0, 0], sizes = [16, 64], strides = [1, 1]} : vector<64x64xbf16> to vector<16x64xbf16>
    %cst_153 = arith.constant dense<0.000000e+00> : vector<32x64xf32>
    %384 = tpu.matmul %382, %383, %cst_153 {dimension_numbers = #tpu.dot_dimension_numbers<[1], [0], [0], [1], [0, 0, 1, 1], [], []>} : vector<32x16xbf16>, vector<16x64xbf16>, vector<32x64xf32> -> vector<32x64xf32>
    %385 = arith.addf %361, %384 : vector<32x64xf32>
    %386 = vector.extract_strided_slice %270 {offsets = [0, 16], sizes = [32, 16], strides = [1, 1]} : vector<32x192xbf16> to vector<32x16xbf16>
    %387 = vector.extract_strided_slice %270 {offsets = [0, 80], sizes = [32, 16], strides = [1, 1]} : vector<32x192xbf16> to vector<32x16xbf16>
    %388 = vector.extract_strided_slice %270 {offsets = [0, 144], sizes = [32, 16], strides = [1, 1]} : vector<32x192xbf16> to vector<32x16xbf16>
    "tpu.trace_start"() <{level = 10 : i32, message = "qd,kd->qk"}> : () -> ()
    %cst_154 = arith.constant dense<0.000000e+00> : vector<32x32xf32>
    %389 = tpu.matmul %386, %387, %cst_154 {dimension_numbers = #tpu.dot_dimension_numbers<[1], [1], [0], [0], [0, 0, 1, 0], [], []>} : vector<32x16xbf16>, vector<32x16xbf16>, vector<32x32xf32> -> vector<32x32xf32>
    "tpu.trace_stop"() : () -> ()
    %cst_155 = arith.constant 2.500000e-01 : f32
    %390 = vector.broadcast %cst_155 : f32 to vector<32x32xf32>
    %391 = arith.mulf %389, %390 : vector<32x32xf32>
    %392 = arith.addf %391, %1 : vector<32x32xf32>
    %cst_156 = arith.constant dense<0xFF800000> : vector<32xf32>
    %393 = vector.multi_reduction <maximumf>, %392, %cst_156 [1] : vector<32x32xf32> to vector<32xf32>
    %394 = vector.shape_cast %393 : vector<32xf32> to vector<32x1xf32>
    %395 = vector.broadcast %394 : vector<32x1xf32> to vector<32x32xf32>
    %396 = arith.subf %392, %395 : vector<32x32xf32>
    %397 = math.exp %396 : vector<32x32xf32>
    %cst_157 = arith.constant dense<0.000000e+00> : vector<32xf32>
    %398 = vector.multi_reduction <add>, %397, %cst_157 [1] : vector<32x32xf32> to vector<32xf32>
    %399 = vector.shape_cast %398 : vector<32xf32> to vector<32x1xf32>
    %400 = vector.broadcast %399 : vector<32x1xf32> to vector<32x32xf32>
    %401 = arith.divf %397, %400 : vector<32x32xf32>
    %402 = arith.truncf %401 : vector<32x32xf32> to vector<32x32xbf16>
    %cst_158 = arith.constant dense<0.000000e+00> : vector<32x16xf32>
    %403 = tpu.matmul %402, %388, %cst_158 {dimension_numbers = #tpu.dot_dimension_numbers<[1], [0], [0], [1], [0, 0, 1, 1], [], []>} : vector<32x32xbf16>, vector<32x16xbf16>, vector<32x16xf32> -> vector<32x16xf32>
    %404 = arith.truncf %403 : vector<32x16xf32> to vector<32x16xbf16>
    %405 = vector.extract_strided_slice %363 {offsets = [16, 0], sizes = [16, 64], strides = [1, 1]} : vector<64x64xbf16> to vector<16x64xbf16>
    %cst_159 = arith.constant dense<0.000000e+00> : vector<32x64xf32>
    %406 = tpu.matmul %404, %405, %cst_159 {dimension_numbers = #tpu.dot_dimension_numbers<[1], [0], [0], [1], [0, 0, 1, 1], [], []>} : vector<32x16xbf16>, vector<16x64xbf16>, vector<32x64xf32> -> vector<32x64xf32>
    %407 = arith.addf %385, %406 : vector<32x64xf32>
    %408 = vector.extract_strided_slice %270 {offsets = [0, 32], sizes = [32, 16], strides = [1, 1]} : vector<32x192xbf16> to vector<32x16xbf16>
    %409 = vector.extract_strided_slice %270 {offsets = [0, 96], sizes = [32, 16], strides = [1, 1]} : vector<32x192xbf16> to vector<32x16xbf16>
    %410 = vector.extract_strided_slice %270 {offsets = [0, 160], sizes = [32, 16], strides = [1, 1]} : vector<32x192xbf16> to vector<32x16xbf16>
    "tpu.trace_start"() <{level = 10 : i32, message = "qd,kd->qk"}> : () -> ()
    %cst_160 = arith.constant dense<0.000000e+00> : vector<32x32xf32>
    %411 = tpu.matmul %408, %409, %cst_160 {dimension_numbers = #tpu.dot_dimension_numbers<[1], [1], [0], [0], [0, 0, 1, 0], [], []>} : vector<32x16xbf16>, vector<32x16xbf16>, vector<32x32xf32> -> vector<32x32xf32>
    "tpu.trace_stop"() : () -> ()
    %cst_161 = arith.constant 2.500000e-01 : f32
    %412 = vector.broadcast %cst_161 : f32 to vector<32x32xf32>
    %413 = arith.mulf %411, %412 : vector<32x32xf32>
    %414 = arith.addf %413, %1 : vector<32x32xf32>
    %cst_162 = arith.constant dense<0xFF800000> : vector<32xf32>
    %415 = vector.multi_reduction <maximumf>, %414, %cst_162 [1] : vector<32x32xf32> to vector<32xf32>
    %416 = vector.shape_cast %415 : vector<32xf32> to vector<32x1xf32>
    %417 = vector.broadcast %416 : vector<32x1xf32> to vector<32x32xf32>
    %418 = arith.subf %414, %417 : vector<32x32xf32>
    %419 = math.exp %418 : vector<32x32xf32>
    %cst_163 = arith.constant dense<0.000000e+00> : vector<32xf32>
    %420 = vector.multi_reduction <add>, %419, %cst_163 [1] : vector<32x32xf32> to vector<32xf32>
    %421 = vector.shape_cast %420 : vector<32xf32> to vector<32x1xf32>
    %422 = vector.broadcast %421 : vector<32x1xf32> to vector<32x32xf32>
    %423 = arith.divf %419, %422 : vector<32x32xf32>
    %424 = arith.truncf %423 : vector<32x32xf32> to vector<32x32xbf16>
    %cst_164 = arith.constant dense<0.000000e+00> : vector<32x16xf32>
    %425 = tpu.matmul %424, %410, %cst_164 {dimension_numbers = #tpu.dot_dimension_numbers<[1], [0], [0], [1], [0, 0, 1, 1], [], []>} : vector<32x32xbf16>, vector<32x16xbf16>, vector<32x16xf32> -> vector<32x16xf32>
    %426 = arith.truncf %425 : vector<32x16xf32> to vector<32x16xbf16>
    %427 = vector.extract_strided_slice %363 {offsets = [32, 0], sizes = [16, 64], strides = [1, 1]} : vector<64x64xbf16> to vector<16x64xbf16>
    %cst_165 = arith.constant dense<0.000000e+00> : vector<32x64xf32>
    %428 = tpu.matmul %426, %427, %cst_165 {dimension_numbers = #tpu.dot_dimension_numbers<[1], [0], [0], [1], [0, 0, 1, 1], [], []>} : vector<32x16xbf16>, vector<16x64xbf16>, vector<32x64xf32> -> vector<32x64xf32>
    %429 = arith.addf %407, %428 : vector<32x64xf32>
    %430 = vector.extract_strided_slice %270 {offsets = [0, 48], sizes = [32, 16], strides = [1, 1]} : vector<32x192xbf16> to vector<32x16xbf16>
    %431 = vector.extract_strided_slice %270 {offsets = [0, 112], sizes = [32, 16], strides = [1, 1]} : vector<32x192xbf16> to vector<32x16xbf16>
    %432 = vector.extract_strided_slice %270 {offsets = [0, 176], sizes = [32, 16], strides = [1, 1]} : vector<32x192xbf16> to vector<32x16xbf16>
    "tpu.trace_start"() <{level = 10 : i32, message = "qd,kd->qk"}> : () -> ()
    %cst_166 = arith.constant dense<0.000000e+00> : vector<32x32xf32>
    %433 = tpu.matmul %430, %431, %cst_166 {dimension_numbers = #tpu.dot_dimension_numbers<[1], [1], [0], [0], [0, 0, 1, 0], [], []>} : vector<32x16xbf16>, vector<32x16xbf16>, vector<32x32xf32> -> vector<32x32xf32>
    "tpu.trace_stop"() : () -> ()
    %cst_167 = arith.constant 2.500000e-01 : f32
    %434 = vector.broadcast %cst_167 : f32 to vector<32x32xf32>
    %435 = arith.mulf %433, %434 : vector<32x32xf32>
    %436 = arith.addf %435, %1 : vector<32x32xf32>
    %cst_168 = arith.constant dense<0xFF800000> : vector<32xf32>
    %437 = vector.multi_reduction <maximumf>, %436, %cst_168 [1] : vector<32x32xf32> to vector<32xf32>
    %438 = vector.shape_cast %437 : vector<32xf32> to vector<32x1xf32>
    %439 = vector.broadcast %438 : vector<32x1xf32> to vector<32x32xf32>
    %440 = arith.subf %436, %439 : vector<32x32xf32>
    %441 = math.exp %440 : vector<32x32xf32>
    %cst_169 = arith.constant dense<0.000000e+00> : vector<32xf32>
    %442 = vector.multi_reduction <add>, %441, %cst_169 [1] : vector<32x32xf32> to vector<32xf32>
    %443 = vector.shape_cast %442 : vector<32xf32> to vector<32x1xf32>
    %444 = vector.broadcast %443 : vector<32x1xf32> to vector<32x32xf32>
    %445 = arith.divf %441, %444 : vector<32x32xf32>
    %446 = arith.truncf %445 : vector<32x32xf32> to vector<32x32xbf16>
    %cst_170 = arith.constant dense<0.000000e+00> : vector<32x16xf32>
    %447 = tpu.matmul %446, %432, %cst_170 {dimension_numbers = #tpu.dot_dimension_numbers<[1], [0], [0], [1], [0, 0, 1, 1], [], []>} : vector<32x32xbf16>, vector<32x16xbf16>, vector<32x16xf32> -> vector<32x16xf32>
    %448 = arith.truncf %447 : vector<32x16xf32> to vector<32x16xbf16>
    %449 = vector.extract_strided_slice %363 {offsets = [48, 0], sizes = [16, 64], strides = [1, 1]} : vector<64x64xbf16> to vector<16x64xbf16>
    %cst_171 = arith.constant dense<0.000000e+00> : vector<32x64xf32>
    %450 = tpu.matmul %448, %449, %cst_171 {dimension_numbers = #tpu.dot_dimension_numbers<[1], [0], [0], [1], [0, 0, 1, 1], [], []>} : vector<32x16xbf16>, vector<16x64xbf16>, vector<32x64xf32> -> vector<32x64xf32>
    %451 = arith.addf %429, %450 : vector<32x64xf32>
    %c1_172 = arith.constant 1 : index
    %c0_173 = arith.constant 0 : index
    %c0_174 = arith.constant 0 : index
    %452 = vector.load %arg15[%c1_172, %c0_173, %c0_174] : memref<3x1x64xf32, #tpu.memory_space<vmem>>, vector<1x1x64xf32>
    %453 = vector.shape_cast %452 : vector<1x1x64xf32> to vector<1x64xf32>
    %454 = vector.broadcast %453 : vector<1x64xf32> to vector<32x64xf32>
    %455 = arith.addf %451, %454 : vector<32x64xf32>
    %cst_175 = arith.constant 5.000000e-01 : f32
    %456 = vector.broadcast %cst_175 : f32 to vector<32x64xf32>
    %457 = arith.mulf %456, %455 : vector<32x64xf32>
    %cst_176 = arith.constant 0.707106769 : f32
    %458 = vector.broadcast %cst_176 : f32 to vector<32x64xf32>
    %459 = arith.mulf %455, %458 : vector<32x64xf32>
    %460 = math.erf %459 : vector<32x64xf32>
    %cst_177 = arith.constant 1.000000e+00 : f32
    %461 = vector.broadcast %cst_177 : f32 to vector<32x64xf32>
    %462 = arith.addf %461, %460 : vector<32x64xf32>
    %463 = arith.mulf %457, %462 : vector<32x64xf32>
    %464 = vector.extract_strided_slice %463 {offsets = [0, 0], sizes = [32, 32], strides = [1, 1]} : vector<32x64xf32> to vector<32x32xf32>
    %465 = arith.addf %238, %464 : vector<32x32xf32>
    %cst_178 = arith.constant 0.707106769 : f32
    %466 = vector.broadcast %cst_178 : f32 to vector<32x32xf32>
    %467 = arith.mulf %465, %466 : vector<32x32xf32>
    %468 = vector.extract_strided_slice %463 {offsets = [0, 32], sizes = [32, 32], strides = [1, 1]} : vector<32x64xf32> to vector<32x32xf32>
    %469 = arith.addf %240, %468 : vector<32x32xf32>
    %470 = vector.extract_strided_slice %8 {offsets = [0, 64], sizes = [1, 32], strides = [1, 1]} : vector<1x96xf32> to vector<1x32xf32>
    %471 = vector.broadcast %470 : vector<1x32xf32> to vector<32x32xf32>
    %472 = arith.addf %467, %471 : vector<32x32xf32>
    %473 = arith.truncf %472 : vector<32x32xf32> to vector<32x32xbf16>
    %c2 = arith.constant 2 : index
    %c0_179 = arith.constant 0 : index
    %c0_180 = arith.constant 0 : index
    %474 = vector.load %arg7[%c2, %c0_179, %c0_180] : memref<3x32x128xbf16, #tpu.memory_space<vmem>>, vector<1x32x128xbf16>
    %475 = vector.shape_cast %474 : vector<1x32x128xbf16> to vector<32x128xbf16>
    %cst_181 = arith.constant dense<0.000000e+00> : vector<32x128xf32>
    %476 = tpu.matmul %473, %475, %cst_181 {dimension_numbers = #tpu.dot_dimension_numbers<[1], [0], [0], [1], [0, 0, 1, 1], [], []>} : vector<32x32xbf16>, vector<32x128xbf16>, vector<32x128xf32> -> vector<32x128xf32>
    %c2_182 = arith.constant 2 : index
    %c0_183 = arith.constant 0 : index
    %c0_184 = arith.constant 0 : index
    %477 = vector.load %arg8[%c2_182, %c0_183, %c0_184] : memref<3x1x128xf32, #tpu.memory_space<vmem>>, vector<1x1x128xf32>
    %478 = vector.shape_cast %477 : vector<1x1x128xf32> to vector<1x128xf32>
    %479 = vector.broadcast %478 : vector<1x128xf32> to vector<32x128xf32>
    %480 = arith.addf %476, %479 : vector<32x128xf32>
    %481 = arith.truncf %480 : vector<32x128xf32> to vector<32x128xbf16>
    %482 = vector.extract_strided_slice %481 {offsets = [0, 0], sizes = [32, 64], strides = [1, 1]} : vector<32x128xbf16> to vector<32x64xbf16>
    %483 = vector.extract_strided_slice %481 {offsets = [0, 64], sizes = [32, 64], strides = [1, 1]} : vector<32x128xbf16> to vector<32x64xbf16>
    %c2_185 = arith.constant 2 : index
    %c0_186 = arith.constant 0 : index
    %c0_187 = arith.constant 0 : index
    %484 = vector.load %arg9[%c2_185, %c0_186, %c0_187] : memref<3x64x192xbf16, #tpu.memory_space<vmem>>, vector<1x64x192xbf16>
    %485 = vector.shape_cast %484 : vector<1x64x192xbf16> to vector<64x192xbf16>
    %cst_188 = arith.constant dense<0.000000e+00> : vector<32x192xf32>
    %486 = tpu.matmul %482, %485, %cst_188 {dimension_numbers = #tpu.dot_dimension_numbers<[1], [0], [0], [1], [0, 0, 1, 1], [], []>} : vector<32x64xbf16>, vector<64x192xbf16>, vector<32x192xf32> -> vector<32x192xf32>
    %c2_189 = arith.constant 2 : index
    %c0_190 = arith.constant 0 : index
    %c0_191 = arith.constant 0 : index
    %487 = vector.load %arg10[%c2_189, %c0_190, %c0_191] : memref<3x1x192xf32, #tpu.memory_space<vmem>>, vector<1x1x192xf32>
    %488 = vector.shape_cast %487 : vector<1x1x192xf32> to vector<1x192xf32>
    %489 = vector.broadcast %488 : vector<1x192xf32> to vector<32x192xf32>
    %490 = arith.addf %486, %489 : vector<32x192xf32>
    %491 = arith.truncf %490 : vector<32x192xf32> to vector<32x192xbf16>
    %c2_192 = arith.constant 2 : index
    %c0_193 = arith.constant 0 : index
    %c0_194 = arith.constant 0 : index
    %492 = vector.load %arg11[%c2_192, %c0_193, %c0_194] : memref<3x64x192xbf16, #tpu.memory_space<vmem>>, vector<1x64x192xbf16>
    %493 = vector.shape_cast %492 : vector<1x64x192xbf16> to vector<64x192xbf16>
    %cst_195 = arith.constant dense<0.000000e+00> : vector<32x192xf32>
    %494 = tpu.matmul %483, %493, %cst_195 {dimension_numbers = #tpu.dot_dimension_numbers<[1], [0], [0], [1], [0, 0, 1, 1], [], []>} : vector<32x64xbf16>, vector<64x192xbf16>, vector<32x192xf32> -> vector<32x192xf32>
    %c2_196 = arith.constant 2 : index
    %c0_197 = arith.constant 0 : index
    %c0_198 = arith.constant 0 : index
    %495 = vector.load %arg12[%c2_196, %c0_197, %c0_198] : memref<3x1x192xf32, #tpu.memory_space<vmem>>, vector<1x1x192xf32>
    %496 = vector.shape_cast %495 : vector<1x1x192xf32> to vector<1x192xf32>
    %497 = vector.broadcast %496 : vector<1x192xf32> to vector<32x192xf32>
    %498 = arith.addf %494, %497 : vector<32x192xf32>
    %499 = arith.truncf %498 : vector<32x192xf32> to vector<32x192xbf16>
    %cst_199 = arith.constant 0.000000e+00 : f32
    %500 = vector.broadcast %cst_199 : f32 to vector<32x64xf32>
    %c2_200 = arith.constant 2 : index
    %c0_201 = arith.constant 0 : index
    %c0_202 = arith.constant 0 : index
    %501 = vector.load %arg13[%c2_200, %c0_201, %c0_202] : memref<3x64x64xbf16, #tpu.memory_space<vmem>>, vector<1x64x64xbf16>
    %502 = vector.shape_cast %501 : vector<1x64x64xbf16> to vector<64x64xbf16>
    %503 = vector.extract_strided_slice %491 {offsets = [0, 0], sizes = [32, 16], strides = [1, 1]} : vector<32x192xbf16> to vector<32x16xbf16>
    %504 = vector.extract_strided_slice %491 {offsets = [0, 64], sizes = [32, 16], strides = [1, 1]} : vector<32x192xbf16> to vector<32x16xbf16>
    %505 = vector.extract_strided_slice %491 {offsets = [0, 128], sizes = [32, 16], strides = [1, 1]} : vector<32x192xbf16> to vector<32x16xbf16>
    "tpu.trace_start"() <{level = 10 : i32, message = "qd,kd->qk"}> : () -> ()
    %cst_203 = arith.constant dense<0.000000e+00> : vector<32x32xf32>
    %506 = tpu.matmul %503, %504, %cst_203 {dimension_numbers = #tpu.dot_dimension_numbers<[1], [1], [0], [0], [0, 0, 1, 0], [], []>} : vector<32x16xbf16>, vector<32x16xbf16>, vector<32x32xf32> -> vector<32x32xf32>
    "tpu.trace_stop"() : () -> ()
    %cst_204 = arith.constant 2.500000e-01 : f32
    %507 = vector.broadcast %cst_204 : f32 to vector<32x32xf32>
    %508 = arith.mulf %506, %507 : vector<32x32xf32>
    %509 = arith.addf %508, %0 : vector<32x32xf32>
    %cst_205 = arith.constant dense<0xFF800000> : vector<32xf32>
    %510 = vector.multi_reduction <maximumf>, %509, %cst_205 [1] : vector<32x32xf32> to vector<32xf32>
    %511 = vector.shape_cast %510 : vector<32xf32> to vector<32x1xf32>
    %512 = vector.broadcast %511 : vector<32x1xf32> to vector<32x32xf32>
    %513 = arith.subf %509, %512 : vector<32x32xf32>
    %514 = math.exp %513 : vector<32x32xf32>
    %cst_206 = arith.constant dense<0.000000e+00> : vector<32xf32>
    %515 = vector.multi_reduction <add>, %514, %cst_206 [1] : vector<32x32xf32> to vector<32xf32>
    %516 = vector.shape_cast %515 : vector<32xf32> to vector<32x1xf32>
    %517 = vector.broadcast %516 : vector<32x1xf32> to vector<32x32xf32>
    %518 = arith.divf %514, %517 : vector<32x32xf32>
    %519 = arith.truncf %518 : vector<32x32xf32> to vector<32x32xbf16>
    %cst_207 = arith.constant dense<0.000000e+00> : vector<32x16xf32>
    %520 = tpu.matmul %519, %505, %cst_207 {dimension_numbers = #tpu.dot_dimension_numbers<[1], [0], [0], [1], [0, 0, 1, 1], [], []>} : vector<32x32xbf16>, vector<32x16xbf16>, vector<32x16xf32> -> vector<32x16xf32>
    %521 = arith.truncf %520 : vector<32x16xf32> to vector<32x16xbf16>
    %522 = vector.extract_strided_slice %502 {offsets = [0, 0], sizes = [16, 64], strides = [1, 1]} : vector<64x64xbf16> to vector<16x64xbf16>
    %cst_208 = arith.constant dense<0.000000e+00> : vector<32x64xf32>
    %523 = tpu.matmul %521, %522, %cst_208 {dimension_numbers = #tpu.dot_dimension_numbers<[1], [0], [0], [1], [0, 0, 1, 1], [], []>} : vector<32x16xbf16>, vector<16x64xbf16>, vector<32x64xf32> -> vector<32x64xf32>
    %524 = arith.addf %500, %523 : vector<32x64xf32>
    %525 = vector.extract_strided_slice %491 {offsets = [0, 16], sizes = [32, 16], strides = [1, 1]} : vector<32x192xbf16> to vector<32x16xbf16>
    %526 = vector.extract_strided_slice %491 {offsets = [0, 80], sizes = [32, 16], strides = [1, 1]} : vector<32x192xbf16> to vector<32x16xbf16>
    %527 = vector.extract_strided_slice %491 {offsets = [0, 144], sizes = [32, 16], strides = [1, 1]} : vector<32x192xbf16> to vector<32x16xbf16>
    "tpu.trace_start"() <{level = 10 : i32, message = "qd,kd->qk"}> : () -> ()
    %cst_209 = arith.constant dense<0.000000e+00> : vector<32x32xf32>
    %528 = tpu.matmul %525, %526, %cst_209 {dimension_numbers = #tpu.dot_dimension_numbers<[1], [1], [0], [0], [0, 0, 1, 0], [], []>} : vector<32x16xbf16>, vector<32x16xbf16>, vector<32x32xf32> -> vector<32x32xf32>
    "tpu.trace_stop"() : () -> ()
    %cst_210 = arith.constant 2.500000e-01 : f32
    %529 = vector.broadcast %cst_210 : f32 to vector<32x32xf32>
    %530 = arith.mulf %528, %529 : vector<32x32xf32>
    %531 = arith.addf %530, %0 : vector<32x32xf32>
    %cst_211 = arith.constant dense<0xFF800000> : vector<32xf32>
    %532 = vector.multi_reduction <maximumf>, %531, %cst_211 [1] : vector<32x32xf32> to vector<32xf32>
    %533 = vector.shape_cast %532 : vector<32xf32> to vector<32x1xf32>
    %534 = vector.broadcast %533 : vector<32x1xf32> to vector<32x32xf32>
    %535 = arith.subf %531, %534 : vector<32x32xf32>
    %536 = math.exp %535 : vector<32x32xf32>
    %cst_212 = arith.constant dense<0.000000e+00> : vector<32xf32>
    %537 = vector.multi_reduction <add>, %536, %cst_212 [1] : vector<32x32xf32> to vector<32xf32>
    %538 = vector.shape_cast %537 : vector<32xf32> to vector<32x1xf32>
    %539 = vector.broadcast %538 : vector<32x1xf32> to vector<32x32xf32>
    %540 = arith.divf %536, %539 : vector<32x32xf32>
    %541 = arith.truncf %540 : vector<32x32xf32> to vector<32x32xbf16>
    %cst_213 = arith.constant dense<0.000000e+00> : vector<32x16xf32>
    %542 = tpu.matmul %541, %527, %cst_213 {dimension_numbers = #tpu.dot_dimension_numbers<[1], [0], [0], [1], [0, 0, 1, 1], [], []>} : vector<32x32xbf16>, vector<32x16xbf16>, vector<32x16xf32> -> vector<32x16xf32>
    %543 = arith.truncf %542 : vector<32x16xf32> to vector<32x16xbf16>
    %544 = vector.extract_strided_slice %502 {offsets = [16, 0], sizes = [16, 64], strides = [1, 1]} : vector<64x64xbf16> to vector<16x64xbf16>
    %cst_214 = arith.constant dense<0.000000e+00> : vector<32x64xf32>
    %545 = tpu.matmul %543, %544, %cst_214 {dimension_numbers = #tpu.dot_dimension_numbers<[1], [0], [0], [1], [0, 0, 1, 1], [], []>} : vector<32x16xbf16>, vector<16x64xbf16>, vector<32x64xf32> -> vector<32x64xf32>
    %546 = arith.addf %524, %545 : vector<32x64xf32>
    %547 = vector.extract_strided_slice %491 {offsets = [0, 32], sizes = [32, 16], strides = [1, 1]} : vector<32x192xbf16> to vector<32x16xbf16>
    %548 = vector.extract_strided_slice %491 {offsets = [0, 96], sizes = [32, 16], strides = [1, 1]} : vector<32x192xbf16> to vector<32x16xbf16>
    %549 = vector.extract_strided_slice %491 {offsets = [0, 160], sizes = [32, 16], strides = [1, 1]} : vector<32x192xbf16> to vector<32x16xbf16>
    "tpu.trace_start"() <{level = 10 : i32, message = "qd,kd->qk"}> : () -> ()
    %cst_215 = arith.constant dense<0.000000e+00> : vector<32x32xf32>
    %550 = tpu.matmul %547, %548, %cst_215 {dimension_numbers = #tpu.dot_dimension_numbers<[1], [1], [0], [0], [0, 0, 1, 0], [], []>} : vector<32x16xbf16>, vector<32x16xbf16>, vector<32x32xf32> -> vector<32x32xf32>
    "tpu.trace_stop"() : () -> ()
    %cst_216 = arith.constant 2.500000e-01 : f32
    %551 = vector.broadcast %cst_216 : f32 to vector<32x32xf32>
    %552 = arith.mulf %550, %551 : vector<32x32xf32>
    %553 = arith.addf %552, %0 : vector<32x32xf32>
    %cst_217 = arith.constant dense<0xFF800000> : vector<32xf32>
    %554 = vector.multi_reduction <maximumf>, %553, %cst_217 [1] : vector<32x32xf32> to vector<32xf32>
    %555 = vector.shape_cast %554 : vector<32xf32> to vector<32x1xf32>
    %556 = vector.broadcast %555 : vector<32x1xf32> to vector<32x32xf32>
    %557 = arith.subf %553, %556 : vector<32x32xf32>
    %558 = math.exp %557 : vector<32x32xf32>
    %cst_218 = arith.constant dense<0.000000e+00> : vector<32xf32>
    %559 = vector.multi_reduction <add>, %558, %cst_218 [1] : vector<32x32xf32> to vector<32xf32>
    %560 = vector.shape_cast %559 : vector<32xf32> to vector<32x1xf32>
    %561 = vector.broadcast %560 : vector<32x1xf32> to vector<32x32xf32>
    %562 = arith.divf %558, %561 : vector<32x32xf32>
    %563 = arith.truncf %562 : vector<32x32xf32> to vector<32x32xbf16>
    %cst_219 = arith.constant dense<0.000000e+00> : vector<32x16xf32>
    %564 = tpu.matmul %563, %549, %cst_219 {dimension_numbers = #tpu.dot_dimension_numbers<[1], [0], [0], [1], [0, 0, 1, 1], [], []>} : vector<32x32xbf16>, vector<32x16xbf16>, vector<32x16xf32> -> vector<32x16xf32>
    %565 = arith.truncf %564 : vector<32x16xf32> to vector<32x16xbf16>
    %566 = vector.extract_strided_slice %502 {offsets = [32, 0], sizes = [16, 64], strides = [1, 1]} : vector<64x64xbf16> to vector<16x64xbf16>
    %cst_220 = arith.constant dense<0.000000e+00> : vector<32x64xf32>
    %567 = tpu.matmul %565, %566, %cst_220 {dimension_numbers = #tpu.dot_dimension_numbers<[1], [0], [0], [1], [0, 0, 1, 1], [], []>} : vector<32x16xbf16>, vector<16x64xbf16>, vector<32x64xf32> -> vector<32x64xf32>
    %568 = arith.addf %546, %567 : vector<32x64xf32>
    %569 = vector.extract_strided_slice %491 {offsets = [0, 48], sizes = [32, 16], strides = [1, 1]} : vector<32x192xbf16> to vector<32x16xbf16>
    %570 = vector.extract_strided_slice %491 {offsets = [0, 112], sizes = [32, 16], strides = [1, 1]} : vector<32x192xbf16> to vector<32x16xbf16>
    %571 = vector.extract_strided_slice %491 {offsets = [0, 176], sizes = [32, 16], strides = [1, 1]} : vector<32x192xbf16> to vector<32x16xbf16>
    "tpu.trace_start"() <{level = 10 : i32, message = "qd,kd->qk"}> : () -> ()
    %cst_221 = arith.constant dense<0.000000e+00> : vector<32x32xf32>
    %572 = tpu.matmul %569, %570, %cst_221 {dimension_numbers = #tpu.dot_dimension_numbers<[1], [1], [0], [0], [0, 0, 1, 0], [], []>} : vector<32x16xbf16>, vector<32x16xbf16>, vector<32x32xf32> -> vector<32x32xf32>
    "tpu.trace_stop"() : () -> ()
    %cst_222 = arith.constant 2.500000e-01 : f32
    %573 = vector.broadcast %cst_222 : f32 to vector<32x32xf32>
    %574 = arith.mulf %572, %573 : vector<32x32xf32>
    %575 = arith.addf %574, %0 : vector<32x32xf32>
    %cst_223 = arith.constant dense<0xFF800000> : vector<32xf32>
    %576 = vector.multi_reduction <maximumf>, %575, %cst_223 [1] : vector<32x32xf32> to vector<32xf32>
    %577 = vector.shape_cast %576 : vector<32xf32> to vector<32x1xf32>
    %578 = vector.broadcast %577 : vector<32x1xf32> to vector<32x32xf32>
    %579 = arith.subf %575, %578 : vector<32x32xf32>
    %580 = math.exp %579 : vector<32x32xf32>
    %cst_224 = arith.constant dense<0.000000e+00> : vector<32xf32>
    %581 = vector.multi_reduction <add>, %580, %cst_224 [1] : vector<32x32xf32> to vector<32xf32>
    %582 = vector.shape_cast %581 : vector<32xf32> to vector<32x1xf32>
    %583 = vector.broadcast %582 : vector<32x1xf32> to vector<32x32xf32>
    %584 = arith.divf %580, %583 : vector<32x32xf32>
    %585 = arith.truncf %584 : vector<32x32xf32> to vector<32x32xbf16>
    %cst_225 = arith.constant dense<0.000000e+00> : vector<32x16xf32>
    %586 = tpu.matmul %585, %571, %cst_225 {dimension_numbers = #tpu.dot_dimension_numbers<[1], [0], [0], [1], [0, 0, 1, 1], [], []>} : vector<32x32xbf16>, vector<32x16xbf16>, vector<32x16xf32> -> vector<32x16xf32>
    %587 = arith.truncf %586 : vector<32x16xf32> to vector<32x16xbf16>
    %588 = vector.extract_strided_slice %502 {offsets = [48, 0], sizes = [16, 64], strides = [1, 1]} : vector<64x64xbf16> to vector<16x64xbf16>
    %cst_226 = arith.constant dense<0.000000e+00> : vector<32x64xf32>
    %589 = tpu.matmul %587, %588, %cst_226 {dimension_numbers = #tpu.dot_dimension_numbers<[1], [0], [0], [1], [0, 0, 1, 1], [], []>} : vector<32x16xbf16>, vector<16x64xbf16>, vector<32x64xf32> -> vector<32x64xf32>
    %590 = arith.addf %568, %589 : vector<32x64xf32>
    %c2_227 = arith.constant 2 : index
    %c0_228 = arith.constant 0 : index
    %c0_229 = arith.constant 0 : index
    %591 = vector.load %arg14[%c2_227, %c0_228, %c0_229] : memref<3x64x64xbf16, #tpu.memory_space<vmem>>, vector<1x64x64xbf16>
    %592 = vector.shape_cast %591 : vector<1x64x64xbf16> to vector<64x64xbf16>
    %593 = vector.extract_strided_slice %499 {offsets = [0, 0], sizes = [32, 16], strides = [1, 1]} : vector<32x192xbf16> to vector<32x16xbf16>
    %594 = vector.extract_strided_slice %499 {offsets = [0, 64], sizes = [32, 16], strides = [1, 1]} : vector<32x192xbf16> to vector<32x16xbf16>
    %595 = vector.extract_strided_slice %499 {offsets = [0, 128], sizes = [32, 16], strides = [1, 1]} : vector<32x192xbf16> to vector<32x16xbf16>
    "tpu.trace_start"() <{level = 10 : i32, message = "qd,kd->qk"}> : () -> ()
    %cst_230 = arith.constant dense<0.000000e+00> : vector<32x32xf32>
    %596 = tpu.matmul %593, %594, %cst_230 {dimension_numbers = #tpu.dot_dimension_numbers<[1], [1], [0], [0], [0, 0, 1, 0], [], []>} : vector<32x16xbf16>, vector<32x16xbf16>, vector<32x32xf32> -> vector<32x32xf32>
    "tpu.trace_stop"() : () -> ()
    %cst_231 = arith.constant 2.500000e-01 : f32
    %597 = vector.broadcast %cst_231 : f32 to vector<32x32xf32>
    %598 = arith.mulf %596, %597 : vector<32x32xf32>
    %599 = arith.addf %598, %1 : vector<32x32xf32>
    %cst_232 = arith.constant dense<0xFF800000> : vector<32xf32>
    %600 = vector.multi_reduction <maximumf>, %599, %cst_232 [1] : vector<32x32xf32> to vector<32xf32>
    %601 = vector.shape_cast %600 : vector<32xf32> to vector<32x1xf32>
    %602 = vector.broadcast %601 : vector<32x1xf32> to vector<32x32xf32>
    %603 = arith.subf %599, %602 : vector<32x32xf32>
    %604 = math.exp %603 : vector<32x32xf32>
    %cst_233 = arith.constant dense<0.000000e+00> : vector<32xf32>
    %605 = vector.multi_reduction <add>, %604, %cst_233 [1] : vector<32x32xf32> to vector<32xf32>
    %606 = vector.shape_cast %605 : vector<32xf32> to vector<32x1xf32>
    %607 = vector.broadcast %606 : vector<32x1xf32> to vector<32x32xf32>
    %608 = arith.divf %604, %607 : vector<32x32xf32>
    %609 = arith.truncf %608 : vector<32x32xf32> to vector<32x32xbf16>
    %cst_234 = arith.constant dense<0.000000e+00> : vector<32x16xf32>
    %610 = tpu.matmul %609, %595, %cst_234 {dimension_numbers = #tpu.dot_dimension_numbers<[1], [0], [0], [1], [0, 0, 1, 1], [], []>} : vector<32x32xbf16>, vector<32x16xbf16>, vector<32x16xf32> -> vector<32x16xf32>
    %611 = arith.truncf %610 : vector<32x16xf32> to vector<32x16xbf16>
    %612 = vector.extract_strided_slice %592 {offsets = [0, 0], sizes = [16, 64], strides = [1, 1]} : vector<64x64xbf16> to vector<16x64xbf16>
    %cst_235 = arith.constant dense<0.000000e+00> : vector<32x64xf32>
    %613 = tpu.matmul %611, %612, %cst_235 {dimension_numbers = #tpu.dot_dimension_numbers<[1], [0], [0], [1], [0, 0, 1, 1], [], []>} : vector<32x16xbf16>, vector<16x64xbf16>, vector<32x64xf32> -> vector<32x64xf32>
    %614 = arith.addf %590, %613 : vector<32x64xf32>
    %615 = vector.extract_strided_slice %499 {offsets = [0, 16], sizes = [32, 16], strides = [1, 1]} : vector<32x192xbf16> to vector<32x16xbf16>
    %616 = vector.extract_strided_slice %499 {offsets = [0, 80], sizes = [32, 16], strides = [1, 1]} : vector<32x192xbf16> to vector<32x16xbf16>
    %617 = vector.extract_strided_slice %499 {offsets = [0, 144], sizes = [32, 16], strides = [1, 1]} : vector<32x192xbf16> to vector<32x16xbf16>
    "tpu.trace_start"() <{level = 10 : i32, message = "qd,kd->qk"}> : () -> ()
    %cst_236 = arith.constant dense<0.000000e+00> : vector<32x32xf32>
    %618 = tpu.matmul %615, %616, %cst_236 {dimension_numbers = #tpu.dot_dimension_numbers<[1], [1], [0], [0], [0, 0, 1, 0], [], []>} : vector<32x16xbf16>, vector<32x16xbf16>, vector<32x32xf32> -> vector<32x32xf32>
    "tpu.trace_stop"() : () -> ()
    %cst_237 = arith.constant 2.500000e-01 : f32
    %619 = vector.broadcast %cst_237 : f32 to vector<32x32xf32>
    %620 = arith.mulf %618, %619 : vector<32x32xf32>
    %621 = arith.addf %620, %1 : vector<32x32xf32>
    %cst_238 = arith.constant dense<0xFF800000> : vector<32xf32>
    %622 = vector.multi_reduction <maximumf>, %621, %cst_238 [1] : vector<32x32xf32> to vector<32xf32>
    %623 = vector.shape_cast %622 : vector<32xf32> to vector<32x1xf32>
    %624 = vector.broadcast %623 : vector<32x1xf32> to vector<32x32xf32>
    %625 = arith.subf %621, %624 : vector<32x32xf32>
    %626 = math.exp %625 : vector<32x32xf32>
    %cst_239 = arith.constant dense<0.000000e+00> : vector<32xf32>
    %627 = vector.multi_reduction <add>, %626, %cst_239 [1] : vector<32x32xf32> to vector<32xf32>
    %628 = vector.shape_cast %627 : vector<32xf32> to vector<32x1xf32>
    %629 = vector.broadcast %628 : vector<32x1xf32> to vector<32x32xf32>
    %630 = arith.divf %626, %629 : vector<32x32xf32>
    %631 = arith.truncf %630 : vector<32x32xf32> to vector<32x32xbf16>
    %cst_240 = arith.constant dense<0.000000e+00> : vector<32x16xf32>
    %632 = tpu.matmul %631, %617, %cst_240 {dimension_numbers = #tpu.dot_dimension_numbers<[1], [0], [0], [1], [0, 0, 1, 1], [], []>} : vector<32x32xbf16>, vector<32x16xbf16>, vector<32x16xf32> -> vector<32x16xf32>
    %633 = arith.truncf %632 : vector<32x16xf32> to vector<32x16xbf16>
    %634 = vector.extract_strided_slice %592 {offsets = [16, 0], sizes = [16, 64], strides = [1, 1]} : vector<64x64xbf16> to vector<16x64xbf16>
    %cst_241 = arith.constant dense<0.000000e+00> : vector<32x64xf32>
    %635 = tpu.matmul %633, %634, %cst_241 {dimension_numbers = #tpu.dot_dimension_numbers<[1], [0], [0], [1], [0, 0, 1, 1], [], []>} : vector<32x16xbf16>, vector<16x64xbf16>, vector<32x64xf32> -> vector<32x64xf32>
    %636 = arith.addf %614, %635 : vector<32x64xf32>
    %637 = vector.extract_strided_slice %499 {offsets = [0, 32], sizes = [32, 16], strides = [1, 1]} : vector<32x192xbf16> to vector<32x16xbf16>
    %638 = vector.extract_strided_slice %499 {offsets = [0, 96], sizes = [32, 16], strides = [1, 1]} : vector<32x192xbf16> to vector<32x16xbf16>
    %639 = vector.extract_strided_slice %499 {offsets = [0, 160], sizes = [32, 16], strides = [1, 1]} : vector<32x192xbf16> to vector<32x16xbf16>
    "tpu.trace_start"() <{level = 10 : i32, message = "qd,kd->qk"}> : () -> ()
    %cst_242 = arith.constant dense<0.000000e+00> : vector<32x32xf32>
    %640 = tpu.matmul %637, %638, %cst_242 {dimension_numbers = #tpu.dot_dimension_numbers<[1], [1], [0], [0], [0, 0, 1, 0], [], []>} : vector<32x16xbf16>, vector<32x16xbf16>, vector<32x32xf32> -> vector<32x32xf32>
    "tpu.trace_stop"() : () -> ()
    %cst_243 = arith.constant 2.500000e-01 : f32
    %641 = vector.broadcast %cst_243 : f32 to vector<32x32xf32>
    %642 = arith.mulf %640, %641 : vector<32x32xf32>
    %643 = arith.addf %642, %1 : vector<32x32xf32>
    %cst_244 = arith.constant dense<0xFF800000> : vector<32xf32>
    %644 = vector.multi_reduction <maximumf>, %643, %cst_244 [1] : vector<32x32xf32> to vector<32xf32>
    %645 = vector.shape_cast %644 : vector<32xf32> to vector<32x1xf32>
    %646 = vector.broadcast %645 : vector<32x1xf32> to vector<32x32xf32>
    %647 = arith.subf %643, %646 : vector<32x32xf32>
    %648 = math.exp %647 : vector<32x32xf32>
    %cst_245 = arith.constant dense<0.000000e+00> : vector<32xf32>
    %649 = vector.multi_reduction <add>, %648, %cst_245 [1] : vector<32x32xf32> to vector<32xf32>
    %650 = vector.shape_cast %649 : vector<32xf32> to vector<32x1xf32>
    %651 = vector.broadcast %650 : vector<32x1xf32> to vector<32x32xf32>
    %652 = arith.divf %648, %651 : vector<32x32xf32>
    %653 = arith.truncf %652 : vector<32x32xf32> to vector<32x32xbf16>
    %cst_246 = arith.constant dense<0.000000e+00> : vector<32x16xf32>
    %654 = tpu.matmul %653, %639, %cst_246 {dimension_numbers = #tpu.dot_dimension_numbers<[1], [0], [0], [1], [0, 0, 1, 1], [], []>} : vector<32x32xbf16>, vector<32x16xbf16>, vector<32x16xf32> -> vector<32x16xf32>
    %655 = arith.truncf %654 : vector<32x16xf32> to vector<32x16xbf16>
    %656 = vector.extract_strided_slice %592 {offsets = [32, 0], sizes = [16, 64], strides = [1, 1]} : vector<64x64xbf16> to vector<16x64xbf16>
    %cst_247 = arith.constant dense<0.000000e+00> : vector<32x64xf32>
    %657 = tpu.matmul %655, %656, %cst_247 {dimension_numbers = #tpu.dot_dimension_numbers<[1], [0], [0], [1], [0, 0, 1, 1], [], []>} : vector<32x16xbf16>, vector<16x64xbf16>, vector<32x64xf32> -> vector<32x64xf32>
    %658 = arith.addf %636, %657 : vector<32x64xf32>
    %659 = vector.extract_strided_slice %499 {offsets = [0, 48], sizes = [32, 16], strides = [1, 1]} : vector<32x192xbf16> to vector<32x16xbf16>
    %660 = vector.extract_strided_slice %499 {offsets = [0, 112], sizes = [32, 16], strides = [1, 1]} : vector<32x192xbf16> to vector<32x16xbf16>
    %661 = vector.extract_strided_slice %499 {offsets = [0, 176], sizes = [32, 16], strides = [1, 1]} : vector<32x192xbf16> to vector<32x16xbf16>
    "tpu.trace_start"() <{level = 10 : i32, message = "qd,kd->qk"}> : () -> ()
    %cst_248 = arith.constant dense<0.000000e+00> : vector<32x32xf32>
    %662 = tpu.matmul %659, %660, %cst_248 {dimension_numbers = #tpu.dot_dimension_numbers<[1], [1], [0], [0], [0, 0, 1, 0], [], []>} : vector<32x16xbf16>, vector<32x16xbf16>, vector<32x32xf32> -> vector<32x32xf32>
    "tpu.trace_stop"() : () -> ()
    %cst_249 = arith.constant 2.500000e-01 : f32
    %663 = vector.broadcast %cst_249 : f32 to vector<32x32xf32>
    %664 = arith.mulf %662, %663 : vector<32x32xf32>
    %665 = arith.addf %664, %1 : vector<32x32xf32>
    %cst_250 = arith.constant dense<0xFF800000> : vector<32xf32>
    %666 = vector.multi_reduction <maximumf>, %665, %cst_250 [1] : vector<32x32xf32> to vector<32xf32>
    %667 = vector.shape_cast %666 : vector<32xf32> to vector<32x1xf32>
    %668 = vector.broadcast %667 : vector<32x1xf32> to vector<32x32xf32>
    %669 = arith.subf %665, %668 : vector<32x32xf32>
    %670 = math.exp %669 : vector<32x32xf32>
    %cst_251 = arith.constant dense<0.000000e+00> : vector<32xf32>
    %671 = vector.multi_reduction <add>, %670, %cst_251 [1] : vector<32x32xf32> to vector<32xf32>
    %672 = vector.shape_cast %671 : vector<32xf32> to vector<32x1xf32>
    %673 = vector.broadcast %672 : vector<32x1xf32> to vector<32x32xf32>
    %674 = arith.divf %670, %673 : vector<32x32xf32>
    %675 = arith.truncf %674 : vector<32x32xf32> to vector<32x32xbf16>
    %cst_252 = arith.constant dense<0.000000e+00> : vector<32x16xf32>
    %676 = tpu.matmul %675, %661, %cst_252 {dimension_numbers = #tpu.dot_dimension_numbers<[1], [0], [0], [1], [0, 0, 1, 1], [], []>} : vector<32x32xbf16>, vector<32x16xbf16>, vector<32x16xf32> -> vector<32x16xf32>
    %677 = arith.truncf %676 : vector<32x16xf32> to vector<32x16xbf16>
    %678 = vector.extract_strided_slice %592 {offsets = [48, 0], sizes = [16, 64], strides = [1, 1]} : vector<64x64xbf16> to vector<16x64xbf16>
    %cst_253 = arith.constant dense<0.000000e+00> : vector<32x64xf32>
    %679 = tpu.matmul %677, %678, %cst_253 {dimension_numbers = #tpu.dot_dimension_numbers<[1], [0], [0], [1], [0, 0, 1, 1], [], []>} : vector<32x16xbf16>, vector<16x64xbf16>, vector<32x64xf32> -> vector<32x64xf32>
    %680 = arith.addf %658, %679 : vector<32x64xf32>
    %c2_254 = arith.constant 2 : index
    %c0_255 = arith.constant 0 : index
    %c0_256 = arith.constant 0 : index
    %681 = vector.load %arg15[%c2_254, %c0_255, %c0_256] : memref<3x1x64xf32, #tpu.memory_space<vmem>>, vector<1x1x64xf32>
    %682 = vector.shape_cast %681 : vector<1x1x64xf32> to vector<1x64xf32>
    %683 = vector.broadcast %682 : vector<1x64xf32> to vector<32x64xf32>
    %684 = arith.addf %680, %683 : vector<32x64xf32>
    %cst_257 = arith.constant 5.000000e-01 : f32
    %685 = vector.broadcast %cst_257 : f32 to vector<32x64xf32>
    %686 = arith.mulf %685, %684 : vector<32x64xf32>
    %cst_258 = arith.constant 0.707106769 : f32
    %687 = vector.broadcast %cst_258 : f32 to vector<32x64xf32>
    %688 = arith.mulf %684, %687 : vector<32x64xf32>
    %689 = math.erf %688 : vector<32x64xf32>
    %cst_259 = arith.constant 1.000000e+00 : f32
    %690 = vector.broadcast %cst_259 : f32 to vector<32x64xf32>
    %691 = arith.addf %690, %689 : vector<32x64xf32>
    %692 = arith.mulf %686, %691 : vector<32x64xf32>
    %693 = vector.extract_strided_slice %692 {offsets = [0, 32], sizes = [32, 32], strides = [1, 1]} : vector<32x64xf32> to vector<32x32xf32>
    %694 = arith.addf %469, %693 : vector<32x32xf32>
    %c0_260 = arith.constant 0 : index
    %c0_261 = arith.constant 0 : index
    %c0_262 = arith.constant 0 : index
    %695 = vector.load %arg16[%c0_260, %c0_261, %c0_262] : memref<1x32x32xf32, #tpu.memory_space<vmem>>, vector<1x32x32xf32>
    %696 = vector.shape_cast %695 : vector<1x32x32xf32> to vector<32x32xf32>
    %697 = vector.shape_cast %694 : vector<32x32xf32> to vector<1x32x32xf32>
    tpu.vector_store %arg16[%c0_260, %c0_261, %c0_262], %697 {strides = array<i32>} : memref<1x32x32xf32, #tpu.memory_space<vmem>>, vector<1x32x32xf32>,
    return
  }
  func.func @transform_0(%arg0: i32) -> (i32, i32, i32) {
    %c0_i32 = arith.constant 0 : i32
    %c0_i32_0 = arith.constant 0 : i32
    %c0_i32_1 = arith.constant 0 : i32
    return %arg0, %c0_i32, %c0_i32_0 : i32, i32, i32
  }
  func.func @transform_1(%arg0: i32) -> (i32, i32, i32) {
    %c0_i32 = arith.constant 0 : i32
    %c0_i32_0 = arith.constant 0 : i32
    %c0_i32_1 = arith.constant 0 : i32
    return %arg0, %c0_i32, %c0_i32_0 : i32, i32, i32
  }
  func.func @transform_2(%arg0: i32) -> (i32, i32) {
    %c0_i32 = arith.constant 0 : i32
    %c0_i32_0 = arith.constant 0 : i32
    %c0_i32_1 = arith.constant 0 : i32
    return %c0_i32, %c0_i32_0 : i32, i32
  }
  func.func @transform_3(%arg0: i32) -> (i32, i32) {
    %c0_i32 = arith.constant 0 : i32
    %c0_i32_0 = arith.constant 0 : i32
    %c0_i32_1 = arith.constant 0 : i32
    return %c0_i32, %c0_i32_0 : i32, i32
  }
  func.func @transform_4(%arg0: i32) -> (i32, i32) {
    %c0_i32 = arith.constant 0 : i32
    %c0_i32_0 = arith.constant 0 : i32
    %c0_i32_1 = arith.constant 0 : i32
    return %c0_i32, %c0_i32_0 : i32, i32
  }
  func.func @transform_5(%arg0: i32) -> (i32, i32) {
    %c0_i32 = arith.constant 0 : i32
    %c0_i32_0 = arith.constant 0 : i32
    %c0_i32_1 = arith.constant 0 : i32
    return %c0_i32, %c0_i32_0 : i32, i32
  }
  func.func @transform_6(%arg0: i32) -> (i32, i32, i32) {
    %c0_i32 = arith.constant 0 : i32
    %c0_i32_0 = arith.constant 0 : i32
    %c0_i32_1 = arith.constant 0 : i32
    %c0_i32_2 = arith.constant 0 : i32
    return %c0_i32, %c0_i32_0, %c0_i32_1 : i32, i32, i32
  }
  func.func @transform_7(%arg0: i32) -> (i32, i32, i32) {
    %c0_i32 = arith.constant 0 : i32
    %c0_i32_0 = arith.constant 0 : i32
    %c0_i32_1 = arith.constant 0 : i32
    %c0_i32_2 = arith.constant 0 : i32
    return %c0_i32, %c0_i32_0, %c0_i32_1 : i32, i32, i32
  }
  func.func @transform_8(%arg0: i32) -> (i32, i32, i32) {
    %c0_i32 = arith.constant 0 : i32
    %c0_i32_0 = arith.constant 0 : i32
    %c0_i32_1 = arith.constant 0 : i32
    %c0_i32_2 = arith.constant 0 : i32
    return %c0_i32, %c0_i32_0, %c0_i32_1 : i32, i32, i32
  }
  func.func @transform_9(%arg0: i32) -> (i32, i32, i32) {
    %c0_i32 = arith.constant 0 : i32
    %c0_i32_0 = arith.constant 0 : i32
    %c0_i32_1 = arith.constant 0 : i32
    %c0_i32_2 = arith.constant 0 : i32
    return %c0_i32, %c0_i32_0, %c0_i32_1 : i32, i32, i32
  }
  func.func @transform_10(%arg0: i32) -> (i32, i32, i32) {
    %c0_i32 = arith.constant 0 : i32
    %c0_i32_0 = arith.constant 0 : i32
    %c0_i32_1 = arith.constant 0 : i32
    %c0_i32_2 = arith.constant 0 : i32
    return %c0_i32, %c0_i32_0, %c0_i32_1 : i32, i32, i32
  }
  func.func @transform_11(%arg0: i32) -> (i32, i32, i32) {
    %c0_i32 = arith.constant 0 : i32
    %c0_i32_0 = arith.constant 0 : i32
    %c0_i32_1 = arith.constant 0 : i32
    %c0_i32_2 = arith.constant 0 : i32
    return %c0_i32, %c0_i32_0, %c0_i32_1 : i32, i32, i32
  }
  func.func @transform_12(%arg0: i32) -> (i32, i32, i32) {
    %c0_i32 = arith.constant 0 : i32
    %c0_i32_0 = arith.constant 0 : i32
    %c0_i32_1 = arith.constant 0 : i32
    %c0_i32_2 = arith.constant 0 : i32
    return %c0_i32, %c0_i32_0, %c0_i32_1 : i32, i32, i32
  }
  func.func @transform_13(%arg0: i32) -> (i32, i32, i32) {
    %c0_i32 = arith.constant 0 : i32
    %c0_i32_0 = arith.constant 0 : i32
    %c0_i32_1 = arith.constant 0 : i32
    %c0_i32_2 = arith.constant 0 : i32
    return %c0_i32, %c0_i32_0, %c0_i32_1 : i32, i32, i32
  }
  func.func @transform_14(%arg0: i32) -> (i32, i32, i32) {
    %c0_i32 = arith.constant 0 : i32
    %c0_i32_0 = arith.constant 0 : i32
    %c0_i32_1 = arith.constant 0 : i32
    %c0_i32_2 = arith.constant 0 : i32
    return %c0_i32, %c0_i32_0, %c0_i32_1 : i32, i32, i32
  }
  func.func @transform_15(%arg0: i32) -> (i32, i32, i32) {
    %c0_i32 = arith.constant 0 : i32
    %c0_i32_0 = arith.constant 0 : i32
    %c0_i32_1 = arith.constant 0 : i32
    return %arg0, %c0_i32, %c0_i32_0 : i32, i32, i32
  }
}

</mosaic_0001>

<llo_original>
// kernel: _lambda_.1
$region0: #{_lambda_.1}
  #allocation0 [shape = 'u32[]', space=smem, size = 0x4, offset = 0x4, fixed_abs, tag = 'smem constant byte address 0x4 - core index']
  #allocation1 [shape = 'u32[144,128]{1,0:T(1,128)}', space=vmem, size = 0x12000, scoped, tag = 'internal scratch']
  %s0 = inlined_call_operand.vmem [shape: f32[2,32,32], index: 0, kind: input, shape index: {}]
  %s1 = inlined_call_operand.vmem [shape: f32[2,1,32], index: 1, kind: input, shape index: {}]
  %s2 = inlined_call_operand.vmem [shape: f32[32,32], index: 2, kind: input, shape index: {}]
  %s3 = inlined_call_operand.vmem [shape: f32[32,32], index: 3, kind: input, shape index: {}]
  %s4 = inlined_call_operand.vmem [shape: bf16[32,96], index: 4, kind: input, shape index: {}]
  %s5 = inlined_call_operand.vmem [shape: f32[1,96], index: 5, kind: input, shape index: {}]
  %s6 = inlined_call_operand.vmem [shape: bf16[3,32,128], index: 6, kind: input, shape index: {}]
  %s7 = inlined_call_operand.vmem [shape: f32[3,1,128], index: 7, kind: input, shape index: {}]
  %s8 = inlined_call_operand.vmem [shape: bf16[3,64,192], index: 8, kind: input, shape index: {}]
  %s9 = inlined_call_operand.vmem [shape: f32[3,1,192], index: 9, kind: input, shape index: {}]
  %s10 = inlined_call_operand.vmem [shape: bf16[3,64,192], index: 10, kind: input, shape index: {}]
  %s11 = inlined_call_operand.vmem [shape: f32[3,1,192], index: 11, kind: input, shape index: {}]
  %s12 = inlined_call_operand.vmem [shape: bf16[3,64,64], index: 12, kind: input, shape index: {}]
  %s13 = inlined_call_operand.vmem [shape: bf16[3,64,64], index: 13, kind: input, shape index: {}]
  %s14 = inlined_call_operand.vmem [shape: f32[3,1,64], index: 14, kind: input, shape index: {}]
  %s15 = inlined_call_operand.hbm [shape: f32[2,32,32], index: 15, kind: output, shape index: {}]
  %s16 = sld [smem:[#allocation0]]
  $region93: #{_lambda_.1} parent=0
    _
  %s18 = ssub.s32 1, %s16
  %s19 = scalar_select 0, %s18, %s16
  $region1: #{_lambda_.1} parent=0
    #allocation2 [shape = 'u8[32768]{0}', space=vmem, size = 0x8000, scoped, tag = 'output window, operand 0']
    #allocation3 [shape = 's32[2]{0}', space=sflag, size = 0x8, scoped, tag = 'scoped memory for _lambda_.1']
    %20 = vsyncpa [#allocation3], 0
    %s21 = scalar_lea.sflag [#allocation3], 1
    %22 = vsyncpa %s21, 0
    loop: start=0, step=1, limit=4
    $region2: #{_lambda_.1} parent=1 // loop_pre_header
      _
    $region3: #{_lambda_.1} parent=1 // loop_header
      %s24 = sphi 0, %s28
      %p25 = scmp.ge.s32.totalorder %s24, 4
      %s34 = sphi 0, %s36
      %s37 = sphi 0, %s34
      %s38 = sphi 0, %s37
      %s54 = sphi 0, %s38
      %s60 = sphi 0, %s62
      %s63 = sphi 0, %s60
      %s64 = sphi 0, %s63
      %s80 = sphi 0, %s64
      %s84 = sphi 0, %s84
      %s86 = sphi 0, %s84
      %s87 = sphi 0, %s86
      %s101 = sphi 0, %s87
      %s105 = sphi 0, %s105
      %s107 = sphi 0, %s105
      %s108 = sphi 0, %s107
      %s122 = sphi 0, %s108
      %s126 = sphi 0, %s126
      %s128 = sphi 0, %s126
      %s129 = sphi 0, %s128
      %s143 = sphi 0, %s129
      %s147 = sphi 0, %s147
      %s149 = sphi 0, %s147
      %s150 = sphi 0, %s149
      %s164 = sphi 0, %s150
      %s168 = sphi 0, %s168
      %s170 = sphi 0, %s168
      %s171 = sphi 0, %s170
      %s185 = sphi 0, %s171
      %s189 = sphi 0, %s189
      %s191 = sphi 0, %s189
      %s192 = sphi 0, %s191
      %s206 = sphi 0, %s192
      %s210 = sphi 0, %s210
      %s212 = sphi 0, %s210
      %s213 = sphi 0, %s212
      %s227 = sphi 0, %s213
      %s231 = sphi 0, %s231
      %s233 = sphi 0, %s231
      %s234 = sphi 0, %s233
      %s248 = sphi 0, %s234
      %s252 = sphi 0, %s252
      %s254 = sphi 0, %s252
      %s255 = sphi 0, %s254
      %s269 = sphi 0, %s255
      %s273 = sphi 0, %s273
      %s275 = sphi 0, %s273
      %s276 = sphi 0, %s275
      %s290 = sphi 0, %s276
      %s294 = sphi 0, %s294
      %s296 = sphi 0, %s294
      %s297 = sphi 0, %s296
      %s311 = sphi 0, %s297
      %s315 = sphi 0, %s315
      %s317 = sphi 0, %s315
      %s318 = sphi 0, %s317
      %s332 = sphi 0, %s318
      %s336 = sphi 0, %s336
      %s338 = sphi 0, %s336
      %s339 = sphi 0, %s338
      %s353 = sphi 0, %s339
      %s359 = sphi 0, %s361
      %s362 = sphi 0, %s359
      %s363 = sphi 0, %s362
      %s379 = sphi 0, %s363
    $region4: #{_lambda_.1} parent=1 // loop_header_branch
      %27 = sbr.rel (%p25) target = $region8
    $region5: #{_lambda_.1} parent=1 // loop_body
      %s29 = ssub.s32 %s24, 1
      %s30 = ssub.s32 %s24, 2
      %s31 = sadd.s32 %s24, 1
      %s32 = ssub.s32 %s24, %s31
      %p33 = scmp.eq.s32.totalorder %s32, 0
      %s35 = sadd.s32 %s34, 1
      %s36 = scalar_select %p33, %s34, %s35
      %p39 = pneg %p33
      %p40 = scmp.eq.s32.totalorder %s24, 1
      %p41 = por %p39, %p40
      %p42 = scmp.ne.s32.totalorder %s34, %s37
      %p43 = scmp.eq.s32.totalorder %s24, 0
      %p44 = por %p42, %p43
      %p45 = scmp.ne.s32.totalorder %s34, %s37
      %p46 = scmp.eq.s32.totalorder %s29, 1
      %p47 = por %p45, %p46
      %p48 = scmp.ne.s32.totalorder %s37, %s38
      %p49 = scmp.eq.s32.totalorder %s29, 0
      %p50 = por %p48, %p49
      %p51 = scmp.ne.s32.totalorder %s37, %s38
      %p52 = scmp.eq.s32.totalorder %s30, 1
      %p53 = por %p51, %p52
      %p55 = scmp.ne.s32.totalorder %s38, %s54
      %p56 = scmp.eq.s32.totalorder %s30, 0
      %p57 = por %p55, %p56
      %s58 = ssub.s32 %s24, %s31
      %p59 = scmp.eq.s32.totalorder %s58, 0
      %s61 = sadd.s32 %s60, 1
      %s62 = scalar_select %p59, %s60, %s61
      %p65 = pneg %p59
      %p66 = scmp.eq.s32.totalorder %s24, 1
      %p67 = por %p65, %p66
      %p68 = scmp.ne.s32.totalorder %s60, %s63
      %p69 = scmp.eq.s32.totalorder %s24, 0
      %p70 = por %p68, %p69
      %p71 = scmp.ne.s32.totalorder %s60, %s63
      %p72 = scmp.eq.s32.totalorder %s29, 1
      %p73 = por %p71, %p72
      %p74 = scmp.ne.s32.totalorder %s63, %s64
      %p75 = scmp.eq.s32.totalorder %s29, 0
      %p76 = por %p74, %p75
      %p77 = scmp.ne.s32.totalorder %s63, %s64
      %p78 = scmp.eq.s32.totalorder %s30, 1
      %p79 = por %p77, %p78
      %p81 = scmp.ne.s32.totalorder %s64, %s80
      %p82 = scmp.eq.s32.totalorder %s30, 0
      %p83 = por %p81, %p82
      %s85 = sadd.s32 %s84, 1
      %p88 = scmp.eq.s32.totalorder %s24, 1
      %p89 = scmp.ne.s32.totalorder %s84, %s86
      %p90 = scmp.eq.s32.totalorder %s24, 0
      %p91 = por %p89, %p90
      %p92 = scmp.ne.s32.totalorder %s84, %s86
      %p93 = scmp.eq.s32.totalorder %s29, 1
      %p94 = por %p92, %p93
      %p95 = scmp.ne.s32.totalorder %s86, %s87
      %p96 = scmp.eq.s32.totalorder %s29, 0
      %p97 = por %p95, %p96
      %p98 = scmp.ne.s32.totalorder %s86, %s87
      %p99 = scmp.eq.s32.totalorder %s30, 1
      %p100 = por %p98, %p99
      %p102 = scmp.ne.s32.totalorder %s87, %s101
      %p103 = scmp.eq.s32.totalorder %s30, 0
      %p104 = por %p102, %p103
      %s106 = sadd.s32 %s105, 1
      %p109 = scmp.eq.s32.totalorder %s24, 1
      %p110 = scmp.ne.s32.totalorder %s105, %s107
      %p111 = scmp.eq.s32.totalorder %s24, 0
      %p112 = por %p110, %p111
      %p113 = scmp.ne.s32.totalorder %s105, %s107
      %p114 = scmp.eq.s32.totalorder %s29, 1
      %p115 = por %p113, %p114
      %p116 = scmp.ne.s32.totalorder %s107, %s108
      %p117 = scmp.eq.s32.totalorder %s29, 0
      %p118 = por %p116, %p117
      %p119 = scmp.ne.s32.totalorder %s107, %s108
      %p120 = scmp.eq.s32.totalorder %s30, 1
      %p121 = por %p119, %p120
      %p123 = scmp.ne.s32.totalorder %s108, %s122
      %p124 = scmp.eq.s32.totalorder %s30, 0
      %p125 = por %p123, %p124
      %s127 = sadd.s32 %s126, 1
      %p130 = scmp.eq.s32.totalorder %s24, 1
      %p131 = scmp.ne.s32.totalorder %s126, %s128
      %p132 = scmp.eq.s32.totalorder %s24, 0
      %p133 = por %p131, %p132
      %p134 = scmp.ne.s32.totalorder %s126, %s128
      %p135 = scmp.eq.s32.totalorder %s29, 1
      %p136 = por %p134, %p135
      %p137 = scmp.ne.s32.totalorder %s128, %s129
      %p138 = scmp.eq.s32.totalorder %s29, 0
      %p139 = por %p137, %p138
      %p140 = scmp.ne.s32.totalorder %s128, %s129
      %p141 = scmp.eq.s32.totalorder %s30, 1
      %p142 = por %p140, %p141
      %p144 = scmp.ne.s32.totalorder %s129, %s143
      %p145 = scmp.eq.s32.totalorder %s30, 0
      %p146 = por %p144, %p145
      %s148 = sadd.s32 %s147, 1
      %p151 = scmp.eq.s32.totalorder %s24, 1
      %p152 = scmp.ne.s32.totalorder %s147, %s149
      %p153 = scmp.eq.s32.totalorder %s24, 0
      %p154 = por %p152, %p153
      %p155 = scmp.ne.s32.totalorder %s147, %s149
      %p156 = scmp.eq.s32.totalorder %s29, 1
      %p157 = por %p155, %p156
      %p158 = scmp.ne.s32.totalorder %s149, %s150
      %p159 = scmp.eq.s32.totalorder %s29, 0
      %p160 = por %p158, %p159
      %p161 = scmp.ne.s32.totalorder %s149, %s150
      %p162 = scmp.eq.s32.totalorder %s30, 1
      %p163 = por %p161, %p162
      %p165 = scmp.ne.s32.totalorder %s150, %s164
      %p166 = scmp.eq.s32.totalorder %s30, 0
      %p167 = por %p165, %p166
      %s169 = sadd.s32 %s168, 1
      %p172 = scmp.eq.s32.totalorder %s24, 1
      %p173 = scmp.ne.s32.totalorder %s168, %s170
      %p174 = scmp.eq.s32.totalorder %s24, 0
      %p175 = por %p173, %p174
      %p176 = scmp.ne.s32.totalorder %s168, %s170
      %p177 = scmp.eq.s32.totalorder %s29, 1
      %p178 = por %p176, %p177
      %p179 = scmp.ne.s32.totalorder %s170, %s171
      %p180 = scmp.eq.s32.totalorder %s29, 0
      %p181 = por %p179, %p180
      %p182 = scmp.ne.s32.totalorder %s170, %s171
      %p183 = scmp.eq.s32.totalorder %s30, 1
      %p184 = por %p182, %p183
      %p186 = scmp.ne.s32.totalorder %s171, %s185
      %p187 = scmp.eq.s32.totalorder %s30, 0
      %p188 = por %p186, %p187
      %s190 = sadd.s32 %s189, 1
      %p193 = scmp.eq.s32.totalorder %s24, 1
      %p194 = scmp.ne.s32.totalorder %s189, %s191
      %p195 = scmp.eq.s32.totalorder %s24, 0
      %p196 = por %p194, %p195
      %p197 = scmp.ne.s32.totalorder %s189, %s191
      %p198 = scmp.eq.s32.totalorder %s29, 1
      %p199 = por %p197, %p198
      %p200 = scmp.ne.s32.totalorder %s191, %s192
      %p201 = scmp.eq.s32.totalorder %s29, 0
      %p202 = por %p200, %p201
      %p203 = scmp.ne.s32.totalorder %s191, %s192
      %p204 = scmp.eq.s32.totalorder %s30, 1
      %p205 = por %p203, %p204
      %p207 = scmp.ne.s32.totalorder %s192, %s206
      %p208 = scmp.eq.s32.totalorder %s30, 0
      %p209 = por %p207, %p208
      %s211 = sadd.s32 %s210, 1
      %p214 = scmp.eq.s32.totalorder %s24, 1
      %p215 = scmp.ne.s32.totalorder %s210, %s212
      %p216 = scmp.eq.s32.totalorder %s24, 0
      %p217 = por %p215, %p216
      %p218 = scmp.ne.s32.totalorder %s210, %s212
      %p219 = scmp.eq.s32.totalorder %s29, 1
      %p220 = por %p218, %p219
      %p221 = scmp.ne.s32.totalorder %s212, %s213
      %p222 = scmp.eq.s32.totalorder %s29, 0
      %p223 = por %p221, %p222
      %p224 = scmp.ne.s32.totalorder %s212, %s213
      %p225 = scmp.eq.s32.totalorder %s30, 1
      %p226 = por %p224, %p225
      %p228 = scmp.ne.s32.totalorder %s213, %s227
      %p229 = scmp.eq.s32.totalorder %s30, 0
      %p230 = por %p228, %p229
      %s232 = sadd.s32 %s231, 1
      %p235 = scmp.eq.s32.totalorder %s24, 1
      %p236 = scmp.ne.s32.totalorder %s231, %s233
      %p237 = scmp.eq.s32.totalorder %s24, 0
      %p238 = por %p236, %p237
      %p239 = scmp.ne.s32.totalorder %s231, %s233
      %p240 = scmp.eq.s32.totalorder %s29, 1
      %p241 = por %p239, %p240
      %p242 = scmp.ne.s32.totalorder %s233, %s234
      %p243 = scmp.eq.s32.totalorder %s29, 0
      %p244 = por %p242, %p243
      %p245 = scmp.ne.s32.totalorder %s233, %s234
      %p246 = scmp.eq.s32.totalorder %s30, 1
      %p247 = por %p245, %p246
      %p249 = scmp.ne.s32.totalorder %s234, %s248
      %p250 = scmp.eq.s32.totalorder %s30, 0
      %p251 = por %p249, %p250
      %s253 = sadd.s32 %s252, 1
      %p256 = scmp.eq.s32.totalorder %s24, 1
      %p257 = scmp.ne.s32.totalorder %s252, %s254
      %p258 = scmp.eq.s32.totalorder %s24, 0
      %p259 = por %p257, %p258
      %p260 = scmp.ne.s32.totalorder %s252, %s254
      %p261 = scmp.eq.s32.totalorder %s29, 1
      %p262 = por %p260, %p261
      %p263 = scmp.ne.s32.totalorder %s254, %s255
      %p264 = scmp.eq.s32.totalorder %s29, 0
      %p265 = por %p263, %p264
      %p266 = scmp.ne.s32.totalorder %s254, %s255
      %p267 = scmp.eq.s32.totalorder %s30, 1
      %p268 = por %p266, %p267
      %p270 = scmp.ne.s32.totalorder %s255, %s269
      %p271 = scmp.eq.s32.totalorder %s30, 0
      %p272 = por %p270, %p271
      %s274 = sadd.s32 %s273, 1
      %p277 = scmp.eq.s32.totalorder %s24, 1
      %p278 = scmp.ne.s32.totalorder %s273, %s275
      %p279 = scmp.eq.s32.totalorder %s24, 0
      %p280 = por %p278, %p279
      %p281 = scmp.ne.s32.totalorder %s273, %s275
      %p282 = scmp.eq.s32.totalorder %s29, 1
      %p283 = por %p281, %p282
      %p284 = scmp.ne.s32.totalorder %s275, %s276
      %p285 = scmp.eq.s32.totalorder %s29, 0
      %p286 = por %p284, %p285
      %p287 = scmp.ne.s32.totalorder %s275, %s276
      %p288 = scmp.eq.s32.totalorder %s30, 1
      %p289 = por %p287, %p288
      %p291 = scmp.ne.s32.totalorder %s276, %s290
      %p292 = scmp.eq.s32.totalorder %s30, 0
      %p293 = por %p291, %p292
      %s295 = sadd.s32 %s294, 1
      %p298 = scmp.eq.s32.totalorder %s24, 1
      %p299 = scmp.ne.s32.totalorder %s294, %s296
      %p300 = scmp.eq.s32.totalorder %s24, 0
      %p301 = por %p299, %p300
      %p302 = scmp.ne.s32.totalorder %s294, %s296
      %p303 = scmp.eq.s32.totalorder %s29, 1
      %p304 = por %p302, %p303
      %p305 = scmp.ne.s32.totalorder %s296, %s297
      %p306 = scmp.eq.s32.totalorder %s29, 0
      %p307 = por %p305, %p306
      %p308 = scmp.ne.s32.totalorder %s296, %s297
      %p309 = scmp.eq.s32.totalorder %s30, 1
      %p310 = por %p308, %p309
      %p312 = scmp.ne.s32.totalorder %s297, %s311
      %p313 = scmp.eq.s32.totalorder %s30, 0
      %p314 = por %p312, %p313
      %s316 = sadd.s32 %s315, 1
      %p319 = scmp.eq.s32.totalorder %s24, 1
      %p320 = scmp.ne.s32.totalorder %s315, %s317
      %p321 = scmp.eq.s32.totalorder %s24, 0
      %p322 = por %p320, %p321
      %p323 = scmp.ne.s32.totalorder %s315, %s317
      %p324 = scmp.eq.s32.totalorder %s29, 1
      %p325 = por %p323, %p324
      %p326 = scmp.ne.s32.totalorder %s317, %s318
      %p327 = scmp.eq.s32.totalorder %s29, 0
      %p328 = por %p326, %p327
      %p329 = scmp.ne.s32.totalorder %s317, %s318
      %p330 = scmp.eq.s32.totalorder %s30, 1
      %p331 = por %p329, %p330
      %p333 = scmp.ne.s32.totalorder %s318, %s332
      %p334 = scmp.eq.s32.totalorder %s30, 0
      %p335 = por %p333, %p334
      %s337 = sadd.s32 %s336, 1
      %p340 = scmp.eq.s32.totalorder %s24, 1
      %p341 = scmp.ne.s32.totalorder %s336, %s338
      %p342 = scmp.eq.s32.totalorder %s24, 0
      %p343 = por %p341, %p342
      %p344 = scmp.ne.s32.totalorder %s336, %s338
      %p345 = scmp.eq.s32.totalorder %s29, 1
      %p346 = por %p344, %p345
      %p347 = scmp.ne.s32.totalorder %s338, %s339
      %p348 = scmp.eq.s32.totalorder %s29, 0
      %p349 = por %p347, %p348
      %p350 = scmp.ne.s32.totalorder %s338, %s339
      %p351 = scmp.eq.s32.totalorder %s30, 1
      %p352 = por %p350, %p351
      %p354 = scmp.ne.s32.totalorder %s339, %s353
      %p355 = scmp.eq.s32.totalorder %s30, 0
      %p356 = por %p354, %p355
      %s357 = ssub.s32 %s24, %s31
      %p358 = scmp.eq.s32.totalorder %s357, 0
      %s360 = sadd.s32 %s359, 1
      %s361 = scalar_select %p358, %s359, %s360
      %p364 = pneg %p358
      %p365 = scmp.eq.s32.totalorder %s24, 1
      %p366 = por %p364, %p365
      %p367 = scmp.ne.s32.totalorder %s359, %s362
      %p368 = scmp.eq.s32.totalorder %s24, 0
      %p369 = por %p367, %p368
      %p370 = scmp.ne.s32.totalorder %s359, %s362
      %p371 = scmp.eq.s32.totalorder %s29, 1
      %p372 = por %p370, %p371
      %p373 = scmp.ne.s32.totalorder %s362, %s363
      %p374 = scmp.eq.s32.totalorder %s29, 0
      %p375 = por %p373, %p374
      %p376 = scmp.ne.s32.totalorder %s362, %s363
      %p377 = scmp.eq.s32.totalorder %s30, 1
      %p378 = por %p376, %p377
      %p380 = scmp.ne.s32.totalorder %s363, %s379
      %p381 = scmp.eq.s32.totalorder %s30, 0
      %p382 = por %p380, %p381
      %p383 = scmp.le.s32.totalorder 1, %s24
      %p384 = scmp.lt.s32.totalorder %s24, 3
      %p385 = pnand %p383, %p384
      %p386 = pneg %p385
      // Predicated region
      $region9: #{_lambda_.1} parent=5 // pred_check
        _
      $region10: #{_lambda_.1} parent=5 // pred_check_branch
        %388 = sbr.rel (%p385) target = $region12
      $region11: #{_lambda_.1} parent=5 // pred_region
        %s389 = ssub.s32 %s24, 1
        // Predicated region
        $region13: #{_lambda_.1} parent=11 // pred_check
          %p390 = pneg %p97
        $region14: #{_lambda_.1} parent=11 // pred_check_branch
          %392 = sbr.rel (%p390) target = $region16
        $region15: #{_lambda_.1} parent=11 // pred_region
          _
        $region16: #{_lambda_.1} parent=11 // pred_fallthru
          _
        // Predicated region
        $region17: #{_lambda_.1} parent=11 // pred_check
          %p393 = pneg %p118
        $region18: #{_lambda_.1} parent=11 // pred_check_branch
          %395 = sbr.rel (%p393) target = $region20
        $region19: #{_lambda_.1} parent=11 // pred_region
          _
        $region20: #{_lambda_.1} parent=11 // pred_fallthru
          _
        // Predicated region
        $region21: #{_lambda_.1} parent=11 // pred_check
          %p396 = pneg %p139
        $region22: #{_lambda_.1} parent=11 // pred_check_branch
          %398 = sbr.rel (%p396) target = $region24
        $region23: #{_lambda_.1} parent=11 // pred_region
          _
        $region24: #{_lambda_.1} parent=11 // pred_fallthru
          _
        // Predicated region
        $region25: #{_lambda_.1} parent=11 // pred_check
          %p399 = pneg %p160
        $region26: #{_lambda_.1} parent=11 // pred_check_branch
          %401 = sbr.rel (%p399) target = $region28
        $region27: #{_lambda_.1} parent=11 // pred_region
          _
        $region28: #{_lambda_.1} parent=11 // pred_fallthru
          _
        // Predicated region
        $region29: #{_lambda_.1} parent=11 // pred_check
          %p402 = pneg %p181
        $region30: #{_lambda_.1} parent=11 // pred_check_branch
          %404 = sbr.rel (%p402) target = $region32
        $region31: #{_lambda_.1} parent=11 // pred_region
          _
        $region32: #{_lambda_.1} parent=11 // pred_fallthru
          _
        // Predicated region
        $region33: #{_lambda_.1} parent=11 // pred_check
          %p405 = pneg %p202
        $region34: #{_lambda_.1} parent=11 // pred_check_branch
          %407 = sbr.rel (%p405) target = $region36
        $region35: #{_lambda_.1} parent=11 // pred_region
          _
        $region36: #{_lambda_.1} parent=11 // pred_fallthru
          _
        // Predicated region
        $region37: #{_lambda_.1} parent=11 // pred_check
          %p408 = pneg %p223
        $region38: #{_lambda_.1} parent=11 // pred_check_branch
          %410 = sbr.rel (%p408) target = $region40
        $region39: #{_lambda_.1} parent=11 // pred_region
          _
        $region40: #{_lambda_.1} parent=11 // pred_fallthru
          _
        // Predicated region
        $region41: #{_lambda_.1} parent=11 // pred_check
          %p411 = pneg %p244
        $region42: #{_lambda_.1} parent=11 // pred_check_branch
          %413 = sbr.rel (%p411) target = $region44
        $region43: #{_lambda_.1} parent=11 // pred_region
          _
        $region44: #{_lambda_.1} parent=11 // pred_fallthru
          _
        // Predicated region
        $region45: #{_lambda_.1} parent=11 // pred_check
          %p414 = pneg %p265
        $region46: #{_lambda_.1} parent=11 // pred_check_branch
          %416 = sbr.rel (%p414) target = $region48
        $region47: #{_lambda_.1} parent=11 // pred_region
          _
        $region48: #{_lambda_.1} parent=11 // pred_fallthru
          _
        // Predicated region
        $region49: #{_lambda_.1} parent=11 // pred_check
          %p417 = pneg %p286
        $region50: #{_lambda_.1} parent=11 // pred_check_branch
          %419 = sbr.rel (%p417) target = $region52
        $region51: #{_lambda_.1} parent=11 // pred_region
          _
        $region52: #{_lambda_.1} parent=11 // pred_fallthru
          _
        // Predicated region
        $region53: #{_lambda_.1} parent=11 // pred_check
          %p420 = pneg %p307
        $region54: #{_lambda_.1} parent=11 // pred_check_branch
          %422 = sbr.rel (%p420) target = $region56
        $region55: #{_lambda_.1} parent=11 // pred_region
          _
        $region56: #{_lambda_.1} parent=11 // pred_fallthru
          _
        // Predicated region
        $region57: #{_lambda_.1} parent=11 // pred_check
          %p423 = pneg %p328
        $region58: #{_lambda_.1} parent=11 // pred_check_branch
          %425 = sbr.rel (%p423) target = $region60
        $region59: #{_lambda_.1} parent=11 // pred_region
          _
        $region60: #{_lambda_.1} parent=11 // pred_fallthru
          _
        // Predicated region
        $region61: #{_lambda_.1} parent=11 // pred_check
          %p426 = pneg %p349
        $region62: #{_lambda_.1} parent=11 // pred_check_branch
          %428 = sbr.rel (%p426) target = $region64
        $region63: #{_lambda_.1} parent=11 // pred_region
          _
        $region64: #{_lambda_.1} parent=11 // pred_fallthru
          _
      $region12: #{_lambda_.1} parent=5 // pred_fallthru
        _
      %p429 = scmp.lt.s32.totalorder %s24, 2
      // Predicated region
      $region65: #{_lambda_.1} parent=5 // pred_check
        %p430 = pneg %p429
      $region66: #{_lambda_.1} parent=5 // pred_check_branch
        %432 = sbr.rel (%p430) target = $region68
      $region67: #{_lambda_.1} parent=5 // pred_region
        // Predicated region
        $region69: #{_lambda_.1} parent=67 // pred_check
          %p433 = pneg %p44
        $region70: #{_lambda_.1} parent=67 // pred_check_branch
          %435 = sbr.rel (%p433) target = $region72
        $region71: #{_lambda_.1} parent=67 // pred_region
          %p436 = scmp.lt.s32.totalorder %s24, 1
          %s437 = scalar_select %p436, %s24, 1
          %s438 = smul.addr %s437, 4
          %s439 = smul.addr %s438, 8
          %s440 = scalar_lea.vmem %s0, %s439
        $region72: #{_lambda_.1} parent=67 // pred_fallthru
          _
        // Predicated region
        $region73: #{_lambda_.1} parent=67 // pred_check
          %p441 = pneg %p70
        $region74: #{_lambda_.1} parent=67 // pred_check_branch
          %443 = sbr.rel (%p441) target = $region76
        $region75: #{_lambda_.1} parent=67 // pred_region
          %p444 = scmp.lt.s32.totalorder %s24, 1
          %s445 = scalar_select %p444, %s24, 1
          %s446 = scalar_lea.vmem %s1, %s445
        $region76: #{_lambda_.1} parent=67 // pred_fallthru
          _
      $region68: #{_lambda_.1} parent=5 // pred_fallthru
        _
      %p447 = scmp.le.s32.totalorder 1, %s24
      %p448 = scmp.lt.s32.totalorder %s24, 3
      %p449 = pnand %p447, %p448
      %p450 = pneg %p449
      // Predicated region
      $region77: #{_lambda_.1} parent=5 // pred_check
        _
      $region78: #{_lambda_.1} parent=5 // pred_check_branch
        %452 = sbr.rel (%p449) target = $region80
      $region79: #{_lambda_.1} parent=5 // pred_region
        %s453 = ssub.s32 %s24, 1
        %p454 = scmp.lt.s32.totalorder %s29, 1
        %s455 = scalar_select %p454, %s29, 1
        %s456 = smul.addr %s455, 4
        %s457 = smul.addr %s456, 8
        %s458 = scalar_lea.vmem %s0, %s457
        %p459 = pneg %p50
        %p460 = pneg %p47
        %p461 = scmp.lt.s32.totalorder %s29, 1
        %s462 = scalar_select %p461, %s29, 1
        %s463 = scalar_lea.vmem %s1, %s462
        %p464 = pneg %p76
        %p465 = pneg %p73
        %p466 = pneg %p97
        %p467 = pneg %p94
        %p468 = pneg %p118
        %p469 = pneg %p115
        %p470 = pneg %p139
        %p471 = pneg %p136
        %p472 = pneg %p160
        %p473 = pneg %p157
        %p474 = pneg %p181
        %p475 = pneg %p178
        %p476 = pneg %p202
        %p477 = pneg %p199
        %p478 = pneg %p223
        %p479 = pneg %p220
        %p480 = pneg %p244
        %p481 = pneg %p241
        %p482 = pneg %p265
        %p483 = pneg %p262
        %p484 = pneg %p286
        %p485 = pneg %p283
        %p486 = pneg %p307
        %p487 = pneg %p304
        %p488 = pneg %p328
        %p489 = pneg %p325
        %p490 = pneg %p349
        %p491 = pneg %p346
        %p492 = pneg %p375
        %p493 = pneg %p372
        %s494 = sand.u32 %s362, 1
        %s495 = scalar_lea.sflag [#allocation3], %s494
        %s496 = sand.u32 %s362, 1
        %s497 = smul.addr %s496, 32
        %s498 = scalar_lea.vmem [#allocation2], %s497
        %p499 = scmp.lt.s32.totalorder %s29, 1
        %s500 = scalar_select %p499, %s29, 1
        %s501 = smul.addr %s500, 4
        %s502 = smul.addr %s501, 8
        %s503 = scalar_lea.vmem %s0, %s502
        %p504 = scmp.lt.s32.totalorder %s29, 1
        %s505 = scalar_select %p504, %s29, 1
        %s506 = scalar_lea.vmem %s1, %s505
        %v508 = vld [vmem:[%s2] sm:$0xff]
        %v509 = vld [vmem:[%s2 + $0x8] sm:$0xff]
        %v510 = vld [vmem:[%s2 + $0x10] sm:$0xff]
        %v511 = vld [vmem:[%s2 + $0x18] sm:$0xff]
        %v512 = vld [vmem:[%s3] sm:$0xff]
        %v513 = vld [vmem:[%s3 + $0x8] sm:$0xff]
        %v514 = vld [vmem:[%s3 + $0x10] sm:$0xff]
        %v515 = vld [vmem:[%s3 + $0x18] sm:$0xff]
        %v516 = vld [vmem:[%s506] sm:$0x1]
        %v517 = vpack.c.bf16 %v516, %v516
        %v518 = vld [vmem:[%s4] sm:$0xf]
        %v519 = vld [vmem:[%s4 + $0x4] sm:$0xf]
        %v520 = vld [vmem:[%s4 + $0x8] sm:$0xf]
        %v521 = vld [vmem:[%s4 + $0xc] sm:$0xf]
        %v522 = vld [vmem:[%s5] sm:$0x1]
        %v527 = vunpack.c.l.b16 %v518
        %v528 = vunpack.c.l.b16 %v519
        %v529 = vunpack.c.l.b16 %v520
        %v530 = vunpack.c.l.b16 %v521
        %v531 = vpack.c.b16 %v528, %v527
        %v532 = vpack.c.b16 %v530, %v529
        %vm535 = vcmask 261120
        %v537 = vsel %vm535, %v517, 0
        %539 = vmatprep.subr.bf16.mxu0 0
        %540 = vmatpush1.bf16.msra.mxu0 %v531
        %541 = vmatprep.subr.bf16.mxu0 0
        %542 = vmatpush1.bf16.msra.mxu0 %v532
        %543 = vmatprep.subr.bf16.mxu0 0
        %544 = vmatpush1.bf16.msra.mxu0 0
        %545 = vmatprep.subr.bf16.mxu0 0
        %546 = vmatpush1.bf16.msra.mxu0 0
        %547 = vmatprep.subr.bf16.mxu0 0
        %548 = vmatpush1.bf16.msra.mxu0 0
        %549 = vmatprep.subr.bf16.mxu0 0
        %550 = vmatpush1.bf16.msra.mxu0 0
        %551 = vmatprep.subr.bf16.mxu0 0
        %552 = vmatpush1.bf16.msra.mxu0 0
        %553 = vmatprep.subr.bf16.mxu0 0
        %554 = vmatpush1.bf16.msra.mxu0 0
        %555 = vmatprep.subr.bf16.mxu0 0
        %556 = vmatpush1.bf16.msra.mxu0 0
        %557 = vmatprep.subr.bf16.mxu0 0
        %558 = vmatpush1.bf16.msra.mxu0 0
        %559 = vmatprep.subr.bf16.mxu0 0
        %560 = vmatpush1.bf16.msra.mxu0 0
        %561 = vmatprep.subr.bf16.mxu0 0
        %562 = vmatpush1.bf16.msra.mxu0 0
        %563 = vmatprep.subr.bf16.mxu0 0
        %564 = vmatpush1.bf16.msra.mxu0 0
        %565 = vmatprep.subr.bf16.mxu0 0
        %566 = vmatpush1.bf16.msra.mxu0 0
        %567 = vmatprep.subr.bf16.mxu0 0
        %568 = vmatpush1.bf16.msra.mxu0 0
        %569 = vmatprep.subr.bf16.mxu0 0
        %570 = vmatpush1.bf16.msra.mxu0 0
        %571 = vmatprep.mubr.bf16.mxu0 0
        %572 = vmatmul.mubr.bf16.gmra.mrb[0].mxu0 %v537
        %v573 = vpop.f32.mrb[0].mxu0
        %v574 = vadd.f32 %v522, %v573
        %v575 = vpop.f32.mrb[0].mxu0
        %v576 = vpop.f32.mrb[0].mxu0
        %v577 = vpop.f32.mrb[0].mxu0
        %578 = vdwg.mxu0
        %v579 = vld [vmem:[%s503] sm:$0xff]
        %v580 = vld [vmem:[%s503 + $0x8] sm:$0xff]
        %v581 = vld [vmem:[%s503 + $0x10] sm:$0xff]
        %v582 = vld [vmem:[%s503 + $0x18] sm:$0xff]
        %v583 = vlaneseq
        %v584 = vshrl.u32 %v583, 7
        %v585 = vsub.s32 0, %v584
        %v586 = vrot.slane %v574, %v585
        %v587 = vadd.f32 %v579, %v586
        %v588 = vadd.f32 %v580, %v586
        %v589 = vadd.f32 %v581, %v586
        %v590 = vadd.f32 %v582, %v586
        %v591 = vpack.c.bf16 %v588, %v587
        %v592 = vpack.c.bf16 %v590, %v589
        %v593 = vld [vmem:[%s6] sm:$0xf]
        %v594 = vld [vmem:[%s6 + $0x4] sm:$0xf]
        %v595 = vld [vmem:[%s6 + $0x8] sm:$0xf]
        %v596 = vld [vmem:[%s6 + $0xc] sm:$0xf]
        %v597 = vld [vmem:[%s7] sm:$0x1]
        %v599 = vlaneseq
        %v600 = vshrl.u32 %v599, 7
        %v601 = vsub.s32 0, %v600
        %v602 = vrot.slane %v597, %v601
        %v608 = vunpack.c.l.b16 %v593
        %v609 = vunpack.c.l.b16 %v594
        %v610 = vunpack.c.l.b16 %v595
        %v611 = vunpack.c.l.b16 %v596
        %v612 = vpack.c.b16 %v609, %v608
        %v613 = vpack.c.b16 %v611, %v610
        %v617 = vsel %vm535, %v591, 0
        %v620 = vsel %vm535, %v592, 0
        %622 = vmatprep.subr.bf16.mxu0 0
        %623 = vmatpush1.bf16.msra.mxu0 %v612
        %624 = vmatprep.subr.bf16.mxu0 0
        %625 = vmatpush1.bf16.msra.mxu0 %v613
        %626 = vmatprep.subr.bf16.mxu0 0
        %627 = vmatpush1.bf16.msra.mxu0 0
        %628 = vmatprep.subr.bf16.mxu0 0
        %629 = vmatpush1.bf16.msra.mxu0 0
        %630 = vmatprep.subr.bf16.mxu0 0
        %631 = vmatpush1.bf16.msra.mxu0 0
        %632 = vmatprep.subr.bf16.mxu0 0
        %633 = vmatpush1.bf16.msra.mxu0 0
        %634 = vmatprep.subr.bf16.mxu0 0
        %635 = vmatpush1.bf16.msra.mxu0 0
        %636 = vmatprep.subr.bf16.mxu0 0
        %637 = vmatpush1.bf16.msra.mxu0 0
        %638 = vmatprep.subr.bf16.mxu0 0
        %639 = vmatpush1.bf16.msra.mxu0 0
        %640 = vmatprep.subr.bf16.mxu0 0
        %641 = vmatpush1.bf16.msra.mxu0 0
        %642 = vmatprep.subr.bf16.mxu0 0
        %643 = vmatpush1.bf16.msra.mxu0 0
        %644 = vmatprep.subr.bf16.mxu0 0
        %645 = vmatpush1.bf16.msra.mxu0 0
        %646 = vmatprep.subr.bf16.mxu0 0
        %647 = vmatpush1.bf16.msra.mxu0 0
        %648 = vmatprep.subr.bf16.mxu0 0
        %649 = vmatpush1.bf16.msra.mxu0 0
        %650 = vmatprep.subr.bf16.mxu0 0
        %651 = vmatpush1.bf16.msra.mxu0 0
        %652 = vmatprep.subr.bf16.mxu0 0
        %653 = vmatpush1.bf16.msra.mxu0 0
        %654 = vmatprep.mubr.bf16.mxu0 0
        %655 = vmatmul.mubr.bf16.gmra.mrb[0].mxu0 %v617
        %v656 = vpop.f32.mrb[0].mxu0
        %v657 = vadd.f32 %v602, %v656
        %v658 = vpop.f32.mrb[0].mxu0
        %v659 = vpop.f32.mrb[0].mxu0
        %v660 = vadd.f32 %v602, %v659
        %v661 = vpop.f32.mrb[0].mxu0
        %662 = vmatprep.mubr.bf16.mxu0 0
        %663 = vmatmul.mubr.bf16.gmra.mrb[0].mxu0 %v620
        %v664 = vpop.f32.mrb[0].mxu0
        %v665 = vadd.f32 %v602, %v664
        %v666 = vpop.f32.mrb[0].mxu0
        %v667 = vpop.f32.mrb[0].mxu0
        %v668 = vadd.f32 %v602, %v667
        %v669 = vpop.f32.mrb[0].mxu0
        %670 = vdwg.mxu0
        %v671 = vpack.c.bf16 %v660, %v657
        %v672 = vpack.c.bf16 %v668, %v665
        %v673 = vld [vmem:[%s8] sm:$0xff]
        %v674 = vld [vmem:[%s8 + $0x8] sm:$0xff]
        %v675 = vld [vmem:[%s8 + $0x10] sm:$0xff]
        %v676 = vld [vmem:[%s8 + $0x18] sm:$0xff]
        %v677 = vld [vmem:[%s8 + $0x20] sm:$0xff]
        %v678 = vld [vmem:[%s8 + $0x28] sm:$0xff]
        %v679 = vld [vmem:[%s8 + $0x30] sm:$0xff]
        %v680 = vld [vmem:[%s8 + $0x38] sm:$0xff]
        %v681 = vld [vmem:[%s9] sm:$0x3]
        %v683 = vlaneseq
        %v684 = vshrl.u32 %v683, 7
        %v685 = vsub.s32 0, %v684
        %v686 = vrot.slane %v681, %v685
        %v687 = vlaneseq
        %v688 = vshrl.u32 %v687, 7
        %v689 = vsub.s32 1, %v688
        %v690 = vrot.slane %v681, %v689
        %v701 = vunpack.c.l.b16 %v673
        %v702 = vunpack.c.h.b16 %v673
        %v703 = vunpack.c.l.b16 %v674
        %v704 = vunpack.c.h.b16 %v674
        %v705 = vunpack.c.l.b16 %v675
        %v706 = vunpack.c.h.b16 %v675
        %v707 = vunpack.c.l.b16 %v676
        %v708 = vunpack.c.h.b16 %v676
        %v709 = vunpack.c.l.b16 %v677
        %v710 = vunpack.c.h.b16 %v677
        %v711 = vunpack.c.l.b16 %v678
        %v712 = vunpack.c.h.b16 %v678
        %v713 = vunpack.c.l.b16 %v679
        %v714 = vunpack.c.h.b16 %v679
        %v715 = vunpack.c.l.b16 %v680
        %v716 = vunpack.c.h.b16 %v680
        %v717 = vpack.c.b16 %v703, %v701
        %v718 = vpack.c.b16 %v704, %v702
        %v719 = vpack.c.b16 %v707, %v705
        %v720 = vpack.c.b16 %v708, %v706
        %v721 = vpack.c.b16 %v711, %v709
        %v722 = vpack.c.b16 %v712, %v710
        %v723 = vpack.c.b16 %v715, %v713
        %v724 = vpack.c.b16 %v716, %v714
        %vm733 = vcmask 523264
        %v735 = vsel %vm733, %v671, 0
        %v738 = vsel %vm733, %v672, 0
        %740 = vmatprep.subr.bf16.mxu0 %v718
        %741 = vmatpush1.bf16.msra.mxu0 %v717
        %742 = vmatprep.subr.bf16.mxu0 %v720
        %743 = vmatpush1.bf16.msra.mxu0 %v719
        %744 = vmatprep.subr.bf16.mxu0 %v722
        %745 = vmatpush1.bf16.msra.mxu0 %v721
        %746 = vmatprep.subr.bf16.mxu0 %v724
        %747 = vmatpush1.bf16.msra.mxu0 %v723
        %748 = vmatprep.subr.bf16.mxu0 0
        %749 = vmatpush1.bf16.msra.mxu0 0
        %750 = vmatprep.subr.bf16.mxu0 0
        %751 = vmatpush1.bf16.msra.mxu0 0
        %752 = vmatprep.subr.bf16.mxu0 0
        %753 = vmatpush1.bf16.msra.mxu0 0
        %754 = vmatprep.subr.bf16.mxu0 0
        %755 = vmatpush1.bf16.msra.mxu0 0
        %756 = vmatprep.subr.bf16.mxu0 0
        %757 = vmatpush1.bf16.msra.mxu0 0
        %758 = vmatprep.subr.bf16.mxu0 0
        %759 = vmatpush1.bf16.msra.mxu0 0
        %760 = vmatprep.subr.bf16.mxu0 0
        %761 = vmatpush1.bf16.msra.mxu0 0
        %762 = vmatprep.subr.bf16.mxu0 0
        %763 = vmatpush1.bf16.msra.mxu0 0
        %764 = vmatprep.subr.bf16.mxu0 0
        %765 = vmatpush1.bf16.msra.mxu0 0
        %766 = vmatprep.subr.bf16.mxu0 0
        %767 = vmatpush1.bf16.msra.mxu0 0
        %768 = vmatprep.subr.bf16.mxu0 0
        %769 = vmatpush1.bf16.msra.mxu0 0
        %770 = vmatprep.subr.bf16.mxu0 0
        %771 = vmatpush1.bf16.msra.mxu0 0
        %772 = vmatprep.mubr.bf16.mxu0 0
        %773 = vmatmul.mubr.bf16.gmra.mrb[0].mxu0 %v735
        %v774 = vpop.f32.mrb[0].mxu0
        %v775 = vadd.f32 %v686, %v774
        %v776 = vpop.f32.mrb[0].mxu0
        %v777 = vadd.f32 %v690, %v776
        %v778 = vpop.f32.mrb[0].mxu0
        %v779 = vadd.f32 %v686, %v778
        %v780 = vpop.f32.mrb[0].mxu0
        %v781 = vadd.f32 %v690, %v780
        %782 = vmatprep.mubr.bf16.mxu0 0
        %783 = vmatmul.mubr.bf16.gmra.mrb[0].mxu0 %v738
        %v784 = vpop.f32.mrb[0].mxu0
        %v785 = vadd.f32 %v686, %v784
        %v786 = vpop.f32.mrb[0].mxu0
        %v787 = vadd.f32 %v690, %v786
        %v788 = vpop.f32.mrb[0].mxu0
        %v789 = vadd.f32 %v686, %v788
        %v790 = vpop.f32.mrb[0].mxu0
        %v791 = vadd.f32 %v690, %v790
        %792 = vdwg.mxu0
        %v793 = vpack.c.bf16 %v779, %v775
        %v794 = vpack.c.bf16 %v781, %v777
        %v795 = vpack.c.bf16 %v789, %v785
        %v796 = vpack.c.bf16 %v791, %v787
        %v797 = vld [vmem:[%s10] sm:$0xff]
        %v798 = vld [vmem:[%s10 + $0x8] sm:$0xff]
        %v799 = vld [vmem:[%s10 + $0x10] sm:$0xff]
        %v800 = vld [vmem:[%s10 + $0x18] sm:$0xff]
        %v801 = vld [vmem:[%s10 + $0x20] sm:$0xff]
        %v802 = vld [vmem:[%s10 + $0x28] sm:$0xff]
        %v803 = vld [vmem:[%s10 + $0x30] sm:$0xff]
        %v804 = vld [vmem:[%s10 + $0x38] sm:$0xff]
        %v805 = vld [vmem:[%s11] sm:$0x3]
        %v807 = vlaneseq
        %v808 = vshrl.u32 %v807, 7
        %v809 = vsub.s32 0, %v808
        %v810 = vrot.slane %v805, %v809
        %v811 = vlaneseq
        %v812 = vshrl.u32 %v811, 7
        %v813 = vsub.s32 1, %v812
        %v814 = vrot.slane %v805, %v813
        %819 = vrot.lane.b32.xlu0 %v671, 64
        %v820 = vpop.permute.xlu0 %819
        %821 = vrot.lane.b32.xlu0 %v672, 64
        %v822 = vpop.permute.xlu0 %821
        %v831 = vunpack.c.l.b16 %v797
        %v832 = vunpack.c.h.b16 %v797
        %v833 = vunpack.c.l.b16 %v798
        %v834 = vunpack.c.h.b16 %v798
        %v835 = vunpack.c.l.b16 %v799
        %v836 = vunpack.c.h.b16 %v799
        %v837 = vunpack.c.l.b16 %v800
        %v838 = vunpack.c.h.b16 %v800
        %v839 = vunpack.c.l.b16 %v801
        %v840 = vunpack.c.h.b16 %v801
        %v841 = vunpack.c.l.b16 %v802
        %v842 = vunpack.c.h.b16 %v802
        %v843 = vunpack.c.l.b16 %v803
        %v844 = vunpack.c.h.b16 %v803
        %v845 = vunpack.c.l.b16 %v804
        %v846 = vunpack.c.h.b16 %v804
        %v847 = vpack.c.b16 %v833, %v831
        %v848 = vpack.c.b16 %v834, %v832
        %v849 = vpack.c.b16 %v837, %v835
        %v850 = vpack.c.b16 %v838, %v836
        %v851 = vpack.c.b16 %v841, %v839
        %v852 = vpack.c.b16 %v842, %v840
        %v853 = vpack.c.b16 %v845, %v843
        %v854 = vpack.c.b16 %v846, %v844
        %v864 = vsel %vm733, %v820, 0
        %v867 = vsel %vm733, %v822, 0
        %869 = vmatprep.subr.bf16.mxu0 %v848
        %870 = vmatpush1.bf16.msra.mxu0 %v847
        %871 = vmatprep.subr.bf16.mxu0 %v850
        %872 = vmatpush1.bf16.msra.mxu0 %v849
        %873 = vmatprep.subr.bf16.mxu0 %v852
        %874 = vmatpush1.bf16.msra.mxu0 %v851
        %875 = vmatprep.subr.bf16.mxu0 %v854
        %876 = vmatpush1.bf16.msra.mxu0 %v853
        %877 = vmatprep.subr.bf16.mxu0 0
        %878 = vmatpush1.bf16.msra.mxu0 0
        %879 = vmatprep.subr.bf16.mxu0 0
        %880 = vmatpush1.bf16.msra.mxu0 0
        %881 = vmatprep.subr.bf16.mxu0 0
        %882 = vmatpush1.bf16.msra.mxu0 0
        %883 = vmatprep.subr.bf16.mxu0 0
        %884 = vmatpush1.bf16.msra.mxu0 0
        %885 = vmatprep.subr.bf16.mxu0 0
        %886 = vmatpush1.bf16.msra.mxu0 0
        %887 = vmatprep.subr.bf16.mxu0 0
        %888 = vmatpush1.bf16.msra.mxu0 0
        %889 = vmatprep.subr.bf16.mxu0 0
        %890 = vmatpush1.bf16.msra.mxu0 0
        %891 = vmatprep.subr.bf16.mxu0 0
        %892 = vmatpush1.bf16.msra.mxu0 0
        %893 = vmatprep.subr.bf16.mxu0 0
        %894 = vmatpush1.bf16.msra.mxu0 0
        %895 = vmatprep.subr.bf16.mxu0 0
        %896 = vmatpush1.bf16.msra.mxu0 0
        %897 = vmatprep.subr.bf16.mxu0 0
        %898 = vmatpush1.bf16.msra.mxu0 0
        %899 = vmatprep.subr.bf16.mxu0 0
        %900 = vmatpush1.bf16.msra.mxu0 0
        %901 = vmatprep.mubr.bf16.mxu0 0
        %902 = vmatmul.mubr.bf16.gmra.mrb[0].mxu0 %v864
        %v903 = vpop.f32.mrb[0].mxu0
        %v904 = vadd.f32 %v810, %v903
        %v905 = vpop.f32.mrb[0].mxu0
        %v906 = vadd.f32 %v814, %v905
        %v907 = vpop.f32.mrb[0].mxu0
        %v908 = vadd.f32 %v810, %v907
        %v909 = vpop.f32.mrb[0].mxu0
        %v910 = vadd.f32 %v814, %v909
        %911 = vmatprep.mubr.bf16.mxu0 0
        %912 = vmatmul.mubr.bf16.gmra.mrb[0].mxu0 %v867
        %v913 = vpop.f32.mrb[0].mxu0
        %v914 = vadd.f32 %v810, %v913
        %v915 = vpop.f32.mrb[0].mxu0
        %v916 = vadd.f32 %v814, %v915
        %v917 = vpop.f32.mrb[0].mxu0
        %v918 = vadd.f32 %v810, %v917
        %v919 = vpop.f32.mrb[0].mxu0
        %v920 = vadd.f32 %v814, %v919
        %921 = vdwg.mxu0
        %v922 = vpack.c.bf16 %v908, %v904
        %v923 = vpack.c.bf16 %v910, %v906
        %v924 = vpack.c.bf16 %v918, %v914
        %v925 = vpack.c.bf16 %v920, %v916
        %v926 = vld [vmem:[%s12] sm:$0xf]
        %v927 = vld [vmem:[%s12 + $0x4] sm:$0xf]
        %v928 = vld [vmem:[%s12 + $0x8] sm:$0xf]
        %v929 = vld [vmem:[%s12 + $0xc] sm:$0xf]
        %v930 = vld [vmem:[%s12 + $0x10] sm:$0xf]
        %v931 = vld [vmem:[%s12 + $0x14] sm:$0xf]
        %v932 = vld [vmem:[%s12 + $0x18] sm:$0xf]
        %v933 = vld [vmem:[%s12 + $0x1c] sm:$0xf]
        %936 = vrot.lane.b32.xlu0 %v793, 64
        %v937 = vpop.permute.xlu0 %936
        %938 = vrot.lane.b32.xlu0 %v795, 64
        %v939 = vpop.permute.xlu0 %938
        %vm940 = vcmask 130048
        %v942 = vsel %vm940, %v793, 0
        %v945 = vsel %vm940, %v795, 0
        %v948 = vsel %vm940, %v937, 0
        %v951 = vsel %vm940, %v939, 0
        %953 = vmatprep.subr.bf16.mxu0 0
        %954 = vmatpush1.bf16.xpose.msra.mxu0 %v948
        %955 = vmatprep.subr.bf16.mxu0 0
        %956 = vmatpush1.bf16.xpose.msra.mxu0 %v951
        %957 = vmatprep.subr.bf16.mxu0 0
        %958 = vmatpush1.bf16.xpose.msra.mxu0 0
        %959 = vmatprep.subr.bf16.mxu0 0
        %960 = vmatpush1.bf16.xpose.msra.mxu0 0
        %961 = vmatprep.subr.bf16.mxu0 0
        %962 = vmatpush1.bf16.xpose.msra.mxu0 0
        %963 = vmatprep.subr.bf16.mxu0 0
        %964 = vmatpush1.bf16.xpose.msra.mxu0 0
        %965 = vmatprep.subr.bf16.mxu0 0
        %966 = vmatpush1.bf16.xpose.msra.mxu0 0
        %967 = vmatprep.subr.bf16.mxu0 0
        %968 = vmatpush1.bf16.xpose.msra.mxu0 0
        %969 = vmatprep.subr.bf16.mxu0 0
        %970 = vmatpush1.bf16.xpose.msra.mxu0 0
        %971 = vmatprep.subr.bf16.mxu0 0
        %972 = vmatpush1.bf16.xpose.msra.mxu0 0
        %973 = vmatprep.subr.bf16.mxu0 0
        %974 = vmatpush1.bf16.xpose.msra.mxu0 0
        %975 = vmatprep.subr.bf16.mxu0 0
        %976 = vmatpush1.bf16.xpose.msra.mxu0 0
        %977 = vmatprep.subr.bf16.mxu0 0
        %978 = vmatpush1.bf16.xpose.msra.mxu0 0
        %979 = vmatprep.subr.bf16.mxu0 0
        %980 = vmatpush1.bf16.xpose.msra.mxu0 0
        %981 = vmatprep.subr.bf16.mxu0 0
        %982 = vmatpush1.bf16.xpose.msra.mxu0 0
        %983 = vmatprep.subr.bf16.mxu0 0
        %984 = vmatpush1.bf16.xpose.msra.mxu0 0
        %985 = vmatprep.mubr.bf16.mxu0 0
        %986 = vmatmul.mubr.bf16.gmra.mrb[0].mxu0 %v942
        %v987 = vpop.f32.mrb[0].mxu0
        %v988 = vadd.f32 0.0, %v987
        %v989 = vpop.f32.mrb[0].mxu0
        %v990 = vpop.f32.mrb[0].mxu0
        %v991 = vadd.f32 0.0, %v990
        %v992 = vpop.f32.mrb[0].mxu0
        %993 = vmatprep.mubr.bf16.mxu0 0
        %994 = vmatmul.mubr.bf16.gmra.mrb[0].mxu0 %v945
        %v995 = vpop.f32.mrb[0].mxu0
        %v996 = vadd.f32 0.0, %v995
        %v997 = vpop.f32.mrb[0].mxu0
        %v998 = vpop.f32.mrb[0].mxu0
        %v999 = vadd.f32 0.0, %v998
        %v1000 = vpop.f32.mrb[0].mxu0
        %1001 = vdwg.mxu0
        %v1002 = vmul.f32 %v988, 0.25
        %v1003 = vmul.f32 %v991, 0.25
        %v1004 = vmul.f32 %v996, 0.25
        %v1005 = vmul.f32 %v999, 0.25
        %v1006 = vadd.f32 %v1002, %v508
        %v1007 = vadd.f32 %v1003, %v509
        %v1008 = vadd.f32 %v1004, %v510
        %v1009 = vadd.f32 %v1005, %v511
        %v1010 = vsel %vm535, %v1006, -inf
        %1011 = vmax.xlane.f32.xlu0 %v1010
        %v1012 = vpop.xlane.xlu0 %1011
        %v1013 = vsel %vm535, %v1007, -inf
        %1014 = vmax.xlane.f32.xlu0 %v1013
        %v1015 = vpop.xlane.xlu0 %1014
        %v1016 = vsel %vm535, %v1008, -inf
        %1017 = vmax.xlane.f32.xlu0 %v1016
        %v1018 = vpop.xlane.xlu0 %1017
        %v1019 = vsel %vm535, %v1009, -inf
        %1020 = vmax.xlane.f32.xlu0 %v1019
        %v1021 = vpop.xlane.xlu0 %1020
        %v1022 = vsub.f32 %v1006, %v1012
        %v1023 = vsub.f32 %v1007, %v1015
        %v1024 = vsub.f32 %v1008, %v1018
        %v1025 = vsub.f32 %v1009, %v1021
        %v1026 = vmul.f32 %v1022, 1.442695
        %v1027 = vpow.pop %v1026
        %v1028 = vmul.f32 %v1023, 1.442695
        %v1029 = vpow.pop %v1028
        %v1030 = vmul.f32 %v1024, 1.442695
        %v1031 = vpow.pop %v1030
        %v1032 = vmul.f32 %v1025, 1.442695
        %v1033 = vpow.pop %v1032
        %v1034 = vsel %vm535, %v1027, 0.0
        %1035 = vadd.xlane.f32.xlu0 %v1034
        %v1036 = vpop.xlane.xlu0 %1035
        %v1037 = vsel %vm535, %v1029, 0.0
        %1038 = vadd.xlane.f32.xlu0 %v1037
        %v1039 = vpop.xlane.xlu0 %1038
        %v1040 = vsel %vm535, %v1031, 0.0
        %1041 = vadd.xlane.f32.xlu0 %v1040
        %v1042 = vpop.xlane.xlu0 %1041
        %v1043 = vsel %vm535, %v1033, 0.0
        %1044 = vadd.xlane.f32.xlu0 %v1043
        %v1045 = vpop.xlane.xlu0 %1044
        %v1046 = vrcp.pop %v1036
        %v1047 = vmul.f32 %v1027, %v1046
        %v1048 = vrcp.pop %v1039
        %v1049 = vmul.f32 %v1029, %v1048
        %v1050 = vrcp.pop %v1042
        %v1051 = vmul.f32 %v1031, %v1050
        %v1052 = vrcp.pop %v1045
        %v1053 = vmul.f32 %v1033, %v1052
        %v1054 = vpack.c.bf16 %v1049, %v1047
        %v1055 = vpack.c.bf16 %v1053, %v1051
        %v1057 = vsel %vm535, %v1054, 0
        %v1060 = vsel %vm535, %v1055, 0
        %1062 = vmatprep.subr.bf16.mxu0 0
        %1063 = vmatpush1.bf16.msra.mxu0 %v794
        %1064 = vmatprep.subr.bf16.mxu0 0
        %1065 = vmatpush1.bf16.msra.mxu0 %v796
        %1066 = vmatprep.subr.bf16.mxu0 0
        %1067 = vmatpush1.bf16.msra.mxu0 0
        %1068 = vmatprep.subr.bf16.mxu0 0
        %1069 = vmatpush1.bf16.msra.mxu0 0
        %1070 = vmatprep.subr.bf16.mxu0 0
        %1071 = vmatpush1.bf16.msra.mxu0 0
        %1072 = vmatprep.subr.bf16.mxu0 0
        %1073 = vmatpush1.bf16.msra.mxu0 0
        %1074 = vmatprep.subr.bf16.mxu0 0
        %1075 = vmatpush1.bf16.msra.mxu0 0
        %1076 = vmatprep.subr.bf16.mxu0 0
        %1077 = vmatpush1.bf16.msra.mxu0 0
        %1078 = vmatprep.subr.bf16.mxu0 0
        %1079 = vmatpush1.bf16.msra.mxu0 0
        %1080 = vmatprep.subr.bf16.mxu0 0
        %1081 = vmatpush1.bf16.msra.mxu0 0
        %1082 = vmatprep.subr.bf16.mxu0 0
        %1083 = vmatpush1.bf16.msra.mxu0 0
        %1084 = vmatprep.subr.bf16.mxu0 0
        %1085 = vmatpush1.bf16.msra.mxu0 0
        %1086 = vmatprep.subr.bf16.mxu0 0
        %1087 = vmatpush1.bf16.msra.mxu0 0
        %1088 = vmatprep.subr.bf16.mxu0 0
        %1089 = vmatpush1.bf16.msra.mxu0 0
        %1090 = vmatprep.subr.bf16.mxu0 0
        %1091 = vmatpush1.bf16.msra.mxu0 0
        %1092 = vmatprep.subr.bf16.mxu0 0
        %1093 = vmatpush1.bf16.msra.mxu0 0
        %1094 = vmatprep.mubr.bf16.mxu0 0
        %1095 = vmatmul.mubr.bf16.gmra.mrb[0].mxu0 %v1057
        %v1096 = vpop.f32.mrb[0].mxu0
        %v1097 = vadd.f32 0.0, %v1096
        %v1098 = vpop.f32.mrb[0].mxu0
        %v1099 = vpop.f32.mrb[0].mxu0
        %v1100 = vadd.f32 0.0, %v1099
        %v1101 = vpop.f32.mrb[0].mxu0
        %1102 = vmatprep.mubr.bf16.mxu0 0
        %1103 = vmatmul.mubr.bf16.gmra.mrb[0].mxu0 %v1060
        %v1104 = vpop.f32.mrb[0].mxu0
        %v1105 = vadd.f32 0.0, %v1104
        %v1106 = vpop.f32.mrb[0].mxu0
        %v1107 = vpop.f32.mrb[0].mxu0
        %v1108 = vadd.f32 0.0, %v1107
        %v1109 = vpop.f32.mrb[0].mxu0
        %1110 = vdwg.mxu0
        %v1111 = vpack.c.bf16 %v1100, %v1097
        %v1112 = vpack.c.bf16 %v1108, %v1105
        %1113 = vrot.lane.b32.xlu0 %v793, 112
        %v1114 = vpop.permute.xlu0 %1113
        %1115 = vrot.lane.b32.xlu0 %v795, 112
        %v1116 = vpop.permute.xlu0 %1115
        %1117 = vrot.lane.b32.xlu0 %v793, 48
        %v1118 = vpop.permute.xlu0 %1117
        %1119 = vrot.lane.b32.xlu0 %v795, 48
        %v1120 = vpop.permute.xlu0 %1119
        %v1122 = vsel %vm940, %v1114, 0
        %v1125 = vsel %vm940, %v1116, 0
        %v1128 = vsel %vm940, %v1118, 0
        %v1131 = vsel %vm940, %v1120, 0
        %1133 = vmatprep.subr.bf16.mxu0 0
        %1134 = vmatpush1.bf16.xpose.msra.mxu0 %v1128
        %1135 = vmatprep.subr.bf16.mxu0 0
        %1136 = vmatpush1.bf16.xpose.msra.mxu0 %v1131
        %1137 = vmatprep.subr.bf16.mxu0 0
        %1138 = vmatpush1.bf16.xpose.msra.mxu0 0
        %1139 = vmatprep.subr.bf16.mxu0 0
        %1140 = vmatpush1.bf16.xpose.msra.mxu0 0
        %1141 = vmatprep.subr.bf16.mxu0 0
        %1142 = vmatpush1.bf16.xpose.msra.mxu0 0
        %1143 = vmatprep.subr.bf16.mxu0 0
        %1144 = vmatpush1.bf16.xpose.msra.mxu0 0
        %1145 = vmatprep.subr.bf16.mxu0 0
        %1146 = vmatpush1.bf16.xpose.msra.mxu0 0
        %1147 = vmatprep.subr.bf16.mxu0 0
        %1148 = vmatpush1.bf16.xpose.msra.mxu0 0
        %1149 = vmatprep.subr.bf16.mxu0 0
        %1150 = vmatpush1.bf16.xpose.msra.mxu0 0
        %1151 = vmatprep.subr.bf16.mxu0 0
        %1152 = vmatpush1.bf16.xpose.msra.mxu0 0
        %1153 = vmatprep.subr.bf16.mxu0 0
        %1154 = vmatpush1.bf16.xpose.msra.mxu0 0
        %1155 = vmatprep.subr.bf16.mxu0 0
        %1156 = vmatpush1.bf16.xpose.msra.mxu0 0
        %1157 = vmatprep.subr.bf16.mxu0 0
        %1158 = vmatpush1.bf16.xpose.msra.mxu0 0
        %1159 = vmatprep.subr.bf16.mxu0 0
        %1160 = vmatpush1.bf16.xpose.msra.mxu0 0
        %1161 = vmatprep.subr.bf16.mxu0 0
        %1162 = vmatpush1.bf16.xpose.msra.mxu0 0
        %1163 = vmatprep.subr.bf16.mxu0 0
        %1164 = vmatpush1.bf16.xpose.msra.mxu0 0
        %1165 = vmatprep.mubr.bf16.mxu0 0
        %1166 = vmatmul.mubr.bf16.gmra.mrb[0].mxu0 %v1122
        %v1167 = vpop.f32.mrb[0].mxu0
        %v1168 = vadd.f32 0.0, %v1167
        %v1169 = vpop.f32.mrb[0].mxu0
        %v1170 = vpop.f32.mrb[0].mxu0
        %v1171 = vadd.f32 0.0, %v1170
        %v1172 = vpop.f32.mrb[0].mxu0
        %1173 = vmatprep.mubr.bf16.mxu0 0
        %1174 = vmatmul.mubr.bf16.gmra.mrb[0].mxu0 %v1125
        %v1175 = vpop.f32.mrb[0].mxu0
        %v1176 = vadd.f32 0.0, %v1175
        %v1177 = vpop.f32.mrb[0].mxu0
        %v1178 = vpop.f32.mrb[0].mxu0
        %v1179 = vadd.f32 0.0, %v1178
        %v1180 = vpop.f32.mrb[0].mxu0
        %1181 = vdwg.mxu0
        %v1182 = vmul.f32 %v1168, 0.25
        %v1183 = vmul.f32 %v1171, 0.25
        %v1184 = vmul.f32 %v1176, 0.25
        %v1185 = vmul.f32 %v1179, 0.25
        %v1186 = vadd.f32 %v1182, %v508
        %v1187 = vadd.f32 %v1183, %v509
        %v1188 = vadd.f32 %v1184, %v510
        %v1189 = vadd.f32 %v1185, %v511
        %v1190 = vsel %vm535, %v1186, -inf
        %1191 = vmax.xlane.f32.xlu0 %v1190
        %v1192 = vpop.xlane.xlu0 %1191
        %v1193 = vsel %vm535, %v1187, -inf
        %1194 = vmax.xlane.f32.xlu0 %v1193
        %v1195 = vpop.xlane.xlu0 %1194
        %v1196 = vsel %vm535, %v1188, -inf
        %1197 = vmax.xlane.f32.xlu0 %v1196
        %v1198 = vpop.xlane.xlu0 %1197
        %v1199 = vsel %vm535, %v1189, -inf
        %1200 = vmax.xlane.f32.xlu0 %v1199
        %v1201 = vpop.xlane.xlu0 %1200
        %v1202 = vsub.f32 %v1186, %v1192
        %v1203 = vsub.f32 %v1187, %v1195
        %v1204 = vsub.f32 %v1188, %v1198
        %v1205 = vsub.f32 %v1189, %v1201
        %v1206 = vmul.f32 %v1202, 1.442695
        %v1207 = vpow.pop %v1206
        %v1208 = vmul.f32 %v1203, 1.442695
        %v1209 = vpow.pop %v1208
        %v1210 = vmul.f32 %v1204, 1.442695
        %v1211 = vpow.pop %v1210
        %v1212 = vmul.f32 %v1205, 1.442695
        %v1213 = vpow.pop %v1212
        %v1214 = vsel %vm535, %v1207, 0.0
        %1215 = vadd.xlane.f32.xlu0 %v1214
        %v1216 = vpop.xlane.xlu0 %1215
        %v1217 = vsel %vm535, %v1209, 0.0
        %1218 = vadd.xlane.f32.xlu0 %v1217
        %v1219 = vpop.xlane.xlu0 %1218
        %v1220 = vsel %vm535, %v1211, 0.0
        %1221 = vadd.xlane.f32.xlu0 %v1220
        %v1222 = vpop.xlane.xlu0 %1221
        %v1223 = vsel %vm535, %v1213, 0.0
        %1224 = vadd.xlane.f32.xlu0 %v1223
        %v1225 = vpop.xlane.xlu0 %1224
        %v1226 = vrcp.pop %v1216
        %v1227 = vmul.f32 %v1207, %v1226
        %v1228 = vrcp.pop %v1219
        %v1229 = vmul.f32 %v1209, %v1228
        %v1230 = vrcp.pop %v1222
        %v1231 = vmul.f32 %v1211, %v1230
        %v1232 = vrcp.pop %v1225
        %v1233 = vmul.f32 %v1213, %v1232
        %v1234 = vpack.c.bf16 %v1229, %v1227
        %v1235 = vpack.c.bf16 %v1233, %v1231
        %1238 = vrot.lane.b32.xlu0 %v794, 112
        %v1239 = vpop.permute.xlu0 %1238
        %1240 = vrot.lane.b32.xlu0 %v796, 112
        %v1241 = vpop.permute.xlu0 %1240
        %v1245 = vsel %vm535, %v1234, 0
        %v1248 = vsel %vm535, %v1235, 0
        %1250 = vmatprep.subr.bf16.mxu0 0
        %1251 = vmatpush1.bf16.msra.mxu0 %v1239
        %1252 = vmatprep.subr.bf16.mxu0 0
        %1253 = vmatpush1.bf16.msra.mxu0 %v1241
        %1254 = vmatprep.subr.bf16.mxu0 0
        %1255 = vmatpush1.bf16.msra.mxu0 0
        %1256 = vmatprep.subr.bf16.mxu0 0
        %1257 = vmatpush1.bf16.msra.mxu0 0
        %1258 = vmatprep.subr.bf16.mxu0 0
        %1259 = vmatpush1.bf16.msra.mxu0 0
        %1260 = vmatprep.subr.bf16.mxu0 0
        %1261 = vmatpush1.bf16.msra.mxu0 0
        %1262 = vmatprep.subr.bf16.mxu0 0
        %1263 = vmatpush1.bf16.msra.mxu0 0
        %1264 = vmatprep.subr.bf16.mxu0 0
        %1265 = vmatpush1.bf16.msra.mxu0 0
        %1266 = vmatprep.subr.bf16.mxu0 0
        %1267 = vmatpush1.bf16.msra.mxu0 0
        %1268 = vmatprep.subr.bf16.mxu0 0
        %1269 = vmatpush1.bf16.msra.mxu0 0
        %1270 = vmatprep.subr.bf16.mxu0 0
        %1271 = vmatpush1.bf16.msra.mxu0 0
        %1272 = vmatprep.subr.bf16.mxu0 0
        %1273 = vmatpush1.bf16.msra.mxu0 0
        %1274 = vmatprep.subr.bf16.mxu0 0
        %1275 = vmatpush1.bf16.msra.mxu0 0
        %1276 = vmatprep.subr.bf16.mxu0 0
        %1277 = vmatpush1.bf16.msra.mxu0 0
        %1278 = vmatprep.subr.bf16.mxu0 0
        %1279 = vmatpush1.bf16.msra.mxu0 0
        %1280 = vmatprep.subr.bf16.mxu0 0
        %1281 = vmatpush1.bf16.msra.mxu0 0
        %1282 = vmatprep.mubr.bf16.mxu0 0
        %1283 = vmatmul.mubr.bf16.gmra.mrb[0].mxu0 %v1245
        %v1284 = vpop.f32.mrb[0].mxu0
        %v1285 = vadd.f32 0.0, %v1284
        %v1286 = vpop.f32.mrb[0].mxu0
        %v1287 = vpop.f32.mrb[0].mxu0
        %v1288 = vadd.f32 0.0, %v1287
        %v1289 = vpop.f32.mrb[0].mxu0
        %1290 = vmatprep.mubr.bf16.mxu0 0
        %1291 = vmatmul.mubr.bf16.gmra.mrb[0].mxu0 %v1248
        %v1292 = vpop.f32.mrb[0].mxu0
        %v1293 = vadd.f32 0.0, %v1292
        %v1294 = vpop.f32.mrb[0].mxu0
        %v1295 = vpop.f32.mrb[0].mxu0
        %v1296 = vadd.f32 0.0, %v1295
        %v1297 = vpop.f32.mrb[0].mxu0
        %1298 = vdwg.mxu0
        %v1299 = vpack.c.bf16 %v1288, %v1285
        %v1300 = vpack.c.bf16 %v1296, %v1293
        %v1303 = vunpack.c.l.b16 %v928
        %v1304 = vunpack.c.l.b16 %v929
        %v1305 = vpack.c.b16 %v1304, %v1303
        %v1308 = vsel %vm940, %v1299, 0
        %v1311 = vsel %vm940, %v1300, 0
        %1313 = vmatprep.subr.bf16.mxu0 0
        %1314 = vmatpush1.bf16.msra.mxu0 %v1305
        %1315 = vmatprep.subr.bf16.mxu0 0
        %1316 = vmatpush1.bf16.msra.mxu0 0
        %1317 = vmatprep.subr.bf16.mxu0 0
        %1318 = vmatpush1.bf16.msra.mxu0 0
        %1319 = vmatprep.subr.bf16.mxu0 0
        %1320 = vmatpush1.bf16.msra.mxu0 0
        %1321 = vmatprep.subr.bf16.mxu0 0
        %1322 = vmatpush1.bf16.msra.mxu0 0
        %1323 = vmatprep.subr.bf16.mxu0 0
        %1324 = vmatpush1.bf16.msra.mxu0 0
        %1325 = vmatprep.subr.bf16.mxu0 0
        %1326 = vmatpush1.bf16.msra.mxu0 0
        %1327 = vmatprep.subr.bf16.mxu0 0
        %1328 = vmatpush1.bf16.msra.mxu0 0
        %1329 = vmatprep.subr.bf16.mxu0 0
        %1330 = vmatpush1.bf16.msra.mxu0 0
        %1331 = vmatprep.subr.bf16.mxu0 0
        %1332 = vmatpush1.bf16.msra.mxu0 0
        %1333 = vmatprep.subr.bf16.mxu0 0
        %1334 = vmatpush1.bf16.msra.mxu0 0
        %1335 = vmatprep.subr.bf16.mxu0 0
        %1336 = vmatpush1.bf16.msra.mxu0 0
        %1337 = vmatprep.subr.bf16.mxu0 0
        %1338 = vmatpush1.bf16.msra.mxu0 0
        %1339 = vmatprep.subr.bf16.mxu0 0
        %1340 = vmatpush1.bf16.msra.mxu0 0
        %1341 = vmatprep.subr.bf16.mxu0 0
        %1342 = vmatpush1.bf16.msra.mxu0 0
        %1343 = vmatprep.subr.bf16.mxu0 0
        %1344 = vmatpush1.bf16.msra.mxu0 0
        %1345 = vmatprep.mubr.bf16.mxu0 0
        %1346 = vmatmul.mubr.bf16.gmra.mrb[0].mxu0 %v1308
        %v1347 = vpop.f32.mrb[0].mxu0
        %v1348 = vadd.f32 0.0, %v1347
        %v1349 = vpop.f32.mrb[0].mxu0
        %v1350 = vpop.f32.mrb[0].mxu0
        %v1351 = vadd.f32 0.0, %v1350
        %v1352 = vpop.f32.mrb[0].mxu0
        %1353 = vmatprep.mubr.bf16.mxu0 0
        %1354 = vmatmul.mubr.bf16.gmra.mrb[0].mxu0 %v1311
        %v1355 = vpop.f32.mrb[0].mxu0
        %v1356 = vadd.f32 0.0, %v1355
        %v1357 = vpop.f32.mrb[0].mxu0
        %v1358 = vpop.f32.mrb[0].mxu0
        %v1359 = vadd.f32 0.0, %v1358
        %v1360 = vpop.f32.mrb[0].mxu0
        %1361 = vdwg.mxu0
        %v1364 = vunpack.c.l.b16 %v926
        %v1365 = vunpack.c.l.b16 %v927
        %v1366 = vpack.c.b16 %v1365, %v1364
        %v1369 = vsel %vm940, %v1111, 0
        %v1372 = vsel %vm940, %v1112, 0
        %1374 = vmatprep.subr.bf16.mxu0 0
        %1375 = vmatpush1.bf16.msra.mxu0 %v1366
        %1376 = vmatprep.subr.bf16.mxu0 0
        %1377 = vmatpush1.bf16.msra.mxu0 0
        %1378 = vmatprep.subr.bf16.mxu0 0
        %1379 = vmatpush1.bf16.msra.mxu0 0
        %1380 = vmatprep.subr.bf16.mxu0 0
        %1381 = vmatpush1.bf16.msra.mxu0 0
        %1382 = vmatprep.subr.bf16.mxu0 0
        %1383 = vmatpush1.bf16.msra.mxu0 0
        %1384 = vmatprep.subr.bf16.mxu0 0
        %1385 = vmatpush1.bf16.msra.mxu0 0
        %1386 = vmatprep.subr.bf16.mxu0 0
        %1387 = vmatpush1.bf16.msra.mxu0 0
        %1388 = vmatprep.subr.bf16.mxu0 0
        %1389 = vmatpush1.bf16.msra.mxu0 0
        %1390 = vmatprep.subr.bf16.mxu0 0
        %1391 = vmatpush1.bf16.msra.mxu0 0
        %1392 = vmatprep.subr.bf16.mxu0 0
        %1393 = vmatpush1.bf16.msra.mxu0 0
        %1394 = vmatprep.subr.bf16.mxu0 0
        %1395 = vmatpush1.bf16.msra.mxu0 0
        %1396 = vmatprep.subr.bf16.mxu0 0
        %1397 = vmatpush1.bf16.msra.mxu0 0
        %1398 = vmatprep.subr.bf16.mxu0 0
        %1399 = vmatpush1.bf16.msra.mxu0 0
        %1400 = vmatprep.subr.bf16.mxu0 0
        %1401 = vmatpush1.bf16.msra.mxu0 0
        %1402 = vmatprep.subr.bf16.mxu0 0
        %1403 = vmatpush1.bf16.msra.mxu0 0
        %1404 = vmatprep.subr.bf16.mxu0 0
        %1405 = vmatpush1.bf16.msra.mxu0 0
        %1406 = vmatprep.mubr.bf16.mxu0 0
        %1407 = vmatmul.mubr.bf16.gmra.mrb[0].mxu0 %v1369
        %v1408 = vpop.f32.mrb[0].mxu0
        %v1409 = vadd.f32 %v1348, %v1408
        %v1410 = vpop.f32.mrb[0].mxu0
        %v1411 = vpop.f32.mrb[0].mxu0
        %v1412 = vadd.f32 %v1351, %v1411
        %v1413 = vpop.f32.mrb[0].mxu0
        %1414 = vmatprep.mubr.bf16.mxu0 0
        %1415 = vmatmul.mubr.bf16.gmra.mrb[0].mxu0 %v1372
        %v1416 = vpop.f32.mrb[0].mxu0
        %v1417 = vadd.f32 %v1356, %v1416
        %v1418 = vpop.f32.mrb[0].mxu0
        %v1419 = vpop.f32.mrb[0].mxu0
        %v1420 = vadd.f32 %v1359, %v1419
        %v1421 = vpop.f32.mrb[0].mxu0
        %1422 = vdwg.mxu0
        %1423 = vrot.lane.b32.xlu0 %v793, 96
        %v1424 = vpop.permute.xlu0 %1423
        %1425 = vrot.lane.b32.xlu0 %v795, 96
        %v1426 = vpop.permute.xlu0 %1425
        %1427 = vrot.lane.b32.xlu0 %v793, 32
        %v1428 = vpop.permute.xlu0 %1427
        %1429 = vrot.lane.b32.xlu0 %v795, 32
        %v1430 = vpop.permute.xlu0 %1429
        %v1432 = vsel %vm940, %v1424, 0
        %v1435 = vsel %vm940, %v1426, 0
        %v1438 = vsel %vm940, %v1428, 0
        %v1441 = vsel %vm940, %v1430, 0
        %1443 = vmatprep.subr.bf16.mxu0 0
        %1444 = vmatpush1.bf16.xpose.msra.mxu0 %v1438
        %1445 = vmatprep.subr.bf16.mxu0 0
        %1446 = vmatpush1.bf16.xpose.msra.mxu0 %v1441
        %1447 = vmatprep.subr.bf16.mxu0 0
        %1448 = vmatpush1.bf16.xpose.msra.mxu0 0
        %1449 = vmatprep.subr.bf16.mxu0 0
        %1450 = vmatpush1.bf16.xpose.msra.mxu0 0
        %1451 = vmatprep.subr.bf16.mxu0 0
        %1452 = vmatpush1.bf16.xpose.msra.mxu0 0
        %1453 = vmatprep.subr.bf16.mxu0 0
        %1454 = vmatpush1.bf16.xpose.msra.mxu0 0
        %1455 = vmatprep.subr.bf16.mxu0 0
        %1456 = vmatpush1.bf16.xpose.msra.mxu0 0
        %1457 = vmatprep.subr.bf16.mxu0 0
        %1458 = vmatpush1.bf16.xpose.msra.mxu0 0
        %1459 = vmatprep.subr.bf16.mxu0 0
        %1460 = vmatpush1.bf16.xpose.msra.mxu0 0
        %1461 = vmatprep.subr.bf16.mxu0 0
        %1462 = vmatpush1.bf16.xpose.msra.mxu0 0
        %1463 = vmatprep.subr.bf16.mxu0 0
        %1464 = vmatpush1.bf16.xpose.msra.mxu0 0
        %1465 = vmatprep.subr.bf16.mxu0 0
        %1466 = vmatpush1.bf16.xpose.msra.mxu0 0
        %1467 = vmatprep.subr.bf16.mxu0 0
        %1468 = vmatpush1.bf16.xpose.msra.mxu0 0
        %1469 = vmatprep.subr.bf16.mxu0 0
        %1470 = vmatpush1.bf16.xpose.msra.mxu0 0
        %1471 = vmatprep.subr.bf16.mxu0 0
        %1472 = vmatpush1.bf16.xpose.msra.mxu0 0
        %1473 = vmatprep.subr.bf16.mxu0 0
        %1474 = vmatpush1.bf16.xpose.msra.mxu0 0
        %1475 = vmatprep.mubr.bf16.mxu0 0
        %1476 = vmatmul.mubr.bf16.gmra.mrb[0].mxu0 %v1432
        %v1477 = vpop.f32.mrb[0].mxu0
        %v1478 = vadd.f32 0.0, %v1477
        %v1479 = vpop.f32.mrb[0].mxu0
        %v1480 = vpop.f32.mrb[0].mxu0
        %v1481 = vadd.f32 0.0, %v1480
        %v1482 = vpop.f32.mrb[0].mxu0
        %1483 = vmatprep.mubr.bf16.mxu0 0
        %1484 = vmatmul.mubr.bf16.gmra.mrb[0].mxu0 %v1435
        %v1485 = vpop.f32.mrb[0].mxu0
        %v1486 = vadd.f32 0.0, %v1485
        %v1487 = vpop.f32.mrb[0].mxu0
        %v1488 = vpop.f32.mrb[0].mxu0
        %v1489 = vadd.f32 0.0, %v1488
        %v1490 = vpop.f32.mrb[0].mxu0
        %1491 = vdwg.mxu0
        %v1492 = vmul.f32 %v1478, 0.25
        %v1493 = vmul.f32 %v1481, 0.25
        %v1494 = vmul.f32 %v1486, 0.25
        %v1495 = vmul.f32 %v1489, 0.25
        %v1496 = vadd.f32 %v1492, %v508
        %v1497 = vadd.f32 %v1493, %v509
        %v1498 = vadd.f32 %v1494, %v510
        %v1499 = vadd.f32 %v1495, %v511
        %v1500 = vsel %vm535, %v1496, -inf
        %1501 = vmax.xlane.f32.xlu0 %v1500
        %v1502 = vpop.xlane.xlu0 %1501
        %v1503 = vsel %vm535, %v1497, -inf
        %1504 = vmax.xlane.f32.xlu0 %v1503
        %v1505 = vpop.xlane.xlu0 %1504
        %v1506 = vsel %vm535, %v1498, -inf
        %1507 = vmax.xlane.f32.xlu0 %v1506
        %v1508 = vpop.xlane.xlu0 %1507
        %v1509 = vsel %vm535, %v1499, -inf
        %1510 = vmax.xlane.f32.xlu0 %v1509
        %v1511 = vpop.xlane.xlu0 %1510
        %v1512 = vsub.f32 %v1496, %v1502
        %v1513 = vsub.f32 %v1497, %v1505
        %v1514 = vsub.f32 %v1498, %v1508
        %v1515 = vsub.f32 %v1499, %v1511
        %v1516 = vmul.f32 %v1512, 1.442695
        %v1517 = vpow.pop %v1516
        %v1518 = vmul.f32 %v1513, 1.442695
        %v1519 = vpow.pop %v1518
        %v1520 = vmul.f32 %v1514, 1.442695
        %v1521 = vpow.pop %v1520
        %v1522 = vmul.f32 %v1515, 1.442695
        %v1523 = vpow.pop %v1522
        %v1524 = vsel %vm535, %v1517, 0.0
        %1525 = vadd.xlane.f32.xlu0 %v1524
        %v1526 = vpop.xlane.xlu0 %1525
        %v1527 = vsel %vm535, %v1519, 0.0
        %1528 = vadd.xlane.f32.xlu0 %v1527
        %v1529 = vpop.xlane.xlu0 %1528
        %v1530 = vsel %vm535, %v1521, 0.0
        %1531 = vadd.xlane.f32.xlu0 %v1530
        %v1532 = vpop.xlane.xlu0 %1531
        %v1533 = vsel %vm535, %v1523, 0.0
        %1534 = vadd.xlane.f32.xlu0 %v1533
        %v1535 = vpop.xlane.xlu0 %1534
        %v1536 = vrcp.pop %v1526
        %v1537 = vmul.f32 %v1517, %v1536
        %v1538 = vrcp.pop %v1529
        %v1539 = vmul.f32 %v1519, %v1538
        %v1540 = vrcp.pop %v1532
        %v1541 = vmul.f32 %v1521, %v1540
        %v1542 = vrcp.pop %v1535
        %v1543 = vmul.f32 %v1523, %v1542
        %v1544 = vpack.c.bf16 %v1539, %v1537
        %v1545 = vpack.c.bf16 %v1543, %v1541
        %1546 = vrot.lane.b32.xlu0 %v794, 96
        %v1547 = vpop.permute.xlu0 %1546
        %1548 = vrot.lane.b32.xlu0 %v796, 96
        %v1549 = vpop.permute.xlu0 %1548
        %v1553 = vsel %vm535, %v1544, 0
        %v1556 = vsel %vm535, %v1545, 0
        %1558 = vmatprep.subr.bf16.mxu0 0
        %1559 = vmatpush1.bf16.msra.mxu0 %v1547
        %1560 = vmatprep.subr.bf16.mxu0 0
        %1561 = vmatpush1.bf16.msra.mxu0 %v1549
        %1562 = vmatprep.subr.bf16.mxu0 0
        %1563 = vmatpush1.bf16.msra.mxu0 0
        %1564 = vmatprep.subr.bf16.mxu0 0
        %1565 = vmatpush1.bf16.msra.mxu0 0
        %1566 = vmatprep.subr.bf16.mxu0 0
        %1567 = vmatpush1.bf16.msra.mxu0 0
        %1568 = vmatprep.subr.bf16.mxu0 0
        %1569 = vmatpush1.bf16.msra.mxu0 0
        %1570 = vmatprep.subr.bf16.mxu0 0
        %1571 = vmatpush1.bf16.msra.mxu0 0
        %1572 = vmatprep.subr.bf16.mxu0 0
        %1573 = vmatpush1.bf16.msra.mxu0 0
        %1574 = vmatprep.subr.bf16.mxu0 0
        %1575 = vmatpush1.bf16.msra.mxu0 0
        %1576 = vmatprep.subr.bf16.mxu0 0
        %1577 = vmatpush1.bf16.msra.mxu0 0
        %1578 = vmatprep.subr.bf16.mxu0 0
        %1579 = vmatpush1.bf16.msra.mxu0 0
        %1580 = vmatprep.subr.bf16.mxu0 0
        %1581 = vmatpush1.bf16.msra.mxu0 0
        %1582 = vmatprep.subr.bf16.mxu0 0
        %1583 = vmatpush1.bf16.msra.mxu0 0
        %1584 = vmatprep.subr.bf16.mxu0 0
        %1585 = vmatpush1.bf16.msra.mxu0 0
        %1586 = vmatprep.subr.bf16.mxu0 0
        %1587 = vmatpush1.bf16.msra.mxu0 0
        %1588 = vmatprep.subr.bf16.mxu0 0
        %1589 = vmatpush1.bf16.msra.mxu0 0
        %1590 = vmatprep.mubr.bf16.mxu0 0
        %1591 = vmatmul.mubr.bf16.gmra.mrb[0].mxu0 %v1553
        %v1592 = vpop.f32.mrb[0].mxu0
        %v1593 = vadd.f32 0.0, %v1592
        %v1594 = vpop.f32.mrb[0].mxu0
        %v1595 = vpop.f32.mrb[0].mxu0
        %v1596 = vadd.f32 0.0, %v1595
        %v1597 = vpop.f32.mrb[0].mxu0
        %1598 = vmatprep.mubr.bf16.mxu0 0
        %1599 = vmatmul.mubr.bf16.gmra.mrb[0].mxu0 %v1556
        %v1600 = vpop.f32.mrb[0].mxu0
        %v1601 = vadd.f32 0.0, %v1600
        %v1602 = vpop.f32.mrb[0].mxu0
        %v1603 = vpop.f32.mrb[0].mxu0
        %v1604 = vadd.f32 0.0, %v1603
        %v1605 = vpop.f32.mrb[0].mxu0
        %1606 = vdwg.mxu0
        %v1607 = vpack.c.bf16 %v1596, %v1593
        %v1608 = vpack.c.bf16 %v1604, %v1601
        %v1611 = vunpack.c.l.b16 %v930
        %v1612 = vunpack.c.l.b16 %v931
        %v1613 = vpack.c.b16 %v1612, %v1611
        %v1616 = vsel %vm940, %v1607, 0
        %v1619 = vsel %vm940, %v1608, 0
        %1621 = vmatprep.subr.bf16.mxu0 0
        %1622 = vmatpush1.bf16.msra.mxu0 %v1613
        %1623 = vmatprep.subr.bf16.mxu0 0
        %1624 = vmatpush1.bf16.msra.mxu0 0
        %1625 = vmatprep.subr.bf16.mxu0 0
        %1626 = vmatpush1.bf16.msra.mxu0 0
        %1627 = vmatprep.subr.bf16.mxu0 0
        %1628 = vmatpush1.bf16.msra.mxu0 0
        %1629 = vmatprep.subr.bf16.mxu0 0
        %1630 = vmatpush1.bf16.msra.mxu0 0
        %1631 = vmatprep.subr.bf16.mxu0 0
        %1632 = vmatpush1.bf16.msra.mxu0 0
        %1633 = vmatprep.subr.bf16.mxu0 0
        %1634 = vmatpush1.bf16.msra.mxu0 0
        %1635 = vmatprep.subr.bf16.mxu0 0
        %1636 = vmatpush1.bf16.msra.mxu0 0
        %1637 = vmatprep.subr.bf16.mxu0 0
        %1638 = vmatpush1.bf16.msra.mxu0 0
        %1639 = vmatprep.subr.bf16.mxu0 0
        %1640 = vmatpush1.bf16.msra.mxu0 0
        %1641 = vmatprep.subr.bf16.mxu0 0
        %1642 = vmatpush1.bf16.msra.mxu0 0
        %1643 = vmatprep.subr.bf16.mxu0 0
        %1644 = vmatpush1.bf16.msra.mxu0 0
        %1645 = vmatprep.subr.bf16.mxu0 0
        %1646 = vmatpush1.bf16.msra.mxu0 0
        %1647 = vmatprep.subr.bf16.mxu0 0
        %1648 = vmatpush1.bf16.msra.mxu0 0
        %1649 = vmatprep.subr.bf16.mxu0 0
        %1650 = vmatpush1.bf16.msra.mxu0 0
        %1651 = vmatprep.subr.bf16.mxu0 0
        %1652 = vmatpush1.bf16.msra.mxu0 0
        %1653 = vmatprep.mubr.bf16.mxu0 0
        %1654 = vmatmul.mubr.bf16.gmra.mrb[0].mxu0 %v1616
        %v1655 = vpop.f32.mrb[0].mxu0
        %v1656 = vadd.f32 0.0, %v1655
        %v1657 = vpop.f32.mrb[0].mxu0
        %v1658 = vpop.f32.mrb[0].mxu0
        %v1659 = vadd.f32 0.0, %v1658
        %v1660 = vpop.f32.mrb[0].mxu0
        %1661 = vmatprep.mubr.bf16.mxu0 0
        %1662 = vmatmul.mubr.bf16.gmra.mrb[0].mxu0 %v1619
        %v1663 = vpop.f32.mrb[0].mxu0
        %v1664 = vadd.f32 0.0, %v1663
        %v1665 = vpop.f32.mrb[0].mxu0
        %v1666 = vpop.f32.mrb[0].mxu0
        %v1667 = vadd.f32 0.0, %v1666
        %v1668 = vpop.f32.mrb[0].mxu0
        %1669 = vdwg.mxu0
        %v1670 = vadd.f32 %v1409, %v1656
        %v1671 = vadd.f32 %v1412, %v1659
        %v1672 = vadd.f32 %v1417, %v1664
        %v1673 = vadd.f32 %v1420, %v1667
        %1674 = vrot.lane.b32.xlu0 %v793, 80
        %v1675 = vpop.permute.xlu0 %1674
        %1676 = vrot.lane.b32.xlu0 %v795, 80
        %v1677 = vpop.permute.xlu0 %1676
        %1678 = vrot.lane.b32.xlu0 %v793, 16
        %v1679 = vpop.permute.xlu0 %1678
        %1680 = vrot.lane.b32.xlu0 %v795, 16
        %v1681 = vpop.permute.xlu0 %1680
        %v1683 = vsel %vm940, %v1675, 0
        %v1686 = vsel %vm940, %v1677, 0
        %v1689 = vsel %vm940, %v1679, 0
        %v1692 = vsel %vm940, %v1681, 0
        %1694 = vmatprep.subr.bf16.mxu0 0
        %1695 = vmatpush1.bf16.xpose.msra.mxu0 %v1689
        %1696 = vmatprep.subr.bf16.mxu0 0
        %1697 = vmatpush1.bf16.xpose.msra.mxu0 %v1692
        %1698 = vmatprep.subr.bf16.mxu0 0
        %1699 = vmatpush1.bf16.xpose.msra.mxu0 0
        %1700 = vmatprep.subr.bf16.mxu0 0
        %1701 = vmatpush1.bf16.xpose.msra.mxu0 0
        %1702 = vmatprep.subr.bf16.mxu0 0
        %1703 = vmatpush1.bf16.xpose.msra.mxu0 0
        %1704 = vmatprep.subr.bf16.mxu0 0
        %1705 = vmatpush1.bf16.xpose.msra.mxu0 0
        %1706 = vmatprep.subr.bf16.mxu0 0
        %1707 = vmatpush1.bf16.xpose.msra.mxu0 0
        %1708 = vmatprep.subr.bf16.mxu0 0
        %1709 = vmatpush1.bf16.xpose.msra.mxu0 0
        %1710 = vmatprep.subr.bf16.mxu0 0
        %1711 = vmatpush1.bf16.xpose.msra.mxu0 0
        %1712 = vmatprep.subr.bf16.mxu0 0
        %1713 = vmatpush1.bf16.xpose.msra.mxu0 0
        %1714 = vmatprep.subr.bf16.mxu0 0
        %1715 = vmatpush1.bf16.xpose.msra.mxu0 0
        %1716 = vmatprep.subr.bf16.mxu0 0
        %1717 = vmatpush1.bf16.xpose.msra.mxu0 0
        %1718 = vmatprep.subr.bf16.mxu0 0
        %1719 = vmatpush1.bf16.xpose.msra.mxu0 0
        %1720 = vmatprep.subr.bf16.mxu0 0
        %1721 = vmatpush1.bf16.xpose.msra.mxu0 0
        %1722 = vmatprep.subr.bf16.mxu0 0
        %1723 = vmatpush1.bf16.xpose.msra.mxu0 0
        %1724 = vmatprep.subr.bf16.mxu0 0
        %1725 = vmatpush1.bf16.xpose.msra.mxu0 0
        %1726 = vmatprep.mubr.bf16.mxu0 0
        %1727 = vmatmul.mubr.bf16.gmra.mrb[0].mxu0 %v1683
        %v1728 = vpop.f32.mrb[0].mxu0
        %v1729 = vadd.f32 0.0, %v1728
        %v1730 = vpop.f32.mrb[0].mxu0
        %v1731 = vpop.f32.mrb[0].mxu0
        %v1732 = vadd.f32 0.0, %v1731
        %v1733 = vpop.f32.mrb[0].mxu0
        %1734 = vmatprep.mubr.bf16.mxu0 0
        %1735 = vmatmul.mubr.bf16.gmra.mrb[0].mxu0 %v1686
        %v1736 = vpop.f32.mrb[0].mxu0
        %v1737 = vadd.f32 0.0, %v1736
        %v1738 = vpop.f32.mrb[0].mxu0
        %v1739 = vpop.f32.mrb[0].mxu0
        %v1740 = vadd.f32 0.0, %v1739
        %v1741 = vpop.f32.mrb[0].mxu0
        %1742 = vdwg.mxu0
        %v1743 = vmul.f32 %v1729, 0.25
        %v1744 = vmul.f32 %v1732, 0.25
        %v1745 = vmul.f32 %v1737, 0.25
        %v1746 = vmul.f32 %v1740, 0.25
        %v1747 = vadd.f32 %v1743, %v508
        %v1748 = vadd.f32 %v1744, %v509
        %v1749 = vadd.f32 %v1745, %v510
        %v1750 = vadd.f32 %v1746, %v511
        %v1751 = vsel %vm535, %v1747, -inf
        %1752 = vmax.xlane.f32.xlu0 %v1751
        %v1753 = vpop.xlane.xlu0 %1752
        %v1754 = vsel %vm535, %v1748, -inf
        %1755 = vmax.xlane.f32.xlu0 %v1754
        %v1756 = vpop.xlane.xlu0 %1755
        %v1757 = vsel %vm535, %v1749, -inf
        %1758 = vmax.xlane.f32.xlu0 %v1757
        %v1759 = vpop.xlane.xlu0 %1758
        %v1760 = vsel %vm535, %v1750, -inf
        %1761 = vmax.xlane.f32.xlu0 %v1760
        %v1762 = vpop.xlane.xlu0 %1761
        %v1763 = vsub.f32 %v1747, %v1753
        %v1764 = vsub.f32 %v1748, %v1756
        %v1765 = vsub.f32 %v1749, %v1759
        %v1766 = vsub.f32 %v1750, %v1762
        %v1767 = vmul.f32 %v1763, 1.442695
        %v1768 = vpow.pop %v1767
        %v1769 = vmul.f32 %v1764, 1.442695
        %v1770 = vpow.pop %v1769
        %v1771 = vmul.f32 %v1765, 1.442695
        %v1772 = vpow.pop %v1771
        %v1773 = vmul.f32 %v1766, 1.442695
        %v1774 = vpow.pop %v1773
        %v1775 = vsel %vm535, %v1768, 0.0
        %1776 = vadd.xlane.f32.xlu0 %v1775
        %v1777 = vpop.xlane.xlu0 %1776
        %v1778 = vsel %vm535, %v1770, 0.0
        %1779 = vadd.xlane.f32.xlu0 %v1778
        %v1780 = vpop.xlane.xlu0 %1779
        %v1781 = vsel %vm535, %v1772, 0.0
        %1782 = vadd.xlane.f32.xlu0 %v1781
        %v1783 = vpop.xlane.xlu0 %1782
        %v1784 = vsel %vm535, %v1774, 0.0
        %1785 = vadd.xlane.f32.xlu0 %v1784
        %v1786 = vpop.xlane.xlu0 %1785
        %v1787 = vrcp.pop %v1777
        %v1788 = vmul.f32 %v1768, %v1787
        %v1789 = vrcp.pop %v1780
        %v1790 = vmul.f32 %v1770, %v1789
        %v1791 = vrcp.pop %v1783
        %v1792 = vmul.f32 %v1772, %v1791
        %v1793 = vrcp.pop %v1786
        %v1794 = vmul.f32 %v1774, %v1793
        %v1795 = vpack.c.bf16 %v1790, %v1788
        %v1796 = vpack.c.bf16 %v1794, %v1792
        %1797 = vrot.lane.b32.xlu0 %v794, 80
        %v1798 = vpop.permute.xlu0 %1797
        %1799 = vrot.lane.b32.xlu0 %v796, 80
        %v1800 = vpop.permute.xlu0 %1799
        %v1804 = vsel %vm535, %v1795, 0
        %v1807 = vsel %vm535, %v1796, 0
        %1809 = vmatprep.subr.bf16.mxu0 0
        %1810 = vmatpush1.bf16.msra.mxu0 %v1798
        %1811 = vmatprep.subr.bf16.mxu0 0
        %1812 = vmatpush1.bf16.msra.mxu0 %v1800
        %1813 = vmatprep.subr.bf16.mxu0 0
        %1814 = vmatpush1.bf16.msra.mxu0 0
        %1815 = vmatprep.subr.bf16.mxu0 0
        %1816 = vmatpush1.bf16.msra.mxu0 0
        %1817 = vmatprep.subr.bf16.mxu0 0
        %1818 = vmatpush1.bf16.msra.mxu0 0
        %1819 = vmatprep.subr.bf16.mxu0 0
        %1820 = vmatpush1.bf16.msra.mxu0 0
        %1821 = vmatprep.subr.bf16.mxu0 0
        %1822 = vmatpush1.bf16.msra.mxu0 0
        %1823 = vmatprep.subr.bf16.mxu0 0
        %1824 = vmatpush1.bf16.msra.mxu0 0
        %1825 = vmatprep.subr.bf16.mxu0 0
        %1826 = vmatpush1.bf16.msra.mxu0 0
        %1827 = vmatprep.subr.bf16.mxu0 0
        %1828 = vmatpush1.bf16.msra.mxu0 0
        %1829 = vmatprep.subr.bf16.mxu0 0
        %1830 = vmatpush1.bf16.msra.mxu0 0
        %1831 = vmatprep.subr.bf16.mxu0 0
        %1832 = vmatpush1.bf16.msra.mxu0 0
        %1833 = vmatprep.subr.bf16.mxu0 0
        %1834 = vmatpush1.bf16.msra.mxu0 0
        %1835 = vmatprep.subr.bf16.mxu0 0
        %1836 = vmatpush1.bf16.msra.mxu0 0
        %1837 = vmatprep.subr.bf16.mxu0 0
        %1838 = vmatpush1.bf16.msra.mxu0 0
        %1839 = vmatprep.subr.bf16.mxu0 0
        %1840 = vmatpush1.bf16.msra.mxu0 0
        %1841 = vmatprep.mubr.bf16.mxu0 0
        %1842 = vmatmul.mubr.bf16.gmra.mrb[0].mxu0 %v1804
        %v1843 = vpop.f32.mrb[0].mxu0
        %v1844 = vadd.f32 0.0, %v1843
        %v1845 = vpop.f32.mrb[0].mxu0
        %v1846 = vpop.f32.mrb[0].mxu0
        %v1847 = vadd.f32 0.0, %v1846
        %v1848 = vpop.f32.mrb[0].mxu0
        %1849 = vmatprep.mubr.bf16.mxu0 0
        %1850 = vmatmul.mubr.bf16.gmra.mrb[0].mxu0 %v1807
        %v1851 = vpop.f32.mrb[0].mxu0
        %v1852 = vadd.f32 0.0, %v1851
        %v1853 = vpop.f32.mrb[0].mxu0
        %v1854 = vpop.f32.mrb[0].mxu0
        %v1855 = vadd.f32 0.0, %v1854
        %v1856 = vpop.f32.mrb[0].mxu0
        %1857 = vdwg.mxu0
        %v1858 = vpack.c.bf16 %v1847, %v1844
        %v1859 = vpack.c.bf16 %v1855, %v1852
        %v1862 = vunpack.c.l.b16 %v932
        %v1863 = vunpack.c.l.b16 %v933
        %v1864 = vpack.c.b16 %v1863, %v1862
        %v1867 = vsel %vm940, %v1858, 0
        %v1870 = vsel %vm940, %v1859, 0
        %1872 = vmatprep.subr.bf16.mxu0 0
        %1873 = vmatpush1.bf16.msra.mxu0 %v1864
        %1874 = vmatprep.subr.bf16.mxu0 0
        %1875 = vmatpush1.bf16.msra.mxu0 0
        %1876 = vmatprep.subr.bf16.mxu0 0
        %1877 = vmatpush1.bf16.msra.mxu0 0
        %1878 = vmatprep.subr.bf16.mxu0 0
        %1879 = vmatpush1.bf16.msra.mxu0 0
        %1880 = vmatprep.subr.bf16.mxu0 0
        %1881 = vmatpush1.bf16.msra.mxu0 0
        %1882 = vmatprep.subr.bf16.mxu0 0
        %1883 = vmatpush1.bf16.msra.mxu0 0
        %1884 = vmatprep.subr.bf16.mxu0 0
        %1885 = vmatpush1.bf16.msra.mxu0 0
        %1886 = vmatprep.subr.bf16.mxu0 0
        %1887 = vmatpush1.bf16.msra.mxu0 0
        %1888 = vmatprep.subr.bf16.mxu0 0
        %1889 = vmatpush1.bf16.msra.mxu0 0
        %1890 = vmatprep.subr.bf16.mxu0 0
        %1891 = vmatpush1.bf16.msra.mxu0 0
        %1892 = vmatprep.subr.bf16.mxu0 0
        %1893 = vmatpush1.bf16.msra.mxu0 0
        %1894 = vmatprep.subr.bf16.mxu0 0
        %1895 = vmatpush1.bf16.msra.mxu0 0
        %1896 = vmatprep.subr.bf16.mxu0 0
        %1897 = vmatpush1.bf16.msra.mxu0 0
        %1898 = vmatprep.subr.bf16.mxu0 0
        %1899 = vmatpush1.bf16.msra.mxu0 0
        %1900 = vmatprep.subr.bf16.mxu0 0
        %1901 = vmatpush1.bf16.msra.mxu0 0
        %1902 = vmatprep.subr.bf16.mxu0 0
        %1903 = vmatpush1.bf16.msra.mxu0 0
        %1904 = vmatprep.mubr.bf16.mxu0 0
        %1905 = vmatmul.mubr.bf16.gmra.mrb[0].mxu0 %v1867
        %v1906 = vpop.f32.mrb[0].mxu0
        %v1907 = vadd.f32 0.0, %v1906
        %v1908 = vpop.f32.mrb[0].mxu0
        %v1909 = vpop.f32.mrb[0].mxu0
        %v1910 = vadd.f32 0.0, %v1909
        %v1911 = vpop.f32.mrb[0].mxu0
        %1912 = vmatprep.mubr.bf16.mxu0 0
        %1913 = vmatmul.mubr.bf16.gmra.mrb[0].mxu0 %v1870
        %v1914 = vpop.f32.mrb[0].mxu0
        %v1915 = vadd.f32 0.0, %v1914
        %v1916 = vpop.f32.mrb[0].mxu0
        %v1917 = vpop.f32.mrb[0].mxu0
        %v1918 = vadd.f32 0.0, %v1917
        %v1919 = vpop.f32.mrb[0].mxu0
        %1920 = vdwg.mxu0
        %v1921 = vadd.f32 %v1670, %v1907
        %v1922 = vadd.f32 %v1671, %v1910
        %v1923 = vadd.f32 %v1672, %v1915
        %v1924 = vadd.f32 %v1673, %v1918
        %v1925 = vld [vmem:[%s13] sm:$0xf]
        %v1926 = vld [vmem:[%s13 + $0x4] sm:$0xf]
        %v1927 = vld [vmem:[%s13 + $0x8] sm:$0xf]
        %v1928 = vld [vmem:[%s13 + $0xc] sm:$0xf]
        %v1929 = vld [vmem:[%s13 + $0x10] sm:$0xf]
        %v1930 = vld [vmem:[%s13 + $0x14] sm:$0xf]
        %v1931 = vld [vmem:[%s13 + $0x18] sm:$0xf]
        %v1932 = vld [vmem:[%s13 + $0x1c] sm:$0xf]
        %1935 = vrot.lane.b32.xlu0 %v922, 64
        %v1936 = vpop.permute.xlu0 %1935
        %1937 = vrot.lane.b32.xlu0 %v924, 64
        %v1938 = vpop.permute.xlu0 %1937
        %v1940 = vsel %vm940, %v922, 0
        %v1943 = vsel %vm940, %v924, 0
        %v1946 = vsel %vm940, %v1936, 0
        %v1949 = vsel %vm940, %v1938, 0
        %1951 = vmatprep.subr.bf16.mxu0 0
        %1952 = vmatpush1.bf16.xpose.msra.mxu0 %v1946
        %1953 = vmatprep.subr.bf16.mxu0 0
        %1954 = vmatpush1.bf16.xpose.msra.mxu0 %v1949
        %1955 = vmatprep.subr.bf16.mxu0 0
        %1956 = vmatpush1.bf16.xpose.msra.mxu0 0
        %1957 = vmatprep.subr.bf16.mxu0 0
        %1958 = vmatpush1.bf16.xpose.msra.mxu0 0
        %1959 = vmatprep.subr.bf16.mxu0 0
        %1960 = vmatpush1.bf16.xpose.msra.mxu0 0
        %1961 = vmatprep.subr.bf16.mxu0 0
        %1962 = vmatpush1.bf16.xpose.msra.mxu0 0
        %1963 = vmatprep.subr.bf16.mxu0 0
        %1964 = vmatpush1.bf16.xpose.msra.mxu0 0
        %1965 = vmatprep.subr.bf16.mxu0 0
        %1966 = vmatpush1.bf16.xpose.msra.mxu0 0
        %1967 = vmatprep.subr.bf16.mxu0 0
        %1968 = vmatpush1.bf16.xpose.msra.mxu0 0
        %1969 = vmatprep.subr.bf16.mxu0 0
        %1970 = vmatpush1.bf16.xpose.msra.mxu0 0
        %1971 = vmatprep.subr.bf16.mxu0 0
        %1972 = vmatpush1.bf16.xpose.msra.mxu0 0
        %1973 = vmatprep.subr.bf16.mxu0 0
        %1974 = vmatpush1.bf16.xpose.msra.mxu0 0
        %1975 = vmatprep.subr.bf16.mxu0 0
        %1976 = vmatpush1.bf16.xpose.msra.mxu0 0
        %1977 = vmatprep.subr.bf16.mxu0 0
        %1978 = vmatpush1.bf16.xpose.msra.mxu0 0
        %1979 = vmatprep.subr.bf16.mxu0 0
        %1980 = vmatpush1.bf16.xpose.msra.mxu0 0
        %1981 = vmatprep.subr.bf16.mxu0 0
        %1982 = vmatpush1.bf16.xpose.msra.mxu0 0
        %1983 = vmatprep.mubr.bf16.mxu0 0
        %1984 = vmatmul.mubr.bf16.gmra.mrb[0].mxu0 %v1940
        %v1985 = vpop.f32.mrb[0].mxu0
        %v1986 = vadd.f32 0.0, %v1985
        %v1987 = vpop.f32.mrb[0].mxu0
        %v1988 = vpop.f32.mrb[0].mxu0
        %v1989 = vadd.f32 0.0, %v1988
        %v1990 = vpop.f32.mrb[0].mxu0
        %1991 = vmatprep.mubr.bf16.mxu0 0
        %1992 = vmatmul.mubr.bf16.gmra.mrb[0].mxu0 %v1943
        %v1993 = vpop.f32.mrb[0].mxu0
        %v1994 = vadd.f32 0.0, %v1993
        %v1995 = vpop.f32.mrb[0].mxu0
        %v1996 = vpop.f32.mrb[0].mxu0
        %v1997 = vadd.f32 0.0, %v1996
        %v1998 = vpop.f32.mrb[0].mxu0
        %1999 = vdwg.mxu0
        %v2000 = vmul.f32 %v1986, 0.25
        %v2001 = vmul.f32 %v1989, 0.25
        %v2002 = vmul.f32 %v1994, 0.25
        %v2003 = vmul.f32 %v1997, 0.25
        %v2004 = vadd.f32 %v2000, %v512
        %v2005 = vadd.f32 %v2001, %v513
        %v2006 = vadd.f32 %v2002, %v514
        %v2007 = vadd.f32 %v2003, %v515
        %v2008 = vsel %vm535, %v2004, -inf
        %2009 = vmax.xlane.f32.xlu0 %v2008
        %v2010 = vpop.xlane.xlu0 %2009
        %v2011 = vsel %vm535, %v2005, -inf
        %2012 = vmax.xlane.f32.xlu0 %v2011
        %v2013 = vpop.xlane.xlu0 %2012
        %v2014 = vsel %vm535, %v2006, -inf
        %2015 = vmax.xlane.f32.xlu0 %v2014
        %v2016 = vpop.xlane.xlu0 %2015
        %v2017 = vsel %vm535, %v2007, -inf
        %2018 = vmax.xlane.f32.xlu0 %v2017
        %v2019 = vpop.xlane.xlu0 %2018
        %v2020 = vsub.f32 %v2004, %v2010
        %v2021 = vsub.f32 %v2005, %v2013
        %v2022 = vsub.f32 %v2006, %v2016
        %v2023 = vsub.f32 %v2007, %v2019
        %v2024 = vmul.f32 %v2020, 1.442695
        %v2025 = vpow.pop %v2024
        %v2026 = vmul.f32 %v2021, 1.442695
        %v2027 = vpow.pop %v2026
        %v2028 = vmul.f32 %v2022, 1.442695
        %v2029 = vpow.pop %v2028
        %v2030 = vmul.f32 %v2023, 1.442695
        %v2031 = vpow.pop %v2030
        %v2032 = vsel %vm535, %v2025, 0.0
        %2033 = vadd.xlane.f32.xlu0 %v2032
        %v2034 = vpop.xlane.xlu0 %2033
        %v2035 = vsel %vm535, %v2027, 0.0
        %2036 = vadd.xlane.f32.xlu0 %v2035
        %v2037 = vpop.xlane.xlu0 %2036
        %v2038 = vsel %vm535, %v2029, 0.0
        %2039 = vadd.xlane.f32.xlu0 %v2038
        %v2040 = vpop.xlane.xlu0 %2039
        %v2041 = vsel %vm535, %v2031, 0.0
        %2042 = vadd.xlane.f32.xlu0 %v2041
        %v2043 = vpop.xlane.xlu0 %2042
        %v2044 = vrcp.pop %v2034
        %v2045 = vmul.f32 %v2025, %v2044
        %v2046 = vrcp.pop %v2037
        %v2047 = vmul.f32 %v2027, %v2046
        %v2048 = vrcp.pop %v2040
        %v2049 = vmul.f32 %v2029, %v2048
        %v2050 = vrcp.pop %v2043
        %v2051 = vmul.f32 %v2031, %v2050
        %v2052 = vpack.c.bf16 %v2047, %v2045
        %v2053 = vpack.c.bf16 %v2051, %v2049
        %v2055 = vsel %vm535, %v2052, 0
        %v2058 = vsel %vm535, %v2053, 0
        %2060 = vmatprep.subr.bf16.mxu0 0
        %2061 = vmatpush1.bf16.msra.mxu0 %v923
        %2062 = vmatprep.subr.bf16.mxu0 0
        %2063 = vmatpush1.bf16.msra.mxu0 %v925
        %2064 = vmatprep.subr.bf16.mxu0 0
        %2065 = vmatpush1.bf16.msra.mxu0 0
        %2066 = vmatprep.subr.bf16.mxu0 0
        %2067 = vmatpush1.bf16.msra.mxu0 0
        %2068 = vmatprep.subr.bf16.mxu0 0
        %2069 = vmatpush1.bf16.msra.mxu0 0
        %2070 = vmatprep.subr.bf16.mxu0 0
        %2071 = vmatpush1.bf16.msra.mxu0 0
        %2072 = vmatprep.subr.bf16.mxu0 0
        %2073 = vmatpush1.bf16.msra.mxu0 0
        %2074 = vmatprep.subr.bf16.mxu0 0
        %2075 = vmatpush1.bf16.msra.mxu0 0
        %2076 = vmatprep.subr.bf16.mxu0 0
        %2077 = vmatpush1.bf16.msra.mxu0 0
        %2078 = vmatprep.subr.bf16.mxu0 0
        %2079 = vmatpush1.bf16.msra.mxu0 0
        %2080 = vmatprep.subr.bf16.mxu0 0
        %2081 = vmatpush1.bf16.msra.mxu0 0
        %2082 = vmatprep.subr.bf16.mxu0 0
        %2083 = vmatpush1.bf16.msra.mxu0 0
        %2084 = vmatprep.subr.bf16.mxu0 0
        %2085 = vmatpush1.bf16.msra.mxu0 0
        %2086 = vmatprep.subr.bf16.mxu0 0
        %2087 = vmatpush1.bf16.msra.mxu0 0
        %2088 = vmatprep.subr.bf16.mxu0 0
        %2089 = vmatpush1.bf16.msra.mxu0 0
        %2090 = vmatprep.subr.bf16.mxu0 0
        %2091 = vmatpush1.bf16.msra.mxu0 0
        %2092 = vmatprep.mubr.bf16.mxu0 0
        %2093 = vmatmul.mubr.bf16.gmra.mrb[0].mxu0 %v2055
        %v2094 = vpop.f32.mrb[0].mxu0
        %v2095 = vadd.f32 0.0, %v2094
        %v2096 = vpop.f32.mrb[0].mxu0
        %v2097 = vpop.f32.mrb[0].mxu0
        %v2098 = vadd.f32 0.0, %v2097
        %v2099 = vpop.f32.mrb[0].mxu0
        %2100 = vmatprep.mubr.bf16.mxu0 0
        %2101 = vmatmul.mubr.bf16.gmra.mrb[0].mxu0 %v2058
        %v2102 = vpop.f32.mrb[0].mxu0
        %v2103 = vadd.f32 0.0, %v2102
        %v2104 = vpop.f32.mrb[0].mxu0
        %v2105 = vpop.f32.mrb[0].mxu0
        %v2106 = vadd.f32 0.0, %v2105
        %v2107 = vpop.f32.mrb[0].mxu0
        %2108 = vdwg.mxu0
        %v2109 = vpack.c.bf16 %v2098, %v2095
        %v2110 = vpack.c.bf16 %v2106, %v2103
        %v2113 = vunpack.c.l.b16 %v1925
        %v2114 = vunpack.c.l.b16 %v1926
        %v2115 = vpack.c.b16 %v2114, %v2113
        %v2118 = vsel %vm940, %v2109, 0
        %v2121 = vsel %vm940, %v2110, 0
        %2123 = vmatprep.subr.bf16.mxu0 0
        %2124 = vmatpush1.bf16.msra.mxu0 %v2115
        %2125 = vmatprep.subr.bf16.mxu0 0
        %2126 = vmatpush1.bf16.msra.mxu0 0
        %2127 = vmatprep.subr.bf16.mxu0 0
        %2128 = vmatpush1.bf16.msra.mxu0 0
        %2129 = vmatprep.subr.bf16.mxu0 0
        %2130 = vmatpush1.bf16.msra.mxu0 0
        %2131 = vmatprep.subr.bf16.mxu0 0
        %2132 = vmatpush1.bf16.msra.mxu0 0
        %2133 = vmatprep.subr.bf16.mxu0 0
        %2134 = vmatpush1.bf16.msra.mxu0 0
        %2135 = vmatprep.subr.bf16.mxu0 0
        %2136 = vmatpush1.bf16.msra.mxu0 0
        %2137 = vmatprep.subr.bf16.mxu0 0
        %2138 = vmatpush1.bf16.msra.mxu0 0
        %2139 = vmatprep.subr.bf16.mxu0 0
        %2140 = vmatpush1.bf16.msra.mxu0 0
        %2141 = vmatprep.subr.bf16.mxu0 0
        %2142 = vmatpush1.bf16.msra.mxu0 0
        %2143 = vmatprep.subr.bf16.mxu0 0
        %2144 = vmatpush1.bf16.msra.mxu0 0
        %2145 = vmatprep.subr.bf16.mxu0 0
        %2146 = vmatpush1.bf16.msra.mxu0 0
        %2147 = vmatprep.subr.bf16.mxu0 0
        %2148 = vmatpush1.bf16.msra.mxu0 0
        %2149 = vmatprep.subr.bf16.mxu0 0
        %2150 = vmatpush1.bf16.msra.mxu0 0
        %2151 = vmatprep.subr.bf16.mxu0 0
        %2152 = vmatpush1.bf16.msra.mxu0 0
        %2153 = vmatprep.subr.bf16.mxu0 0
        %2154 = vmatpush1.bf16.msra.mxu0 0
        %2155 = vmatprep.mubr.bf16.mxu0 0
        %2156 = vmatmul.mubr.bf16.gmra.mrb[0].mxu0 %v2118
        %v2157 = vpop.f32.mrb[0].mxu0
        %v2158 = vadd.f32 0.0, %v2157
        %v2159 = vpop.f32.mrb[0].mxu0
        %v2160 = vpop.f32.mrb[0].mxu0
        %v2161 = vadd.f32 0.0, %v2160
        %v2162 = vpop.f32.mrb[0].mxu0
        %2163 = vmatprep.mubr.bf16.mxu0 0
        %2164 = vmatmul.mubr.bf16.gmra.mrb[0].mxu0 %v2121
        %v2165 = vpop.f32.mrb[0].mxu0
        %v2166 = vadd.f32 0.0, %v2165
        %v2167 = vpop.f32.mrb[0].mxu0
        %v2168 = vpop.f32.mrb[0].mxu0
        %v2169 = vadd.f32 0.0, %v2168
        %v2170 = vpop.f32.mrb[0].mxu0
        %2171 = vdwg.mxu0
        %v2172 = vadd.f32 %v1921, %v2158
        %v2173 = vadd.f32 %v1922, %v2161
        %v2174 = vadd.f32 %v1923, %v2166
        %v2175 = vadd.f32 %v1924, %v2169
        %2176 = vrot.lane.b32.xlu0 %v922, 112
        %v2177 = vpop.permute.xlu0 %2176
        %2178 = vrot.lane.b32.xlu0 %v924, 112
        %v2179 = vpop.permute.xlu0 %2178
        %2180 = vrot.lane.b32.xlu0 %v922, 48
        %v2181 = vpop.permute.xlu0 %2180
        %2182 = vrot.lane.b32.xlu0 %v924, 48
        %v2183 = vpop.permute.xlu0 %2182
        %v2185 = vsel %vm940, %v2177, 0
        %v2188 = vsel %vm940, %v2179, 0
        %v2191 = vsel %vm940, %v2181, 0
        %v2194 = vsel %vm940, %v2183, 0
        %2196 = vmatprep.subr.bf16.mxu0 0
        %2197 = vmatpush1.bf16.xpose.msra.mxu0 %v2191
        %2198 = vmatprep.subr.bf16.mxu0 0
        %2199 = vmatpush1.bf16.xpose.msra.mxu0 %v2194
        %2200 = vmatprep.subr.bf16.mxu0 0
        %2201 = vmatpush1.bf16.xpose.msra.mxu0 0
        %2202 = vmatprep.subr.bf16.mxu0 0
        %2203 = vmatpush1.bf16.xpose.msra.mxu0 0
        %2204 = vmatprep.subr.bf16.mxu0 0
        %2205 = vmatpush1.bf16.xpose.msra.mxu0 0
        %2206 = vmatprep.subr.bf16.mxu0 0
        %2207 = vmatpush1.bf16.xpose.msra.mxu0 0
        %2208 = vmatprep.subr.bf16.mxu0 0
        %2209 = vmatpush1.bf16.xpose.msra.mxu0 0
        %2210 = vmatprep.subr.bf16.mxu0 0
        %2211 = vmatpush1.bf16.xpose.msra.mxu0 0
        %2212 = vmatprep.subr.bf16.mxu0 0
        %2213 = vmatpush1.bf16.xpose.msra.mxu0 0
        %2214 = vmatprep.subr.bf16.mxu0 0
        %2215 = vmatpush1.bf16.xpose.msra.mxu0 0
        %2216 = vmatprep.subr.bf16.mxu0 0
        %2217 = vmatpush1.bf16.xpose.msra.mxu0 0
        %2218 = vmatprep.subr.bf16.mxu0 0
        %2219 = vmatpush1.bf16.xpose.msra.mxu0 0
        %2220 = vmatprep.subr.bf16.mxu0 0
        %2221 = vmatpush1.bf16.xpose.msra.mxu0 0
        %2222 = vmatprep.subr.bf16.mxu0 0
        %2223 = vmatpush1.bf16.xpose.msra.mxu0 0
        %2224 = vmatprep.subr.bf16.mxu0 0
        %2225 = vmatpush1.bf16.xpose.msra.mxu0 0
        %2226 = vmatprep.subr.bf16.mxu0 0
        %2227 = vmatpush1.bf16.xpose.msra.mxu0 0
        %2228 = vmatprep.mubr.bf16.mxu0 0
        %2229 = vmatmul.mubr.bf16.gmra.mrb[0].mxu0 %v2185
        %v2230 = vpop.f32.mrb[0].mxu0
        %v2231 = vadd.f32 0.0, %v2230
        %v2232 = vpop.f32.mrb[0].mxu0
        %v2233 = vpop.f32.mrb[0].mxu0
        %v2234 = vadd.f32 0.0, %v2233
        %v2235 = vpop.f32.mrb[0].mxu0
        %2236 = vmatprep.mubr.bf16.mxu0 0
        %2237 = vmatmul.mubr.bf16.gmra.mrb[0].mxu0 %v2188
        %v2238 = vpop.f32.mrb[0].mxu0
        %v2239 = vadd.f32 0.0, %v2238
        %v2240 = vpop.f32.mrb[0].mxu0
        %v2241 = vpop.f32.mrb[0].mxu0
        %v2242 = vadd.f32 0.0, %v2241
        %v2243 = vpop.f32.mrb[0].mxu0
        %2244 = vdwg.mxu0
        %v2245 = vmul.f32 %v2231, 0.25
        %v2246 = vmul.f32 %v2234, 0.25
        %v2247 = vmul.f32 %v2239, 0.25
        %v2248 = vmul.f32 %v2242, 0.25
        %v2249 = vadd.f32 %v2245, %v512
        %v2250 = vadd.f32 %v2246, %v513
        %v2251 = vadd.f32 %v2247, %v514
        %v2252 = vadd.f32 %v2248, %v515
        %v2253 = vsel %vm535, %v2249, -inf
        %2254 = vmax.xlane.f32.xlu0 %v2253
        %v2255 = vpop.xlane.xlu0 %2254
        %v2256 = vsel %vm535, %v2250, -inf
        %2257 = vmax.xlane.f32.xlu0 %v2256
        %v2258 = vpop.xlane.xlu0 %2257
        %v2259 = vsel %vm535, %v2251, -inf
        %2260 = vmax.xlane.f32.xlu0 %v2259
        %v2261 = vpop.xlane.xlu0 %2260
        %v2262 = vsel %vm535, %v2252, -inf
        %2263 = vmax.xlane.f32.xlu0 %v2262
        %v2264 = vpop.xlane.xlu0 %2263
        %v2265 = vsub.f32 %v2249, %v2255
        %v2266 = vsub.f32 %v2250, %v2258
        %v2267 = vsub.f32 %v2251, %v2261
        %v2268 = vsub.f32 %v2252, %v2264
        %v2269 = vmul.f32 %v2265, 1.442695
        %v2270 = vpow.pop %v2269
        %v2271 = vmul.f32 %v2266, 1.442695
        %v2272 = vpow.pop %v2271
        %v2273 = vmul.f32 %v2267, 1.442695
        %v2274 = vpow.pop %v2273
        %v2275 = vmul.f32 %v2268, 1.442695
        %v2276 = vpow.pop %v2275
        %v2277 = vsel %vm535, %v2270, 0.0
        %2278 = vadd.xlane.f32.xlu0 %v2277
        %v2279 = vpop.xlane.xlu0 %2278
        %v2280 = vsel %vm535, %v2272, 0.0
        %2281 = vadd.xlane.f32.xlu0 %v2280
        %v2282 = vpop.xlane.xlu0 %2281
        %v2283 = vsel %vm535, %v2274, 0.0
        %2284 = vadd.xlane.f32.xlu0 %v2283
        %v2285 = vpop.xlane.xlu0 %2284
        %v2286 = vsel %vm535, %v2276, 0.0
        %2287 = vadd.xlane.f32.xlu0 %v2286
        %v2288 = vpop.xlane.xlu0 %2287
        %v2289 = vrcp.pop %v2279
        %v2290 = vmul.f32 %v2270, %v2289
        %v2291 = vrcp.pop %v2282
        %v2292 = vmul.f32 %v2272, %v2291
        %v2293 = vrcp.pop %v2285
        %v2294 = vmul.f32 %v2274, %v2293
        %v2295 = vrcp.pop %v2288
        %v2296 = vmul.f32 %v2276, %v2295
        %v2297 = vpack.c.bf16 %v2292, %v2290
        %v2298 = vpack.c.bf16 %v2296, %v2294
        %2301 = vrot.lane.b32.xlu0 %v923, 112
        %v2302 = vpop.permute.xlu0 %2301
        %2303 = vrot.lane.b32.xlu0 %v925, 112
        %v2304 = vpop.permute.xlu0 %2303
        %v2308 = vsel %vm535, %v2297, 0
        %v2311 = vsel %vm535, %v2298, 0
        %2313 = vmatprep.subr.bf16.mxu0 0
        %2314 = vmatpush1.bf16.msra.mxu0 %v2302
        %2315 = vmatprep.subr.bf16.mxu0 0
        %2316 = vmatpush1.bf16.msra.mxu0 %v2304
        %2317 = vmatprep.subr.bf16.mxu0 0
        %2318 = vmatpush1.bf16.msra.mxu0 0
        %2319 = vmatprep.subr.bf16.mxu0 0
        %2320 = vmatpush1.bf16.msra.mxu0 0
        %2321 = vmatprep.subr.bf16.mxu0 0
        %2322 = vmatpush1.bf16.msra.mxu0 0
        %2323 = vmatprep.subr.bf16.mxu0 0
        %2324 = vmatpush1.bf16.msra.mxu0 0
        %2325 = vmatprep.subr.bf16.mxu0 0
        %2326 = vmatpush1.bf16.msra.mxu0 0
        %2327 = vmatprep.subr.bf16.mxu0 0
        %2328 = vmatpush1.bf16.msra.mxu0 0
        %2329 = vmatprep.subr.bf16.mxu0 0
        %2330 = vmatpush1.bf16.msra.mxu0 0
        %2331 = vmatprep.subr.bf16.mxu0 0
        %2332 = vmatpush1.bf16.msra.mxu0 0
        %2333 = vmatprep.subr.bf16.mxu0 0
        %2334 = vmatpush1.bf16.msra.mxu0 0
        %2335 = vmatprep.subr.bf16.mxu0 0
        %2336 = vmatpush1.bf16.msra.mxu0 0
        %2337 = vmatprep.subr.bf16.mxu0 0
        %2338 = vmatpush1.bf16.msra.mxu0 0
        %2339 = vmatprep.subr.bf16.mxu0 0
        %2340 = vmatpush1.bf16.msra.mxu0 0
        %2341 = vmatprep.subr.bf16.mxu0 0
        %2342 = vmatpush1.bf16.msra.mxu0 0
        %2343 = vmatprep.subr.bf16.mxu0 0
        %2344 = vmatpush1.bf16.msra.mxu0 0
        %2345 = vmatprep.mubr.bf16.mxu0 0
        %2346 = vmatmul.mubr.bf16.gmra.mrb[0].mxu0 %v2308
        %v2347 = vpop.f32.mrb[0].mxu0
        %v2348 = vadd.f32 0.0, %v2347
        %v2349 = vpop.f32.mrb[0].mxu0
        %v2350 = vpop.f32.mrb[0].mxu0
        %v2351 = vadd.f32 0.0, %v2350
        %v2352 = vpop.f32.mrb[0].mxu0
        %2353 = vmatprep.mubr.bf16.mxu0 0
        %2354 = vmatmul.mubr.bf16.gmra.mrb[0].mxu0 %v2311
        %v2355 = vpop.f32.mrb[0].mxu0
        %v2356 = vadd.f32 0.0, %v2355
        %v2357 = vpop.f32.mrb[0].mxu0
        %v2358 = vpop.f32.mrb[0].mxu0
        %v2359 = vadd.f32 0.0, %v2358
        %v2360 = vpop.f32.mrb[0].mxu0
        %2361 = vdwg.mxu0
        %v2362 = vpack.c.bf16 %v2351, %v2348
        %v2363 = vpack.c.bf16 %v2359, %v2356
        %v2366 = vunpack.c.l.b16 %v1927
        %v2367 = vunpack.c.l.b16 %v1928
        %v2368 = vpack.c.b16 %v2367, %v2366
        %v2371 = vsel %vm940, %v2362, 0
        %v2374 = vsel %vm940, %v2363, 0
        %2376 = vmatprep.subr.bf16.mxu0 0
        %2377 = vmatpush1.bf16.msra.mxu0 %v2368
        %2378 = vmatprep.subr.bf16.mxu0 0
        %2379 = vmatpush1.bf16.msra.mxu0 0
        %2380 = vmatprep.subr.bf16.mxu0 0
        %2381 = vmatpush1.bf16.msra.mxu0 0
        %2382 = vmatprep.subr.bf16.mxu0 0
        %2383 = vmatpush1.bf16.msra.mxu0 0
        %2384 = vmatprep.subr.bf16.mxu0 0
        %2385 = vmatpush1.bf16.msra.mxu0 0
        %2386 = vmatprep.subr.bf16.mxu0 0
        %2387 = vmatpush1.bf16.msra.mxu0 0
        %2388 = vmatprep.subr.bf16.mxu0 0
        %2389 = vmatpush1.bf16.msra.mxu0 0
        %2390 = vmatprep.subr.bf16.mxu0 0
        %2391 = vmatpush1.bf16.msra.mxu0 0
        %2392 = vmatprep.subr.bf16.mxu0 0
        %2393 = vmatpush1.bf16.msra.mxu0 0
        %2394 = vmatprep.subr.bf16.mxu0 0
        %2395 = vmatpush1.bf16.msra.mxu0 0
        %2396 = vmatprep.subr.bf16.mxu0 0
        %2397 = vmatpush1.bf16.msra.mxu0 0
        %2398 = vmatprep.subr.bf16.mxu0 0
        %2399 = vmatpush1.bf16.msra.mxu0 0
        %2400 = vmatprep.subr.bf16.mxu0 0
        %2401 = vmatpush1.bf16.msra.mxu0 0
        %2402 = vmatprep.subr.bf16.mxu0 0
        %2403 = vmatpush1.bf16.msra.mxu0 0
        %2404 = vmatprep.subr.bf16.mxu0 0
        %2405 = vmatpush1.bf16.msra.mxu0 0
        %2406 = vmatprep.subr.bf16.mxu0 0
        %2407 = vmatpush1.bf16.msra.mxu0 0
        %2408 = vmatprep.mubr.bf16.mxu0 0
        %2409 = vmatmul.mubr.bf16.gmra.mrb[0].mxu0 %v2371
        %v2410 = vpop.f32.mrb[0].mxu0
        %v2411 = vadd.f32 0.0, %v2410
        %v2412 = vpop.f32.mrb[0].mxu0
        %v2413 = vpop.f32.mrb[0].mxu0
        %v2414 = vadd.f32 0.0, %v2413
        %v2415 = vpop.f32.mrb[0].mxu0
        %2416 = vmatprep.mubr.bf16.mxu0 0
        %2417 = vmatmul.mubr.bf16.gmra.mrb[0].mxu0 %v2374
        %v2418 = vpop.f32.mrb[0].mxu0
        %v2419 = vadd.f32 0.0, %v2418
        %v2420 = vpop.f32.mrb[0].mxu0
        %v2421 = vpop.f32.mrb[0].mxu0
        %v2422 = vadd.f32 0.0, %v2421
        %v2423 = vpop.f32.mrb[0].mxu0
        %2424 = vdwg.mxu0
        %v2425 = vadd.f32 %v2172, %v2411
        %v2426 = vadd.f32 %v2173, %v2414
        %v2427 = vadd.f32 %v2174, %v2419
        %v2428 = vadd.f32 %v2175, %v2422
        %2429 = vrot.lane.b32.xlu0 %v922, 96
        %v2430 = vpop.permute.xlu0 %2429
        %2431 = vrot.lane.b32.xlu0 %v924, 96
        %v2432 = vpop.permute.xlu0 %2431
        %2433 = vrot.lane.b32.xlu0 %v922, 32
        %v2434 = vpop.permute.xlu0 %2433
        %2435 = vrot.lane.b32.xlu0 %v924, 32
        %v2436 = vpop.permute.xlu0 %2435
        %v2438 = vsel %vm940, %v2430, 0
        %v2441 = vsel %vm940, %v2432, 0
        %v2444 = vsel %vm940, %v2434, 0
        %v2447 = vsel %vm940, %v2436, 0
        %2449 = vmatprep.subr.bf16.mxu0 0
        %2450 = vmatpush1.bf16.xpose.msra.mxu0 %v2444
        %2451 = vmatprep.subr.bf16.mxu0 0
        %2452 = vmatpush1.bf16.xpose.msra.mxu0 %v2447
        %2453 = vmatprep.subr.bf16.mxu0 0
        %2454 = vmatpush1.bf16.xpose.msra.mxu0 0
        %2455 = vmatprep.subr.bf16.mxu0 0
        %2456 = vmatpush1.bf16.xpose.msra.mxu0 0
        %2457 = vmatprep.subr.bf16.mxu0 0
        %2458 = vmatpush1.bf16.xpose.msra.mxu0 0
        %2459 = vmatprep.subr.bf16.mxu0 0
        %2460 = vmatpush1.bf16.xpose.msra.mxu0 0
        %2461 = vmatprep.subr.bf16.mxu0 0
        %2462 = vmatpush1.bf16.xpose.msra.mxu0 0
        %2463 = vmatprep.subr.bf16.mxu0 0
        %2464 = vmatpush1.bf16.xpose.msra.mxu0 0
        %2465 = vmatprep.subr.bf16.mxu0 0
        %2466 = vmatpush1.bf16.xpose.msra.mxu0 0
        %2467 = vmatprep.subr.bf16.mxu0 0
        %2468 = vmatpush1.bf16.xpose.msra.mxu0 0
        %2469 = vmatprep.subr.bf16.mxu0 0
        %2470 = vmatpush1.bf16.xpose.msra.mxu0 0
        %2471 = vmatprep.subr.bf16.mxu0 0
        %2472 = vmatpush1.bf16.xpose.msra.mxu0 0
        %2473 = vmatprep.subr.bf16.mxu0 0
        %2474 = vmatpush1.bf16.xpose.msra.mxu0 0
        %2475 = vmatprep.subr.bf16.mxu0 0
        %2476 = vmatpush1.bf16.xpose.msra.mxu0 0
        %2477 = vmatprep.subr.bf16.mxu0 0
        %2478 = vmatpush1.bf16.xpose.msra.mxu0 0
        %2479 = vmatprep.subr.bf16.mxu0 0
        %2480 = vmatpush1.bf16.xpose.msra.mxu0 0
        %2481 = vmatprep.mubr.bf16.mxu0 0
        %2482 = vmatmul.mubr.bf16.gmra.mrb[0].mxu0 %v2438
        %v2483 = vpop.f32.mrb[0].mxu0
        %v2484 = vadd.f32 0.0, %v2483
        %v2485 = vpop.f32.mrb[0].mxu0
        %v2486 = vpop.f32.mrb[0].mxu0
        %v2487 = vadd.f32 0.0, %v2486
        %v2488 = vpop.f32.mrb[0].mxu0
        %2489 = vmatprep.mubr.bf16.mxu0 0
        %2490 = vmatmul.mubr.bf16.gmra.mrb[0].mxu0 %v2441
        %v2491 = vpop.f32.mrb[0].mxu0
        %v2492 = vadd.f32 0.0, %v2491
        %v2493 = vpop.f32.mrb[0].mxu0
        %v2494 = vpop.f32.mrb[0].mxu0
        %v2495 = vadd.f32 0.0, %v2494
        %v2496 = vpop.f32.mrb[0].mxu0
        %2497 = vdwg.mxu0
        %v2498 = vmul.f32 %v2484, 0.25
        %v2499 = vmul.f32 %v2487, 0.25
        %v2500 = vmul.f32 %v2492, 0.25
        %v2501 = vmul.f32 %v2495, 0.25
        %v2502 = vadd.f32 %v2498, %v512
        %v2503 = vadd.f32 %v2499, %v513
        %v2504 = vadd.f32 %v2500, %v514
        %v2505 = vadd.f32 %v2501, %v515
        %v2506 = vsel %vm535, %v2502, -inf
        %2507 = vmax.xlane.f32.xlu0 %v2506
        %v2508 = vpop.xlane.xlu0 %2507
        %v2509 = vsel %vm535, %v2503, -inf
        %2510 = vmax.xlane.f32.xlu0 %v2509
        %v2511 = vpop.xlane.xlu0 %2510
        %v2512 = vsel %vm535, %v2504, -inf
        %2513 = vmax.xlane.f32.xlu0 %v2512
        %v2514 = vpop.xlane.xlu0 %2513
        %v2515 = vsel %vm535, %v2505, -inf
        %2516 = vmax.xlane.f32.xlu0 %v2515
        %v2517 = vpop.xlane.xlu0 %2516
        %v2518 = vsub.f32 %v2502, %v2508
        %v2519 = vsub.f32 %v2503, %v2511
        %v2520 = vsub.f32 %v2504, %v2514
        %v2521 = vsub.f32 %v2505, %v2517
        %v2522 = vmul.f32 %v2518, 1.442695
        %v2523 = vpow.pop %v2522
        %v2524 = vmul.f32 %v2519, 1.442695
        %v2525 = vpow.pop %v2524
        %v2526 = vmul.f32 %v2520, 1.442695
        %v2527 = vpow.pop %v2526
        %v2528 = vmul.f32 %v2521, 1.442695
        %v2529 = vpow.pop %v2528
        %v2530 = vsel %vm535, %v2523, 0.0
        %2531 = vadd.xlane.f32.xlu0 %v2530
        %v2532 = vpop.xlane.xlu0 %2531
        %v2533 = vsel %vm535, %v2525, 0.0
        %2534 = vadd.xlane.f32.xlu0 %v2533
        %v2535 = vpop.xlane.xlu0 %2534
        %v2536 = vsel %vm535, %v2527, 0.0
        %2537 = vadd.xlane.f32.xlu0 %v2536
        %v2538 = vpop.xlane.xlu0 %2537
        %v2539 = vsel %vm535, %v2529, 0.0
        %2540 = vadd.xlane.f32.xlu0 %v2539
        %v2541 = vpop.xlane.xlu0 %2540
        %v2542 = vrcp.pop %v2532
        %v2543 = vmul.f32 %v2523, %v2542
        %v2544 = vrcp.pop %v2535
        %v2545 = vmul.f32 %v2525, %v2544
        %v2546 = vrcp.pop %v2538
        %v2547 = vmul.f32 %v2527, %v2546
        %v2548 = vrcp.pop %v2541
        %v2549 = vmul.f32 %v2529, %v2548
        %v2550 = vpack.c.bf16 %v2545, %v2543
        %v2551 = vpack.c.bf16 %v2549, %v2547
        %2552 = vrot.lane.b32.xlu0 %v923, 96
        %v2553 = vpop.permute.xlu0 %2552
        %2554 = vrot.lane.b32.xlu0 %v925, 96
        %v2555 = vpop.permute.xlu0 %2554
        %v2559 = vsel %vm535, %v2550, 0
        %v2562 = vsel %vm535, %v2551, 0
        %2564 = vmatprep.subr.bf16.mxu0 0
        %2565 = vmatpush1.bf16.msra.mxu0 %v2553
        %2566 = vmatprep.subr.bf16.mxu0 0
        %2567 = vmatpush1.bf16.msra.mxu0 %v2555
        %2568 = vmatprep.subr.bf16.mxu0 0
        %2569 = vmatpush1.bf16.msra.mxu0 0
        %2570 = vmatprep.subr.bf16.mxu0 0
        %2571 = vmatpush1.bf16.msra.mxu0 0
        %2572 = vmatprep.subr.bf16.mxu0 0
        %2573 = vmatpush1.bf16.msra.mxu0 0
        %2574 = vmatprep.subr.bf16.mxu0 0
        %2575 = vmatpush1.bf16.msra.mxu0 0
        %2576 = vmatprep.subr.bf16.mxu0 0
        %2577 = vmatpush1.bf16.msra.mxu0 0
        %2578 = vmatprep.subr.bf16.mxu0 0
        %2579 = vmatpush1.bf16.msra.mxu0 0
        %2580 = vmatprep.subr.bf16.mxu0 0
        %2581 = vmatpush1.bf16.msra.mxu0 0
        %2582 = vmatprep.subr.bf16.mxu0 0
        %2583 = vmatpush1.bf16.msra.mxu0 0
        %2584 = vmatprep.subr.bf16.mxu0 0
        %2585 = vmatpush1.bf16.msra.mxu0 0
        %2586 = vmatprep.subr.bf16.mxu0 0
        %2587 = vmatpush1.bf16.msra.mxu0 0
        %2588 = vmatprep.subr.bf16.mxu0 0
        %2589 = vmatpush1.bf16.msra.mxu0 0
        %2590 = vmatprep.subr.bf16.mxu0 0
        %2591 = vmatpush1.bf16.msra.mxu0 0
        %2592 = vmatprep.subr.bf16.mxu0 0
        %2593 = vmatpush1.bf16.msra.mxu0 0
        %2594 = vmatprep.subr.bf16.mxu0 0
        %2595 = vmatpush1.bf16.msra.mxu0 0
        %2596 = vmatprep.mubr.bf16.mxu0 0
        %2597 = vmatmul.mubr.bf16.gmra.mrb[0].mxu0 %v2559
        %v2598 = vpop.f32.mrb[0].mxu0
        %v2599 = vadd.f32 0.0, %v2598
        %v2600 = vpop.f32.mrb[0].mxu0
        %v2601 = vpop.f32.mrb[0].mxu0
        %v2602 = vadd.f32 0.0, %v2601
        %v2603 = vpop.f32.mrb[0].mxu0
        %2604 = vmatprep.mubr.bf16.mxu0 0
        %2605 = vmatmul.mubr.bf16.gmra.mrb[0].mxu0 %v2562
        %v2606 = vpop.f32.mrb[0].mxu0
        %v2607 = vadd.f32 0.0, %v2606
        %v2608 = vpop.f32.mrb[0].mxu0
        %v2609 = vpop.f32.mrb[0].mxu0
        %v2610 = vadd.f32 0.0, %v2609
        %v2611 = vpop.f32.mrb[0].mxu0
        %2612 = vdwg.mxu0
        %v2613 = vpack.c.bf16 %v2602, %v2599
        %v2614 = vpack.c.bf16 %v2610, %v2607
        %v2617 = vunpack.c.l.b16 %v1929
        %v2618 = vunpack.c.l.b16 %v1930
        %v2619 = vpack.c.b16 %v2618, %v2617
        %v2622 = vsel %vm940, %v2613, 0
        %v2625 = vsel %vm940, %v2614, 0
        %2627 = vmatprep.subr.bf16.mxu0 0
        %2628 = vmatpush1.bf16.msra.mxu0 %v2619
        %2629 = vmatprep.subr.bf16.mxu0 0
        %2630 = vmatpush1.bf16.msra.mxu0 0
        %2631 = vmatprep.subr.bf16.mxu0 0
        %2632 = vmatpush1.bf16.msra.mxu0 0
        %2633 = vmatprep.subr.bf16.mxu0 0
        %2634 = vmatpush1.bf16.msra.mxu0 0
        %2635 = vmatprep.subr.bf16.mxu0 0
        %2636 = vmatpush1.bf16.msra.mxu0 0
        %2637 = vmatprep.subr.bf16.mxu0 0
        %2638 = vmatpush1.bf16.msra.mxu0 0
        %2639 = vmatprep.subr.bf16.mxu0 0
        %2640 = vmatpush1.bf16.msra.mxu0 0
        %2641 = vmatprep.subr.bf16.mxu0 0
        %2642 = vmatpush1.bf16.msra.mxu0 0
        %2643 = vmatprep.subr.bf16.mxu0 0
        %2644 = vmatpush1.bf16.msra.mxu0 0
        %2645 = vmatprep.subr.bf16.mxu0 0
        %2646 = vmatpush1.bf16.msra.mxu0 0
        %2647 = vmatprep.subr.bf16.mxu0 0
        %2648 = vmatpush1.bf16.msra.mxu0 0
        %2649 = vmatprep.subr.bf16.mxu0 0
        %2650 = vmatpush1.bf16.msra.mxu0 0
        %2651 = vmatprep.subr.bf16.mxu0 0
        %2652 = vmatpush1.bf16.msra.mxu0 0
        %2653 = vmatprep.subr.bf16.mxu0 0
        %2654 = vmatpush1.bf16.msra.mxu0 0
        %2655 = vmatprep.subr.bf16.mxu0 0
        %2656 = vmatpush1.bf16.msra.mxu0 0
        %2657 = vmatprep.subr.bf16.mxu0 0
        %2658 = vmatpush1.bf16.msra.mxu0 0
        %2659 = vmatprep.mubr.bf16.mxu0 0
        %2660 = vmatmul.mubr.bf16.gmra.mrb[0].mxu0 %v2622
        %v2661 = vpop.f32.mrb[0].mxu0
        %v2662 = vadd.f32 0.0, %v2661
        %v2663 = vpop.f32.mrb[0].mxu0
        %v2664 = vpop.f32.mrb[0].mxu0
        %v2665 = vadd.f32 0.0, %v2664
        %v2666 = vpop.f32.mrb[0].mxu0
        %2667 = vmatprep.mubr.bf16.mxu0 0
        %2668 = vmatmul.mubr.bf16.gmra.mrb[0].mxu0 %v2625
        %v2669 = vpop.f32.mrb[0].mxu0
        %v2670 = vadd.f32 0.0, %v2669
        %v2671 = vpop.f32.mrb[0].mxu0
        %v2672 = vpop.f32.mrb[0].mxu0
        %v2673 = vadd.f32 0.0, %v2672
        %v2674 = vpop.f32.mrb[0].mxu0
        %2675 = vdwg.mxu0
        %v2676 = vadd.f32 %v2425, %v2662
        %v2677 = vadd.f32 %v2426, %v2665
        %v2678 = vadd.f32 %v2427, %v2670
        %v2679 = vadd.f32 %v2428, %v2673
        %2680 = vrot.lane.b32.xlu0 %v922, 80
        %v2681 = vpop.permute.xlu0 %2680
        %2682 = vrot.lane.b32.xlu0 %v924, 80
        %v2683 = vpop.permute.xlu0 %2682
        %2684 = vrot.lane.b32.xlu0 %v922, 16
        %v2685 = vpop.permute.xlu0 %2684
        %2686 = vrot.lane.b32.xlu0 %v924, 16
        %v2687 = vpop.permute.xlu0 %2686
        %v2689 = vsel %vm940, %v2681, 0
        %v2692 = vsel %vm940, %v2683, 0
        %v2695 = vsel %vm940, %v2685, 0
        %v2698 = vsel %vm940, %v2687, 0
        %2700 = vmatprep.subr.bf16.mxu0 0
        %2701 = vmatpush1.bf16.xpose.msra.mxu0 %v2695
        %2702 = vmatprep.subr.bf16.mxu0 0
        %2703 = vmatpush1.bf16.xpose.msra.mxu0 %v2698
        %2704 = vmatprep.subr.bf16.mxu0 0
        %2705 = vmatpush1.bf16.xpose.msra.mxu0 0
        %2706 = vmatprep.subr.bf16.mxu0 0
        %2707 = vmatpush1.bf16.xpose.msra.mxu0 0
        %2708 = vmatprep.subr.bf16.mxu0 0
        %2709 = vmatpush1.bf16.xpose.msra.mxu0 0
        %2710 = vmatprep.subr.bf16.mxu0 0
        %2711 = vmatpush1.bf16.xpose.msra.mxu0 0
        %2712 = vmatprep.subr.bf16.mxu0 0
        %2713 = vmatpush1.bf16.xpose.msra.mxu0 0
        %2714 = vmatprep.subr.bf16.mxu0 0
        %2715 = vmatpush1.bf16.xpose.msra.mxu0 0
        %2716 = vmatprep.subr.bf16.mxu0 0
        %2717 = vmatpush1.bf16.xpose.msra.mxu0 0
        %2718 = vmatprep.subr.bf16.mxu0 0
        %2719 = vmatpush1.bf16.xpose.msra.mxu0 0
        %2720 = vmatprep.subr.bf16.mxu0 0
        %2721 = vmatpush1.bf16.xpose.msra.mxu0 0
        %2722 = vmatprep.subr.bf16.mxu0 0
        %2723 = vmatpush1.bf16.xpose.msra.mxu0 0
        %2724 = vmatprep.subr.bf16.mxu0 0
        %2725 = vmatpush1.bf16.xpose.msra.mxu0 0
        %2726 = vmatprep.subr.bf16.mxu0 0
        %2727 = vmatpush1.bf16.xpose.msra.mxu0 0
        %2728 = vmatprep.subr.bf16.mxu0 0
        %2729 = vmatpush1.bf16.xpose.msra.mxu0 0
        %2730 = vmatprep.subr.bf16.mxu0 0
        %2731 = vmatpush1.bf16.xpose.msra.mxu0 0
        %2732 = vmatprep.mubr.bf16.mxu0 0
        %2733 = vmatmul.mubr.bf16.gmra.mrb[0].mxu0 %v2689
        %v2734 = vpop.f32.mrb[0].mxu0
        %v2735 = vadd.f32 0.0, %v2734
        %v2736 = vpop.f32.mrb[0].mxu0
        %v2737 = vpop.f32.mrb[0].mxu0
        %v2738 = vadd.f32 0.0, %v2737
        %v2739 = vpop.f32.mrb[0].mxu0
        %2740 = vmatprep.mubr.bf16.mxu0 0
        %2741 = vmatmul.mubr.bf16.gmra.mrb[0].mxu0 %v2692
        %v2742 = vpop.f32.mrb[0].mxu0
        %v2743 = vadd.f32 0.0, %v2742
        %v2744 = vpop.f32.mrb[0].mxu0
        %v2745 = vpop.f32.mrb[0].mxu0
        %v2746 = vadd.f32 0.0, %v2745
        %v2747 = vpop.f32.mrb[0].mxu0
        %2748 = vdwg.mxu0
        %v2749 = vmul.f32 %v2735, 0.25
        %v2750 = vmul.f32 %v2738, 0.25
        %v2751 = vmul.f32 %v2743, 0.25
        %v2752 = vmul.f32 %v2746, 0.25
        %v2753 = vadd.f32 %v2749, %v512
        %v2754 = vadd.f32 %v2750, %v513
        %v2755 = vadd.f32 %v2751, %v514
        %v2756 = vadd.f32 %v2752, %v515
        %v2757 = vsel %vm535, %v2753, -inf
        %2758 = vmax.xlane.f32.xlu0 %v2757
        %v2759 = vpop.xlane.xlu0 %2758
        %v2760 = vsel %vm535, %v2754, -inf
        %2761 = vmax.xlane.f32.xlu0 %v2760
        %v2762 = vpop.xlane.xlu0 %2761
        %v2763 = vsel %vm535, %v2755, -inf
        %2764 = vmax.xlane.f32.xlu0 %v2763
        %v2765 = vpop.xlane.xlu0 %2764
        %v2766 = vsel %vm535, %v2756, -inf
        %2767 = vmax.xlane.f32.xlu0 %v2766
        %v2768 = vpop.xlane.xlu0 %2767
        %v2769 = vsub.f32 %v2753, %v2759
        %v2770 = vsub.f32 %v2754, %v2762
        %v2771 = vsub.f32 %v2755, %v2765
        %v2772 = vsub.f32 %v2756, %v2768
        %v2773 = vmul.f32 %v2769, 1.442695
        %v2774 = vpow.pop %v2773
        %v2775 = vmul.f32 %v2770, 1.442695
        %v2776 = vpow.pop %v2775
        %v2777 = vmul.f32 %v2771, 1.442695
        %v2778 = vpow.pop %v2777
        %v2779 = vmul.f32 %v2772, 1.442695
        %v2780 = vpow.pop %v2779
        %v2781 = vsel %vm535, %v2774, 0.0
        %2782 = vadd.xlane.f32.xlu0 %v2781
        %v2783 = vpop.xlane.xlu0 %2782
        %v2784 = vsel %vm535, %v2776, 0.0
        %2785 = vadd.xlane.f32.xlu0 %v2784
        %v2786 = vpop.xlane.xlu0 %2785
        %v2787 = vsel %vm535, %v2778, 0.0
        %2788 = vadd.xlane.f32.xlu0 %v2787
        %v2789 = vpop.xlane.xlu0 %2788
        %v2790 = vsel %vm535, %v2780, 0.0
        %2791 = vadd.xlane.f32.xlu0 %v2790
        %v2792 = vpop.xlane.xlu0 %2791
        %v2793 = vrcp.pop %v2783
        %v2794 = vmul.f32 %v2774, %v2793
        %v2795 = vrcp.pop %v2786
        %v2796 = vmul.f32 %v2776, %v2795
        %v2797 = vrcp.pop %v2789
        %v2798 = vmul.f32 %v2778, %v2797
        %v2799 = vrcp.pop %v2792
        %v2800 = vmul.f32 %v2780, %v2799
        %v2801 = vpack.c.bf16 %v2796, %v2794
        %v2802 = vpack.c.bf16 %v2800, %v2798
        %2803 = vrot.lane.b32.xlu0 %v923, 80
        %v2804 = vpop.permute.xlu0 %2803
        %2805 = vrot.lane.b32.xlu0 %v925, 80
        %v2806 = vpop.permute.xlu0 %2805
        %v2810 = vsel %vm535, %v2801, 0
        %v2813 = vsel %vm535, %v2802, 0
        %2815 = vmatprep.subr.bf16.mxu0 0
        %2816 = vmatpush1.bf16.msra.mxu0 %v2804
        %2817 = vmatprep.subr.bf16.mxu0 0
        %2818 = vmatpush1.bf16.msra.mxu0 %v2806
        %2819 = vmatprep.subr.bf16.mxu0 0
        %2820 = vmatpush1.bf16.msra.mxu0 0
        %2821 = vmatprep.subr.bf16.mxu0 0
        %2822 = vmatpush1.bf16.msra.mxu0 0
        %2823 = vmatprep.subr.bf16.mxu0 0
        %2824 = vmatpush1.bf16.msra.mxu0 0
        %2825 = vmatprep.subr.bf16.mxu0 0
        %2826 = vmatpush1.bf16.msra.mxu0 0
        %2827 = vmatprep.subr.bf16.mxu0 0
        %2828 = vmatpush1.bf16.msra.mxu0 0
        %2829 = vmatprep.subr.bf16.mxu0 0
        %2830 = vmatpush1.bf16.msra.mxu0 0
        %2831 = vmatprep.subr.bf16.mxu0 0
        %2832 = vmatpush1.bf16.msra.mxu0 0
        %2833 = vmatprep.subr.bf16.mxu0 0
        %2834 = vmatpush1.bf16.msra.mxu0 0
        %2835 = vmatprep.subr.bf16.mxu0 0
        %2836 = vmatpush1.bf16.msra.mxu0 0
        %2837 = vmatprep.subr.bf16.mxu0 0
        %2838 = vmatpush1.bf16.msra.mxu0 0
        %2839 = vmatprep.subr.bf16.mxu0 0
        %2840 = vmatpush1.bf16.msra.mxu0 0
        %2841 = vmatprep.subr.bf16.mxu0 0
        %2842 = vmatpush1.bf16.msra.mxu0 0
        %2843 = vmatprep.subr.bf16.mxu0 0
        %2844 = vmatpush1.bf16.msra.mxu0 0
        %2845 = vmatprep.subr.bf16.mxu0 0
        %2846 = vmatpush1.bf16.msra.mxu0 0
        %2847 = vmatprep.mubr.bf16.mxu0 0
        %2848 = vmatmul.mubr.bf16.gmra.mrb[0].mxu0 %v2810
        %v2849 = vpop.f32.mrb[0].mxu0
        %v2850 = vadd.f32 0.0, %v2849
        %v2851 = vpop.f32.mrb[0].mxu0
        %v2852 = vpop.f32.mrb[0].mxu0
        %v2853 = vadd.f32 0.0, %v2852
        %v2854 = vpop.f32.mrb[0].mxu0
        %2855 = vmatprep.mubr.bf16.mxu0 0
        %2856 = vmatmul.mubr.bf16.gmra.mrb[0].mxu0 %v2813
        %v2857 = vpop.f32.mrb[0].mxu0
        %v2858 = vadd.f32 0.0, %v2857
        %v2859 = vpop.f32.mrb[0].mxu0
        %v2860 = vpop.f32.mrb[0].mxu0
        %v2861 = vadd.f32 0.0, %v2860
        %v2862 = vpop.f32.mrb[0].mxu0
        %2863 = vdwg.mxu0
        %v2864 = vpack.c.bf16 %v2853, %v2850
        %v2865 = vpack.c.bf16 %v2861, %v2858
        %v2868 = vunpack.c.l.b16 %v1931
        %v2869 = vunpack.c.l.b16 %v1932
        %v2870 = vpack.c.b16 %v2869, %v2868
        %v2873 = vsel %vm940, %v2864, 0
        %v2876 = vsel %vm940, %v2865, 0
        %2878 = vmatprep.subr.bf16.mxu0 0
        %2879 = vmatpush1.bf16.msra.mxu0 %v2870
        %2880 = vmatprep.subr.bf16.mxu0 0
        %2881 = vmatpush1.bf16.msra.mxu0 0
        %2882 = vmatprep.subr.bf16.mxu0 0
        %2883 = vmatpush1.bf16.msra.mxu0 0
        %2884 = vmatprep.subr.bf16.mxu0 0
        %2885 = vmatpush1.bf16.msra.mxu0 0
        %2886 = vmatprep.subr.bf16.mxu0 0
        %2887 = vmatpush1.bf16.msra.mxu0 0
        %2888 = vmatprep.subr.bf16.mxu0 0
        %2889 = vmatpush1.bf16.msra.mxu0 0
        %2890 = vmatprep.subr.bf16.mxu0 0
        %2891 = vmatpush1.bf16.msra.mxu0 0
        %2892 = vmatprep.subr.bf16.mxu0 0
        %2893 = vmatpush1.bf16.msra.mxu0 0
        %2894 = vmatprep.subr.bf16.mxu0 0
        %2895 = vmatpush1.bf16.msra.mxu0 0
        %2896 = vmatprep.subr.bf16.mxu0 0
        %2897 = vmatpush1.bf16.msra.mxu0 0
        %2898 = vmatprep.subr.bf16.mxu0 0
        %2899 = vmatpush1.bf16.msra.mxu0 0
        %2900 = vmatprep.subr.bf16.mxu0 0
        %2901 = vmatpush1.bf16.msra.mxu0 0
        %2902 = vmatprep.subr.bf16.mxu0 0
        %2903 = vmatpush1.bf16.msra.mxu0 0
        %2904 = vmatprep.subr.bf16.mxu0 0
        %2905 = vmatpush1.bf16.msra.mxu0 0
        %2906 = vmatprep.subr.bf16.mxu0 0
        %2907 = vmatpush1.bf16.msra.mxu0 0
        %2908 = vmatprep.subr.bf16.mxu0 0
        %2909 = vmatpush1.bf16.msra.mxu0 0
        %2910 = vmatprep.mubr.bf16.mxu0 0
        %2911 = vmatmul.mubr.bf16.gmra.mrb[0].mxu0 %v2873
        %v2912 = vpop.f32.mrb[0].mxu0
        %v2913 = vadd.f32 0.0, %v2912
        %v2914 = vpop.f32.mrb[0].mxu0
        %v2915 = vpop.f32.mrb[0].mxu0
        %v2916 = vadd.f32 0.0, %v2915
        %v2917 = vpop.f32.mrb[0].mxu0
        %2918 = vmatprep.mubr.bf16.mxu0 0
        %2919 = vmatmul.mubr.bf16.gmra.mrb[0].mxu0 %v2876
        %v2920 = vpop.f32.mrb[0].mxu0
        %v2921 = vadd.f32 0.0, %v2920
        %v2922 = vpop.f32.mrb[0].mxu0
        %v2923 = vpop.f32.mrb[0].mxu0
        %v2924 = vadd.f32 0.0, %v2923
        %v2925 = vpop.f32.mrb[0].mxu0
        %2926 = vdwg.mxu0
        %v2927 = vadd.f32 %v2676, %v2913
        %v2928 = vadd.f32 %v2677, %v2916
        %v2929 = vadd.f32 %v2678, %v2921
        %v2930 = vadd.f32 %v2679, %v2924
        %v2931 = vld [vmem:[%s14] sm:$0x1]
        %v2933 = vlaneseq
        %v2934 = vshrl.u32 %v2933, 7
        %v2935 = vsub.s32 0, %v2934
        %v2936 = vrot.slane %v2931, %v2935
        %v2938 = vadd.f32 %v2927, %v2936
        %v2939 = vadd.f32 %v2928, %v2936
        %v2940 = vadd.f32 %v2929, %v2936
        %v2941 = vadd.f32 %v2930, %v2936
        %v2942 = vmul.f32 %v2938, 0.5
        %v2943 = vmul.f32 %v2939, 0.5
        %v2944 = vmul.f32 %v2940, 0.5
        %v2945 = vmul.f32 %v2941, 0.5
        %v2946 = vmul.f32 %v2938, 0.70710677
        %v2947 = vmul.f32 %v2939, 0.70710677
        %v2948 = vmul.f32 %v2940, 0.70710677
        %v2949 = vmul.f32 %v2941, 0.70710677
        %v2950 = verf.f32.pop %v2946
        %v2951 = verf.f32.pop %v2947
        %v2952 = verf.f32.pop %v2948
        %v2953 = verf.f32.pop %v2949
        %v2954 = vadd.f32 %v2950, 1.0
        %v2955 = vadd.f32 %v2951, 1.0
        %v2956 = vadd.f32 %v2952, 1.0
        %v2957 = vadd.f32 %v2953, 1.0
        %v2958 = vmul.f32 %v2942, %v2954
        %v2959 = vmul.f32 %v2943, %v2955
        %v2960 = vmul.f32 %v2944, %v2956
        %v2961 = vmul.f32 %v2945, %v2957
        %v2962 = vadd.f32 %v579, %v2958
        %v2963 = vadd.f32 %v580, %v2959
        %v2964 = vadd.f32 %v581, %v2960
        %v2965 = vadd.f32 %v582, %v2961
        %v2966 = vmul.f32 %v2962, 0.70710677
        %v2967 = vmul.f32 %v2963, 0.70710677
        %v2968 = vmul.f32 %v2964, 0.70710677
        %v2969 = vmul.f32 %v2965, 0.70710677
        %v2970 = vadd.f32 %v2958, 0.0
        %v2971 = vadd.f32 %v2959, 0.0
        %v2972 = vadd.f32 %v2960, 0.0
        %v2973 = vadd.f32 %v2961, 0.0
        %2975 = vrot.lane.b32.xlu0 %v586, 96
        %v2976 = vpop.permute.xlu0 %2975
        %v2978 = vadd.f32 %v2966, %v2976
        %v2979 = vadd.f32 %v2967, %v2976
        %v2980 = vadd.f32 %v2968, %v2976
        %v2981 = vadd.f32 %v2969, %v2976
        %v2982 = vpack.c.bf16 %v2979, %v2978
        %v2983 = vpack.c.bf16 %v2981, %v2980
        %s2984 = scalar_lea.vmem %s6, 16
        %v2985 = vld [vmem:[%s2984] sm:$0xf]
        %v2986 = vld [vmem:[%s2984 + $0x4] sm:$0xf]
        %v2987 = vld [vmem:[%s2984 + $0x8] sm:$0xf]
        %v2988 = vld [vmem:[%s2984 + $0xc] sm:$0xf]
        %s2989 = scalar_lea.vmem %s7, 1
        %v2990 = vld [vmem:[%s2989] sm:$0x1]
        %v2992 = vlaneseq
        %v2993 = vshrl.u32 %v2992, 7
        %v2994 = vsub.s32 0, %v2993
        %v2995 = vrot.slane %v2990, %v2994
        %v3001 = vunpack.c.l.b16 %v2985
        %v3002 = vunpack.c.l.b16 %v2986
        %v3003 = vunpack.c.l.b16 %v2987
        %v3004 = vunpack.c.l.b16 %v2988
        %v3005 = vpack.c.b16 %v3002, %v3001
        %v3006 = vpack.c.b16 %v3004, %v3003
        %v3010 = vsel %vm535, %v2982, 0
        %v3013 = vsel %vm535, %v2983, 0
        %3015 = vmatprep.subr.bf16.mxu0 0
        %3016 = vmatpush1.bf16.msra.mxu0 %v3005
        %3017 = vmatprep.subr.bf16.mxu0 0
        %3018 = vmatpush1.bf16.msra.mxu0 %v3006
        %3019 = vmatprep.subr.bf16.mxu0 0
        %3020 = vmatpush1.bf16.msra.mxu0 0
        %3021 = vmatprep.subr.bf16.mxu0 0
        %3022 = vmatpush1.bf16.msra.mxu0 0
        %3023 = vmatprep.subr.bf16.mxu0 0
        %3024 = vmatpush1.bf16.msra.mxu0 0
        %3025 = vmatprep.subr.bf16.mxu0 0
        %3026 = vmatpush1.bf16.msra.mxu0 0
        %3027 = vmatprep.subr.bf16.mxu0 0
        %3028 = vmatpush1.bf16.msra.mxu0 0
        %3029 = vmatprep.subr.bf16.mxu0 0
        %3030 = vmatpush1.bf16.msra.mxu0 0
        %3031 = vmatprep.subr.bf16.mxu0 0
        %3032 = vmatpush1.bf16.msra.mxu0 0
        %3033 = vmatprep.subr.bf16.mxu0 0
        %3034 = vmatpush1.bf16.msra.mxu0 0
        %3035 = vmatprep.subr.bf16.mxu0 0
        %3036 = vmatpush1.bf16.msra.mxu0 0
        %3037 = vmatprep.subr.bf16.mxu0 0
        %3038 = vmatpush1.bf16.msra.mxu0 0
        %3039 = vmatprep.subr.bf16.mxu0 0
        %3040 = vmatpush1.bf16.msra.mxu0 0
        %3041 = vmatprep.subr.bf16.mxu0 0
        %3042 = vmatpush1.bf16.msra.mxu0 0
        %3043 = vmatprep.subr.bf16.mxu0 0
        %3044 = vmatpush1.bf16.msra.mxu0 0
        %3045 = vmatprep.subr.bf16.mxu0 0
        %3046 = vmatpush1.bf16.msra.mxu0 0
        %3047 = vmatprep.mubr.bf16.mxu0 0
        %3048 = vmatmul.mubr.bf16.gmra.mrb[0].mxu0 %v3010
        %v3049 = vpop.f32.mrb[0].mxu0
        %v3050 = vadd.f32 %v2995, %v3049
        %v3051 = vpop.f32.mrb[0].mxu0
        %v3052 = vpop.f32.mrb[0].mxu0
        %v3053 = vadd.f32 %v2995, %v3052
        %v3054 = vpop.f32.mrb[0].mxu0
        %3055 = vmatprep.mubr.bf16.mxu0 0
        %3056 = vmatmul.mubr.bf16.gmra.mrb[0].mxu0 %v3013
        %v3057 = vpop.f32.mrb[0].mxu0
        %v3058 = vadd.f32 %v2995, %v3057
        %v3059 = vpop.f32.mrb[0].mxu0
        %v3060 = vpop.f32.mrb[0].mxu0
        %v3061 = vadd.f32 %v2995, %v3060
        %v3062 = vpop.f32.mrb[0].mxu0
        %3063 = vdwg.mxu0
        %v3064 = vpack.c.bf16 %v3053, %v3050
        %v3065 = vpack.c.bf16 %v3061, %v3058
        %s3066 = scalar_lea.vmem %s8, 64
        %v3067 = vld [vmem:[%s3066] sm:$0xff]
        %v3068 = vld [vmem:[%s3066 + $0x8] sm:$0xff]
        %v3069 = vld [vmem:[%s3066 + $0x10] sm:$0xff]
        %v3070 = vld [vmem:[%s3066 + $0x18] sm:$0xff]
        %v3071 = vld [vmem:[%s3066 + $0x20] sm:$0xff]
        %v3072 = vld [vmem:[%s3066 + $0x28] sm:$0xff]
        %v3073 = vld [vmem:[%s3066 + $0x30] sm:$0xff]
        %v3074 = vld [vmem:[%s3066 + $0x38] sm:$0xff]
        %s3075 = scalar_lea.vmem %s9, 2
        %v3076 = vld [vmem:[%s3075] sm:$0x3]
        %v3078 = vlaneseq
        %v3079 = vshrl.u32 %v3078, 7
        %v3080 = vsub.s32 0, %v3079
        %v3081 = vrot.slane %v3076, %v3080
        %v3082 = vlaneseq
        %v3083 = vshrl.u32 %v3082, 7
        %v3084 = vsub.s32 1, %v3083
        %v3085 = vrot.slane %v3076, %v3084
        %v3096 = vunpack.c.l.b16 %v3067
        %v3097 = vunpack.c.h.b16 %v3067
        %v3098 = vunpack.c.l.b16 %v3068
        %v3099 = vunpack.c.h.b16 %v3068
        %v3100 = vunpack.c.l.b16 %v3069
        %v3101 = vunpack.c.h.b16 %v3069
        %v3102 = vunpack.c.l.b16 %v3070
        %v3103 = vunpack.c.h.b16 %v3070
        %v3104 = vunpack.c.l.b16 %v3071
        %v3105 = vunpack.c.h.b16 %v3071
        %v3106 = vunpack.c.l.b16 %v3072
        %v3107 = vunpack.c.h.b16 %v3072
        %v3108 = vunpack.c.l.b16 %v3073
        %v3109 = vunpack.c.h.b16 %v3073
        %v3110 = vunpack.c.l.b16 %v3074
        %v3111 = vunpack.c.h.b16 %v3074
        %v3112 = vpack.c.b16 %v3098, %v3096
        %v3113 = vpack.c.b16 %v3099, %v3097
        %v3114 = vpack.c.b16 %v3102, %v3100
        %v3115 = vpack.c.b16 %v3103, %v3101
        %v3116 = vpack.c.b16 %v3106, %v3104
        %v3117 = vpack.c.b16 %v3107, %v3105
        %v3118 = vpack.c.b16 %v3110, %v3108
        %v3119 = vpack.c.b16 %v3111, %v3109
        %v3129 = vsel %vm733, %v3064, 0
        %v3132 = vsel %vm733, %v3065, 0
        %3134 = vmatprep.subr.bf16.mxu0 %v3113
        %3135 = vmatpush1.bf16.msra.mxu0 %v3112
        %3136 = vmatprep.subr.bf16.mxu0 %v3115
        %3137 = vmatpush1.bf16.msra.mxu0 %v3114
        %3138 = vmatprep.subr.bf16.mxu0 %v3117
        %3139 = vmatpush1.bf16.msra.mxu0 %v3116
        %3140 = vmatprep.subr.bf16.mxu0 %v3119
        %3141 = vmatpush1.bf16.msra.mxu0 %v3118
        %3142 = vmatprep.subr.bf16.mxu0 0
        %3143 = vmatpush1.bf16.msra.mxu0 0
        %3144 = vmatprep.subr.bf16.mxu0 0
        %3145 = vmatpush1.bf16.msra.mxu0 0
        %3146 = vmatprep.subr.bf16.mxu0 0
        %3147 = vmatpush1.bf16.msra.mxu0 0
        %3148 = vmatprep.subr.bf16.mxu0 0
        %3149 = vmatpush1.bf16.msra.mxu0 0
        %3150 = vmatprep.subr.bf16.mxu0 0
        %3151 = vmatpush1.bf16.msra.mxu0 0
        %3152 = vmatprep.subr.bf16.mxu0 0
        %3153 = vmatpush1.bf16.msra.mxu0 0
        %3154 = vmatprep.subr.bf16.mxu0 0
        %3155 = vmatpush1.bf16.msra.mxu0 0
        %3156 = vmatprep.subr.bf16.mxu0 0
        %3157 = vmatpush1.bf16.msra.mxu0 0
        %3158 = vmatprep.subr.bf16.mxu0 0
        %3159 = vmatpush1.bf16.msra.mxu0 0
        %3160 = vmatprep.subr.bf16.mxu0 0
        %3161 = vmatpush1.bf16.msra.mxu0 0
        %3162 = vmatprep.subr.bf16.mxu0 0
        %3163 = vmatpush1.bf16.msra.mxu0 0
        %3164 = vmatprep.subr.bf16.mxu0 0
        %3165 = vmatpush1.bf16.msra.mxu0 0
        %3166 = vmatprep.mubr.bf16.mxu0 0
        %3167 = vmatmul.mubr.bf16.gmra.mrb[0].mxu0 %v3129
        %v3168 = vpop.f32.mrb[0].mxu0
        %v3169 = vadd.f32 %v3081, %v3168
        %v3170 = vpop.f32.mrb[0].mxu0
        %v3171 = vadd.f32 %v3085, %v3170
        %v3172 = vpop.f32.mrb[0].mxu0
        %v3173 = vadd.f32 %v3081, %v3172
        %v3174 = vpop.f32.mrb[0].mxu0
        %v3175 = vadd.f32 %v3085, %v3174
        %3176 = vmatprep.mubr.bf16.mxu0 0
        %3177 = vmatmul.mubr.bf16.gmra.mrb[0].mxu0 %v3132
        %v3178 = vpop.f32.mrb[0].mxu0
        %v3179 = vadd.f32 %v3081, %v3178
        %v3180 = vpop.f32.mrb[0].mxu0
        %v3181 = vadd.f32 %v3085, %v3180
        %v3182 = vpop.f32.mrb[0].mxu0
        %v3183 = vadd.f32 %v3081, %v3182
        %v3184 = vpop.f32.mrb[0].mxu0
        %v3185 = vadd.f32 %v3085, %v3184
        %3186 = vdwg.mxu0
        %v3187 = vpack.c.bf16 %v3173, %v3169
        %v3188 = vpack.c.bf16 %v3175, %v3171
        %v3189 = vpack.c.bf16 %v3183, %v3179
        %v3190 = vpack.c.bf16 %v3185, %v3181
        %s3191 = scalar_lea.vmem %s10, 64
        %v3192 = vld [vmem:[%s3191] sm:$0xff]
        %v3193 = vld [vmem:[%s3191 + $0x8] sm:$0xff]
        %v3194 = vld [vmem:[%s3191 + $0x10] sm:$0xff]
        %v3195 = vld [vmem:[%s3191 + $0x18] sm:$0xff]
        %v3196 = vld [vmem:[%s3191 + $0x20] sm:$0xff]
        %v3197 = vld [vmem:[%s3191 + $0x28] sm:$0xff]
        %v3198 = vld [vmem:[%s3191 + $0x30] sm:$0xff]
        %v3199 = vld [vmem:[%s3191 + $0x38] sm:$0xff]
        %s3200 = scalar_lea.vmem %s11, 2
        %v3201 = vld [vmem:[%s3200] sm:$0x3]
        %v3203 = vlaneseq
        %v3204 = vshrl.u32 %v3203, 7
        %v3205 = vsub.s32 0, %v3204
        %v3206 = vrot.slane %v3201, %v3205
        %v3207 = vlaneseq
        %v3208 = vshrl.u32 %v3207, 7
        %v3209 = vsub.s32 1, %v3208
        %v3210 = vrot.slane %v3201, %v3209
        %3215 = vrot.lane.b32.xlu0 %v3064, 64
        %v3216 = vpop.permute.xlu0 %3215
        %3217 = vrot.lane.b32.xlu0 %v3065, 64
        %v3218 = vpop.permute.xlu0 %3217
        %v3227 = vunpack.c.l.b16 %v3192
        %v3228 = vunpack.c.h.b16 %v3192
        %v3229 = vunpack.c.l.b16 %v3193
        %v3230 = vunpack.c.h.b16 %v3193
        %v3231 = vunpack.c.l.b16 %v3194
        %v3232 = vunpack.c.h.b16 %v3194
        %v3233 = vunpack.c.l.b16 %v3195
        %v3234 = vunpack.c.h.b16 %v3195
        %v3235 = vunpack.c.l.b16 %v3196
        %v3236 = vunpack.c.h.b16 %v3196
        %v3237 = vunpack.c.l.b16 %v3197
        %v3238 = vunpack.c.h.b16 %v3197
        %v3239 = vunpack.c.l.b16 %v3198
        %v3240 = vunpack.c.h.b16 %v3198
        %v3241 = vunpack.c.l.b16 %v3199
        %v3242 = vunpack.c.h.b16 %v3199
        %v3243 = vpack.c.b16 %v3229, %v3227
        %v3244 = vpack.c.b16 %v3230, %v3228
        %v3245 = vpack.c.b16 %v3233, %v3231
        %v3246 = vpack.c.b16 %v3234, %v3232
        %v3247 = vpack.c.b16 %v3237, %v3235
        %v3248 = vpack.c.b16 %v3238, %v3236
        %v3249 = vpack.c.b16 %v3241, %v3239
        %v3250 = vpack.c.b16 %v3242, %v3240
        %v3260 = vsel %vm733, %v3216, 0
        %v3263 = vsel %vm733, %v3218, 0
        %3265 = vmatprep.subr.bf16.mxu0 %v3244
        %3266 = vmatpush1.bf16.msra.mxu0 %v3243
        %3267 = vmatprep.subr.bf16.mxu0 %v3246
        %3268 = vmatpush1.bf16.msra.mxu0 %v3245
        %3269 = vmatprep.subr.bf16.mxu0 %v3248
        %3270 = vmatpush1.bf16.msra.mxu0 %v3247
        %3271 = vmatprep.subr.bf16.mxu0 %v3250
        %3272 = vmatpush1.bf16.msra.mxu0 %v3249
        %3273 = vmatprep.subr.bf16.mxu0 0
        %3274 = vmatpush1.bf16.msra.mxu0 0
        %3275 = vmatprep.subr.bf16.mxu0 0
        %3276 = vmatpush1.bf16.msra.mxu0 0
        %3277 = vmatprep.subr.bf16.mxu0 0
        %3278 = vmatpush1.bf16.msra.mxu0 0
        %3279 = vmatprep.subr.bf16.mxu0 0
        %3280 = vmatpush1.bf16.msra.mxu0 0
        %3281 = vmatprep.subr.bf16.mxu0 0
        %3282 = vmatpush1.bf16.msra.mxu0 0
        %3283 = vmatprep.subr.bf16.mxu0 0
        %3284 = vmatpush1.bf16.msra.mxu0 0
        %3285 = vmatprep.subr.bf16.mxu0 0
        %3286 = vmatpush1.bf16.msra.mxu0 0
        %3287 = vmatprep.subr.bf16.mxu0 0
        %3288 = vmatpush1.bf16.msra.mxu0 0
        %3289 = vmatprep.subr.bf16.mxu0 0
        %3290 = vmatpush1.bf16.msra.mxu0 0
        %3291 = vmatprep.subr.bf16.mxu0 0
        %3292 = vmatpush1.bf16.msra.mxu0 0
        %3293 = vmatprep.subr.bf16.mxu0 0
        %3294 = vmatpush1.bf16.msra.mxu0 0
        %3295 = vmatprep.subr.bf16.mxu0 0
        %3296 = vmatpush1.bf16.msra.mxu0 0
        %3297 = vmatprep.mubr.bf16.mxu0 0
        %3298 = vmatmul.mubr.bf16.gmra.mrb[0].mxu0 %v3260
        %v3299 = vpop.f32.mrb[0].mxu0
        %v3300 = vadd.f32 %v3206, %v3299
        %v3301 = vpop.f32.mrb[0].mxu0
        %v3302 = vadd.f32 %v3210, %v3301
        %v3303 = vpop.f32.mrb[0].mxu0
        %v3304 = vadd.f32 %v3206, %v3303
        %v3305 = vpop.f32.mrb[0].mxu0
        %v3306 = vadd.f32 %v3210, %v3305
        %3307 = vmatprep.mubr.bf16.mxu0 0
        %3308 = vmatmul.mubr.bf16.gmra.mrb[0].mxu0 %v3263
        %v3309 = vpop.f32.mrb[0].mxu0
        %v3310 = vadd.f32 %v3206, %v3309
        %v3311 = vpop.f32.mrb[0].mxu0
        %v3312 = vadd.f32 %v3210, %v3311
        %v3313 = vpop.f32.mrb[0].mxu0
        %v3314 = vadd.f32 %v3206, %v3313
        %v3315 = vpop.f32.mrb[0].mxu0
        %v3316 = vadd.f32 %v3210, %v3315
        %3317 = vdwg.mxu0
        %v3318 = vpack.c.bf16 %v3304, %v3300
        %v3319 = vpack.c.bf16 %v3306, %v3302
        %v3320 = vpack.c.bf16 %v3314, %v3310
        %v3321 = vpack.c.bf16 %v3316, %v3312
        %s3322 = scalar_lea.vmem %s12, 32
        %v3323 = vld [vmem:[%s3322] sm:$0xf]
        %v3324 = vld [vmem:[%s3322 + $0x4] sm:$0xf]
        %v3325 = vld [vmem:[%s3322 + $0x8] sm:$0xf]
        %v3326 = vld [vmem:[%s3322 + $0xc] sm:$0xf]
        %v3327 = vld [vmem:[%s3322 + $0x10] sm:$0xf]
        %v3328 = vld [vmem:[%s3322 + $0x14] sm:$0xf]
        %v3329 = vld [vmem:[%s3322 + $0x18] sm:$0xf]
        %v3330 = vld [vmem:[%s3322 + $0x1c] sm:$0xf]
        %3333 = vrot.lane.b32.xlu0 %v3187, 64
        %v3334 = vpop.permute.xlu0 %3333
        %3335 = vrot.lane.b32.xlu0 %v3189, 64
        %v3336 = vpop.permute.xlu0 %3335
        %v3338 = vsel %vm940, %v3187, 0
        %v3341 = vsel %vm940, %v3189, 0
        %v3344 = vsel %vm940, %v3334, 0
        %v3347 = vsel %vm940, %v3336, 0
        %3349 = vmatprep.subr.bf16.mxu0 0
        %3350 = vmatpush1.bf16.xpose.msra.mxu0 %v3344
        %3351 = vmatprep.subr.bf16.mxu0 0
        %3352 = vmatpush1.bf16.xpose.msra.mxu0 %v3347
        %3353 = vmatprep.subr.bf16.mxu0 0
        %3354 = vmatpush1.bf16.xpose.msra.mxu0 0
        %3355 = vmatprep.subr.bf16.mxu0 0
        %3356 = vmatpush1.bf16.xpose.msra.mxu0 0
        %3357 = vmatprep.subr.bf16.mxu0 0
        %3358 = vmatpush1.bf16.xpose.msra.mxu0 0
        %3359 = vmatprep.subr.bf16.mxu0 0
        %3360 = vmatpush1.bf16.xpose.msra.mxu0 0
        %3361 = vmatprep.subr.bf16.mxu0 0
        %3362 = vmatpush1.bf16.xpose.msra.mxu0 0
        %3363 = vmatprep.subr.bf16.mxu0 0
        %3364 = vmatpush1.bf16.xpose.msra.mxu0 0
        %3365 = vmatprep.subr.bf16.mxu0 0
        %3366 = vmatpush1.bf16.xpose.msra.mxu0 0
        %3367 = vmatprep.subr.bf16.mxu0 0
        %3368 = vmatpush1.bf16.xpose.msra.mxu0 0
        %3369 = vmatprep.subr.bf16.mxu0 0
        %3370 = vmatpush1.bf16.xpose.msra.mxu0 0
        %3371 = vmatprep.subr.bf16.mxu0 0
        %3372 = vmatpush1.bf16.xpose.msra.mxu0 0
        %3373 = vmatprep.subr.bf16.mxu0 0
        %3374 = vmatpush1.bf16.xpose.msra.mxu0 0
        %3375 = vmatprep.subr.bf16.mxu0 0
        %3376 = vmatpush1.bf16.xpose.msra.mxu0 0
        %3377 = vmatprep.subr.bf16.mxu0 0
        %3378 = vmatpush1.bf16.xpose.msra.mxu0 0
        %3379 = vmatprep.subr.bf16.mxu0 0
        %3380 = vmatpush1.bf16.xpose.msra.mxu0 0
        %3381 = vmatprep.mubr.bf16.mxu0 0
        %3382 = vmatmul.mubr.bf16.gmra.mrb[0].mxu0 %v3338
        %v3383 = vpop.f32.mrb[0].mxu0
        %v3384 = vadd.f32 0.0, %v3383
        %v3385 = vpop.f32.mrb[0].mxu0
        %v3386 = vpop.f32.mrb[0].mxu0
        %v3387 = vadd.f32 0.0, %v3386
        %v3388 = vpop.f32.mrb[0].mxu0
        %3389 = vmatprep.mubr.bf16.mxu0 0
        %3390 = vmatmul.mubr.bf16.gmra.mrb[0].mxu0 %v3341
        %v3391 = vpop.f32.mrb[0].mxu0
        %v3392 = vadd.f32 0.0, %v3391
        %v3393 = vpop.f32.mrb[0].mxu0
        %v3394 = vpop.f32.mrb[0].mxu0
        %v3395 = vadd.f32 0.0, %v3394
        %v3396 = vpop.f32.mrb[0].mxu0
        %3397 = vdwg.mxu0
        %v3398 = vmul.f32 %v3384, 0.25
        %v3399 = vmul.f32 %v3387, 0.25
        %v3400 = vmul.f32 %v3392, 0.25
        %v3401 = vmul.f32 %v3395, 0.25
        %v3402 = vadd.f32 %v3398, %v508
        %v3403 = vadd.f32 %v3399, %v509
        %v3404 = vadd.f32 %v3400, %v510
        %v3405 = vadd.f32 %v3401, %v511
        %v3406 = vsel %vm535, %v3402, -inf
        %3407 = vmax.xlane.f32.xlu0 %v3406
        %v3408 = vpop.xlane.xlu0 %3407
        %v3409 = vsel %vm535, %v3403, -inf
        %3410 = vmax.xlane.f32.xlu0 %v3409
        %v3411 = vpop.xlane.xlu0 %3410
        %v3412 = vsel %vm535, %v3404, -inf
        %3413 = vmax.xlane.f32.xlu0 %v3412
        %v3414 = vpop.xlane.xlu0 %3413
        %v3415 = vsel %vm535, %v3405, -inf
        %3416 = vmax.xlane.f32.xlu0 %v3415
        %v3417 = vpop.xlane.xlu0 %3416
        %v3418 = vsub.f32 %v3402, %v3408
        %v3419 = vsub.f32 %v3403, %v3411
        %v3420 = vsub.f32 %v3404, %v3414
        %v3421 = vsub.f32 %v3405, %v3417
        %v3422 = vmul.f32 %v3418, 1.442695
        %v3423 = vpow.pop %v3422
        %v3424 = vmul.f32 %v3419, 1.442695
        %v3425 = vpow.pop %v3424
        %v3426 = vmul.f32 %v3420, 1.442695
        %v3427 = vpow.pop %v3426
        %v3428 = vmul.f32 %v3421, 1.442695
        %v3429 = vpow.pop %v3428
        %v3430 = vsel %vm535, %v3423, 0.0
        %3431 = vadd.xlane.f32.xlu0 %v3430
        %v3432 = vpop.xlane.xlu0 %3431
        %v3433 = vsel %vm535, %v3425, 0.0
        %3434 = vadd.xlane.f32.xlu0 %v3433
        %v3435 = vpop.xlane.xlu0 %3434
        %v3436 = vsel %vm535, %v3427, 0.0
        %3437 = vadd.xlane.f32.xlu0 %v3436
        %v3438 = vpop.xlane.xlu0 %3437
        %v3439 = vsel %vm535, %v3429, 0.0
        %3440 = vadd.xlane.f32.xlu0 %v3439
        %v3441 = vpop.xlane.xlu0 %3440
        %v3442 = vrcp.pop %v3432
        %v3443 = vmul.f32 %v3423, %v3442
        %v3444 = vrcp.pop %v3435
        %v3445 = vmul.f32 %v3425, %v3444
        %v3446 = vrcp.pop %v3438
        %v3447 = vmul.f32 %v3427, %v3446
        %v3448 = vrcp.pop %v3441
        %v3449 = vmul.f32 %v3429, %v3448
        %v3450 = vpack.c.bf16 %v3445, %v3443
        %v3451 = vpack.c.bf16 %v3449, %v3447
        %v3453 = vsel %vm535, %v3450, 0
        %v3456 = vsel %vm535, %v3451, 0
        %3458 = vmatprep.subr.bf16.mxu0 0
        %3459 = vmatpush1.bf16.msra.mxu0 %v3188
        %3460 = vmatprep.subr.bf16.mxu0 0
        %3461 = vmatpush1.bf16.msra.mxu0 %v3190
        %3462 = vmatprep.subr.bf16.mxu0 0
        %3463 = vmatpush1.bf16.msra.mxu0 0
        %3464 = vmatprep.subr.bf16.mxu0 0
        %3465 = vmatpush1.bf16.msra.mxu0 0
        %3466 = vmatprep.subr.bf16.mxu0 0
        %3467 = vmatpush1.bf16.msra.mxu0 0
        %3468 = vmatprep.subr.bf16.mxu0 0
        %3469 = vmatpush1.bf16.msra.mxu0 0
        %3470 = vmatprep.subr.bf16.mxu0 0
        %3471 = vmatpush1.bf16.msra.mxu0 0
        %3472 = vmatprep.subr.bf16.mxu0 0
        %3473 = vmatpush1.bf16.msra.mxu0 0
        %3474 = vmatprep.subr.bf16.mxu0 0
        %3475 = vmatpush1.bf16.msra.mxu0 0
        %3476 = vmatprep.subr.bf16.mxu0 0
        %3477 = vmatpush1.bf16.msra.mxu0 0
        %3478 = vmatprep.subr.bf16.mxu0 0
        %3479 = vmatpush1.bf16.msra.mxu0 0
        %3480 = vmatprep.subr.bf16.mxu0 0
        %3481 = vmatpush1.bf16.msra.mxu0 0
        %3482 = vmatprep.subr.bf16.mxu0 0
        %3483 = vmatpush1.bf16.msra.mxu0 0
        %3484 = vmatprep.subr.bf16.mxu0 0
        %3485 = vmatpush1.bf16.msra.mxu0 0
        %3486 = vmatprep.subr.bf16.mxu0 0
        %3487 = vmatpush1.bf16.msra.mxu0 0
        %3488 = vmatprep.subr.bf16.mxu0 0
        %3489 = vmatpush1.bf16.msra.mxu0 0
        %3490 = vmatprep.mubr.bf16.mxu0 0
        %3491 = vmatmul.mubr.bf16.gmra.mrb[0].mxu0 %v3453
        %v3492 = vpop.f32.mrb[0].mxu0
        %v3493 = vadd.f32 0.0, %v3492
        %v3494 = vpop.f32.mrb[0].mxu0
        %v3495 = vpop.f32.mrb[0].mxu0
        %v3496 = vadd.f32 0.0, %v3495
        %v3497 = vpop.f32.mrb[0].mxu0
        %3498 = vmatprep.mubr.bf16.mxu0 0
        %3499 = vmatmul.mubr.bf16.gmra.mrb[0].mxu0 %v3456
        %v3500 = vpop.f32.mrb[0].mxu0
        %v3501 = vadd.f32 0.0, %v3500
        %v3502 = vpop.f32.mrb[0].mxu0
        %v3503 = vpop.f32.mrb[0].mxu0
        %v3504 = vadd.f32 0.0, %v3503
        %v3505 = vpop.f32.mrb[0].mxu0
        %3506 = vdwg.mxu0
        %v3507 = vpack.c.bf16 %v3496, %v3493
        %v3508 = vpack.c.bf16 %v3504, %v3501
        %3509 = vrot.lane.b32.xlu0 %v3187, 112
        %v3510 = vpop.permute.xlu0 %3509
        %3511 = vrot.lane.b32.xlu0 %v3189, 112
        %v3512 = vpop.permute.xlu0 %3511
        %3513 = vrot.lane.b32.xlu0 %v3187, 48
        %v3514 = vpop.permute.xlu0 %3513
        %3515 = vrot.lane.b32.xlu0 %v3189, 48
        %v3516 = vpop.permute.xlu0 %3515
        %v3518 = vsel %vm940, %v3510, 0
        %v3521 = vsel %vm940, %v3512, 0
        %v3524 = vsel %vm940, %v3514, 0
        %v3527 = vsel %vm940, %v3516, 0
        %3529 = vmatprep.subr.bf16.mxu0 0
        %3530 = vmatpush1.bf16.xpose.msra.mxu0 %v3524
        %3531 = vmatprep.subr.bf16.mxu0 0
        %3532 = vmatpush1.bf16.xpose.msra.mxu0 %v3527
        %3533 = vmatprep.subr.bf16.mxu0 0
        %3534 = vmatpush1.bf16.xpose.msra.mxu0 0
        %3535 = vmatprep.subr.bf16.mxu0 0
        %3536 = vmatpush1.bf16.xpose.msra.mxu0 0
        %3537 = vmatprep.subr.bf16.mxu0 0
        %3538 = vmatpush1.bf16.xpose.msra.mxu0 0
        %3539 = vmatprep.subr.bf16.mxu0 0
        %3540 = vmatpush1.bf16.xpose.msra.mxu0 0
        %3541 = vmatprep.subr.bf16.mxu0 0
        %3542 = vmatpush1.bf16.xpose.msra.mxu0 0
        %3543 = vmatprep.subr.bf16.mxu0 0
        %3544 = vmatpush1.bf16.xpose.msra.mxu0 0
        %3545 = vmatprep.subr.bf16.mxu0 0
        %3546 = vmatpush1.bf16.xpose.msra.mxu0 0
        %3547 = vmatprep.subr.bf16.mxu0 0
        %3548 = vmatpush1.bf16.xpose.msra.mxu0 0
        %3549 = vmatprep.subr.bf16.mxu0 0
        %3550 = vmatpush1.bf16.xpose.msra.mxu0 0
        %3551 = vmatprep.subr.bf16.mxu0 0
        %3552 = vmatpush1.bf16.xpose.msra.mxu0 0
        %3553 = vmatprep.subr.bf16.mxu0 0
        %3554 = vmatpush1.bf16.xpose.msra.mxu0 0
        %3555 = vmatprep.subr.bf16.mxu0 0
        %3556 = vmatpush1.bf16.xpose.msra.mxu0 0
        %3557 = vmatprep.subr.bf16.mxu0 0
        %3558 = vmatpush1.bf16.xpose.msra.mxu0 0
        %3559 = vmatprep.subr.bf16.mxu0 0
        %3560 = vmatpush1.bf16.xpose.msra.mxu0 0
        %3561 = vmatprep.mubr.bf16.mxu0 0
        %3562 = vmatmul.mubr.bf16.gmra.mrb[0].mxu0 %v3518
        %v3563 = vpop.f32.mrb[0].mxu0
        %v3564 = vadd.f32 0.0, %v3563
        %v3565 = vpop.f32.mrb[0].mxu0
        %v3566 = vpop.f32.mrb[0].mxu0
        %v3567 = vadd.f32 0.0, %v3566
        %v3568 = vpop.f32.mrb[0].mxu0
        %3569 = vmatprep.mubr.bf16.mxu0 0
        %3570 = vmatmul.mubr.bf16.gmra.mrb[0].mxu0 %v3521
        %v3571 = vpop.f32.mrb[0].mxu0
        %v3572 = vadd.f32 0.0, %v3571
        %v3573 = vpop.f32.mrb[0].mxu0
        %v3574 = vpop.f32.mrb[0].mxu0
        %v3575 = vadd.f32 0.0, %v3574
        %v3576 = vpop.f32.mrb[0].mxu0
        %3577 = vdwg.mxu0
        %v3578 = vmul.f32 %v3564, 0.25
        %v3579 = vmul.f32 %v3567, 0.25
        %v3580 = vmul.f32 %v3572, 0.25
        %v3581 = vmul.f32 %v3575, 0.25
        %v3582 = vadd.f32 %v3578, %v508
        %v3583 = vadd.f32 %v3579, %v509
        %v3584 = vadd.f32 %v3580, %v510
        %v3585 = vadd.f32 %v3581, %v511
        %v3586 = vsel %vm535, %v3582, -inf
        %3587 = vmax.xlane.f32.xlu0 %v3586
        %v3588 = vpop.xlane.xlu0 %3587
        %v3589 = vsel %vm535, %v3583, -inf
        %3590 = vmax.xlane.f32.xlu0 %v3589
        %v3591 = vpop.xlane.xlu0 %3590
        %v3592 = vsel %vm535, %v3584, -inf
        %3593 = vmax.xlane.f32.xlu0 %v3592
        %v3594 = vpop.xlane.xlu0 %3593
        %v3595 = vsel %vm535, %v3585, -inf
        %3596 = vmax.xlane.f32.xlu0 %v3595
        %v3597 = vpop.xlane.xlu0 %3596
        %v3598 = vsub.f32 %v3582, %v3588
        %v3599 = vsub.f32 %v3583, %v3591
        %v3600 = vsub.f32 %v3584, %v3594
        %v3601 = vsub.f32 %v3585, %v3597
        %v3602 = vmul.f32 %v3598, 1.442695
        %v3603 = vpow.pop %v3602
        %v3604 = vmul.f32 %v3599, 1.442695
        %v3605 = vpow.pop %v3604
        %v3606 = vmul.f32 %v3600, 1.442695
        %v3607 = vpow.pop %v3606
        %v3608 = vmul.f32 %v3601, 1.442695
        %v3609 = vpow.pop %v3608
        %v3610 = vsel %vm535, %v3603, 0.0
        %3611 = vadd.xlane.f32.xlu0 %v3610
        %v3612 = vpop.xlane.xlu0 %3611
        %v3613 = vsel %vm535, %v3605, 0.0
        %3614 = vadd.xlane.f32.xlu0 %v3613
        %v3615 = vpop.xlane.xlu0 %3614
        %v3616 = vsel %vm535, %v3607, 0.0
        %3617 = vadd.xlane.f32.xlu0 %v3616
        %v3618 = vpop.xlane.xlu0 %3617
        %v3619 = vsel %vm535, %v3609, 0.0
        %3620 = vadd.xlane.f32.xlu0 %v3619
        %v3621 = vpop.xlane.xlu0 %3620
        %v3622 = vrcp.pop %v3612
        %v3623 = vmul.f32 %v3603, %v3622
        %v3624 = vrcp.pop %v3615
        %v3625 = vmul.f32 %v3605, %v3624
        %v3626 = vrcp.pop %v3618
        %v3627 = vmul.f32 %v3607, %v3626
        %v3628 = vrcp.pop %v3621
        %v3629 = vmul.f32 %v3609, %v3628
        %v3630 = vpack.c.bf16 %v3625, %v3623
        %v3631 = vpack.c.bf16 %v3629, %v3627
        %3634 = vrot.lane.b32.xlu0 %v3188, 112
        %v3635 = vpop.permute.xlu0 %3634
        %3636 = vrot.lane.b32.xlu0 %v3190, 112
        %v3637 = vpop.permute.xlu0 %3636
        %v3641 = vsel %vm535, %v3630, 0
        %v3644 = vsel %vm535, %v3631, 0
        %3646 = vmatprep.subr.bf16.mxu0 0
        %3647 = vmatpush1.bf16.msra.mxu0 %v3635
        %3648 = vmatprep.subr.bf16.mxu0 0
        %3649 = vmatpush1.bf16.msra.mxu0 %v3637
        %3650 = vmatprep.subr.bf16.mxu0 0
        %3651 = vmatpush1.bf16.msra.mxu0 0
        %3652 = vmatprep.subr.bf16.mxu0 0
        %3653 = vmatpush1.bf16.msra.mxu0 0
        %3654 = vmatprep.subr.bf16.mxu0 0
        %3655 = vmatpush1.bf16.msra.mxu0 0
        %3656 = vmatprep.subr.bf16.mxu0 0
        %3657 = vmatpush1.bf16.msra.mxu0 0
        %3658 = vmatprep.subr.bf16.mxu0 0
        %3659 = vmatpush1.bf16.msra.mxu0 0
        %3660 = vmatprep.subr.bf16.mxu0 0
        %3661 = vmatpush1.bf16.msra.mxu0 0
        %3662 = vmatprep.subr.bf16.mxu0 0
        %3663 = vmatpush1.bf16.msra.mxu0 0
        %3664 = vmatprep.subr.bf16.mxu0 0
        %3665 = vmatpush1.bf16.msra.mxu0 0
        %3666 = vmatprep.subr.bf16.mxu0 0
        %3667 = vmatpush1.bf16.msra.mxu0 0
        %3668 = vmatprep.subr.bf16.mxu0 0
        %3669 = vmatpush1.bf16.msra.mxu0 0
        %3670 = vmatprep.subr.bf16.mxu0 0
        %3671 = vmatpush1.bf16.msra.mxu0 0
        %3672 = vmatprep.subr.bf16.mxu0 0
        %3673 = vmatpush1.bf16.msra.mxu0 0
        %3674 = vmatprep.subr.bf16.mxu0 0
        %3675 = vmatpush1.bf16.msra.mxu0 0
        %3676 = vmatprep.subr.bf16.mxu0 0
        %3677 = vmatpush1.bf16.msra.mxu0 0
        %3678 = vmatprep.mubr.bf16.mxu0 0
        %3679 = vmatmul.mubr.bf16.gmra.mrb[0].mxu0 %v3641
        %v3680 = vpop.f32.mrb[0].mxu0
        %v3681 = vadd.f32 0.0, %v3680
        %v3682 = vpop.f32.mrb[0].mxu0
        %v3683 = vpop.f32.mrb[0].mxu0
        %v3684 = vadd.f32 0.0, %v3683
        %v3685 = vpop.f32.mrb[0].mxu0
        %3686 = vmatprep.mubr.bf16.mxu0 0
        %3687 = vmatmul.mubr.bf16.gmra.mrb[0].mxu0 %v3644
        %v3688 = vpop.f32.mrb[0].mxu0
        %v3689 = vadd.f32 0.0, %v3688
        %v3690 = vpop.f32.mrb[0].mxu0
        %v3691 = vpop.f32.mrb[0].mxu0
        %v3692 = vadd.f32 0.0, %v3691
        %v3693 = vpop.f32.mrb[0].mxu0
        %3694 = vdwg.mxu0
        %v3695 = vpack.c.bf16 %v3684, %v3681
        %v3696 = vpack.c.bf16 %v3692, %v3689
        %v3699 = vunpack.c.l.b16 %v3325
        %v3700 = vunpack.c.l.b16 %v3326
        %v3701 = vpack.c.b16 %v3700, %v3699
        %v3704 = vsel %vm940, %v3695, 0
        %v3707 = vsel %vm940, %v3696, 0
        %3709 = vmatprep.subr.bf16.mxu0 0
        %3710 = vmatpush1.bf16.msra.mxu0 %v3701
        %3711 = vmatprep.subr.bf16.mxu0 0
        %3712 = vmatpush1.bf16.msra.mxu0 0
        %3713 = vmatprep.subr.bf16.mxu0 0
        %3714 = vmatpush1.bf16.msra.mxu0 0
        %3715 = vmatprep.subr.bf16.mxu0 0
        %3716 = vmatpush1.bf16.msra.mxu0 0
        %3717 = vmatprep.subr.bf16.mxu0 0
        %3718 = vmatpush1.bf16.msra.mxu0 0
        %3719 = vmatprep.subr.bf16.mxu0 0
        %3720 = vmatpush1.bf16.msra.mxu0 0
        %3721 = vmatprep.subr.bf16.mxu0 0
        %3722 = vmatpush1.bf16.msra.mxu0 0
        %3723 = vmatprep.subr.bf16.mxu0 0
        %3724 = vmatpush1.bf16.msra.mxu0 0
        %3725 = vmatprep.subr.bf16.mxu0 0
        %3726 = vmatpush1.bf16.msra.mxu0 0
        %3727 = vmatprep.subr.bf16.mxu0 0
        %3728 = vmatpush1.bf16.msra.mxu0 0
        %3729 = vmatprep.subr.bf16.mxu0 0
        %3730 = vmatpush1.bf16.msra.mxu0 0
        %3731 = vmatprep.subr.bf16.mxu0 0
        %3732 = vmatpush1.bf16.msra.mxu0 0
        %3733 = vmatprep.subr.bf16.mxu0 0
        %3734 = vmatpush1.bf16.msra.mxu0 0
        %3735 = vmatprep.subr.bf16.mxu0 0
        %3736 = vmatpush1.bf16.msra.mxu0 0
        %3737 = vmatprep.subr.bf16.mxu0 0
        %3738 = vmatpush1.bf16.msra.mxu0 0
        %3739 = vmatprep.subr.bf16.mxu0 0
        %3740 = vmatpush1.bf16.msra.mxu0 0
        %3741 = vmatprep.mubr.bf16.mxu0 0
        %3742 = vmatmul.mubr.bf16.gmra.mrb[0].mxu0 %v3704
        %v3743 = vpop.f32.mrb[0].mxu0
        %v3744 = vadd.f32 0.0, %v3743
        %v3745 = vpop.f32.mrb[0].mxu0
        %v3746 = vpop.f32.mrb[0].mxu0
        %v3747 = vadd.f32 0.0, %v3746
        %v3748 = vpop.f32.mrb[0].mxu0
        %3749 = vmatprep.mubr.bf16.mxu0 0
        %3750 = vmatmul.mubr.bf16.gmra.mrb[0].mxu0 %v3707
        %v3751 = vpop.f32.mrb[0].mxu0
        %v3752 = vadd.f32 0.0, %v3751
        %v3753 = vpop.f32.mrb[0].mxu0
        %v3754 = vpop.f32.mrb[0].mxu0
        %v3755 = vadd.f32 0.0, %v3754
        %v3756 = vpop.f32.mrb[0].mxu0
        %3757 = vdwg.mxu0
        %v3760 = vunpack.c.l.b16 %v3323
        %v3761 = vunpack.c.l.b16 %v3324
        %v3762 = vpack.c.b16 %v3761, %v3760
        %v3765 = vsel %vm940, %v3507, 0
        %v3768 = vsel %vm940, %v3508, 0
        %3770 = vmatprep.subr.bf16.mxu0 0
        %3771 = vmatpush1.bf16.msra.mxu0 %v3762
        %3772 = vmatprep.subr.bf16.mxu0 0
        %3773 = vmatpush1.bf16.msra.mxu0 0
        %3774 = vmatprep.subr.bf16.mxu0 0
        %3775 = vmatpush1.bf16.msra.mxu0 0
        %3776 = vmatprep.subr.bf16.mxu0 0
        %3777 = vmatpush1.bf16.msra.mxu0 0
        %3778 = vmatprep.subr.bf16.mxu0 0
        %3779 = vmatpush1.bf16.msra.mxu0 0
        %3780 = vmatprep.subr.bf16.mxu0 0
        %3781 = vmatpush1.bf16.msra.mxu0 0
        %3782 = vmatprep.subr.bf16.mxu0 0
        %3783 = vmatpush1.bf16.msra.mxu0 0
        %3784 = vmatprep.subr.bf16.mxu0 0
        %3785 = vmatpush1.bf16.msra.mxu0 0
        %3786 = vmatprep.subr.bf16.mxu0 0
        %3787 = vmatpush1.bf16.msra.mxu0 0
        %3788 = vmatprep.subr.bf16.mxu0 0
        %3789 = vmatpush1.bf16.msra.mxu0 0
        %3790 = vmatprep.subr.bf16.mxu0 0
        %3791 = vmatpush1.bf16.msra.mxu0 0
        %3792 = vmatprep.subr.bf16.mxu0 0
        %3793 = vmatpush1.bf16.msra.mxu0 0
        %3794 = vmatprep.subr.bf16.mxu0 0
        %3795 = vmatpush1.bf16.msra.mxu0 0
        %3796 = vmatprep.subr.bf16.mxu0 0
        %3797 = vmatpush1.bf16.msra.mxu0 0
        %3798 = vmatprep.subr.bf16.mxu0 0
        %3799 = vmatpush1.bf16.msra.mxu0 0
        %3800 = vmatprep.subr.bf16.mxu0 0
        %3801 = vmatpush1.bf16.msra.mxu0 0
        %3802 = vmatprep.mubr.bf16.mxu0 0
        %3803 = vmatmul.mubr.bf16.gmra.mrb[0].mxu0 %v3765
        %v3804 = vpop.f32.mrb[0].mxu0
        %v3805 = vadd.f32 %v3744, %v3804
        %v3806 = vpop.f32.mrb[0].mxu0
        %v3807 = vpop.f32.mrb[0].mxu0
        %v3808 = vadd.f32 %v3747, %v3807
        %v3809 = vpop.f32.mrb[0].mxu0
        %3810 = vmatprep.mubr.bf16.mxu0 0
        %3811 = vmatmul.mubr.bf16.gmra.mrb[0].mxu0 %v3768
        %v3812 = vpop.f32.mrb[0].mxu0
        %v3813 = vadd.f32 %v3752, %v3812
        %v3814 = vpop.f32.mrb[0].mxu0
        %v3815 = vpop.f32.mrb[0].mxu0
        %v3816 = vadd.f32 %v3755, %v3815
        %v3817 = vpop.f32.mrb[0].mxu0
        %3818 = vdwg.mxu0
        %3819 = vrot.lane.b32.xlu0 %v3187, 96
        %v3820 = vpop.permute.xlu0 %3819
        %3821 = vrot.lane.b32.xlu0 %v3189, 96
        %v3822 = vpop.permute.xlu0 %3821
        %3823 = vrot.lane.b32.xlu0 %v3187, 32
        %v3824 = vpop.permute.xlu0 %3823
        %3825 = vrot.lane.b32.xlu0 %v3189, 32
        %v3826 = vpop.permute.xlu0 %3825
        %v3828 = vsel %vm940, %v3820, 0
        %v3831 = vsel %vm940, %v3822, 0
        %v3834 = vsel %vm940, %v3824, 0
        %v3837 = vsel %vm940, %v3826, 0
        %3839 = vmatprep.subr.bf16.mxu0 0
        %3840 = vmatpush1.bf16.xpose.msra.mxu0 %v3834
        %3841 = vmatprep.subr.bf16.mxu0 0
        %3842 = vmatpush1.bf16.xpose.msra.mxu0 %v3837
        %3843 = vmatprep.subr.bf16.mxu0 0
        %3844 = vmatpush1.bf16.xpose.msra.mxu0 0
        %3845 = vmatprep.subr.bf16.mxu0 0
        %3846 = vmatpush1.bf16.xpose.msra.mxu0 0
        %3847 = vmatprep.subr.bf16.mxu0 0
        %3848 = vmatpush1.bf16.xpose.msra.mxu0 0
        %3849 = vmatprep.subr.bf16.mxu0 0
        %3850 = vmatpush1.bf16.xpose.msra.mxu0 0
        %3851 = vmatprep.subr.bf16.mxu0 0
        %3852 = vmatpush1.bf16.xpose.msra.mxu0 0
        %3853 = vmatprep.subr.bf16.mxu0 0
        %3854 = vmatpush1.bf16.xpose.msra.mxu0 0
        %3855 = vmatprep.subr.bf16.mxu0 0
        %3856 = vmatpush1.bf16.xpose.msra.mxu0 0
        %3857 = vmatprep.subr.bf16.mxu0 0
        %3858 = vmatpush1.bf16.xpose.msra.mxu0 0
        %3859 = vmatprep.subr.bf16.mxu0 0
        %3860 = vmatpush1.bf16.xpose.msra.mxu0 0
        %3861 = vmatprep.subr.bf16.mxu0 0
        %3862 = vmatpush1.bf16.xpose.msra.mxu0 0
        %3863 = vmatprep.subr.bf16.mxu0 0
        %3864 = vmatpush1.bf16.xpose.msra.mxu0 0
        %3865 = vmatprep.subr.bf16.mxu0 0
        %3866 = vmatpush1.bf16.xpose.msra.mxu0 0
        %3867 = vmatprep.subr.bf16.mxu0 0
        %3868 = vmatpush1.bf16.xpose.msra.mxu0 0
        %3869 = vmatprep.subr.bf16.mxu0 0
        %3870 = vmatpush1.bf16.xpose.msra.mxu0 0
        %3871 = vmatprep.mubr.bf16.mxu0 0
        %3872 = vmatmul.mubr.bf16.gmra.mrb[0].mxu0 %v3828
        %v3873 = vpop.f32.mrb[0].mxu0
        %v3874 = vadd.f32 0.0, %v3873
        %v3875 = vpop.f32.mrb[0].mxu0
        %v3876 = vpop.f32.mrb[0].mxu0
        %v3877 = vadd.f32 0.0, %v3876
        %v3878 = vpop.f32.mrb[0].mxu0
        %3879 = vmatprep.mubr.bf16.mxu0 0
        %3880 = vmatmul.mubr.bf16.gmra.mrb[0].mxu0 %v3831
        %v3881 = vpop.f32.mrb[0].mxu0
        %v3882 = vadd.f32 0.0, %v3881
        %v3883 = vpop.f32.mrb[0].mxu0
        %v3884 = vpop.f32.mrb[0].mxu0
        %v3885 = vadd.f32 0.0, %v3884
        %v3886 = vpop.f32.mrb[0].mxu0
        %3887 = vdwg.mxu0
        %v3888 = vmul.f32 %v3874, 0.25
        %v3889 = vmul.f32 %v3877, 0.25
        %v3890 = vmul.f32 %v3882, 0.25
        %v3891 = vmul.f32 %v3885, 0.25
        %v3892 = vadd.f32 %v3888, %v508
        %v3893 = vadd.f32 %v3889, %v509
        %v3894 = vadd.f32 %v3890, %v510
        %v3895 = vadd.f32 %v3891, %v511
        %v3896 = vsel %vm535, %v3892, -inf
        %3897 = vmax.xlane.f32.xlu0 %v3896
        %v3898 = vpop.xlane.xlu0 %3897
        %v3899 = vsel %vm535, %v3893, -inf
        %3900 = vmax.xlane.f32.xlu0 %v3899
        %v3901 = vpop.xlane.xlu0 %3900
        %v3902 = vsel %vm535, %v3894, -inf
        %3903 = vmax.xlane.f32.xlu0 %v3902
        %v3904 = vpop.xlane.xlu0 %3903
        %v3905 = vsel %vm535, %v3895, -inf
        %3906 = vmax.xlane.f32.xlu0 %v3905
        %v3907 = vpop.xlane.xlu0 %3906
        %v3908 = vsub.f32 %v3892, %v3898
        %v3909 = vsub.f32 %v3893, %v3901
        %v3910 = vsub.f32 %v3894, %v3904
        %v3911 = vsub.f32 %v3895, %v3907
        %v3912 = vmul.f32 %v3908, 1.442695
        %v3913 = vpow.pop %v3912
        %v3914 = vmul.f32 %v3909, 1.442695
        %v3915 = vpow.pop %v3914
        %v3916 = vmul.f32 %v3910, 1.442695
        %v3917 = vpow.pop %v3916
        %v3918 = vmul.f32 %v3911, 1.442695
        %v3919 = vpow.pop %v3918
        %v3920 = vsel %vm535, %v3913, 0.0
        %3921 = vadd.xlane.f32.xlu0 %v3920
        %v3922 = vpop.xlane.xlu0 %3921
        %v3923 = vsel %vm535, %v3915, 0.0
        %3924 = vadd.xlane.f32.xlu0 %v3923
        %v3925 = vpop.xlane.xlu0 %3924
        %v3926 = vsel %vm535, %v3917, 0.0
        %3927 = vadd.xlane.f32.xlu0 %v3926
        %v3928 = vpop.xlane.xlu0 %3927
        %v3929 = vsel %vm535, %v3919, 0.0
        %3930 = vadd.xlane.f32.xlu0 %v3929
        %v3931 = vpop.xlane.xlu0 %3930
        %v3932 = vrcp.pop %v3922
        %v3933 = vmul.f32 %v3913, %v3932
        %v3934 = vrcp.pop %v3925
        %v3935 = vmul.f32 %v3915, %v3934
        %v3936 = vrcp.pop %v3928
        %v3937 = vmul.f32 %v3917, %v3936
        %v3938 = vrcp.pop %v3931
        %v3939 = vmul.f32 %v3919, %v3938
        %v3940 = vpack.c.bf16 %v3935, %v3933
        %v3941 = vpack.c.bf16 %v3939, %v3937
        %3942 = vrot.lane.b32.xlu0 %v3188, 96
        %v3943 = vpop.permute.xlu0 %3942
        %3944 = vrot.lane.b32.xlu0 %v3190, 96
        %v3945 = vpop.permute.xlu0 %3944
        %v3949 = vsel %vm535, %v3940, 0
        %v3952 = vsel %vm535, %v3941, 0
        %3954 = vmatprep.subr.bf16.mxu0 0
        %3955 = vmatpush1.bf16.msra.mxu0 %v3943
        %3956 = vmatprep.subr.bf16.mxu0 0
        %3957 = vmatpush1.bf16.msra.mxu0 %v3945
        %3958 = vmatprep.subr.bf16.mxu0 0
        %3959 = vmatpush1.bf16.msra.mxu0 0
        %3960 = vmatprep.subr.bf16.mxu0 0
        %3961 = vmatpush1.bf16.msra.mxu0 0
        %3962 = vmatprep.subr.bf16.mxu0 0
        %3963 = vmatpush1.bf16.msra.mxu0 0
        %3964 = vmatprep.subr.bf16.mxu0 0
        %3965 = vmatpush1.bf16.msra.mxu0 0
        %3966 = vmatprep.subr.bf16.mxu0 0
        %3967 = vmatpush1.bf16.msra.mxu0 0
        %3968 = vmatprep.subr.bf16.mxu0 0
        %3969 = vmatpush1.bf16.msra.mxu0 0
        %3970 = vmatprep.subr.bf16.mxu0 0
        %3971 = vmatpush1.bf16.msra.mxu0 0
        %3972 = vmatprep.subr.bf16.mxu0 0
        %3973 = vmatpush1.bf16.msra.mxu0 0
        %3974 = vmatprep.subr.bf16.mxu0 0
        %3975 = vmatpush1.bf16.msra.mxu0 0
        %3976 = vmatprep.subr.bf16.mxu0 0
        %3977 = vmatpush1.bf16.msra.mxu0 0
        %3978 = vmatprep.subr.bf16.mxu0 0
        %3979 = vmatpush1.bf16.msra.mxu0 0
        %3980 = vmatprep.subr.bf16.mxu0 0
        %3981 = vmatpush1.bf16.msra.mxu0 0
        %3982 = vmatprep.subr.bf16.mxu0 0
        %3983 = vmatpush1.bf16.msra.mxu0 0
        %3984 = vmatprep.subr.bf16.mxu0 0
        %3985 = vmatpush1.bf16.msra.mxu0 0
        %3986 = vmatprep.mubr.bf16.mxu0 0
        %3987 = vmatmul.mubr.bf16.gmra.mrb[0].mxu0 %v3949
        %v3988 = vpop.f32.mrb[0].mxu0
        %v3989 = vadd.f32 0.0, %v3988
        %v3990 = vpop.f32.mrb[0].mxu0
        %v3991 = vpop.f32.mrb[0].mxu0
        %v3992 = vadd.f32 0.0, %v3991
        %v3993 = vpop.f32.mrb[0].mxu0
        %3994 = vmatprep.mubr.bf16.mxu0 0
        %3995 = vmatmul.mubr.bf16.gmra.mrb[0].mxu0 %v3952
        %v3996 = vpop.f32.mrb[0].mxu0
        %v3997 = vadd.f32 0.0, %v3996
        %v3998 = vpop.f32.mrb[0].mxu0
        %v3999 = vpop.f32.mrb[0].mxu0
        %v4000 = vadd.f32 0.0, %v3999
        %v4001 = vpop.f32.mrb[0].mxu0
        %4002 = vdwg.mxu0
        %v4003 = vpack.c.bf16 %v3992, %v3989
        %v4004 = vpack.c.bf16 %v4000, %v3997
        %v4007 = vunpack.c.l.b16 %v3327
        %v4008 = vunpack.c.l.b16 %v3328
        %v4009 = vpack.c.b16 %v4008, %v4007
        %v4012 = vsel %vm940, %v4003, 0
        %v4015 = vsel %vm940, %v4004, 0
        %4017 = vmatprep.subr.bf16.mxu0 0
        %4018 = vmatpush1.bf16.msra.mxu0 %v4009
        %4019 = vmatprep.subr.bf16.mxu0 0
        %4020 = vmatpush1.bf16.msra.mxu0 0
        %4021 = vmatprep.subr.bf16.mxu0 0
        %4022 = vmatpush1.bf16.msra.mxu0 0
        %4023 = vmatprep.subr.bf16.mxu0 0
        %4024 = vmatpush1.bf16.msra.mxu0 0
        %4025 = vmatprep.subr.bf16.mxu0 0
        %4026 = vmatpush1.bf16.msra.mxu0 0
        %4027 = vmatprep.subr.bf16.mxu0 0
        %4028 = vmatpush1.bf16.msra.mxu0 0
        %4029 = vmatprep.subr.bf16.mxu0 0
        %4030 = vmatpush1.bf16.msra.mxu0 0
        %4031 = vmatprep.subr.bf16.mxu0 0
        %4032 = vmatpush1.bf16.msra.mxu0 0
        %4033 = vmatprep.subr.bf16.mxu0 0
        %4034 = vmatpush1.bf16.msra.mxu0 0
        %4035 = vmatprep.subr.bf16.mxu0 0
        %4036 = vmatpush1.bf16.msra.mxu0 0
        %4037 = vmatprep.subr.bf16.mxu0 0
        %4038 = vmatpush1.bf16.msra.mxu0 0
        %4039 = vmatprep.subr.bf16.mxu0 0
        %4040 = vmatpush1.bf16.msra.mxu0 0
        %4041 = vmatprep.subr.bf16.mxu0 0
        %4042 = vmatpush1.bf16.msra.mxu0 0
        %4043 = vmatprep.subr.bf16.mxu0 0
        %4044 = vmatpush1.bf16.msra.mxu0 0
        %4045 = vmatprep.subr.bf16.mxu0 0
        %4046 = vmatpush1.bf16.msra.mxu0 0
        %4047 = vmatprep.subr.bf16.mxu0 0
        %4048 = vmatpush1.bf16.msra.mxu0 0
        %4049 = vmatprep.mubr.bf16.mxu0 0
        %4050 = vmatmul.mubr.bf16.gmra.mrb[0].mxu0 %v4012
        %v4051 = vpop.f32.mrb[0].mxu0
        %v4052 = vadd.f32 0.0, %v4051
        %v4053 = vpop.f32.mrb[0].mxu0
        %v4054 = vpop.f32.mrb[0].mxu0
        %v4055 = vadd.f32 0.0, %v4054
        %v4056 = vpop.f32.mrb[0].mxu0
        %4057 = vmatprep.mubr.bf16.mxu0 0
        %4058 = vmatmul.mubr.bf16.gmra.mrb[0].mxu0 %v4015
        %v4059 = vpop.f32.mrb[0].mxu0
        %v4060 = vadd.f32 0.0, %v4059
        %v4061 = vpop.f32.mrb[0].mxu0
        %v4062 = vpop.f32.mrb[0].mxu0
        %v4063 = vadd.f32 0.0, %v4062
        %v4064 = vpop.f32.mrb[0].mxu0
        %4065 = vdwg.mxu0
        %v4066 = vadd.f32 %v3805, %v4052
        %v4067 = vadd.f32 %v3808, %v4055
        %v4068 = vadd.f32 %v3813, %v4060
        %v4069 = vadd.f32 %v3816, %v4063
        %4070 = vrot.lane.b32.xlu0 %v3187, 80
        %v4071 = vpop.permute.xlu0 %4070
        %4072 = vrot.lane.b32.xlu0 %v3189, 80
        %v4073 = vpop.permute.xlu0 %4072
        %4074 = vrot.lane.b32.xlu0 %v3187, 16
        %v4075 = vpop.permute.xlu0 %4074
        %4076 = vrot.lane.b32.xlu0 %v3189, 16
        %v4077 = vpop.permute.xlu0 %4076
        %v4079 = vsel %vm940, %v4071, 0
        %v4082 = vsel %vm940, %v4073, 0
        %v4085 = vsel %vm940, %v4075, 0
        %v4088 = vsel %vm940, %v4077, 0
        %4090 = vmatprep.subr.bf16.mxu0 0
        %4091 = vmatpush1.bf16.xpose.msra.mxu0 %v4085
        %4092 = vmatprep.subr.bf16.mxu0 0
        %4093 = vmatpush1.bf16.xpose.msra.mxu0 %v4088
        %4094 = vmatprep.subr.bf16.mxu0 0
        %4095 = vmatpush1.bf16.xpose.msra.mxu0 0
        %4096 = vmatprep.subr.bf16.mxu0 0
        %4097 = vmatpush1.bf16.xpose.msra.mxu0 0
        %4098 = vmatprep.subr.bf16.mxu0 0
        %4099 = vmatpush1.bf16.xpose.msra.mxu0 0
        %4100 = vmatprep.subr.bf16.mxu0 0
        %4101 = vmatpush1.bf16.xpose.msra.mxu0 0
        %4102 = vmatprep.subr.bf16.mxu0 0
        %4103 = vmatpush1.bf16.xpose.msra.mxu0 0
        %4104 = vmatprep.subr.bf16.mxu0 0
        %4105 = vmatpush1.bf16.xpose.msra.mxu0 0
        %4106 = vmatprep.subr.bf16.mxu0 0
        %4107 = vmatpush1.bf16.xpose.msra.mxu0 0
        %4108 = vmatprep.subr.bf16.mxu0 0
        %4109 = vmatpush1.bf16.xpose.msra.mxu0 0
        %4110 = vmatprep.subr.bf16.mxu0 0
        %4111 = vmatpush1.bf16.xpose.msra.mxu0 0
        %4112 = vmatprep.subr.bf16.mxu0 0
        %4113 = vmatpush1.bf16.xpose.msra.mxu0 0
        %4114 = vmatprep.subr.bf16.mxu0 0
        %4115 = vmatpush1.bf16.xpose.msra.mxu0 0
        %4116 = vmatprep.subr.bf16.mxu0 0
        %4117 = vmatpush1.bf16.xpose.msra.mxu0 0
        %4118 = vmatprep.subr.bf16.mxu0 0
        %4119 = vmatpush1.bf16.xpose.msra.mxu0 0
        %4120 = vmatprep.subr.bf16.mxu0 0
        %4121 = vmatpush1.bf16.xpose.msra.mxu0 0
        %4122 = vmatprep.mubr.bf16.mxu0 0
        %4123 = vmatmul.mubr.bf16.gmra.mrb[0].mxu0 %v4079
        %v4124 = vpop.f32.mrb[0].mxu0
        %v4125 = vadd.f32 0.0, %v4124
        %v4126 = vpop.f32.mrb[0].mxu0
        %v4127 = vpop.f32.mrb[0].mxu0
        %v4128 = vadd.f32 0.0, %v4127
        %v4129 = vpop.f32.mrb[0].mxu0
        %4130 = vmatprep.mubr.bf16.mxu0 0
        %4131 = vmatmul.mubr.bf16.gmra.mrb[0].mxu0 %v4082
        %v4132 = vpop.f32.mrb[0].mxu0
        %v4133 = vadd.f32 0.0, %v4132
        %v4134 = vpop.f32.mrb[0].mxu0
        %v4135 = vpop.f32.mrb[0].mxu0
        %v4136 = vadd.f32 0.0, %v4135
        %v4137 = vpop.f32.mrb[0].mxu0
        %4138 = vdwg.mxu0
        %v4139 = vmul.f32 %v4125, 0.25
        %v4140 = vmul.f32 %v4128, 0.25
        %v4141 = vmul.f32 %v4133, 0.25
        %v4142 = vmul.f32 %v4136, 0.25
        %v4143 = vadd.f32 %v4139, %v508
        %v4144 = vadd.f32 %v4140, %v509
        %v4145 = vadd.f32 %v4141, %v510
        %v4146 = vadd.f32 %v4142, %v511
        %v4147 = vsel %vm535, %v4143, -inf
        %4148 = vmax.xlane.f32.xlu0 %v4147
        %v4149 = vpop.xlane.xlu0 %4148
        %v4150 = vsel %vm535, %v4144, -inf
        %4151 = vmax.xlane.f32.xlu0 %v4150
        %v4152 = vpop.xlane.xlu0 %4151
        %v4153 = vsel %vm535, %v4145, -inf
        %4154 = vmax.xlane.f32.xlu0 %v4153
        %v4155 = vpop.xlane.xlu0 %4154
        %v4156 = vsel %vm535, %v4146, -inf
        %4157 = vmax.xlane.f32.xlu0 %v4156
        %v4158 = vpop.xlane.xlu0 %4157
        %v4159 = vsub.f32 %v4143, %v4149
        %v4160 = vsub.f32 %v4144, %v4152
        %v4161 = vsub.f32 %v4145, %v4155
        %v4162 = vsub.f32 %v4146, %v4158
        %v4163 = vmul.f32 %v4159, 1.442695
        %v4164 = vpow.pop %v4163
        %v4165 = vmul.f32 %v4160, 1.442695
        %v4166 = vpow.pop %v4165
        %v4167 = vmul.f32 %v4161, 1.442695
        %v4168 = vpow.pop %v4167
        %v4169 = vmul.f32 %v4162, 1.442695
        %v4170 = vpow.pop %v4169
        %v4171 = vsel %vm535, %v4164, 0.0
        %4172 = vadd.xlane.f32.xlu0 %v4171
        %v4173 = vpop.xlane.xlu0 %4172
        %v4174 = vsel %vm535, %v4166, 0.0
        %4175 = vadd.xlane.f32.xlu0 %v4174
        %v4176 = vpop.xlane.xlu0 %4175
        %v4177 = vsel %vm535, %v4168, 0.0
        %4178 = vadd.xlane.f32.xlu0 %v4177
        %v4179 = vpop.xlane.xlu0 %4178
        %v4180 = vsel %vm535, %v4170, 0.0
        %4181 = vadd.xlane.f32.xlu0 %v4180
        %v4182 = vpop.xlane.xlu0 %4181
        %v4183 = vrcp.pop %v4173
        %v4184 = vmul.f32 %v4164, %v4183
        %v4185 = vrcp.pop %v4176
        %v4186 = vmul.f32 %v4166, %v4185
        %v4187 = vrcp.pop %v4179
        %v4188 = vmul.f32 %v4168, %v4187
        %v4189 = vrcp.pop %v4182
        %v4190 = vmul.f32 %v4170, %v4189
        %v4191 = vpack.c.bf16 %v4186, %v4184
        %v4192 = vpack.c.bf16 %v4190, %v4188
        %4193 = vrot.lane.b32.xlu0 %v3188, 80
        %v4194 = vpop.permute.xlu0 %4193
        %4195 = vrot.lane.b32.xlu0 %v3190, 80
        %v4196 = vpop.permute.xlu0 %4195
        %v4200 = vsel %vm535, %v4191, 0
        %v4203 = vsel %vm535, %v4192, 0
        %4205 = vmatprep.subr.bf16.mxu0 0
        %4206 = vmatpush1.bf16.msra.mxu0 %v4194
        %4207 = vmatprep.subr.bf16.mxu0 0
        %4208 = vmatpush1.bf16.msra.mxu0 %v4196
        %4209 = vmatprep.subr.bf16.mxu0 0
        %4210 = vmatpush1.bf16.msra.mxu0 0
        %4211 = vmatprep.subr.bf16.mxu0 0
        %4212 = vmatpush1.bf16.msra.mxu0 0
        %4213 = vmatprep.subr.bf16.mxu0 0
        %4214 = vmatpush1.bf16.msra.mxu0 0
        %4215 = vmatprep.subr.bf16.mxu0 0
        %4216 = vmatpush1.bf16.msra.mxu0 0
        %4217 = vmatprep.subr.bf16.mxu0 0
        %4218 = vmatpush1.bf16.msra.mxu0 0
        %4219 = vmatprep.subr.bf16.mxu0 0
        %4220 = vmatpush1.bf16.msra.mxu0 0
        %4221 = vmatprep.subr.bf16.mxu0 0
        %4222 = vmatpush1.bf16.msra.mxu0 0
        %4223 = vmatprep.subr.bf16.mxu0 0
        %4224 = vmatpush1.bf16.msra.mxu0 0
        %4225 = vmatprep.subr.bf16.mxu0 0
        %4226 = vmatpush1.bf16.msra.mxu0 0
        %4227 = vmatprep.subr.bf16.mxu0 0
        %4228 = vmatpush1.bf16.msra.mxu0 0
        %4229 = vmatprep.subr.bf16.mxu0 0
        %4230 = vmatpush1.bf16.msra.mxu0 0
        %4231 = vmatprep.subr.bf16.mxu0 0
        %4232 = vmatpush1.bf16.msra.mxu0 0
        %4233 = vmatprep.subr.bf16.mxu0 0
        %4234 = vmatpush1.bf16.msra.mxu0 0
        %4235 = vmatprep.subr.bf16.mxu0 0
        %4236 = vmatpush1.bf16.msra.mxu0 0
        %4237 = vmatprep.mubr.bf16.mxu0 0
        %4238 = vmatmul.mubr.bf16.gmra.mrb[0].mxu0 %v4200
        %v4239 = vpop.f32.mrb[0].mxu0
        %v4240 = vadd.f32 0.0, %v4239
        %v4241 = vpop.f32.mrb[0].mxu0
        %v4242 = vpop.f32.mrb[0].mxu0
        %v4243 = vadd.f32 0.0, %v4242
        %v4244 = vpop.f32.mrb[0].mxu0
        %4245 = vmatprep.mubr.bf16.mxu0 0
        %4246 = vmatmul.mubr.bf16.gmra.mrb[0].mxu0 %v4203
        %v4247 = vpop.f32.mrb[0].mxu0
        %v4248 = vadd.f32 0.0, %v4247
        %v4249 = vpop.f32.mrb[0].mxu0
        %v4250 = vpop.f32.mrb[0].mxu0
        %v4251 = vadd.f32 0.0, %v4250
        %v4252 = vpop.f32.mrb[0].mxu0
        %4253 = vdwg.mxu0
        %v4254 = vpack.c.bf16 %v4243, %v4240
        %v4255 = vpack.c.bf16 %v4251, %v4248
        %v4258 = vunpack.c.l.b16 %v3329
        %v4259 = vunpack.c.l.b16 %v3330
        %v4260 = vpack.c.b16 %v4259, %v4258
        %v4263 = vsel %vm940, %v4254, 0
        %v4266 = vsel %vm940, %v4255, 0
        %4268 = vmatprep.subr.bf16.mxu0 0
        %4269 = vmatpush1.bf16.msra.mxu0 %v4260
        %4270 = vmatprep.subr.bf16.mxu0 0
        %4271 = vmatpush1.bf16.msra.mxu0 0
        %4272 = vmatprep.subr.bf16.mxu0 0
        %4273 = vmatpush1.bf16.msra.mxu0 0
        %4274 = vmatprep.subr.bf16.mxu0 0
        %4275 = vmatpush1.bf16.msra.mxu0 0
        %4276 = vmatprep.subr.bf16.mxu0 0
        %4277 = vmatpush1.bf16.msra.mxu0 0
        %4278 = vmatprep.subr.bf16.mxu0 0
        %4279 = vmatpush1.bf16.msra.mxu0 0
        %4280 = vmatprep.subr.bf16.mxu0 0
        %4281 = vmatpush1.bf16.msra.mxu0 0
        %4282 = vmatprep.subr.bf16.mxu0 0
        %4283 = vmatpush1.bf16.msra.mxu0 0
        %4284 = vmatprep.subr.bf16.mxu0 0
        %4285 = vmatpush1.bf16.msra.mxu0 0
        %4286 = vmatprep.subr.bf16.mxu0 0
        %4287 = vmatpush1.bf16.msra.mxu0 0
        %4288 = vmatprep.subr.bf16.mxu0 0
        %4289 = vmatpush1.bf16.msra.mxu0 0
        %4290 = vmatprep.subr.bf16.mxu0 0
        %4291 = vmatpush1.bf16.msra.mxu0 0
        %4292 = vmatprep.subr.bf16.mxu0 0
        %4293 = vmatpush1.bf16.msra.mxu0 0
        %4294 = vmatprep.subr.bf16.mxu0 0
        %4295 = vmatpush1.bf16.msra.mxu0 0
        %4296 = vmatprep.subr.bf16.mxu0 0
        %4297 = vmatpush1.bf16.msra.mxu0 0
        %4298 = vmatprep.subr.bf16.mxu0 0
        %4299 = vmatpush1.bf16.msra.mxu0 0
        %4300 = vmatprep.mubr.bf16.mxu0 0
        %4301 = vmatmul.mubr.bf16.gmra.mrb[0].mxu0 %v4263
        %v4302 = vpop.f32.mrb[0].mxu0
        %v4303 = vadd.f32 0.0, %v4302
        %v4304 = vpop.f32.mrb[0].mxu0
        %v4305 = vpop.f32.mrb[0].mxu0
        %v4306 = vadd.f32 0.0, %v4305
        %v4307 = vpop.f32.mrb[0].mxu0
        %4308 = vmatprep.mubr.bf16.mxu0 0
        %4309 = vmatmul.mubr.bf16.gmra.mrb[0].mxu0 %v4266
        %v4310 = vpop.f32.mrb[0].mxu0
        %v4311 = vadd.f32 0.0, %v4310
        %v4312 = vpop.f32.mrb[0].mxu0
        %v4313 = vpop.f32.mrb[0].mxu0
        %v4314 = vadd.f32 0.0, %v4313
        %v4315 = vpop.f32.mrb[0].mxu0
        %4316 = vdwg.mxu0
        %v4317 = vadd.f32 %v4066, %v4303
        %v4318 = vadd.f32 %v4067, %v4306
        %v4319 = vadd.f32 %v4068, %v4311
        %v4320 = vadd.f32 %v4069, %v4314
        %s4321 = scalar_lea.vmem %s13, 32
        %v4322 = vld [vmem:[%s4321] sm:$0xf]
        %v4323 = vld [vmem:[%s4321 + $0x4] sm:$0xf]
        %v4324 = vld [vmem:[%s4321 + $0x8] sm:$0xf]
        %v4325 = vld [vmem:[%s4321 + $0xc] sm:$0xf]
        %v4326 = vld [vmem:[%s4321 + $0x10] sm:$0xf]
        %v4327 = vld [vmem:[%s4321 + $0x14] sm:$0xf]
        %v4328 = vld [vmem:[%s4321 + $0x18] sm:$0xf]
        %v4329 = vld [vmem:[%s4321 + $0x1c] sm:$0xf]
        %4332 = vrot.lane.b32.xlu0 %v3318, 64
        %v4333 = vpop.permute.xlu0 %4332
        %4334 = vrot.lane.b32.xlu0 %v3320, 64
        %v4335 = vpop.permute.xlu0 %4334
        %v4337 = vsel %vm940, %v3318, 0
        %v4340 = vsel %vm940, %v3320, 0
        %v4343 = vsel %vm940, %v4333, 0
        %v4346 = vsel %vm940, %v4335, 0
        %4348 = vmatprep.subr.bf16.mxu0 0
        %4349 = vmatpush1.bf16.xpose.msra.mxu0 %v4343
        %4350 = vmatprep.subr.bf16.mxu0 0
        %4351 = vmatpush1.bf16.xpose.msra.mxu0 %v4346
        %4352 = vmatprep.subr.bf16.mxu0 0
        %4353 = vmatpush1.bf16.xpose.msra.mxu0 0
        %4354 = vmatprep.subr.bf16.mxu0 0
        %4355 = vmatpush1.bf16.xpose.msra.mxu0 0
        %4356 = vmatprep.subr.bf16.mxu0 0
        %4357 = vmatpush1.bf16.xpose.msra.mxu0 0
        %4358 = vmatprep.subr.bf16.mxu0 0
        %4359 = vmatpush1.bf16.xpose.msra.mxu0 0
        %4360 = vmatprep.subr.bf16.mxu0 0
        %4361 = vmatpush1.bf16.xpose.msra.mxu0 0
        %4362 = vmatprep.subr.bf16.mxu0 0
        %4363 = vmatpush1.bf16.xpose.msra.mxu0 0
        %4364 = vmatprep.subr.bf16.mxu0 0
        %4365 = vmatpush1.bf16.xpose.msra.mxu0 0
        %4366 = vmatprep.subr.bf16.mxu0 0
        %4367 = vmatpush1.bf16.xpose.msra.mxu0 0
        %4368 = vmatprep.subr.bf16.mxu0 0
        %4369 = vmatpush1.bf16.xpose.msra.mxu0 0
        %4370 = vmatprep.subr.bf16.mxu0 0
        %4371 = vmatpush1.bf16.xpose.msra.mxu0 0
        %4372 = vmatprep.subr.bf16.mxu0 0
        %4373 = vmatpush1.bf16.xpose.msra.mxu0 0
        %4374 = vmatprep.subr.bf16.mxu0 0
        %4375 = vmatpush1.bf16.xpose.msra.mxu0 0
        %4376 = vmatprep.subr.bf16.mxu0 0
        %4377 = vmatpush1.bf16.xpose.msra.mxu0 0
        %4378 = vmatprep.subr.bf16.mxu0 0
        %4379 = vmatpush1.bf16.xpose.msra.mxu0 0
        %4380 = vmatprep.mubr.bf16.mxu0 0
        %4381 = vmatmul.mubr.bf16.gmra.mrb[0].mxu0 %v4337
        %v4382 = vpop.f32.mrb[0].mxu0
        %v4383 = vadd.f32 0.0, %v4382
        %v4384 = vpop.f32.mrb[0].mxu0
        %v4385 = vpop.f32.mrb[0].mxu0
        %v4386 = vadd.f32 0.0, %v4385
        %v4387 = vpop.f32.mrb[0].mxu0
        %4388 = vmatprep.mubr.bf16.mxu0 0
        %4389 = vmatmul.mubr.bf16.gmra.mrb[0].mxu0 %v4340
        %v4390 = vpop.f32.mrb[0].mxu0
        %v4391 = vadd.f32 0.0, %v4390
        %v4392 = vpop.f32.mrb[0].mxu0
        %v4393 = vpop.f32.mrb[0].mxu0
        %v4394 = vadd.f32 0.0, %v4393
        %v4395 = vpop.f32.mrb[0].mxu0
        %4396 = vdwg.mxu0
        %v4397 = vmul.f32 %v4383, 0.25
        %v4398 = vmul.f32 %v4386, 0.25
        %v4399 = vmul.f32 %v4391, 0.25
        %v4400 = vmul.f32 %v4394, 0.25
        %v4401 = vadd.f32 %v4397, %v512
        %v4402 = vadd.f32 %v4398, %v513
        %v4403 = vadd.f32 %v4399, %v514
        %v4404 = vadd.f32 %v4400, %v515
        %v4405 = vsel %vm535, %v4401, -inf
        %4406 = vmax.xlane.f32.xlu0 %v4405
        %v4407 = vpop.xlane.xlu0 %4406
        %v4408 = vsel %vm535, %v4402, -inf
        %4409 = vmax.xlane.f32.xlu0 %v4408
        %v4410 = vpop.xlane.xlu0 %4409
        %v4411 = vsel %vm535, %v4403, -inf
        %4412 = vmax.xlane.f32.xlu0 %v4411
        %v4413 = vpop.xlane.xlu0 %4412
        %v4414 = vsel %vm535, %v4404, -inf
        %4415 = vmax.xlane.f32.xlu0 %v4414
        %v4416 = vpop.xlane.xlu0 %4415
        %v4417 = vsub.f32 %v4401, %v4407
        %v4418 = vsub.f32 %v4402, %v4410
        %v4419 = vsub.f32 %v4403, %v4413
        %v4420 = vsub.f32 %v4404, %v4416
        %v4421 = vmul.f32 %v4417, 1.442695
        %v4422 = vpow.pop %v4421
        %v4423 = vmul.f32 %v4418, 1.442695
        %v4424 = vpow.pop %v4423
        %v4425 = vmul.f32 %v4419, 1.442695
        %v4426 = vpow.pop %v4425
        %v4427 = vmul.f32 %v4420, 1.442695
        %v4428 = vpow.pop %v4427
        %v4429 = vsel %vm535, %v4422, 0.0
        %4430 = vadd.xlane.f32.xlu0 %v4429
        %v4431 = vpop.xlane.xlu0 %4430
        %v4432 = vsel %vm535, %v4424, 0.0
        %4433 = vadd.xlane.f32.xlu0 %v4432
        %v4434 = vpop.xlane.xlu0 %4433
        %v4435 = vsel %vm535, %v4426, 0.0
        %4436 = vadd.xlane.f32.xlu0 %v4435
        %v4437 = vpop.xlane.xlu0 %4436
        %v4438 = vsel %vm535, %v4428, 0.0
        %4439 = vadd.xlane.f32.xlu0 %v4438
        %v4440 = vpop.xlane.xlu0 %4439
        %v4441 = vrcp.pop %v4431
        %v4442 = vmul.f32 %v4422, %v4441
        %v4443 = vrcp.pop %v4434
        %v4444 = vmul.f32 %v4424, %v4443
        %v4445 = vrcp.pop %v4437
        %v4446 = vmul.f32 %v4426, %v4445
        %v4447 = vrcp.pop %v4440
        %v4448 = vmul.f32 %v4428, %v4447
        %v4449 = vpack.c.bf16 %v4444, %v4442
        %v4450 = vpack.c.bf16 %v4448, %v4446
        %v4452 = vsel %vm535, %v4449, 0
        %v4455 = vsel %vm535, %v4450, 0
        %4457 = vmatprep.subr.bf16.mxu0 0
        %4458 = vmatpush1.bf16.msra.mxu0 %v3319
        %4459 = vmatprep.subr.bf16.mxu0 0
        %4460 = vmatpush1.bf16.msra.mxu0 %v3321
        %4461 = vmatprep.subr.bf16.mxu0 0
        %4462 = vmatpush1.bf16.msra.mxu0 0
        %4463 = vmatprep.subr.bf16.mxu0 0
        %4464 = vmatpush1.bf16.msra.mxu0 0
        %4465 = vmatprep.subr.bf16.mxu0 0
        %4466 = vmatpush1.bf16.msra.mxu0 0
        %4467 = vmatprep.subr.bf16.mxu0 0
        %4468 = vmatpush1.bf16.msra.mxu0 0
        %4469 = vmatprep.subr.bf16.mxu0 0
        %4470 = vmatpush1.bf16.msra.mxu0 0
        %4471 = vmatprep.subr.bf16.mxu0 0
        %4472 = vmatpush1.bf16.msra.mxu0 0
        %4473 = vmatprep.subr.bf16.mxu0 0
        %4474 = vmatpush1.bf16.msra.mxu0 0
        %4475 = vmatprep.subr.bf16.mxu0 0
        %4476 = vmatpush1.bf16.msra.mxu0 0
        %4477 = vmatprep.subr.bf16.mxu0 0
        %4478 = vmatpush1.bf16.msra.mxu0 0
        %4479 = vmatprep.subr.bf16.mxu0 0
        %4480 = vmatpush1.bf16.msra.mxu0 0
        %4481 = vmatprep.subr.bf16.mxu0 0
        %4482 = vmatpush1.bf16.msra.mxu0 0
        %4483 = vmatprep.subr.bf16.mxu0 0
        %4484 = vmatpush1.bf16.msra.mxu0 0
        %4485 = vmatprep.subr.bf16.mxu0 0
        %4486 = vmatpush1.bf16.msra.mxu0 0
        %4487 = vmatprep.subr.bf16.mxu0 0
        %4488 = vmatpush1.bf16.msra.mxu0 0
        %4489 = vmatprep.mubr.bf16.mxu0 0
        %4490 = vmatmul.mubr.bf16.gmra.mrb[0].mxu0 %v4452
        %v4491 = vpop.f32.mrb[0].mxu0
        %v4492 = vadd.f32 0.0, %v4491
        %v4493 = vpop.f32.mrb[0].mxu0
        %v4494 = vpop.f32.mrb[0].mxu0
        %v4495 = vadd.f32 0.0, %v4494
        %v4496 = vpop.f32.mrb[0].mxu0
        %4497 = vmatprep.mubr.bf16.mxu0 0
        %4498 = vmatmul.mubr.bf16.gmra.mrb[0].mxu0 %v4455
        %v4499 = vpop.f32.mrb[0].mxu0
        %v4500 = vadd.f32 0.0, %v4499
        %v4501 = vpop.f32.mrb[0].mxu0
        %v4502 = vpop.f32.mrb[0].mxu0
        %v4503 = vadd.f32 0.0, %v4502
        %v4504 = vpop.f32.mrb[0].mxu0
        %4505 = vdwg.mxu0
        %v4506 = vpack.c.bf16 %v4495, %v4492
        %v4507 = vpack.c.bf16 %v4503, %v4500
        %v4510 = vunpack.c.l.b16 %v4322
        %v4511 = vunpack.c.l.b16 %v4323
        %v4512 = vpack.c.b16 %v4511, %v4510
        %v4515 = vsel %vm940, %v4506, 0
        %v4518 = vsel %vm940, %v4507, 0
        %4520 = vmatprep.subr.bf16.mxu0 0
        %4521 = vmatpush1.bf16.msra.mxu0 %v4512
        %4522 = vmatprep.subr.bf16.mxu0 0
        %4523 = vmatpush1.bf16.msra.mxu0 0
        %4524 = vmatprep.subr.bf16.mxu0 0
        %4525 = vmatpush1.bf16.msra.mxu0 0
        %4526 = vmatprep.subr.bf16.mxu0 0
        %4527 = vmatpush1.bf16.msra.mxu0 0
        %4528 = vmatprep.subr.bf16.mxu0 0
        %4529 = vmatpush1.bf16.msra.mxu0 0
        %4530 = vmatprep.subr.bf16.mxu0 0
        %4531 = vmatpush1.bf16.msra.mxu0 0
        %4532 = vmatprep.subr.bf16.mxu0 0
        %4533 = vmatpush1.bf16.msra.mxu0 0
        %4534 = vmatprep.subr.bf16.mxu0 0
        %4535 = vmatpush1.bf16.msra.mxu0 0
        %4536 = vmatprep.subr.bf16.mxu0 0
        %4537 = vmatpush1.bf16.msra.mxu0 0
        %4538 = vmatprep.subr.bf16.mxu0 0
        %4539 = vmatpush1.bf16.msra.mxu0 0
        %4540 = vmatprep.subr.bf16.mxu0 0
        %4541 = vmatpush1.bf16.msra.mxu0 0
        %4542 = vmatprep.subr.bf16.mxu0 0
        %4543 = vmatpush1.bf16.msra.mxu0 0
        %4544 = vmatprep.subr.bf16.mxu0 0
        %4545 = vmatpush1.bf16.msra.mxu0 0
        %4546 = vmatprep.subr.bf16.mxu0 0
        %4547 = vmatpush1.bf16.msra.mxu0 0
        %4548 = vmatprep.subr.bf16.mxu0 0
        %4549 = vmatpush1.bf16.msra.mxu0 0
        %4550 = vmatprep.subr.bf16.mxu0 0
        %4551 = vmatpush1.bf16.msra.mxu0 0
        %4552 = vmatprep.mubr.bf16.mxu0 0
        %4553 = vmatmul.mubr.bf16.gmra.mrb[0].mxu0 %v4515
        %v4554 = vpop.f32.mrb[0].mxu0
        %v4555 = vadd.f32 0.0, %v4554
        %v4556 = vpop.f32.mrb[0].mxu0
        %v4557 = vpop.f32.mrb[0].mxu0
        %v4558 = vadd.f32 0.0, %v4557
        %v4559 = vpop.f32.mrb[0].mxu0
        %4560 = vmatprep.mubr.bf16.mxu0 0
        %4561 = vmatmul.mubr.bf16.gmra.mrb[0].mxu0 %v4518
        %v4562 = vpop.f32.mrb[0].mxu0
        %v4563 = vadd.f32 0.0, %v4562
        %v4564 = vpop.f32.mrb[0].mxu0
        %v4565 = vpop.f32.mrb[0].mxu0
        %v4566 = vadd.f32 0.0, %v4565
        %v4567 = vpop.f32.mrb[0].mxu0
        %4568 = vdwg.mxu0
        %v4569 = vadd.f32 %v4317, %v4555
        %v4570 = vadd.f32 %v4318, %v4558
        %v4571 = vadd.f32 %v4319, %v4563
        %v4572 = vadd.f32 %v4320, %v4566
        %4573 = vrot.lane.b32.xlu0 %v3318, 112
        %v4574 = vpop.permute.xlu0 %4573
        %4575 = vrot.lane.b32.xlu0 %v3320, 112
        %v4576 = vpop.permute.xlu0 %4575
        %4577 = vrot.lane.b32.xlu0 %v3318, 48
        %v4578 = vpop.permute.xlu0 %4577
        %4579 = vrot.lane.b32.xlu0 %v3320, 48
        %v4580 = vpop.permute.xlu0 %4579
        %v4582 = vsel %vm940, %v4574, 0
        %v4585 = vsel %vm940, %v4576, 0
        %v4588 = vsel %vm940, %v4578, 0
        %v4591 = vsel %vm940, %v4580, 0
        %4593 = vmatprep.subr.bf16.mxu0 0
        %4594 = vmatpush1.bf16.xpose.msra.mxu0 %v4588
        %4595 = vmatprep.subr.bf16.mxu0 0
        %4596 = vmatpush1.bf16.xpose.msra.mxu0 %v4591
        %4597 = vmatprep.subr.bf16.mxu0 0
        %4598 = vmatpush1.bf16.xpose.msra.mxu0 0
        %4599 = vmatprep.subr.bf16.mxu0 0
        %4600 = vmatpush1.bf16.xpose.msra.mxu0 0
        %4601 = vmatprep.subr.bf16.mxu0 0
        %4602 = vmatpush1.bf16.xpose.msra.mxu0 0
        %4603 = vmatprep.subr.bf16.mxu0 0
        %4604 = vmatpush1.bf16.xpose.msra.mxu0 0
        %4605 = vmatprep.subr.bf16.mxu0 0
        %4606 = vmatpush1.bf16.xpose.msra.mxu0 0
        %4607 = vmatprep.subr.bf16.mxu0 0
        %4608 = vmatpush1.bf16.xpose.msra.mxu0 0
        %4609 = vmatprep.subr.bf16.mxu0 0
        %4610 = vmatpush1.bf16.xpose.msra.mxu0 0
        %4611 = vmatprep.subr.bf16.mxu0 0
        %4612 = vmatpush1.bf16.xpose.msra.mxu0 0
        %4613 = vmatprep.subr.bf16.mxu0 0
        %4614 = vmatpush1.bf16.xpose.msra.mxu0 0
        %4615 = vmatprep.subr.bf16.mxu0 0
        %4616 = vmatpush1.bf16.xpose.msra.mxu0 0
        %4617 = vmatprep.subr.bf16.mxu0 0
        %4618 = vmatpush1.bf16.xpose.msra.mxu0 0
        %4619 = vmatprep.subr.bf16.mxu0 0
        %4620 = vmatpush1.bf16.xpose.msra.mxu0 0
        %4621 = vmatprep.subr.bf16.mxu0 0
        %4622 = vmatpush1.bf16.xpose.msra.mxu0 0
        %4623 = vmatprep.subr.bf16.mxu0 0
        %4624 = vmatpush1.bf16.xpose.msra.mxu0 0
        %4625 = vmatprep.mubr.bf16.mxu0 0
        %4626 = vmatmul.mubr.bf16.gmra.mrb[0].mxu0 %v4582
        %v4627 = vpop.f32.mrb[0].mxu0
        %v4628 = vadd.f32 0.0, %v4627
        %v4629 = vpop.f32.mrb[0].mxu0
        %v4630 = vpop.f32.mrb[0].mxu0
        %v4631 = vadd.f32 0.0, %v4630
        %v4632 = vpop.f32.mrb[0].mxu0
        %4633 = vmatprep.mubr.bf16.mxu0 0
        %4634 = vmatmul.mubr.bf16.gmra.mrb[0].mxu0 %v4585
        %v4635 = vpop.f32.mrb[0].mxu0
        %v4636 = vadd.f32 0.0, %v4635
        %v4637 = vpop.f32.mrb[0].mxu0
        %v4638 = vpop.f32.mrb[0].mxu0
        %v4639 = vadd.f32 0.0, %v4638
        %v4640 = vpop.f32.mrb[0].mxu0
        %4641 = vdwg.mxu0
        %v4642 = vmul.f32 %v4628, 0.25
        %v4643 = vmul.f32 %v4631, 0.25
        %v4644 = vmul.f32 %v4636, 0.25
        %v4645 = vmul.f32 %v4639, 0.25
        %v4646 = vadd.f32 %v4642, %v512
        %v4647 = vadd.f32 %v4643, %v513
        %v4648 = vadd.f32 %v4644, %v514
        %v4649 = vadd.f32 %v4645, %v515
        %v4650 = vsel %vm535, %v4646, -inf
        %4651 = vmax.xlane.f32.xlu0 %v4650
        %v4652 = vpop.xlane.xlu0 %4651
        %v4653 = vsel %vm535, %v4647, -inf
        %4654 = vmax.xlane.f32.xlu0 %v4653
        %v4655 = vpop.xlane.xlu0 %4654
        %v4656 = vsel %vm535, %v4648, -inf
        %4657 = vmax.xlane.f32.xlu0 %v4656
        %v4658 = vpop.xlane.xlu0 %4657
        %v4659 = vsel %vm535, %v4649, -inf
        %4660 = vmax.xlane.f32.xlu0 %v4659
        %v4661 = vpop.xlane.xlu0 %4660
        %v4662 = vsub.f32 %v4646, %v4652
        %v4663 = vsub.f32 %v4647, %v4655
        %v4664 = vsub.f32 %v4648, %v4658
        %v4665 = vsub.f32 %v4649, %v4661
        %v4666 = vmul.f32 %v4662, 1.442695
        %v4667 = vpow.pop %v4666
        %v4668 = vmul.f32 %v4663, 1.442695
        %v4669 = vpow.pop %v4668
        %v4670 = vmul.f32 %v4664, 1.442695
        %v4671 = vpow.pop %v4670
        %v4672 = vmul.f32 %v4665, 1.442695
        %v4673 = vpow.pop %v4672
        %v4674 = vsel %vm535, %v4667, 0.0
        %4675 = vadd.xlane.f32.xlu0 %v4674
        %v4676 = vpop.xlane.xlu0 %4675
        %v4677 = vsel %vm535, %v4669, 0.0
        %4678 = vadd.xlane.f32.xlu0 %v4677
        %v4679 = vpop.xlane.xlu0 %4678
        %v4680 = vsel %vm535, %v4671, 0.0
        %4681 = vadd.xlane.f32.xlu0 %v4680
        %v4682 = vpop.xlane.xlu0 %4681
        %v4683 = vsel %vm535, %v4673, 0.0
        %4684 = vadd.xlane.f32.xlu0 %v4683
        %v4685 = vpop.xlane.xlu0 %4684
        %v4686 = vrcp.pop %v4676
        %v4687 = vmul.f32 %v4667, %v4686
        %v4688 = vrcp.pop %v4679
        %v4689 = vmul.f32 %v4669, %v4688
        %v4690 = vrcp.pop %v4682
        %v4691 = vmul.f32 %v4671, %v4690
        %v4692 = vrcp.pop %v4685
        %v4693 = vmul.f32 %v4673, %v4692
        %v4694 = vpack.c.bf16 %v4689, %v4687
        %v4695 = vpack.c.bf16 %v4693, %v4691
        %4698 = vrot.lane.b32.xlu0 %v3319, 112
        %v4699 = vpop.permute.xlu0 %4698
        %4700 = vrot.lane.b32.xlu0 %v3321, 112
        %v4701 = vpop.permute.xlu0 %4700
        %v4705 = vsel %vm535, %v4694, 0
        %v4708 = vsel %vm535, %v4695, 0
        %4710 = vmatprep.subr.bf16.mxu0 0
        %4711 = vmatpush1.bf16.msra.mxu0 %v4699
        %4712 = vmatprep.subr.bf16.mxu0 0
        %4713 = vmatpush1.bf16.msra.mxu0 %v4701
        %4714 = vmatprep.subr.bf16.mxu0 0
        %4715 = vmatpush1.bf16.msra.mxu0 0
        %4716 = vmatprep.subr.bf16.mxu0 0
        %4717 = vmatpush1.bf16.msra.mxu0 0
        %4718 = vmatprep.subr.bf16.mxu0 0
        %4719 = vmatpush1.bf16.msra.mxu0 0
        %4720 = vmatprep.subr.bf16.mxu0 0
        %4721 = vmatpush1.bf16.msra.mxu0 0
        %4722 = vmatprep.subr.bf16.mxu0 0
        %4723 = vmatpush1.bf16.msra.mxu0 0
        %4724 = vmatprep.subr.bf16.mxu0 0
        %4725 = vmatpush1.bf16.msra.mxu0 0
        %4726 = vmatprep.subr.bf16.mxu0 0
        %4727 = vmatpush1.bf16.msra.mxu0 0
        %4728 = vmatprep.subr.bf16.mxu0 0
        %4729 = vmatpush1.bf16.msra.mxu0 0
        %4730 = vmatprep.subr.bf16.mxu0 0
        %4731 = vmatpush1.bf16.msra.mxu0 0
        %4732 = vmatprep.subr.bf16.mxu0 0
        %4733 = vmatpush1.bf16.msra.mxu0 0
        %4734 = vmatprep.subr.bf16.mxu0 0
        %4735 = vmatpush1.bf16.msra.mxu0 0
        %4736 = vmatprep.subr.bf16.mxu0 0
        %4737 = vmatpush1.bf16.msra.mxu0 0
        %4738 = vmatprep.subr.bf16.mxu0 0
        %4739 = vmatpush1.bf16.msra.mxu0 0
        %4740 = vmatprep.subr.bf16.mxu0 0
        %4741 = vmatpush1.bf16.msra.mxu0 0
        %4742 = vmatprep.mubr.bf16.mxu0 0
        %4743 = vmatmul.mubr.bf16.gmra.mrb[0].mxu0 %v4705
        %v4744 = vpop.f32.mrb[0].mxu0
        %v4745 = vadd.f32 0.0, %v4744
        %v4746 = vpop.f32.mrb[0].mxu0
        %v4747 = vpop.f32.mrb[0].mxu0
        %v4748 = vadd.f32 0.0, %v4747
        %v4749 = vpop.f32.mrb[0].mxu0
        %4750 = vmatprep.mubr.bf16.mxu0 0
        %4751 = vmatmul.mubr.bf16.gmra.mrb[0].mxu0 %v4708
        %v4752 = vpop.f32.mrb[0].mxu0
        %v4753 = vadd.f32 0.0, %v4752
        %v4754 = vpop.f32.mrb[0].mxu0
        %v4755 = vpop.f32.mrb[0].mxu0
        %v4756 = vadd.f32 0.0, %v4755
        %v4757 = vpop.f32.mrb[0].mxu0
        %4758 = vdwg.mxu0
        %v4759 = vpack.c.bf16 %v4748, %v4745
        %v4760 = vpack.c.bf16 %v4756, %v4753
        %v4763 = vunpack.c.l.b16 %v4324
        %v4764 = vunpack.c.l.b16 %v4325
        %v4765 = vpack.c.b16 %v4764, %v4763
        %v4768 = vsel %vm940, %v4759, 0
        %v4771 = vsel %vm940, %v4760, 0
        %4773 = vmatprep.subr.bf16.mxu0 0
        %4774 = vmatpush1.bf16.msra.mxu0 %v4765
        %4775 = vmatprep.subr.bf16.mxu0 0
        %4776 = vmatpush1.bf16.msra.mxu0 0
        %4777 = vmatprep.subr.bf16.mxu0 0
        %4778 = vmatpush1.bf16.msra.mxu0 0
        %4779 = vmatprep.subr.bf16.mxu0 0
        %4780 = vmatpush1.bf16.msra.mxu0 0
        %4781 = vmatprep.subr.bf16.mxu0 0
        %4782 = vmatpush1.bf16.msra.mxu0 0
        %4783 = vmatprep.subr.bf16.mxu0 0
        %4784 = vmatpush1.bf16.msra.mxu0 0
        %4785 = vmatprep.subr.bf16.mxu0 0
        %4786 = vmatpush1.bf16.msra.mxu0 0
        %4787 = vmatprep.subr.bf16.mxu0 0
        %4788 = vmatpush1.bf16.msra.mxu0 0
        %4789 = vmatprep.subr.bf16.mxu0 0
        %4790 = vmatpush1.bf16.msra.mxu0 0
        %4791 = vmatprep.subr.bf16.mxu0 0
        %4792 = vmatpush1.bf16.msra.mxu0 0
        %4793 = vmatprep.subr.bf16.mxu0 0
        %4794 = vmatpush1.bf16.msra.mxu0 0
        %4795 = vmatprep.subr.bf16.mxu0 0
        %4796 = vmatpush1.bf16.msra.mxu0 0
        %4797 = vmatprep.subr.bf16.mxu0 0
        %4798 = vmatpush1.bf16.msra.mxu0 0
        %4799 = vmatprep.subr.bf16.mxu0 0
        %4800 = vmatpush1.bf16.msra.mxu0 0
        %4801 = vmatprep.subr.bf16.mxu0 0
        %4802 = vmatpush1.bf16.msra.mxu0 0
        %4803 = vmatprep.subr.bf16.mxu0 0
        %4804 = vmatpush1.bf16.msra.mxu0 0
        %4805 = vmatprep.mubr.bf16.mxu0 0
        %4806 = vmatmul.mubr.bf16.gmra.mrb[0].mxu0 %v4768
        %v4807 = vpop.f32.mrb[0].mxu0
        %v4808 = vadd.f32 0.0, %v4807
        %v4809 = vpop.f32.mrb[0].mxu0
        %v4810 = vpop.f32.mrb[0].mxu0
        %v4811 = vadd.f32 0.0, %v4810
        %v4812 = vpop.f32.mrb[0].mxu0
        %4813 = vmatprep.mubr.bf16.mxu0 0
        %4814 = vmatmul.mubr.bf16.gmra.mrb[0].mxu0 %v4771
        %v4815 = vpop.f32.mrb[0].mxu0
        %v4816 = vadd.f32 0.0, %v4815
        %v4817 = vpop.f32.mrb[0].mxu0
        %v4818 = vpop.f32.mrb[0].mxu0
        %v4819 = vadd.f32 0.0, %v4818
        %v4820 = vpop.f32.mrb[0].mxu0
        %4821 = vdwg.mxu0
        %v4822 = vadd.f32 %v4569, %v4808
        %v4823 = vadd.f32 %v4570, %v4811
        %v4824 = vadd.f32 %v4571, %v4816
        %v4825 = vadd.f32 %v4572, %v4819
        %4826 = vrot.lane.b32.xlu0 %v3318, 96
        %v4827 = vpop.permute.xlu0 %4826
        %4828 = vrot.lane.b32.xlu0 %v3320, 96
        %v4829 = vpop.permute.xlu0 %4828
        %4830 = vrot.lane.b32.xlu0 %v3318, 32
        %v4831 = vpop.permute.xlu0 %4830
        %4832 = vrot.lane.b32.xlu0 %v3320, 32
        %v4833 = vpop.permute.xlu0 %4832
        %v4835 = vsel %vm940, %v4827, 0
        %v4838 = vsel %vm940, %v4829, 0
        %v4841 = vsel %vm940, %v4831, 0
        %v4844 = vsel %vm940, %v4833, 0
        %4846 = vmatprep.subr.bf16.mxu0 0
        %4847 = vmatpush1.bf16.xpose.msra.mxu0 %v4841
        %4848 = vmatprep.subr.bf16.mxu0 0
        %4849 = vmatpush1.bf16.xpose.msra.mxu0 %v4844
        %4850 = vmatprep.subr.bf16.mxu0 0
        %4851 = vmatpush1.bf16.xpose.msra.mxu0 0
        %4852 = vmatprep.subr.bf16.mxu0 0
        %4853 = vmatpush1.bf16.xpose.msra.mxu0 0
        %4854 = vmatprep.subr.bf16.mxu0 0
        %4855 = vmatpush1.bf16.xpose.msra.mxu0 0
        %4856 = vmatprep.subr.bf16.mxu0 0
        %4857 = vmatpush1.bf16.xpose.msra.mxu0 0
        %4858 = vmatprep.subr.bf16.mxu0 0
        %4859 = vmatpush1.bf16.xpose.msra.mxu0 0
        %4860 = vmatprep.subr.bf16.mxu0 0
        %4861 = vmatpush1.bf16.xpose.msra.mxu0 0
        %4862 = vmatprep.subr.bf16.mxu0 0
        %4863 = vmatpush1.bf16.xpose.msra.mxu0 0
        %4864 = vmatprep.subr.bf16.mxu0 0
        %4865 = vmatpush1.bf16.xpose.msra.mxu0 0
        %4866 = vmatprep.subr.bf16.mxu0 0
        %4867 = vmatpush1.bf16.xpose.msra.mxu0 0
        %4868 = vmatprep.subr.bf16.mxu0 0
        %4869 = vmatpush1.bf16.xpose.msra.mxu0 0
        %4870 = vmatprep.subr.bf16.mxu0 0
        %4871 = vmatpush1.bf16.xpose.msra.mxu0 0
        %4872 = vmatprep.subr.bf16.mxu0 0
        %4873 = vmatpush1.bf16.xpose.msra.mxu0 0
        %4874 = vmatprep.subr.bf16.mxu0 0
        %4875 = vmatpush1.bf16.xpose.msra.mxu0 0
        %4876 = vmatprep.subr.bf16.mxu0 0
        %4877 = vmatpush1.bf16.xpose.msra.mxu0 0
        %4878 = vmatprep.mubr.bf16.mxu0 0
        %4879 = vmatmul.mubr.bf16.gmra.mrb[0].mxu0 %v4835
        %v4880 = vpop.f32.mrb[0].mxu0
        %v4881 = vadd.f32 0.0, %v4880
        %v4882 = vpop.f32.mrb[0].mxu0
        %v4883 = vpop.f32.mrb[0].mxu0
        %v4884 = vadd.f32 0.0, %v4883
        %v4885 = vpop.f32.mrb[0].mxu0
        %4886 = vmatprep.mubr.bf16.mxu0 0
        %4887 = vmatmul.mubr.bf16.gmra.mrb[0].mxu0 %v4838
        %v4888 = vpop.f32.mrb[0].mxu0
        %v4889 = vadd.f32 0.0, %v4888
        %v4890 = vpop.f32.mrb[0].mxu0
        %v4891 = vpop.f32.mrb[0].mxu0
        %v4892 = vadd.f32 0.0, %v4891
        %v4893 = vpop.f32.mrb[0].mxu0
        %4894 = vdwg.mxu0
        %v4895 = vmul.f32 %v4881, 0.25
        %v4896 = vmul.f32 %v4884, 0.25
        %v4897 = vmul.f32 %v4889, 0.25
        %v4898 = vmul.f32 %v4892, 0.25
        %v4899 = vadd.f32 %v4895, %v512
        %v4900 = vadd.f32 %v4896, %v513
        %v4901 = vadd.f32 %v4897, %v514
        %v4902 = vadd.f32 %v4898, %v515
        %v4903 = vsel %vm535, %v4899, -inf
        %4904 = vmax.xlane.f32.xlu0 %v4903
        %v4905 = vpop.xlane.xlu0 %4904
        %v4906 = vsel %vm535, %v4900, -inf
        %4907 = vmax.xlane.f32.xlu0 %v4906
        %v4908 = vpop.xlane.xlu0 %4907
        %v4909 = vsel %vm535, %v4901, -inf
        %4910 = vmax.xlane.f32.xlu0 %v4909
        %v4911 = vpop.xlane.xlu0 %4910
        %v4912 = vsel %vm535, %v4902, -inf
        %4913 = vmax.xlane.f32.xlu0 %v4912
        %v4914 = vpop.xlane.xlu0 %4913
        %v4915 = vsub.f32 %v4899, %v4905
        %v4916 = vsub.f32 %v4900, %v4908
        %v4917 = vsub.f32 %v4901, %v4911
        %v4918 = vsub.f32 %v4902, %v4914
        %v4919 = vmul.f32 %v4915, 1.442695
        %v4920 = vpow.pop %v4919
        %v4921 = vmul.f32 %v4916, 1.442695
        %v4922 = vpow.pop %v4921
        %v4923 = vmul.f32 %v4917, 1.442695
        %v4924 = vpow.pop %v4923
        %v4925 = vmul.f32 %v4918, 1.442695
        %v4926 = vpow.pop %v4925
        %v4927 = vsel %vm535, %v4920, 0.0
        %4928 = vadd.xlane.f32.xlu0 %v4927
        %v4929 = vpop.xlane.xlu0 %4928
        %v4930 = vsel %vm535, %v4922, 0.0
        %4931 = vadd.xlane.f32.xlu0 %v4930
        %v4932 = vpop.xlane.xlu0 %4931
        %v4933 = vsel %vm535, %v4924, 0.0
        %4934 = vadd.xlane.f32.xlu0 %v4933
        %v4935 = vpop.xlane.xlu0 %4934
        %v4936 = vsel %vm535, %v4926, 0.0
        %4937 = vadd.xlane.f32.xlu0 %v4936
        %v4938 = vpop.xlane.xlu0 %4937
        %v4939 = vrcp.pop %v4929
        %v4940 = vmul.f32 %v4920, %v4939
        %v4941 = vrcp.pop %v4932
        %v4942 = vmul.f32 %v4922, %v4941
        %v4943 = vrcp.pop %v4935
        %v4944 = vmul.f32 %v4924, %v4943
        %v4945 = vrcp.pop %v4938
        %v4946 = vmul.f32 %v4926, %v4945
        %v4947 = vpack.c.bf16 %v4942, %v4940
        %v4948 = vpack.c.bf16 %v4946, %v4944
        %4949 = vrot.lane.b32.xlu0 %v3319, 96
        %v4950 = vpop.permute.xlu0 %4949
        %4951 = vrot.lane.b32.xlu0 %v3321, 96
        %v4952 = vpop.permute.xlu0 %4951
        %v4956 = vsel %vm535, %v4947, 0
        %v4959 = vsel %vm535, %v4948, 0
        %4961 = vmatprep.subr.bf16.mxu0 0
        %4962 = vmatpush1.bf16.msra.mxu0 %v4950
        %4963 = vmatprep.subr.bf16.mxu0 0
        %4964 = vmatpush1.bf16.msra.mxu0 %v4952
        %4965 = vmatprep.subr.bf16.mxu0 0
        %4966 = vmatpush1.bf16.msra.mxu0 0
        %4967 = vmatprep.subr.bf16.mxu0 0
        %4968 = vmatpush1.bf16.msra.mxu0 0
        %4969 = vmatprep.subr.bf16.mxu0 0
        %4970 = vmatpush1.bf16.msra.mxu0 0
        %4971 = vmatprep.subr.bf16.mxu0 0
        %4972 = vmatpush1.bf16.msra.mxu0 0
        %4973 = vmatprep.subr.bf16.mxu0 0
        %4974 = vmatpush1.bf16.msra.mxu0 0
        %4975 = vmatprep.subr.bf16.mxu0 0
        %4976 = vmatpush1.bf16.msra.mxu0 0
        %4977 = vmatprep.subr.bf16.mxu0 0
        %4978 = vmatpush1.bf16.msra.mxu0 0
        %4979 = vmatprep.subr.bf16.mxu0 0
        %4980 = vmatpush1.bf16.msra.mxu0 0
        %4981 = vmatprep.subr.bf16.mxu0 0
        %4982 = vmatpush1.bf16.msra.mxu0 0
        %4983 = vmatprep.subr.bf16.mxu0 0
        %4984 = vmatpush1.bf16.msra.mxu0 0
        %4985 = vmatprep.subr.bf16.mxu0 0
        %4986 = vmatpush1.bf16.msra.mxu0 0
        %4987 = vmatprep.subr.bf16.mxu0 0
        %4988 = vmatpush1.bf16.msra.mxu0 0
        %4989 = vmatprep.subr.bf16.mxu0 0
        %4990 = vmatpush1.bf16.msra.mxu0 0
        %4991 = vmatprep.subr.bf16.mxu0 0
        %4992 = vmatpush1.bf16.msra.mxu0 0
        %4993 = vmatprep.mubr.bf16.mxu0 0
        %4994 = vmatmul.mubr.bf16.gmra.mrb[0].mxu0 %v4956
        %v4995 = vpop.f32.mrb[0].mxu0
        %v4996 = vadd.f32 0.0, %v4995
        %v4997 = vpop.f32.mrb[0].mxu0
        %v4998 = vpop.f32.mrb[0].mxu0
        %v4999 = vadd.f32 0.0, %v4998
        %v5000 = vpop.f32.mrb[0].mxu0
        %5001 = vmatprep.mubr.bf16.mxu0 0
        %5002 = vmatmul.mubr.bf16.gmra.mrb[0].mxu0 %v4959
        %v5003 = vpop.f32.mrb[0].mxu0
        %v5004 = vadd.f32 0.0, %v5003
        %v5005 = vpop.f32.mrb[0].mxu0
        %v5006 = vpop.f32.mrb[0].mxu0
        %v5007 = vadd.f32 0.0, %v5006
        %v5008 = vpop.f32.mrb[0].mxu0
        %5009 = vdwg.mxu0
        %v5010 = vpack.c.bf16 %v4999, %v4996
        %v5011 = vpack.c.bf16 %v5007, %v5004
        %v5014 = vunpack.c.l.b16 %v4326
        %v5015 = vunpack.c.l.b16 %v4327
        %v5016 = vpack.c.b16 %v5015, %v5014
        %v5019 = vsel %vm940, %v5010, 0
        %v5022 = vsel %vm940, %v5011, 0
        %5024 = vmatprep.subr.bf16.mxu0 0
        %5025 = vmatpush1.bf16.msra.mxu0 %v5016
        %5026 = vmatprep.subr.bf16.mxu0 0
        %5027 = vmatpush1.bf16.msra.mxu0 0
        %5028 = vmatprep.subr.bf16.mxu0 0
        %5029 = vmatpush1.bf16.msra.mxu0 0
        %5030 = vmatprep.subr.bf16.mxu0 0
        %5031 = vmatpush1.bf16.msra.mxu0 0
        %5032 = vmatprep.subr.bf16.mxu0 0
        %5033 = vmatpush1.bf16.msra.mxu0 0
        %5034 = vmatprep.subr.bf16.mxu0 0
        %5035 = vmatpush1.bf16.msra.mxu0 0
        %5036 = vmatprep.subr.bf16.mxu0 0
        %5037 = vmatpush1.bf16.msra.mxu0 0
        %5038 = vmatprep.subr.bf16.mxu0 0
        %5039 = vmatpush1.bf16.msra.mxu0 0
        %5040 = vmatprep.subr.bf16.mxu0 0
        %5041 = vmatpush1.bf16.msra.mxu0 0
        %5042 = vmatprep.subr.bf16.mxu0 0
        %5043 = vmatpush1.bf16.msra.mxu0 0
        %5044 = vmatprep.subr.bf16.mxu0 0
        %5045 = vmatpush1.bf16.msra.mxu0 0
        %5046 = vmatprep.subr.bf16.mxu0 0
        %5047 = vmatpush1.bf16.msra.mxu0 0
        %5048 = vmatprep.subr.bf16.mxu0 0
        %5049 = vmatpush1.bf16.msra.mxu0 0
        %5050 = vmatprep.subr.bf16.mxu0 0
        %5051 = vmatpush1.bf16.msra.mxu0 0
        %5052 = vmatprep.subr.bf16.mxu0 0
        %5053 = vmatpush1.bf16.msra.mxu0 0
        %5054 = vmatprep.subr.bf16.mxu0 0
        %5055 = vmatpush1.bf16.msra.mxu0 0
        %5056 = vmatprep.mubr.bf16.mxu0 0
        %5057 = vmatmul.mubr.bf16.gmra.mrb[0].mxu0 %v5019
        %v5058 = vpop.f32.mrb[0].mxu0
        %v5059 = vadd.f32 0.0, %v5058
        %v5060 = vpop.f32.mrb[0].mxu0
        %v5061 = vpop.f32.mrb[0].mxu0
        %v5062 = vadd.f32 0.0, %v5061
        %v5063 = vpop.f32.mrb[0].mxu0
        %5064 = vmatprep.mubr.bf16.mxu0 0
        %5065 = vmatmul.mubr.bf16.gmra.mrb[0].mxu0 %v5022
        %v5066 = vpop.f32.mrb[0].mxu0
        %v5067 = vadd.f32 0.0, %v5066
        %v5068 = vpop.f32.mrb[0].mxu0
        %v5069 = vpop.f32.mrb[0].mxu0
        %v5070 = vadd.f32 0.0, %v5069
        %v5071 = vpop.f32.mrb[0].mxu0
        %5072 = vdwg.mxu0
        %v5073 = vadd.f32 %v4822, %v5059
        %v5074 = vadd.f32 %v4823, %v5062
        %v5075 = vadd.f32 %v4824, %v5067
        %v5076 = vadd.f32 %v4825, %v5070
        %5077 = vrot.lane.b32.xlu0 %v3318, 80
        %v5078 = vpop.permute.xlu0 %5077
        %5079 = vrot.lane.b32.xlu0 %v3320, 80
        %v5080 = vpop.permute.xlu0 %5079
        %5081 = vrot.lane.b32.xlu0 %v3318, 16
        %v5082 = vpop.permute.xlu0 %5081
        %5083 = vrot.lane.b32.xlu0 %v3320, 16
        %v5084 = vpop.permute.xlu0 %5083
        %v5086 = vsel %vm940, %v5078, 0
        %v5089 = vsel %vm940, %v5080, 0
        %v5092 = vsel %vm940, %v5082, 0
        %v5095 = vsel %vm940, %v5084, 0
        %5097 = vmatprep.subr.bf16.mxu0 0
        %5098 = vmatpush1.bf16.xpose.msra.mxu0 %v5092
        %5099 = vmatprep.subr.bf16.mxu0 0
        %5100 = vmatpush1.bf16.xpose.msra.mxu0 %v5095
        %5101 = vmatprep.subr.bf16.mxu0 0
        %5102 = vmatpush1.bf16.xpose.msra.mxu0 0
        %5103 = vmatprep.subr.bf16.mxu0 0
        %5104 = vmatpush1.bf16.xpose.msra.mxu0 0
        %5105 = vmatprep.subr.bf16.mxu0 0
        %5106 = vmatpush1.bf16.xpose.msra.mxu0 0
        %5107 = vmatprep.subr.bf16.mxu0 0
        %5108 = vmatpush1.bf16.xpose.msra.mxu0 0
        %5109 = vmatprep.subr.bf16.mxu0 0
        %5110 = vmatpush1.bf16.xpose.msra.mxu0 0
        %5111 = vmatprep.subr.bf16.mxu0 0
        %5112 = vmatpush1.bf16.xpose.msra.mxu0 0
        %5113 = vmatprep.subr.bf16.mxu0 0
        %5114 = vmatpush1.bf16.xpose.msra.mxu0 0
        %5115 = vmatprep.subr.bf16.mxu0 0
        %5116 = vmatpush1.bf16.xpose.msra.mxu0 0
        %5117 = vmatprep.subr.bf16.mxu0 0
        %5118 = vmatpush1.bf16.xpose.msra.mxu0 0
        %5119 = vmatprep.subr.bf16.mxu0 0
        %5120 = vmatpush1.bf16.xpose.msra.mxu0 0
        %5121 = vmatprep.subr.bf16.mxu0 0
        %5122 = vmatpush1.bf16.xpose.msra.mxu0 0
        %5123 = vmatprep.subr.bf16.mxu0 0
        %5124 = vmatpush1.bf16.xpose.msra.mxu0 0
        %5125 = vmatprep.subr.bf16.mxu0 0
        %5126 = vmatpush1.bf16.xpose.msra.mxu0 0
        %5127 = vmatprep.subr.bf16.mxu0 0
        %5128 = vmatpush1.bf16.xpose.msra.mxu0 0
        %5129 = vmatprep.mubr.bf16.mxu0 0
        %5130 = vmatmul.mubr.bf16.gmra.mrb[0].mxu0 %v5086
        %v5131 = vpop.f32.mrb[0].mxu0
        %v5132 = vadd.f32 0.0, %v5131
        %v5133 = vpop.f32.mrb[0].mxu0
        %v5134 = vpop.f32.mrb[0].mxu0
        %v5135 = vadd.f32 0.0, %v5134
        %v5136 = vpop.f32.mrb[0].mxu0
        %5137 = vmatprep.mubr.bf16.mxu0 0
        %5138 = vmatmul.mubr.bf16.gmra.mrb[0].mxu0 %v5089
        %v5139 = vpop.f32.mrb[0].mxu0
        %v5140 = vadd.f32 0.0, %v5139
        %v5141 = vpop.f32.mrb[0].mxu0
        %v5142 = vpop.f32.mrb[0].mxu0
        %v5143 = vadd.f32 0.0, %v5142
        %v5144 = vpop.f32.mrb[0].mxu0
        %5145 = vdwg.mxu0
        %v5146 = vmul.f32 %v5132, 0.25
        %v5147 = vmul.f32 %v5135, 0.25
        %v5148 = vmul.f32 %v5140, 0.25
        %v5149 = vmul.f32 %v5143, 0.25
        %v5150 = vadd.f32 %v5146, %v512
        %v5151 = vadd.f32 %v5147, %v513
        %v5152 = vadd.f32 %v5148, %v514
        %v5153 = vadd.f32 %v5149, %v515
        %v5154 = vsel %vm535, %v5150, -inf
        %5155 = vmax.xlane.f32.xlu0 %v5154
        %v5156 = vpop.xlane.xlu0 %5155
        %v5157 = vsel %vm535, %v5151, -inf
        %5158 = vmax.xlane.f32.xlu0 %v5157
        %v5159 = vpop.xlane.xlu0 %5158
        %v5160 = vsel %vm535, %v5152, -inf
        %5161 = vmax.xlane.f32.xlu0 %v5160
        %v5162 = vpop.xlane.xlu0 %5161
        %v5163 = vsel %vm535, %v5153, -inf
        %5164 = vmax.xlane.f32.xlu0 %v5163
        %v5165 = vpop.xlane.xlu0 %5164
        %v5166 = vsub.f32 %v5150, %v5156
        %v5167 = vsub.f32 %v5151, %v5159
        %v5168 = vsub.f32 %v5152, %v5162
        %v5169 = vsub.f32 %v5153, %v5165
        %v5170 = vmul.f32 %v5166, 1.442695
        %v5171 = vpow.pop %v5170
        %v5172 = vmul.f32 %v5167, 1.442695
        %v5173 = vpow.pop %v5172
        %v5174 = vmul.f32 %v5168, 1.442695
        %v5175 = vpow.pop %v5174
        %v5176 = vmul.f32 %v5169, 1.442695
        %v5177 = vpow.pop %v5176
        %v5178 = vsel %vm535, %v5171, 0.0
        %5179 = vadd.xlane.f32.xlu0 %v5178
        %v5180 = vpop.xlane.xlu0 %5179
        %v5181 = vsel %vm535, %v5173, 0.0
        %5182 = vadd.xlane.f32.xlu0 %v5181
        %v5183 = vpop.xlane.xlu0 %5182
        %v5184 = vsel %vm535, %v5175, 0.0
        %5185 = vadd.xlane.f32.xlu0 %v5184
        %v5186 = vpop.xlane.xlu0 %5185
        %v5187 = vsel %vm535, %v5177, 0.0
        %5188 = vadd.xlane.f32.xlu0 %v5187
        %v5189 = vpop.xlane.xlu0 %5188
        %v5190 = vrcp.pop %v5180
        %v5191 = vmul.f32 %v5171, %v5190
        %v5192 = vrcp.pop %v5183
        %v5193 = vmul.f32 %v5173, %v5192
        %v5194 = vrcp.pop %v5186
        %v5195 = vmul.f32 %v5175, %v5194
        %v5196 = vrcp.pop %v5189
        %v5197 = vmul.f32 %v5177, %v5196
        %v5198 = vpack.c.bf16 %v5193, %v5191
        %v5199 = vpack.c.bf16 %v5197, %v5195
        %5200 = vrot.lane.b32.xlu0 %v3319, 80
        %v5201 = vpop.permute.xlu0 %5200
        %5202 = vrot.lane.b32.xlu0 %v3321, 80
        %v5203 = vpop.permute.xlu0 %5202
        %v5207 = vsel %vm535, %v5198, 0
        %v5210 = vsel %vm535, %v5199, 0
        %5212 = vmatprep.subr.bf16.mxu0 0
        %5213 = vmatpush1.bf16.msra.mxu0 %v5201
        %5214 = vmatprep.subr.bf16.mxu0 0
        %5215 = vmatpush1.bf16.msra.mxu0 %v5203
        %5216 = vmatprep.subr.bf16.mxu0 0
        %5217 = vmatpush1.bf16.msra.mxu0 0
        %5218 = vmatprep.subr.bf16.mxu0 0
        %5219 = vmatpush1.bf16.msra.mxu0 0
        %5220 = vmatprep.subr.bf16.mxu0 0
        %5221 = vmatpush1.bf16.msra.mxu0 0
        %5222 = vmatprep.subr.bf16.mxu0 0
        %5223 = vmatpush1.bf16.msra.mxu0 0
        %5224 = vmatprep.subr.bf16.mxu0 0
        %5225 = vmatpush1.bf16.msra.mxu0 0
        %5226 = vmatprep.subr.bf16.mxu0 0
        %5227 = vmatpush1.bf16.msra.mxu0 0
        %5228 = vmatprep.subr.bf16.mxu0 0
        %5229 = vmatpush1.bf16.msra.mxu0 0
        %5230 = vmatprep.subr.bf16.mxu0 0
        %5231 = vmatpush1.bf16.msra.mxu0 0
        %5232 = vmatprep.subr.bf16.mxu0 0
        %5233 = vmatpush1.bf16.msra.mxu0 0
        %5234 = vmatprep.subr.bf16.mxu0 0
        %5235 = vmatpush1.bf16.msra.mxu0 0
        %5236 = vmatprep.subr.bf16.mxu0 0
        %5237 = vmatpush1.bf16.msra.mxu0 0
        %5238 = vmatprep.subr.bf16.mxu0 0
        %5239 = vmatpush1.bf16.msra.mxu0 0
        %5240 = vmatprep.subr.bf16.mxu0 0
        %5241 = vmatpush1.bf16.msra.mxu0 0
        %5242 = vmatprep.subr.bf16.mxu0 0
        %5243 = vmatpush1.bf16.msra.mxu0 0
        %5244 = vmatprep.mubr.bf16.mxu0 0
        %5245 = vmatmul.mubr.bf16.gmra.mrb[0].mxu0 %v5207
        %v5246 = vpop.f32.mrb[0].mxu0
        %v5247 = vadd.f32 0.0, %v5246
        %v5248 = vpop.f32.mrb[0].mxu0
        %v5249 = vpop.f32.mrb[0].mxu0
        %v5250 = vadd.f32 0.0, %v5249
        %v5251 = vpop.f32.mrb[0].mxu0
        %5252 = vmatprep.mubr.bf16.mxu0 0
        %5253 = vmatmul.mubr.bf16.gmra.mrb[0].mxu0 %v5210
        %v5254 = vpop.f32.mrb[0].mxu0
        %v5255 = vadd.f32 0.0, %v5254
        %v5256 = vpop.f32.mrb[0].mxu0
        %v5257 = vpop.f32.mrb[0].mxu0
        %v5258 = vadd.f32 0.0, %v5257
        %v5259 = vpop.f32.mrb[0].mxu0
        %5260 = vdwg.mxu0
        %v5261 = vpack.c.bf16 %v5250, %v5247
        %v5262 = vpack.c.bf16 %v5258, %v5255
        %v5265 = vunpack.c.l.b16 %v4328
        %v5266 = vunpack.c.l.b16 %v4329
        %v5267 = vpack.c.b16 %v5266, %v5265
        %v5270 = vsel %vm940, %v5261, 0
        %v5273 = vsel %vm940, %v5262, 0
        %5275 = vmatprep.subr.bf16.mxu0 0
        %5276 = vmatpush1.bf16.msra.mxu0 %v5267
        %5277 = vmatprep.subr.bf16.mxu0 0
        %5278 = vmatpush1.bf16.msra.mxu0 0
        %5279 = vmatprep.subr.bf16.mxu0 0
        %5280 = vmatpush1.bf16.msra.mxu0 0
        %5281 = vmatprep.subr.bf16.mxu0 0
        %5282 = vmatpush1.bf16.msra.mxu0 0
        %5283 = vmatprep.subr.bf16.mxu0 0
        %5284 = vmatpush1.bf16.msra.mxu0 0
        %5285 = vmatprep.subr.bf16.mxu0 0
        %5286 = vmatpush1.bf16.msra.mxu0 0
        %5287 = vmatprep.subr.bf16.mxu0 0
        %5288 = vmatpush1.bf16.msra.mxu0 0
        %5289 = vmatprep.subr.bf16.mxu0 0
        %5290 = vmatpush1.bf16.msra.mxu0 0
        %5291 = vmatprep.subr.bf16.mxu0 0
        %5292 = vmatpush1.bf16.msra.mxu0 0
        %5293 = vmatprep.subr.bf16.mxu0 0
        %5294 = vmatpush1.bf16.msra.mxu0 0
        %5295 = vmatprep.subr.bf16.mxu0 0
        %5296 = vmatpush1.bf16.msra.mxu0 0
        %5297 = vmatprep.subr.bf16.mxu0 0
        %5298 = vmatpush1.bf16.msra.mxu0 0
        %5299 = vmatprep.subr.bf16.mxu0 0
        %5300 = vmatpush1.bf16.msra.mxu0 0
        %5301 = vmatprep.subr.bf16.mxu0 0
        %5302 = vmatpush1.bf16.msra.mxu0 0
        %5303 = vmatprep.subr.bf16.mxu0 0
        %5304 = vmatpush1.bf16.msra.mxu0 0
        %5305 = vmatprep.subr.bf16.mxu0 0
        %5306 = vmatpush1.bf16.msra.mxu0 0
        %5307 = vmatprep.mubr.bf16.mxu0 0
        %5308 = vmatmul.mubr.bf16.gmra.mrb[0].mxu0 %v5270
        %v5309 = vpop.f32.mrb[0].mxu0
        %v5310 = vadd.f32 0.0, %v5309
        %v5311 = vpop.f32.mrb[0].mxu0
        %v5312 = vpop.f32.mrb[0].mxu0
        %v5313 = vadd.f32 0.0, %v5312
        %v5314 = vpop.f32.mrb[0].mxu0
        %5315 = vmatprep.mubr.bf16.mxu0 0
        %5316 = vmatmul.mubr.bf16.gmra.mrb[0].mxu0 %v5273
        %v5317 = vpop.f32.mrb[0].mxu0
        %v5318 = vadd.f32 0.0, %v5317
        %v5319 = vpop.f32.mrb[0].mxu0
        %v5320 = vpop.f32.mrb[0].mxu0
        %v5321 = vadd.f32 0.0, %v5320
        %v5322 = vpop.f32.mrb[0].mxu0
        %5323 = vdwg.mxu0
        %v5324 = vadd.f32 %v5073, %v5310
        %v5325 = vadd.f32 %v5074, %v5313
        %v5326 = vadd.f32 %v5075, %v5318
        %v5327 = vadd.f32 %v5076, %v5321
        %s5328 = scalar_lea.vmem %s14, 1
        %v5329 = vld [vmem:[%s5328] sm:$0x1]
        %v5331 = vlaneseq
        %v5332 = vshrl.u32 %v5331, 7
        %v5333 = vsub.s32 0, %v5332
        %v5334 = vrot.slane %v5329, %v5333
        %v5336 = vadd.f32 %v5324, %v5334
        %v5337 = vadd.f32 %v5325, %v5334
        %v5338 = vadd.f32 %v5326, %v5334
        %v5339 = vadd.f32 %v5327, %v5334
        %v5340 = vmul.f32 %v5336, 0.5
        %v5341 = vmul.f32 %v5337, 0.5
        %v5342 = vmul.f32 %v5338, 0.5
        %v5343 = vmul.f32 %v5339, 0.5
        %v5344 = vmul.f32 %v5336, 0.70710677
        %v5345 = vmul.f32 %v5337, 0.70710677
        %v5346 = vmul.f32 %v5338, 0.70710677
        %v5347 = vmul.f32 %v5339, 0.70710677
        %v5348 = verf.f32.pop %v5344
        %v5349 = verf.f32.pop %v5345
        %v5350 = verf.f32.pop %v5346
        %v5351 = verf.f32.pop %v5347
        %v5352 = vadd.f32 %v5348, 1.0
        %v5353 = vadd.f32 %v5349, 1.0
        %v5354 = vadd.f32 %v5350, 1.0
        %v5355 = vadd.f32 %v5351, 1.0
        %v5356 = vmul.f32 %v5340, %v5352
        %v5357 = vmul.f32 %v5341, %v5353
        %v5358 = vmul.f32 %v5342, %v5354
        %v5359 = vmul.f32 %v5343, %v5355
        %v5360 = vadd.f32 %v2966, %v5356
        %v5361 = vadd.f32 %v2967, %v5357
        %v5362 = vadd.f32 %v2968, %v5358
        %v5363 = vadd.f32 %v2969, %v5359
        %v5364 = vmul.f32 %v5360, 0.70710677
        %v5365 = vmul.f32 %v5361, 0.70710677
        %v5366 = vmul.f32 %v5362, 0.70710677
        %v5367 = vmul.f32 %v5363, 0.70710677
        %v5368 = vadd.f32 %v2970, %v5356
        %v5369 = vadd.f32 %v2971, %v5357
        %v5370 = vadd.f32 %v2972, %v5358
        %v5371 = vadd.f32 %v2973, %v5359
        %5372 = vrot.lane.b32.xlu0 %v586, 64
        %v5373 = vpop.permute.xlu0 %5372
        %v5375 = vadd.f32 %v5364, %v5373
        %v5376 = vadd.f32 %v5365, %v5373
        %v5377 = vadd.f32 %v5366, %v5373
        %v5378 = vadd.f32 %v5367, %v5373
        %v5379 = vpack.c.bf16 %v5376, %v5375
        %v5380 = vpack.c.bf16 %v5378, %v5377
        %s5381 = scalar_lea.vmem %s6, 32
        %v5382 = vld [vmem:[%s5381] sm:$0xf]
        %v5383 = vld [vmem:[%s5381 + $0x4] sm:$0xf]
        %v5384 = vld [vmem:[%s5381 + $0x8] sm:$0xf]
        %v5385 = vld [vmem:[%s5381 + $0xc] sm:$0xf]
        %s5386 = scalar_lea.vmem %s7, 2
        %v5387 = vld [vmem:[%s5386] sm:$0x1]
        %v5389 = vlaneseq
        %v5390 = vshrl.u32 %v5389, 7
        %v5391 = vsub.s32 0, %v5390
        %v5392 = vrot.slane %v5387, %v5391
        %v5398 = vunpack.c.l.b16 %v5382
        %v5399 = vunpack.c.l.b16 %v5383
        %v5400 = vunpack.c.l.b16 %v5384
        %v5401 = vunpack.c.l.b16 %v5385
        %v5402 = vpack.c.b16 %v5399, %v5398
        %v5403 = vpack.c.b16 %v5401, %v5400
        %v5407 = vsel %vm535, %v5379, 0
        %v5410 = vsel %vm535, %v5380, 0
        %5412 = vmatprep.subr.bf16.mxu0 0
        %5413 = vmatpush1.bf16.msra.mxu0 %v5402
        %5414 = vmatprep.subr.bf16.mxu0 0
        %5415 = vmatpush1.bf16.msra.mxu0 %v5403
        %5416 = vmatprep.subr.bf16.mxu0 0
        %5417 = vmatpush1.bf16.msra.mxu0 0
        %5418 = vmatprep.subr.bf16.mxu0 0
        %5419 = vmatpush1.bf16.msra.mxu0 0
        %5420 = vmatprep.subr.bf16.mxu0 0
        %5421 = vmatpush1.bf16.msra.mxu0 0
        %5422 = vmatprep.subr.bf16.mxu0 0
        %5423 = vmatpush1.bf16.msra.mxu0 0
        %5424 = vmatprep.subr.bf16.mxu0 0
        %5425 = vmatpush1.bf16.msra.mxu0 0
        %5426 = vmatprep.subr.bf16.mxu0 0
        %5427 = vmatpush1.bf16.msra.mxu0 0
        %5428 = vmatprep.subr.bf16.mxu0 0
        %5429 = vmatpush1.bf16.msra.mxu0 0
        %5430 = vmatprep.subr.bf16.mxu0 0
        %5431 = vmatpush1.bf16.msra.mxu0 0
        %5432 = vmatprep.subr.bf16.mxu0 0
        %5433 = vmatpush1.bf16.msra.mxu0 0
        %5434 = vmatprep.subr.bf16.mxu0 0
        %5435 = vmatpush1.bf16.msra.mxu0 0
        %5436 = vmatprep.subr.bf16.mxu0 0
        %5437 = vmatpush1.bf16.msra.mxu0 0
        %5438 = vmatprep.subr.bf16.mxu0 0
        %5439 = vmatpush1.bf16.msra.mxu0 0
        %5440 = vmatprep.subr.bf16.mxu0 0
        %5441 = vmatpush1.bf16.msra.mxu0 0
        %5442 = vmatprep.subr.bf16.mxu0 0
        %5443 = vmatpush1.bf16.msra.mxu0 0
        %5444 = vmatprep.mubr.bf16.mxu0 0
        %5445 = vmatmul.mubr.bf16.gmra.mrb[0].mxu0 %v5407
        %v5446 = vpop.f32.mrb[0].mxu0
        %v5447 = vadd.f32 %v5392, %v5446
        %v5448 = vpop.f32.mrb[0].mxu0
        %v5449 = vpop.f32.mrb[0].mxu0
        %v5450 = vadd.f32 %v5392, %v5449
        %v5451 = vpop.f32.mrb[0].mxu0
        %5452 = vmatprep.mubr.bf16.mxu0 0
        %5453 = vmatmul.mubr.bf16.gmra.mrb[0].mxu0 %v5410
        %v5454 = vpop.f32.mrb[0].mxu0
        %v5455 = vadd.f32 %v5392, %v5454
        %v5456 = vpop.f32.mrb[0].mxu0
        %v5457 = vpop.f32.mrb[0].mxu0
        %v5458 = vadd.f32 %v5392, %v5457
        %v5459 = vpop.f32.mrb[0].mxu0
        %5460 = vdwg.mxu0
        %v5461 = vpack.c.bf16 %v5450, %v5447
        %v5462 = vpack.c.bf16 %v5458, %v5455
        %s5463 = scalar_lea.vmem %s8, 128
        %v5464 = vld [vmem:[%s5463] sm:$0xff]
        %v5465 = vld [vmem:[%s5463 + $0x8] sm:$0xff]
        %v5466 = vld [vmem:[%s5463 + $0x10] sm:$0xff]
        %v5467 = vld [vmem:[%s5463 + $0x18] sm:$0xff]
        %v5468 = vld [vmem:[%s5463 + $0x20] sm:$0xff]
        %v5469 = vld [vmem:[%s5463 + $0x28] sm:$0xff]
        %v5470 = vld [vmem:[%s5463 + $0x30] sm:$0xff]
        %v5471 = vld [vmem:[%s5463 + $0x38] sm:$0xff]
        %s5472 = scalar_lea.vmem %s9, 4
        %v5473 = vld [vmem:[%s5472] sm:$0x3]
        %v5475 = vlaneseq
        %v5476 = vshrl.u32 %v5475, 7
        %v5477 = vsub.s32 0, %v5476
        %v5478 = vrot.slane %v5473, %v5477
        %v5479 = vlaneseq
        %v5480 = vshrl.u32 %v5479, 7
        %v5481 = vsub.s32 1, %v5480
        %v5482 = vrot.slane %v5473, %v5481
        %v5493 = vunpack.c.l.b16 %v5464
        %v5494 = vunpack.c.h.b16 %v5464
        %v5495 = vunpack.c.l.b16 %v5465
        %v5496 = vunpack.c.h.b16 %v5465
        %v5497 = vunpack.c.l.b16 %v5466
        %v5498 = vunpack.c.h.b16 %v5466
        %v5499 = vunpack.c.l.b16 %v5467
        %v5500 = vunpack.c.h.b16 %v5467
        %v5501 = vunpack.c.l.b16 %v5468
        %v5502 = vunpack.c.h.b16 %v5468
        %v5503 = vunpack.c.l.b16 %v5469
        %v5504 = vunpack.c.h.b16 %v5469
        %v5505 = vunpack.c.l.b16 %v5470
        %v5506 = vunpack.c.h.b16 %v5470
        %v5507 = vunpack.c.l.b16 %v5471
        %v5508 = vunpack.c.h.b16 %v5471
        %v5509 = vpack.c.b16 %v5495, %v5493
        %v5510 = vpack.c.b16 %v5496, %v5494
        %v5511 = vpack.c.b16 %v5499, %v5497
        %v5512 = vpack.c.b16 %v5500, %v5498
        %v5513 = vpack.c.b16 %v5503, %v5501
        %v5514 = vpack.c.b16 %v5504, %v5502
        %v5515 = vpack.c.b16 %v5507, %v5505
        %v5516 = vpack.c.b16 %v5508, %v5506
        %v5526 = vsel %vm733, %v5461, 0
        %v5529 = vsel %vm733, %v5462, 0
        %5531 = vmatprep.subr.bf16.mxu0 %v5510
        %5532 = vmatpush1.bf16.msra.mxu0 %v5509
        %5533 = vmatprep.subr.bf16.mxu0 %v5512
        %5534 = vmatpush1.bf16.msra.mxu0 %v5511
        %5535 = vmatprep.subr.bf16.mxu0 %v5514
        %5536 = vmatpush1.bf16.msra.mxu0 %v5513
        %5537 = vmatprep.subr.bf16.mxu0 %v5516
        %5538 = vmatpush1.bf16.msra.mxu0 %v5515
        %5539 = vmatprep.subr.bf16.mxu0 0
        %5540 = vmatpush1.bf16.msra.mxu0 0
        %5541 = vmatprep.subr.bf16.mxu0 0
        %5542 = vmatpush1.bf16.msra.mxu0 0
        %5543 = vmatprep.subr.bf16.mxu0 0
        %5544 = vmatpush1.bf16.msra.mxu0 0
        %5545 = vmatprep.subr.bf16.mxu0 0
        %5546 = vmatpush1.bf16.msra.mxu0 0
        %5547 = vmatprep.subr.bf16.mxu0 0
        %5548 = vmatpush1.bf16.msra.mxu0 0
        %5549 = vmatprep.subr.bf16.mxu0 0
        %5550 = vmatpush1.bf16.msra.mxu0 0
        %5551 = vmatprep.subr.bf16.mxu0 0
        %5552 = vmatpush1.bf16.msra.mxu0 0
        %5553 = vmatprep.subr.bf16.mxu0 0
        %5554 = vmatpush1.bf16.msra.mxu0 0
        %5555 = vmatprep.subr.bf16.mxu0 0
        %5556 = vmatpush1.bf16.msra.mxu0 0
        %5557 = vmatprep.subr.bf16.mxu0 0
        %5558 = vmatpush1.bf16.msra.mxu0 0
        %5559 = vmatprep.subr.bf16.mxu0 0
        %5560 = vmatpush1.bf16.msra.mxu0 0
        %5561 = vmatprep.subr.bf16.mxu0 0
        %5562 = vmatpush1.bf16.msra.mxu0 0
        %5563 = vmatprep.mubr.bf16.mxu0 0
        %5564 = vmatmul.mubr.bf16.gmra.mrb[0].mxu0 %v5526
        %v5565 = vpop.f32.mrb[0].mxu0
        %v5566 = vadd.f32 %v5478, %v5565
        %v5567 = vpop.f32.mrb[0].mxu0
        %v5568 = vadd.f32 %v5482, %v5567
        %v5569 = vpop.f32.mrb[0].mxu0
        %v5570 = vadd.f32 %v5478, %v5569
        %v5571 = vpop.f32.mrb[0].mxu0
        %v5572 = vadd.f32 %v5482, %v5571
        %5573 = vmatprep.mubr.bf16.mxu0 0
        %5574 = vmatmul.mubr.bf16.gmra.mrb[0].mxu0 %v5529
        %v5575 = vpop.f32.mrb[0].mxu0
        %v5576 = vadd.f32 %v5478, %v5575
        %v5577 = vpop.f32.mrb[0].mxu0
        %v5578 = vadd.f32 %v5482, %v5577
        %v5579 = vpop.f32.mrb[0].mxu0
        %v5580 = vadd.f32 %v5478, %v5579
        %v5581 = vpop.f32.mrb[0].mxu0
        %v5582 = vadd.f32 %v5482, %v5581
        %5583 = vdwg.mxu0
        %v5584 = vpack.c.bf16 %v5570, %v5566
        %v5585 = vpack.c.bf16 %v5572, %v5568
        %v5586 = vpack.c.bf16 %v5580, %v5576
        %v5587 = vpack.c.bf16 %v5582, %v5578
        %s5588 = scalar_lea.vmem %s10, 128
        %v5589 = vld [vmem:[%s5588] sm:$0xff]
        %v5590 = vld [vmem:[%s5588 + $0x8] sm:$0xff]
        %v5591 = vld [vmem:[%s5588 + $0x10] sm:$0xff]
        %v5592 = vld [vmem:[%s5588 + $0x18] sm:$0xff]
        %v5593 = vld [vmem:[%s5588 + $0x20] sm:$0xff]
        %v5594 = vld [vmem:[%s5588 + $0x28] sm:$0xff]
        %v5595 = vld [vmem:[%s5588 + $0x30] sm:$0xff]
        %v5596 = vld [vmem:[%s5588 + $0x38] sm:$0xff]
        %s5597 = scalar_lea.vmem %s11, 4
        %v5598 = vld [vmem:[%s5597] sm:$0x3]
        %v5600 = vlaneseq
        %v5601 = vshrl.u32 %v5600, 7
        %v5602 = vsub.s32 0, %v5601
        %v5603 = vrot.slane %v5598, %v5602
        %v5604 = vlaneseq
        %v5605 = vshrl.u32 %v5604, 7
        %v5606 = vsub.s32 1, %v5605
        %v5607 = vrot.slane %v5598, %v5606
        %5612 = vrot.lane.b32.xlu0 %v5461, 64
        %v5613 = vpop.permute.xlu0 %5612
        %5614 = vrot.lane.b32.xlu0 %v5462, 64
        %v5615 = vpop.permute.xlu0 %5614
        %v5624 = vunpack.c.l.b16 %v5589
        %v5625 = vunpack.c.h.b16 %v5589
        %v5626 = vunpack.c.l.b16 %v5590
        %v5627 = vunpack.c.h.b16 %v5590
        %v5628 = vunpack.c.l.b16 %v5591
        %v5629 = vunpack.c.h.b16 %v5591
        %v5630 = vunpack.c.l.b16 %v5592
        %v5631 = vunpack.c.h.b16 %v5592
        %v5632 = vunpack.c.l.b16 %v5593
        %v5633 = vunpack.c.h.b16 %v5593
        %v5634 = vunpack.c.l.b16 %v5594
        %v5635 = vunpack.c.h.b16 %v5594
        %v5636 = vunpack.c.l.b16 %v5595
        %v5637 = vunpack.c.h.b16 %v5595
        %v5638 = vunpack.c.l.b16 %v5596
        %v5639 = vunpack.c.h.b16 %v5596
        %v5640 = vpack.c.b16 %v5626, %v5624
        %v5641 = vpack.c.b16 %v5627, %v5625
        %v5642 = vpack.c.b16 %v5630, %v5628
        %v5643 = vpack.c.b16 %v5631, %v5629
        %v5644 = vpack.c.b16 %v5634, %v5632
        %v5645 = vpack.c.b16 %v5635, %v5633
        %v5646 = vpack.c.b16 %v5638, %v5636
        %v5647 = vpack.c.b16 %v5639, %v5637
        %v5657 = vsel %vm733, %v5613, 0
        %v5660 = vsel %vm733, %v5615, 0
        %5662 = vmatprep.subr.bf16.mxu0 %v5641
        %5663 = vmatpush1.bf16.msra.mxu0 %v5640
        %5664 = vmatprep.subr.bf16.mxu0 %v5643
        %5665 = vmatpush1.bf16.msra.mxu0 %v5642
        %5666 = vmatprep.subr.bf16.mxu0 %v5645
        %5667 = vmatpush1.bf16.msra.mxu0 %v5644
        %5668 = vmatprep.subr.bf16.mxu0 %v5647
        %5669 = vmatpush1.bf16.msra.mxu0 %v5646
        %5670 = vmatprep.subr.bf16.mxu0 0
        %5671 = vmatpush1.bf16.msra.mxu0 0
        %5672 = vmatprep.subr.bf16.mxu0 0
        %5673 = vmatpush1.bf16.msra.mxu0 0
        %5674 = vmatprep.subr.bf16.mxu0 0
        %5675 = vmatpush1.bf16.msra.mxu0 0
        %5676 = vmatprep.subr.bf16.mxu0 0
        %5677 = vmatpush1.bf16.msra.mxu0 0
        %5678 = vmatprep.subr.bf16.mxu0 0
        %5679 = vmatpush1.bf16.msra.mxu0 0
        %5680 = vmatprep.subr.bf16.mxu0 0
        %5681 = vmatpush1.bf16.msra.mxu0 0
        %5682 = vmatprep.subr.bf16.mxu0 0
        %5683 = vmatpush1.bf16.msra.mxu0 0
        %5684 = vmatprep.subr.bf16.mxu0 0
        %5685 = vmatpush1.bf16.msra.mxu0 0
        %5686 = vmatprep.subr.bf16.mxu0 0
        %5687 = vmatpush1.bf16.msra.mxu0 0
        %5688 = vmatprep.subr.bf16.mxu0 0
        %5689 = vmatpush1.bf16.msra.mxu0 0
        %5690 = vmatprep.subr.bf16.mxu0 0
        %5691 = vmatpush1.bf16.msra.mxu0 0
        %5692 = vmatprep.subr.bf16.mxu0 0
        %5693 = vmatpush1.bf16.msra.mxu0 0
        %5694 = vmatprep.mubr.bf16.mxu0 0
        %5695 = vmatmul.mubr.bf16.gmra.mrb[0].mxu0 %v5657
        %v5696 = vpop.f32.mrb[0].mxu0
        %v5697 = vadd.f32 %v5603, %v5696
        %v5698 = vpop.f32.mrb[0].mxu0
        %v5699 = vadd.f32 %v5607, %v5698
        %v5700 = vpop.f32.mrb[0].mxu0
        %v5701 = vadd.f32 %v5603, %v5700
        %v5702 = vpop.f32.mrb[0].mxu0
        %v5703 = vadd.f32 %v5607, %v5702
        %5704 = vmatprep.mubr.bf16.mxu0 0
        %5705 = vmatmul.mubr.bf16.gmra.mrb[0].mxu0 %v5660
        %v5706 = vpop.f32.mrb[0].mxu0
        %v5707 = vadd.f32 %v5603, %v5706
        %v5708 = vpop.f32.mrb[0].mxu0
        %v5709 = vadd.f32 %v5607, %v5708
        %v5710 = vpop.f32.mrb[0].mxu0
        %v5711 = vadd.f32 %v5603, %v5710
        %v5712 = vpop.f32.mrb[0].mxu0
        %v5713 = vadd.f32 %v5607, %v5712
        %5714 = vdwg.mxu0
        %v5715 = vpack.c.bf16 %v5701, %v5697
        %v5716 = vpack.c.bf16 %v5703, %v5699
        %v5717 = vpack.c.bf16 %v5711, %v5707
        %v5718 = vpack.c.bf16 %v5713, %v5709
        %s5719 = scalar_lea.vmem %s12, 64
        %v5720 = vld [vmem:[%s5719] sm:$0xf]
        %v5721 = vld [vmem:[%s5719 + $0x4] sm:$0xf]
        %v5722 = vld [vmem:[%s5719 + $0x8] sm:$0xf]
        %v5723 = vld [vmem:[%s5719 + $0xc] sm:$0xf]
        %v5724 = vld [vmem:[%s5719 + $0x10] sm:$0xf]
        %v5725 = vld [vmem:[%s5719 + $0x14] sm:$0xf]
        %v5726 = vld [vmem:[%s5719 + $0x18] sm:$0xf]
        %v5727 = vld [vmem:[%s5719 + $0x1c] sm:$0xf]
        %5730 = vrot.lane.b32.xlu0 %v5584, 64
        %v5731 = vpop.permute.xlu0 %5730
        %5732 = vrot.lane.b32.xlu0 %v5586, 64
        %v5733 = vpop.permute.xlu0 %5732
        %v5735 = vsel %vm940, %v5584, 0
        %v5738 = vsel %vm940, %v5586, 0
        %v5741 = vsel %vm940, %v5731, 0
        %v5744 = vsel %vm940, %v5733, 0
        %5746 = vmatprep.subr.bf16.mxu0 0
        %5747 = vmatpush1.bf16.xpose.msra.mxu0 %v5741
        %5748 = vmatprep.subr.bf16.mxu0 0
        %5749 = vmatpush1.bf16.xpose.msra.mxu0 %v5744
        %5750 = vmatprep.subr.bf16.mxu0 0
        %5751 = vmatpush1.bf16.xpose.msra.mxu0 0
        %5752 = vmatprep.subr.bf16.mxu0 0
        %5753 = vmatpush1.bf16.xpose.msra.mxu0 0
        %5754 = vmatprep.subr.bf16.mxu0 0
        %5755 = vmatpush1.bf16.xpose.msra.mxu0 0
        %5756 = vmatprep.subr.bf16.mxu0 0
        %5757 = vmatpush1.bf16.xpose.msra.mxu0 0
        %5758 = vmatprep.subr.bf16.mxu0 0
        %5759 = vmatpush1.bf16.xpose.msra.mxu0 0
        %5760 = vmatprep.subr.bf16.mxu0 0
        %5761 = vmatpush1.bf16.xpose.msra.mxu0 0
        %5762 = vmatprep.subr.bf16.mxu0 0
        %5763 = vmatpush1.bf16.xpose.msra.mxu0 0
        %5764 = vmatprep.subr.bf16.mxu0 0
        %5765 = vmatpush1.bf16.xpose.msra.mxu0 0
        %5766 = vmatprep.subr.bf16.mxu0 0
        %5767 = vmatpush1.bf16.xpose.msra.mxu0 0
        %5768 = vmatprep.subr.bf16.mxu0 0
        %5769 = vmatpush1.bf16.xpose.msra.mxu0 0
        %5770 = vmatprep.subr.bf16.mxu0 0
        %5771 = vmatpush1.bf16.xpose.msra.mxu0 0
        %5772 = vmatprep.subr.bf16.mxu0 0
        %5773 = vmatpush1.bf16.xpose.msra.mxu0 0
        %5774 = vmatprep.subr.bf16.mxu0 0
        %5775 = vmatpush1.bf16.xpose.msra.mxu0 0
        %5776 = vmatprep.subr.bf16.mxu0 0
        %5777 = vmatpush1.bf16.xpose.msra.mxu0 0
        %5778 = vmatprep.mubr.bf16.mxu0 0
        %5779 = vmatmul.mubr.bf16.gmra.mrb[0].mxu0 %v5735
        %v5780 = vpop.f32.mrb[0].mxu0
        %v5781 = vadd.f32 0.0, %v5780
        %v5782 = vpop.f32.mrb[0].mxu0
        %v5783 = vpop.f32.mrb[0].mxu0
        %v5784 = vadd.f32 0.0, %v5783
        %v5785 = vpop.f32.mrb[0].mxu0
        %5786 = vmatprep.mubr.bf16.mxu0 0
        %5787 = vmatmul.mubr.bf16.gmra.mrb[0].mxu0 %v5738
        %v5788 = vpop.f32.mrb[0].mxu0
        %v5789 = vadd.f32 0.0, %v5788
        %v5790 = vpop.f32.mrb[0].mxu0
        %v5791 = vpop.f32.mrb[0].mxu0
        %v5792 = vadd.f32 0.0, %v5791
        %v5793 = vpop.f32.mrb[0].mxu0
        %5794 = vdwg.mxu0
        %v5795 = vmul.f32 %v5781, 0.25
        %v5796 = vmul.f32 %v5784, 0.25
        %v5797 = vmul.f32 %v5789, 0.25
        %v5798 = vmul.f32 %v5792, 0.25
        %v5799 = vadd.f32 %v5795, %v508
        %v5800 = vadd.f32 %v5796, %v509
        %v5801 = vadd.f32 %v5797, %v510
        %v5802 = vadd.f32 %v5798, %v511
        %v5803 = vsel %vm535, %v5799, -inf
        %5804 = vmax.xlane.f32.xlu0 %v5803
        %v5805 = vpop.xlane.xlu0 %5804
        %v5806 = vsel %vm535, %v5800, -inf
        %5807 = vmax.xlane.f32.xlu0 %v5806
        %v5808 = vpop.xlane.xlu0 %5807
        %v5809 = vsel %vm535, %v5801, -inf
        %5810 = vmax.xlane.f32.xlu0 %v5809
        %v5811 = vpop.xlane.xlu0 %5810
        %v5812 = vsel %vm535, %v5802, -inf
        %5813 = vmax.xlane.f32.xlu0 %v5812
        %v5814 = vpop.xlane.xlu0 %5813
        %v5815 = vsub.f32 %v5799, %v5805
        %v5816 = vsub.f32 %v5800, %v5808
        %v5817 = vsub.f32 %v5801, %v5811
        %v5818 = vsub.f32 %v5802, %v5814
        %v5819 = vmul.f32 %v5815, 1.442695
        %v5820 = vpow.pop %v5819
        %v5821 = vmul.f32 %v5816, 1.442695
        %v5822 = vpow.pop %v5821
        %v5823 = vmul.f32 %v5817, 1.442695
        %v5824 = vpow.pop %v5823
        %v5825 = vmul.f32 %v5818, 1.442695
        %v5826 = vpow.pop %v5825
        %v5827 = vsel %vm535, %v5820, 0.0
        %5828 = vadd.xlane.f32.xlu0 %v5827
        %v5829 = vpop.xlane.xlu0 %5828
        %v5830 = vsel %vm535, %v5822, 0.0
        %5831 = vadd.xlane.f32.xlu0 %v5830
        %v5832 = vpop.xlane.xlu0 %5831
        %v5833 = vsel %vm535, %v5824, 0.0
        %5834 = vadd.xlane.f32.xlu0 %v5833
        %v5835 = vpop.xlane.xlu0 %5834
        %v5836 = vsel %vm535, %v5826, 0.0
        %5837 = vadd.xlane.f32.xlu0 %v5836
        %v5838 = vpop.xlane.xlu0 %5837
        %v5839 = vrcp.pop %v5829
        %v5840 = vmul.f32 %v5820, %v5839
        %v5841 = vrcp.pop %v5832
        %v5842 = vmul.f32 %v5822, %v5841
        %v5843 = vrcp.pop %v5835
        %v5844 = vmul.f32 %v5824, %v5843
        %v5845 = vrcp.pop %v5838
        %v5846 = vmul.f32 %v5826, %v5845
        %v5847 = vpack.c.bf16 %v5842, %v5840
        %v5848 = vpack.c.bf16 %v5846, %v5844
        %v5850 = vsel %vm535, %v5847, 0
        %v5853 = vsel %vm535, %v5848, 0
        %5855 = vmatprep.subr.bf16.mxu0 0
        %5856 = vmatpush1.bf16.msra.mxu0 %v5585
        %5857 = vmatprep.subr.bf16.mxu0 0
        %5858 = vmatpush1.bf16.msra.mxu0 %v5587
        %5859 = vmatprep.subr.bf16.mxu0 0
        %5860 = vmatpush1.bf16.msra.mxu0 0
        %5861 = vmatprep.subr.bf16.mxu0 0
        %5862 = vmatpush1.bf16.msra.mxu0 0
        %5863 = vmatprep.subr.bf16.mxu0 0
        %5864 = vmatpush1.bf16.msra.mxu0 0
        %5865 = vmatprep.subr.bf16.mxu0 0
        %5866 = vmatpush1.bf16.msra.mxu0 0
        %5867 = vmatprep.subr.bf16.mxu0 0
        %5868 = vmatpush1.bf16.msra.mxu0 0
        %5869 = vmatprep.subr.bf16.mxu0 0
        %5870 = vmatpush1.bf16.msra.mxu0 0
        %5871 = vmatprep.subr.bf16.mxu0 0
        %5872 = vmatpush1.bf16.msra.mxu0 0
        %5873 = vmatprep.subr.bf16.mxu0 0
        %5874 = vmatpush1.bf16.msra.mxu0 0
        %5875 = vmatprep.subr.bf16.mxu0 0
        %5876 = vmatpush1.bf16.msra.mxu0 0
        %5877 = vmatprep.subr.bf16.mxu0 0
        %5878 = vmatpush1.bf16.msra.mxu0 0
        %5879 = vmatprep.subr.bf16.mxu0 0
        %5880 = vmatpush1.bf16.msra.mxu0 0
        %5881 = vmatprep.subr.bf16.mxu0 0
        %5882 = vmatpush1.bf16.msra.mxu0 0
        %5883 = vmatprep.subr.bf16.mxu0 0
        %5884 = vmatpush1.bf16.msra.mxu0 0
        %5885 = vmatprep.subr.bf16.mxu0 0
        %5886 = vmatpush1.bf16.msra.mxu0 0
        %5887 = vmatprep.mubr.bf16.mxu0 0
        %5888 = vmatmul.mubr.bf16.gmra.mrb[0].mxu0 %v5850
        %v5889 = vpop.f32.mrb[0].mxu0
        %v5890 = vadd.f32 0.0, %v5889
        %v5891 = vpop.f32.mrb[0].mxu0
        %v5892 = vpop.f32.mrb[0].mxu0
        %v5893 = vadd.f32 0.0, %v5892
        %v5894 = vpop.f32.mrb[0].mxu0
        %5895 = vmatprep.mubr.bf16.mxu0 0
        %5896 = vmatmul.mubr.bf16.gmra.mrb[0].mxu0 %v5853
        %v5897 = vpop.f32.mrb[0].mxu0
        %v5898 = vadd.f32 0.0, %v5897
        %v5899 = vpop.f32.mrb[0].mxu0
        %v5900 = vpop.f32.mrb[0].mxu0
        %v5901 = vadd.f32 0.0, %v5900
        %v5902 = vpop.f32.mrb[0].mxu0
        %5903 = vdwg.mxu0
        %v5904 = vpack.c.bf16 %v5893, %v5890
        %v5905 = vpack.c.bf16 %v5901, %v5898
        %5906 = vrot.lane.b32.xlu0 %v5584, 112
        %v5907 = vpop.permute.xlu0 %5906
        %5908 = vrot.lane.b32.xlu0 %v5586, 112
        %v5909 = vpop.permute.xlu0 %5908
        %5910 = vrot.lane.b32.xlu0 %v5584, 48
        %v5911 = vpop.permute.xlu0 %5910
        %5912 = vrot.lane.b32.xlu0 %v5586, 48
        %v5913 = vpop.permute.xlu0 %5912
        %v5915 = vsel %vm940, %v5907, 0
        %v5918 = vsel %vm940, %v5909, 0
        %v5921 = vsel %vm940, %v5911, 0
        %v5924 = vsel %vm940, %v5913, 0
        %5926 = vmatprep.subr.bf16.mxu0 0
        %5927 = vmatpush1.bf16.xpose.msra.mxu0 %v5921
        %5928 = vmatprep.subr.bf16.mxu0 0
        %5929 = vmatpush1.bf16.xpose.msra.mxu0 %v5924
        %5930 = vmatprep.subr.bf16.mxu0 0
        %5931 = vmatpush1.bf16.xpose.msra.mxu0 0
        %5932 = vmatprep.subr.bf16.mxu0 0
        %5933 = vmatpush1.bf16.xpose.msra.mxu0 0
        %5934 = vmatprep.subr.bf16.mxu0 0
        %5935 = vmatpush1.bf16.xpose.msra.mxu0 0
        %5936 = vmatprep.subr.bf16.mxu0 0
        %5937 = vmatpush1.bf16.xpose.msra.mxu0 0
        %5938 = vmatprep.subr.bf16.mxu0 0
        %5939 = vmatpush1.bf16.xpose.msra.mxu0 0
        %5940 = vmatprep.subr.bf16.mxu0 0
        %5941 = vmatpush1.bf16.xpose.msra.mxu0 0
        %5942 = vmatprep.subr.bf16.mxu0 0
        %5943 = vmatpush1.bf16.xpose.msra.mxu0 0
        %5944 = vmatprep.subr.bf16.mxu0 0
        %5945 = vmatpush1.bf16.xpose.msra.mxu0 0
        %5946 = vmatprep.subr.bf16.mxu0 0
        %5947 = vmatpush1.bf16.xpose.msra.mxu0 0
        %5948 = vmatprep.subr.bf16.mxu0 0
        %5949 = vmatpush1.bf16.xpose.msra.mxu0 0
        %5950 = vmatprep.subr.bf16.mxu0 0
        %5951 = vmatpush1.bf16.xpose.msra.mxu0 0
        %5952 = vmatprep.subr.bf16.mxu0 0
        %5953 = vmatpush1.bf16.xpose.msra.mxu0 0
        %5954 = vmatprep.subr.bf16.mxu0 0
        %5955 = vmatpush1.bf16.xpose.msra.mxu0 0
        %5956 = vmatprep.subr.bf16.mxu0 0
        %5957 = vmatpush1.bf16.xpose.msra.mxu0 0
        %5958 = vmatprep.mubr.bf16.mxu0 0
        %5959 = vmatmul.mubr.bf16.gmra.mrb[0].mxu0 %v5915
        %v5960 = vpop.f32.mrb[0].mxu0
        %v5961 = vadd.f32 0.0, %v5960
        %v5962 = vpop.f32.mrb[0].mxu0
        %v5963 = vpop.f32.mrb[0].mxu0
        %v5964 = vadd.f32 0.0, %v5963
        %v5965 = vpop.f32.mrb[0].mxu0
        %5966 = vmatprep.mubr.bf16.mxu0 0
        %5967 = vmatmul.mubr.bf16.gmra.mrb[0].mxu0 %v5918
        %v5968 = vpop.f32.mrb[0].mxu0
        %v5969 = vadd.f32 0.0, %v5968
        %v5970 = vpop.f32.mrb[0].mxu0
        %v5971 = vpop.f32.mrb[0].mxu0
        %v5972 = vadd.f32 0.0, %v5971
        %v5973 = vpop.f32.mrb[0].mxu0
        %5974 = vdwg.mxu0
        %v5975 = vmul.f32 %v5961, 0.25
        %v5976 = vmul.f32 %v5964, 0.25
        %v5977 = vmul.f32 %v5969, 0.25
        %v5978 = vmul.f32 %v5972, 0.25
        %v5979 = vadd.f32 %v5975, %v508
        %v5980 = vadd.f32 %v5976, %v509
        %v5981 = vadd.f32 %v5977, %v510
        %v5982 = vadd.f32 %v5978, %v511
        %v5983 = vsel %vm535, %v5979, -inf
        %5984 = vmax.xlane.f32.xlu0 %v5983
        %v5985 = vpop.xlane.xlu0 %5984
        %v5986 = vsel %vm535, %v5980, -inf
        %5987 = vmax.xlane.f32.xlu0 %v5986
        %v5988 = vpop.xlane.xlu0 %5987
        %v5989 = vsel %vm535, %v5981, -inf
        %5990 = vmax.xlane.f32.xlu0 %v5989
        %v5991 = vpop.xlane.xlu0 %5990
        %v5992 = vsel %vm535, %v5982, -inf
        %5993 = vmax.xlane.f32.xlu0 %v5992
        %v5994 = vpop.xlane.xlu0 %5993
        %v5995 = vsub.f32 %v5979, %v5985
        %v5996 = vsub.f32 %v5980, %v5988
        %v5997 = vsub.f32 %v5981, %v5991
        %v5998 = vsub.f32 %v5982, %v5994
        %v5999 = vmul.f32 %v5995, 1.442695
        %v6000 = vpow.pop %v5999
        %v6001 = vmul.f32 %v5996, 1.442695
        %v6002 = vpow.pop %v6001
        %v6003 = vmul.f32 %v5997, 1.442695
        %v6004 = vpow.pop %v6003
        %v6005 = vmul.f32 %v5998, 1.442695
        %v6006 = vpow.pop %v6005
        %v6007 = vsel %vm535, %v6000, 0.0
        %6008 = vadd.xlane.f32.xlu0 %v6007
        %v6009 = vpop.xlane.xlu0 %6008
        %v6010 = vsel %vm535, %v6002, 0.0
        %6011 = vadd.xlane.f32.xlu0 %v6010
        %v6012 = vpop.xlane.xlu0 %6011
        %v6013 = vsel %vm535, %v6004, 0.0
        %6014 = vadd.xlane.f32.xlu0 %v6013
        %v6015 = vpop.xlane.xlu0 %6014
        %v6016 = vsel %vm535, %v6006, 0.0
        %6017 = vadd.xlane.f32.xlu0 %v6016
        %v6018 = vpop.xlane.xlu0 %6017
        %v6019 = vrcp.pop %v6009
        %v6020 = vmul.f32 %v6000, %v6019
        %v6021 = vrcp.pop %v6012
        %v6022 = vmul.f32 %v6002, %v6021
        %v6023 = vrcp.pop %v6015
        %v6024 = vmul.f32 %v6004, %v6023
        %v6025 = vrcp.pop %v6018
        %v6026 = vmul.f32 %v6006, %v6025
        %v6027 = vpack.c.bf16 %v6022, %v6020
        %v6028 = vpack.c.bf16 %v6026, %v6024
        %6031 = vrot.lane.b32.xlu0 %v5585, 112
        %v6032 = vpop.permute.xlu0 %6031
        %6033 = vrot.lane.b32.xlu0 %v5587, 112
        %v6034 = vpop.permute.xlu0 %6033
        %v6038 = vsel %vm535, %v6027, 0
        %v6041 = vsel %vm535, %v6028, 0
        %6043 = vmatprep.subr.bf16.mxu0 0
        %6044 = vmatpush1.bf16.msra.mxu0 %v6032
        %6045 = vmatprep.subr.bf16.mxu0 0
        %6046 = vmatpush1.bf16.msra.mxu0 %v6034
        %6047 = vmatprep.subr.bf16.mxu0 0
        %6048 = vmatpush1.bf16.msra.mxu0 0
        %6049 = vmatprep.subr.bf16.mxu0 0
        %6050 = vmatpush1.bf16.msra.mxu0 0
        %6051 = vmatprep.subr.bf16.mxu0 0
        %6052 = vmatpush1.bf16.msra.mxu0 0
        %6053 = vmatprep.subr.bf16.mxu0 0
        %6054 = vmatpush1.bf16.msra.mxu0 0
        %6055 = vmatprep.subr.bf16.mxu0 0
        %6056 = vmatpush1.bf16.msra.mxu0 0
        %6057 = vmatprep.subr.bf16.mxu0 0
        %6058 = vmatpush1.bf16.msra.mxu0 0
        %6059 = vmatprep.subr.bf16.mxu0 0
        %6060 = vmatpush1.bf16.msra.mxu0 0
        %6061 = vmatprep.subr.bf16.mxu0 0
        %6062 = vmatpush1.bf16.msra.mxu0 0
        %6063 = vmatprep.subr.bf16.mxu0 0
        %6064 = vmatpush1.bf16.msra.mxu0 0
        %6065 = vmatprep.subr.bf16.mxu0 0
        %6066 = vmatpush1.bf16.msra.mxu0 0
        %6067 = vmatprep.subr.bf16.mxu0 0
        %6068 = vmatpush1.bf16.msra.mxu0 0
        %6069 = vmatprep.subr.bf16.mxu0 0
        %6070 = vmatpush1.bf16.msra.mxu0 0
        %6071 = vmatprep.subr.bf16.mxu0 0
        %6072 = vmatpush1.bf16.msra.mxu0 0
        %6073 = vmatprep.subr.bf16.mxu0 0
        %6074 = vmatpush1.bf16.msra.mxu0 0
        %6075 = vmatprep.mubr.bf16.mxu0 0
        %6076 = vmatmul.mubr.bf16.gmra.mrb[0].mxu0 %v6038
        %v6077 = vpop.f32.mrb[0].mxu0
        %v6078 = vadd.f32 0.0, %v6077
        %v6079 = vpop.f32.mrb[0].mxu0
        %v6080 = vpop.f32.mrb[0].mxu0
        %v6081 = vadd.f32 0.0, %v6080
        %v6082 = vpop.f32.mrb[0].mxu0
        %6083 = vmatprep.mubr.bf16.mxu0 0
        %6084 = vmatmul.mubr.bf16.gmra.mrb[0].mxu0 %v6041
        %v6085 = vpop.f32.mrb[0].mxu0
        %v6086 = vadd.f32 0.0, %v6085
        %v6087 = vpop.f32.mrb[0].mxu0
        %v6088 = vpop.f32.mrb[0].mxu0
        %v6089 = vadd.f32 0.0, %v6088
        %v6090 = vpop.f32.mrb[0].mxu0
        %6091 = vdwg.mxu0
        %v6092 = vpack.c.bf16 %v6081, %v6078
        %v6093 = vpack.c.bf16 %v6089, %v6086
        %v6096 = vunpack.c.l.b16 %v5722
        %v6097 = vunpack.c.l.b16 %v5723
        %v6098 = vpack.c.b16 %v6097, %v6096
        %v6101 = vsel %vm940, %v6092, 0
        %v6104 = vsel %vm940, %v6093, 0
        %6106 = vmatprep.subr.bf16.mxu0 0
        %6107 = vmatpush1.bf16.msra.mxu0 %v6098
        %6108 = vmatprep.subr.bf16.mxu0 0
        %6109 = vmatpush1.bf16.msra.mxu0 0
        %6110 = vmatprep.subr.bf16.mxu0 0
        %6111 = vmatpush1.bf16.msra.mxu0 0
        %6112 = vmatprep.subr.bf16.mxu0 0
        %6113 = vmatpush1.bf16.msra.mxu0 0
        %6114 = vmatprep.subr.bf16.mxu0 0
        %6115 = vmatpush1.bf16.msra.mxu0 0
        %6116 = vmatprep.subr.bf16.mxu0 0
        %6117 = vmatpush1.bf16.msra.mxu0 0
        %6118 = vmatprep.subr.bf16.mxu0 0
        %6119 = vmatpush1.bf16.msra.mxu0 0
        %6120 = vmatprep.subr.bf16.mxu0 0
        %6121 = vmatpush1.bf16.msra.mxu0 0
        %6122 = vmatprep.subr.bf16.mxu0 0
        %6123 = vmatpush1.bf16.msra.mxu0 0
        %6124 = vmatprep.subr.bf16.mxu0 0
        %6125 = vmatpush1.bf16.msra.mxu0 0
        %6126 = vmatprep.subr.bf16.mxu0 0
        %6127 = vmatpush1.bf16.msra.mxu0 0
        %6128 = vmatprep.subr.bf16.mxu0 0
        %6129 = vmatpush1.bf16.msra.mxu0 0
        %6130 = vmatprep.subr.bf16.mxu0 0
        %6131 = vmatpush1.bf16.msra.mxu0 0
        %6132 = vmatprep.subr.bf16.mxu0 0
        %6133 = vmatpush1.bf16.msra.mxu0 0
        %6134 = vmatprep.subr.bf16.mxu0 0
        %6135 = vmatpush1.bf16.msra.mxu0 0
        %6136 = vmatprep.subr.bf16.mxu0 0
        %6137 = vmatpush1.bf16.msra.mxu0 0
        %6138 = vmatprep.mubr.bf16.mxu0 0
        %6139 = vmatmul.mubr.bf16.gmra.mrb[0].mxu0 %v6101
        %v6140 = vpop.f32.mrb[0].mxu0
        %v6141 = vadd.f32 0.0, %v6140
        %v6142 = vpop.f32.mrb[0].mxu0
        %v6143 = vpop.f32.mrb[0].mxu0
        %v6144 = vadd.f32 0.0, %v6143
        %v6145 = vpop.f32.mrb[0].mxu0
        %6146 = vmatprep.mubr.bf16.mxu0 0
        %6147 = vmatmul.mubr.bf16.gmra.mrb[0].mxu0 %v6104
        %v6148 = vpop.f32.mrb[0].mxu0
        %v6149 = vadd.f32 0.0, %v6148
        %v6150 = vpop.f32.mrb[0].mxu0
        %v6151 = vpop.f32.mrb[0].mxu0
        %v6152 = vadd.f32 0.0, %v6151
        %v6153 = vpop.f32.mrb[0].mxu0
        %6154 = vdwg.mxu0
        %v6157 = vunpack.c.l.b16 %v5720
        %v6158 = vunpack.c.l.b16 %v5721
        %v6159 = vpack.c.b16 %v6158, %v6157
        %v6162 = vsel %vm940, %v5904, 0
        %v6165 = vsel %vm940, %v5905, 0
        %6167 = vmatprep.subr.bf16.mxu0 0
        %6168 = vmatpush1.bf16.msra.mxu0 %v6159
        %6169 = vmatprep.subr.bf16.mxu0 0
        %6170 = vmatpush1.bf16.msra.mxu0 0
        %6171 = vmatprep.subr.bf16.mxu0 0
        %6172 = vmatpush1.bf16.msra.mxu0 0
        %6173 = vmatprep.subr.bf16.mxu0 0
        %6174 = vmatpush1.bf16.msra.mxu0 0
        %6175 = vmatprep.subr.bf16.mxu0 0
        %6176 = vmatpush1.bf16.msra.mxu0 0
        %6177 = vmatprep.subr.bf16.mxu0 0
        %6178 = vmatpush1.bf16.msra.mxu0 0
        %6179 = vmatprep.subr.bf16.mxu0 0
        %6180 = vmatpush1.bf16.msra.mxu0 0
        %6181 = vmatprep.subr.bf16.mxu0 0
        %6182 = vmatpush1.bf16.msra.mxu0 0
        %6183 = vmatprep.subr.bf16.mxu0 0
        %6184 = vmatpush1.bf16.msra.mxu0 0
        %6185 = vmatprep.subr.bf16.mxu0 0
        %6186 = vmatpush1.bf16.msra.mxu0 0
        %6187 = vmatprep.subr.bf16.mxu0 0
        %6188 = vmatpush1.bf16.msra.mxu0 0
        %6189 = vmatprep.subr.bf16.mxu0 0
        %6190 = vmatpush1.bf16.msra.mxu0 0
        %6191 = vmatprep.subr.bf16.mxu0 0
        %6192 = vmatpush1.bf16.msra.mxu0 0
        %6193 = vmatprep.subr.bf16.mxu0 0
        %6194 = vmatpush1.bf16.msra.mxu0 0
        %6195 = vmatprep.subr.bf16.mxu0 0
        %6196 = vmatpush1.bf16.msra.mxu0 0
        %6197 = vmatprep.subr.bf16.mxu0 0
        %6198 = vmatpush1.bf16.msra.mxu0 0
        %6199 = vmatprep.mubr.bf16.mxu0 0
        %6200 = vmatmul.mubr.bf16.gmra.mrb[0].mxu0 %v6162
        %v6201 = vpop.f32.mrb[0].mxu0
        %v6202 = vadd.f32 %v6141, %v6201
        %v6203 = vpop.f32.mrb[0].mxu0
        %v6204 = vpop.f32.mrb[0].mxu0
        %v6205 = vadd.f32 %v6144, %v6204
        %v6206 = vpop.f32.mrb[0].mxu0
        %6207 = vmatprep.mubr.bf16.mxu0 0
        %6208 = vmatmul.mubr.bf16.gmra.mrb[0].mxu0 %v6165
        %v6209 = vpop.f32.mrb[0].mxu0
        %v6210 = vadd.f32 %v6149, %v6209
        %v6211 = vpop.f32.mrb[0].mxu0
        %v6212 = vpop.f32.mrb[0].mxu0
        %v6213 = vadd.f32 %v6152, %v6212
        %v6214 = vpop.f32.mrb[0].mxu0
        %6215 = vdwg.mxu0
        %6216 = vrot.lane.b32.xlu0 %v5584, 96
        %v6217 = vpop.permute.xlu0 %6216
        %6218 = vrot.lane.b32.xlu0 %v5586, 96
        %v6219 = vpop.permute.xlu0 %6218
        %6220 = vrot.lane.b32.xlu0 %v5584, 32
        %v6221 = vpop.permute.xlu0 %6220
        %6222 = vrot.lane.b32.xlu0 %v5586, 32
        %v6223 = vpop.permute.xlu0 %6222
        %v6225 = vsel %vm940, %v6217, 0
        %v6228 = vsel %vm940, %v6219, 0
        %v6231 = vsel %vm940, %v6221, 0
        %v6234 = vsel %vm940, %v6223, 0
        %6236 = vmatprep.subr.bf16.mxu0 0
        %6237 = vmatpush1.bf16.xpose.msra.mxu0 %v6231
        %6238 = vmatprep.subr.bf16.mxu0 0
        %6239 = vmatpush1.bf16.xpose.msra.mxu0 %v6234
        %6240 = vmatprep.subr.bf16.mxu0 0
        %6241 = vmatpush1.bf16.xpose.msra.mxu0 0
        %6242 = vmatprep.subr.bf16.mxu0 0
        %6243 = vmatpush1.bf16.xpose.msra.mxu0 0
        %6244 = vmatprep.subr.bf16.mxu0 0
        %6245 = vmatpush1.bf16.xpose.msra.mxu0 0
        %6246 = vmatprep.subr.bf16.mxu0 0
        %6247 = vmatpush1.bf16.xpose.msra.mxu0 0
        %6248 = vmatprep.subr.bf16.mxu0 0
        %6249 = vmatpush1.bf16.xpose.msra.mxu0 0
        %6250 = vmatprep.subr.bf16.mxu0 0
        %6251 = vmatpush1.bf16.xpose.msra.mxu0 0
        %6252 = vmatprep.subr.bf16.mxu0 0
        %6253 = vmatpush1.bf16.xpose.msra.mxu0 0
        %6254 = vmatprep.subr.bf16.mxu0 0
        %6255 = vmatpush1.bf16.xpose.msra.mxu0 0
        %6256 = vmatprep.subr.bf16.mxu0 0
        %6257 = vmatpush1.bf16.xpose.msra.mxu0 0
        %6258 = vmatprep.subr.bf16.mxu0 0
        %6259 = vmatpush1.bf16.xpose.msra.mxu0 0
        %6260 = vmatprep.subr.bf16.mxu0 0
        %6261 = vmatpush1.bf16.xpose.msra.mxu0 0
        %6262 = vmatprep.subr.bf16.mxu0 0
        %6263 = vmatpush1.bf16.xpose.msra.mxu0 0
        %6264 = vmatprep.subr.bf16.mxu0 0
        %6265 = vmatpush1.bf16.xpose.msra.mxu0 0
        %6266 = vmatprep.subr.bf16.mxu0 0
        %6267 = vmatpush1.bf16.xpose.msra.mxu0 0
        %6268 = vmatprep.mubr.bf16.mxu0 0
        %6269 = vmatmul.mubr.bf16.gmra.mrb[0].mxu0 %v6225
        %v6270 = vpop.f32.mrb[0].mxu0
        %v6271 = vadd.f32 0.0, %v6270
        %v6272 = vpop.f32.mrb[0].mxu0
        %v6273 = vpop.f32.mrb[0].mxu0
        %v6274 = vadd.f32 0.0, %v6273
        %v6275 = vpop.f32.mrb[0].mxu0
        %6276 = vmatprep.mubr.bf16.mxu0 0
        %6277 = vmatmul.mubr.bf16.gmra.mrb[0].mxu0 %v6228
        %v6278 = vpop.f32.mrb[0].mxu0
        %v6279 = vadd.f32 0.0, %v6278
        %v6280 = vpop.f32.mrb[0].mxu0
        %v6281 = vpop.f32.mrb[0].mxu0
        %v6282 = vadd.f32 0.0, %v6281
        %v6283 = vpop.f32.mrb[0].mxu0
        %6284 = vdwg.mxu0
        %v6285 = vmul.f32 %v6271, 0.25
        %v6286 = vmul.f32 %v6274, 0.25
        %v6287 = vmul.f32 %v6279, 0.25
        %v6288 = vmul.f32 %v6282, 0.25
        %v6289 = vadd.f32 %v6285, %v508
        %v6290 = vadd.f32 %v6286, %v509
        %v6291 = vadd.f32 %v6287, %v510
        %v6292 = vadd.f32 %v6288, %v511
        %v6293 = vsel %vm535, %v6289, -inf
        %6294 = vmax.xlane.f32.xlu0 %v6293
        %v6295 = vpop.xlane.xlu0 %6294
        %v6296 = vsel %vm535, %v6290, -inf
        %6297 = vmax.xlane.f32.xlu0 %v6296
        %v6298 = vpop.xlane.xlu0 %6297
        %v6299 = vsel %vm535, %v6291, -inf
        %6300 = vmax.xlane.f32.xlu0 %v6299
        %v6301 = vpop.xlane.xlu0 %6300
        %v6302 = vsel %vm535, %v6292, -inf
        %6303 = vmax.xlane.f32.xlu0 %v6302
        %v6304 = vpop.xlane.xlu0 %6303
        %v6305 = vsub.f32 %v6289, %v6295
        %v6306 = vsub.f32 %v6290, %v6298
        %v6307 = vsub.f32 %v6291, %v6301
        %v6308 = vsub.f32 %v6292, %v6304
        %v6309 = vmul.f32 %v6305, 1.442695
        %v6310 = vpow.pop %v6309
        %v6311 = vmul.f32 %v6306, 1.442695
        %v6312 = vpow.pop %v6311
        %v6313 = vmul.f32 %v6307, 1.442695
        %v6314 = vpow.pop %v6313
        %v6315 = vmul.f32 %v6308, 1.442695
        %v6316 = vpow.pop %v6315
        %v6317 = vsel %vm535, %v6310, 0.0
        %6318 = vadd.xlane.f32.xlu0 %v6317
        %v6319 = vpop.xlane.xlu0 %6318
        %v6320 = vsel %vm535, %v6312, 0.0
        %6321 = vadd.xlane.f32.xlu0 %v6320
        %v6322 = vpop.xlane.xlu0 %6321
        %v6323 = vsel %vm535, %v6314, 0.0
        %6324 = vadd.xlane.f32.xlu0 %v6323
        %v6325 = vpop.xlane.xlu0 %6324
        %v6326 = vsel %vm535, %v6316, 0.0
        %6327 = vadd.xlane.f32.xlu0 %v6326
        %v6328 = vpop.xlane.xlu0 %6327
        %v6329 = vrcp.pop %v6319
        %v6330 = vmul.f32 %v6310, %v6329
        %v6331 = vrcp.pop %v6322
        %v6332 = vmul.f32 %v6312, %v6331
        %v6333 = vrcp.pop %v6325
        %v6334 = vmul.f32 %v6314, %v6333
        %v6335 = vrcp.pop %v6328
        %v6336 = vmul.f32 %v6316, %v6335
        %v6337 = vpack.c.bf16 %v6332, %v6330
        %v6338 = vpack.c.bf16 %v6336, %v6334
        %6339 = vrot.lane.b32.xlu0 %v5585, 96
        %v6340 = vpop.permute.xlu0 %6339
        %6341 = vrot.lane.b32.xlu0 %v5587, 96
        %v6342 = vpop.permute.xlu0 %6341
        %v6346 = vsel %vm535, %v6337, 0
        %v6349 = vsel %vm535, %v6338, 0
        %6351 = vmatprep.subr.bf16.mxu0 0
        %6352 = vmatpush1.bf16.msra.mxu0 %v6340
        %6353 = vmatprep.subr.bf16.mxu0 0
        %6354 = vmatpush1.bf16.msra.mxu0 %v6342
        %6355 = vmatprep.subr.bf16.mxu0 0
        %6356 = vmatpush1.bf16.msra.mxu0 0
        %6357 = vmatprep.subr.bf16.mxu0 0
        %6358 = vmatpush1.bf16.msra.mxu0 0
        %6359 = vmatprep.subr.bf16.mxu0 0
        %6360 = vmatpush1.bf16.msra.mxu0 0
        %6361 = vmatprep.subr.bf16.mxu0 0
        %6362 = vmatpush1.bf16.msra.mxu0 0
        %6363 = vmatprep.subr.bf16.mxu0 0
        %6364 = vmatpush1.bf16.msra.mxu0 0
        %6365 = vmatprep.subr.bf16.mxu0 0
        %6366 = vmatpush1.bf16.msra.mxu0 0
        %6367 = vmatprep.subr.bf16.mxu0 0
        %6368 = vmatpush1.bf16.msra.mxu0 0
        %6369 = vmatprep.subr.bf16.mxu0 0
        %6370 = vmatpush1.bf16.msra.mxu0 0
        %6371 = vmatprep.subr.bf16.mxu0 0
        %6372 = vmatpush1.bf16.msra.mxu0 0
        %6373 = vmatprep.subr.bf16.mxu0 0
        %6374 = vmatpush1.bf16.msra.mxu0 0
        %6375 = vmatprep.subr.bf16.mxu0 0
        %6376 = vmatpush1.bf16.msra.mxu0 0
        %6377 = vmatprep.subr.bf16.mxu0 0
        %6378 = vmatpush1.bf16.msra.mxu0 0
        %6379 = vmatprep.subr.bf16.mxu0 0
        %6380 = vmatpush1.bf16.msra.mxu0 0
        %6381 = vmatprep.subr.bf16.mxu0 0
        %6382 = vmatpush1.bf16.msra.mxu0 0
        %6383 = vmatprep.mubr.bf16.mxu0 0
        %6384 = vmatmul.mubr.bf16.gmra.mrb[0].mxu0 %v6346
        %v6385 = vpop.f32.mrb[0].mxu0
        %v6386 = vadd.f32 0.0, %v6385
        %v6387 = vpop.f32.mrb[0].mxu0
        %v6388 = vpop.f32.mrb[0].mxu0
        %v6389 = vadd.f32 0.0, %v6388
        %v6390 = vpop.f32.mrb[0].mxu0
        %6391 = vmatprep.mubr.bf16.mxu0 0
        %6392 = vmatmul.mubr.bf16.gmra.mrb[0].mxu0 %v6349
        %v6393 = vpop.f32.mrb[0].mxu0
        %v6394 = vadd.f32 0.0, %v6393
        %v6395 = vpop.f32.mrb[0].mxu0
        %v6396 = vpop.f32.mrb[0].mxu0
        %v6397 = vadd.f32 0.0, %v6396
        %v6398 = vpop.f32.mrb[0].mxu0
        %6399 = vdwg.mxu0
        %v6400 = vpack.c.bf16 %v6389, %v6386
        %v6401 = vpack.c.bf16 %v6397, %v6394
        %v6404 = vunpack.c.l.b16 %v5724
        %v6405 = vunpack.c.l.b16 %v5725
        %v6406 = vpack.c.b16 %v6405, %v6404
        %v6409 = vsel %vm940, %v6400, 0
        %v6412 = vsel %vm940, %v6401, 0
        %6414 = vmatprep.subr.bf16.mxu0 0
        %6415 = vmatpush1.bf16.msra.mxu0 %v6406
        %6416 = vmatprep.subr.bf16.mxu0 0
        %6417 = vmatpush1.bf16.msra.mxu0 0
        %6418 = vmatprep.subr.bf16.mxu0 0
        %6419 = vmatpush1.bf16.msra.mxu0 0
        %6420 = vmatprep.subr.bf16.mxu0 0
        %6421 = vmatpush1.bf16.msra.mxu0 0
        %6422 = vmatprep.subr.bf16.mxu0 0
        %6423 = vmatpush1.bf16.msra.mxu0 0
        %6424 = vmatprep.subr.bf16.mxu0 0
        %6425 = vmatpush1.bf16.msra.mxu0 0
        %6426 = vmatprep.subr.bf16.mxu0 0
        %6427 = vmatpush1.bf16.msra.mxu0 0
        %6428 = vmatprep.subr.bf16.mxu0 0
        %6429 = vmatpush1.bf16.msra.mxu0 0
        %6430 = vmatprep.subr.bf16.mxu0 0
        %6431 = vmatpush1.bf16.msra.mxu0 0
        %6432 = vmatprep.subr.bf16.mxu0 0
        %6433 = vmatpush1.bf16.msra.mxu0 0
        %6434 = vmatprep.subr.bf16.mxu0 0
        %6435 = vmatpush1.bf16.msra.mxu0 0
        %6436 = vmatprep.subr.bf16.mxu0 0
        %6437 = vmatpush1.bf16.msra.mxu0 0
        %6438 = vmatprep.subr.bf16.mxu0 0
        %6439 = vmatpush1.bf16.msra.mxu0 0
        %6440 = vmatprep.subr.bf16.mxu0 0
        %6441 = vmatpush1.bf16.msra.mxu0 0
        %6442 = vmatprep.subr.bf16.mxu0 0
        %6443 = vmatpush1.bf16.msra.mxu0 0
        %6444 = vmatprep.subr.bf16.mxu0 0
        %6445 = vmatpush1.bf16.msra.mxu0 0
        %6446 = vmatprep.mubr.bf16.mxu0 0
        %6447 = vmatmul.mubr.bf16.gmra.mrb[0].mxu0 %v6409
        %v6448 = vpop.f32.mrb[0].mxu0
        %v6449 = vadd.f32 0.0, %v6448
        %v6450 = vpop.f32.mrb[0].mxu0
        %v6451 = vpop.f32.mrb[0].mxu0
        %v6452 = vadd.f32 0.0, %v6451
        %v6453 = vpop.f32.mrb[0].mxu0
        %6454 = vmatprep.mubr.bf16.mxu0 0
        %6455 = vmatmul.mubr.bf16.gmra.mrb[0].mxu0 %v6412
        %v6456 = vpop.f32.mrb[0].mxu0
        %v6457 = vadd.f32 0.0, %v6456
        %v6458 = vpop.f32.mrb[0].mxu0
        %v6459 = vpop.f32.mrb[0].mxu0
        %v6460 = vadd.f32 0.0, %v6459
        %v6461 = vpop.f32.mrb[0].mxu0
        %6462 = vdwg.mxu0
        %v6463 = vadd.f32 %v6202, %v6449
        %v6464 = vadd.f32 %v6205, %v6452
        %v6465 = vadd.f32 %v6210, %v6457
        %v6466 = vadd.f32 %v6213, %v6460
        %6467 = vrot.lane.b32.xlu0 %v5584, 80
        %v6468 = vpop.permute.xlu0 %6467
        %6469 = vrot.lane.b32.xlu0 %v5586, 80
        %v6470 = vpop.permute.xlu0 %6469
        %6471 = vrot.lane.b32.xlu0 %v5584, 16
        %v6472 = vpop.permute.xlu0 %6471
        %6473 = vrot.lane.b32.xlu0 %v5586, 16
        %v6474 = vpop.permute.xlu0 %6473
        %v6476 = vsel %vm940, %v6468, 0
        %v6479 = vsel %vm940, %v6470, 0
        %v6482 = vsel %vm940, %v6472, 0
        %v6485 = vsel %vm940, %v6474, 0
        %6487 = vmatprep.subr.bf16.mxu0 0
        %6488 = vmatpush1.bf16.xpose.msra.mxu0 %v6482
        %6489 = vmatprep.subr.bf16.mxu0 0
        %6490 = vmatpush1.bf16.xpose.msra.mxu0 %v6485
        %6491 = vmatprep.subr.bf16.mxu0 0
        %6492 = vmatpush1.bf16.xpose.msra.mxu0 0
        %6493 = vmatprep.subr.bf16.mxu0 0
        %6494 = vmatpush1.bf16.xpose.msra.mxu0 0
        %6495 = vmatprep.subr.bf16.mxu0 0
        %6496 = vmatpush1.bf16.xpose.msra.mxu0 0
        %6497 = vmatprep.subr.bf16.mxu0 0
        %6498 = vmatpush1.bf16.xpose.msra.mxu0 0
        %6499 = vmatprep.subr.bf16.mxu0 0
        %6500 = vmatpush1.bf16.xpose.msra.mxu0 0
        %6501 = vmatprep.subr.bf16.mxu0 0
        %6502 = vmatpush1.bf16.xpose.msra.mxu0 0
        %6503 = vmatprep.subr.bf16.mxu0 0
        %6504 = vmatpush1.bf16.xpose.msra.mxu0 0
        %6505 = vmatprep.subr.bf16.mxu0 0
        %6506 = vmatpush1.bf16.xpose.msra.mxu0 0
        %6507 = vmatprep.subr.bf16.mxu0 0
        %6508 = vmatpush1.bf16.xpose.msra.mxu0 0
        %6509 = vmatprep.subr.bf16.mxu0 0
        %6510 = vmatpush1.bf16.xpose.msra.mxu0 0
        %6511 = vmatprep.subr.bf16.mxu0 0
        %6512 = vmatpush1.bf16.xpose.msra.mxu0 0
        %6513 = vmatprep.subr.bf16.mxu0 0
        %6514 = vmatpush1.bf16.xpose.msra.mxu0 0
        %6515 = vmatprep.subr.bf16.mxu0 0
        %6516 = vmatpush1.bf16.xpose.msra.mxu0 0
        %6517 = vmatprep.subr.bf16.mxu0 0
        %6518 = vmatpush1.bf16.xpose.msra.mxu0 0
        %6519 = vmatprep.mubr.bf16.mxu0 0
        %6520 = vmatmul.mubr.bf16.gmra.mrb[0].mxu0 %v6476
        %v6521 = vpop.f32.mrb[0].mxu0
        %v6522 = vadd.f32 0.0, %v6521
        %v6523 = vpop.f32.mrb[0].mxu0
        %v6524 = vpop.f32.mrb[0].mxu0
        %v6525 = vadd.f32 0.0, %v6524
        %v6526 = vpop.f32.mrb[0].mxu0
        %6527 = vmatprep.mubr.bf16.mxu0 0
        %6528 = vmatmul.mubr.bf16.gmra.mrb[0].mxu0 %v6479
        %v6529 = vpop.f32.mrb[0].mxu0
        %v6530 = vadd.f32 0.0, %v6529
        %v6531 = vpop.f32.mrb[0].mxu0
        %v6532 = vpop.f32.mrb[0].mxu0
        %v6533 = vadd.f32 0.0, %v6532
        %v6534 = vpop.f32.mrb[0].mxu0
        %6535 = vdwg.mxu0
        %v6536 = vmul.f32 %v6522, 0.25
        %v6537 = vmul.f32 %v6525, 0.25
        %v6538 = vmul.f32 %v6530, 0.25
        %v6539 = vmul.f32 %v6533, 0.25
        %v6540 = vadd.f32 %v6536, %v508
        %v6541 = vadd.f32 %v6537, %v509
        %v6542 = vadd.f32 %v6538, %v510
        %v6543 = vadd.f32 %v6539, %v511
        %v6544 = vsel %vm535, %v6540, -inf
        %6545 = vmax.xlane.f32.xlu0 %v6544
        %v6546 = vpop.xlane.xlu0 %6545
        %v6547 = vsel %vm535, %v6541, -inf
        %6548 = vmax.xlane.f32.xlu0 %v6547
        %v6549 = vpop.xlane.xlu0 %6548
        %v6550 = vsel %vm535, %v6542, -inf
        %6551 = vmax.xlane.f32.xlu0 %v6550
        %v6552 = vpop.xlane.xlu0 %6551
        %v6553 = vsel %vm535, %v6543, -inf
        %6554 = vmax.xlane.f32.xlu0 %v6553
        %v6555 = vpop.xlane.xlu0 %6554
        %v6556 = vsub.f32 %v6540, %v6546
        %v6557 = vsub.f32 %v6541, %v6549
        %v6558 = vsub.f32 %v6542, %v6552
        %v6559 = vsub.f32 %v6543, %v6555
        %v6560 = vmul.f32 %v6556, 1.442695
        %v6561 = vpow.pop %v6560
        %v6562 = vmul.f32 %v6557, 1.442695
        %v6563 = vpow.pop %v6562
        %v6564 = vmul.f32 %v6558, 1.442695
        %v6565 = vpow.pop %v6564
        %v6566 = vmul.f32 %v6559, 1.442695
        %v6567 = vpow.pop %v6566
        %v6568 = vsel %vm535, %v6561, 0.0
        %6569 = vadd.xlane.f32.xlu0 %v6568
        %v6570 = vpop.xlane.xlu0 %6569
        %v6571 = vsel %vm535, %v6563, 0.0
        %6572 = vadd.xlane.f32.xlu0 %v6571
        %v6573 = vpop.xlane.xlu0 %6572
        %v6574 = vsel %vm535, %v6565, 0.0
        %6575 = vadd.xlane.f32.xlu0 %v6574
        %v6576 = vpop.xlane.xlu0 %6575
        %v6577 = vsel %vm535, %v6567, 0.0
        %6578 = vadd.xlane.f32.xlu0 %v6577
        %v6579 = vpop.xlane.xlu0 %6578
        %v6580 = vrcp.pop %v6570
        %v6581 = vmul.f32 %v6561, %v6580
        %v6582 = vrcp.pop %v6573
        %v6583 = vmul.f32 %v6563, %v6582
        %v6584 = vrcp.pop %v6576
        %v6585 = vmul.f32 %v6565, %v6584
        %v6586 = vrcp.pop %v6579
        %v6587 = vmul.f32 %v6567, %v6586
        %v6588 = vpack.c.bf16 %v6583, %v6581
        %v6589 = vpack.c.bf16 %v6587, %v6585
        %6590 = vrot.lane.b32.xlu0 %v5585, 80
        %v6591 = vpop.permute.xlu0 %6590
        %6592 = vrot.lane.b32.xlu0 %v5587, 80
        %v6593 = vpop.permute.xlu0 %6592
        %v6597 = vsel %vm535, %v6588, 0
        %v6600 = vsel %vm535, %v6589, 0
        %6602 = vmatprep.subr.bf16.mxu0 0
        %6603 = vmatpush1.bf16.msra.mxu0 %v6591
        %6604 = vmatprep.subr.bf16.mxu0 0
        %6605 = vmatpush1.bf16.msra.mxu0 %v6593
        %6606 = vmatprep.subr.bf16.mxu0 0
        %6607 = vmatpush1.bf16.msra.mxu0 0
        %6608 = vmatprep.subr.bf16.mxu0 0
        %6609 = vmatpush1.bf16.msra.mxu0 0
        %6610 = vmatprep.subr.bf16.mxu0 0
        %6611 = vmatpush1.bf16.msra.mxu0 0
        %6612 = vmatprep.subr.bf16.mxu0 0
        %6613 = vmatpush1.bf16.msra.mxu0 0
        %6614 = vmatprep.subr.bf16.mxu0 0
        %6615 = vmatpush1.bf16.msra.mxu0 0
        %6616 = vmatprep.subr.bf16.mxu0 0
        %6617 = vmatpush1.bf16.msra.mxu0 0
        %6618 = vmatprep.subr.bf16.mxu0 0
        %6619 = vmatpush1.bf16.msra.mxu0 0
        %6620 = vmatprep.subr.bf16.mxu0 0
        %6621 = vmatpush1.bf16.msra.mxu0 0
        %6622 = vmatprep.subr.bf16.mxu0 0
        %6623 = vmatpush1.bf16.msra.mxu0 0
        %6624 = vmatprep.subr.bf16.mxu0 0
        %6625 = vmatpush1.bf16.msra.mxu0 0
        %6626 = vmatprep.subr.bf16.mxu0 0
        %6627 = vmatpush1.bf16.msra.mxu0 0
        %6628 = vmatprep.subr.bf16.mxu0 0
        %6629 = vmatpush1.bf16.msra.mxu0 0
        %6630 = vmatprep.subr.bf16.mxu0 0
        %6631 = vmatpush1.bf16.msra.mxu0 0
        %6632 = vmatprep.subr.bf16.mxu0 0
        %6633 = vmatpush1.bf16.msra.mxu0 0
        %6634 = vmatprep.mubr.bf16.mxu0 0
        %6635 = vmatmul.mubr.bf16.gmra.mrb[0].mxu0 %v6597
        %v6636 = vpop.f32.mrb[0].mxu0
        %v6637 = vadd.f32 0.0, %v6636
        %v6638 = vpop.f32.mrb[0].mxu0
        %v6639 = vpop.f32.mrb[0].mxu0
        %v6640 = vadd.f32 0.0, %v6639
        %v6641 = vpop.f32.mrb[0].mxu0
        %6642 = vmatprep.mubr.bf16.mxu0 0
        %6643 = vmatmul.mubr.bf16.gmra.mrb[0].mxu0 %v6600
        %v6644 = vpop.f32.mrb[0].mxu0
        %v6645 = vadd.f32 0.0, %v6644
        %v6646 = vpop.f32.mrb[0].mxu0
        %v6647 = vpop.f32.mrb[0].mxu0
        %v6648 = vadd.f32 0.0, %v6647
        %v6649 = vpop.f32.mrb[0].mxu0
        %6650 = vdwg.mxu0
        %v6651 = vpack.c.bf16 %v6640, %v6637
        %v6652 = vpack.c.bf16 %v6648, %v6645
        %v6655 = vunpack.c.l.b16 %v5726
        %v6656 = vunpack.c.l.b16 %v5727
        %v6657 = vpack.c.b16 %v6656, %v6655
        %v6660 = vsel %vm940, %v6651, 0
        %v6663 = vsel %vm940, %v6652, 0
        %6665 = vmatprep.subr.bf16.mxu0 0
        %6666 = vmatpush1.bf16.msra.mxu0 %v6657
        %6667 = vmatprep.subr.bf16.mxu0 0
        %6668 = vmatpush1.bf16.msra.mxu0 0
        %6669 = vmatprep.subr.bf16.mxu0 0
        %6670 = vmatpush1.bf16.msra.mxu0 0
        %6671 = vmatprep.subr.bf16.mxu0 0
        %6672 = vmatpush1.bf16.msra.mxu0 0
        %6673 = vmatprep.subr.bf16.mxu0 0
        %6674 = vmatpush1.bf16.msra.mxu0 0
        %6675 = vmatprep.subr.bf16.mxu0 0
        %6676 = vmatpush1.bf16.msra.mxu0 0
        %6677 = vmatprep.subr.bf16.mxu0 0
        %6678 = vmatpush1.bf16.msra.mxu0 0
        %6679 = vmatprep.subr.bf16.mxu0 0
        %6680 = vmatpush1.bf16.msra.mxu0 0
        %6681 = vmatprep.subr.bf16.mxu0 0
        %6682 = vmatpush1.bf16.msra.mxu0 0
        %6683 = vmatprep.subr.bf16.mxu0 0
        %6684 = vmatpush1.bf16.msra.mxu0 0
        %6685 = vmatprep.subr.bf16.mxu0 0
        %6686 = vmatpush1.bf16.msra.mxu0 0
        %6687 = vmatprep.subr.bf16.mxu0 0
        %6688 = vmatpush1.bf16.msra.mxu0 0
        %6689 = vmatprep.subr.bf16.mxu0 0
        %6690 = vmatpush1.bf16.msra.mxu0 0
        %6691 = vmatprep.subr.bf16.mxu0 0
        %6692 = vmatpush1.bf16.msra.mxu0 0
        %6693 = vmatprep.subr.bf16.mxu0 0
        %6694 = vmatpush1.bf16.msra.mxu0 0
        %6695 = vmatprep.subr.bf16.mxu0 0
        %6696 = vmatpush1.bf16.msra.mxu0 0
        %6697 = vmatprep.mubr.bf16.mxu0 0
        %6698 = vmatmul.mubr.bf16.gmra.mrb[0].mxu0 %v6660
        %v6699 = vpop.f32.mrb[0].mxu0
        %v6700 = vadd.f32 0.0, %v6699
        %v6701 = vpop.f32.mrb[0].mxu0
        %v6702 = vpop.f32.mrb[0].mxu0
        %v6703 = vadd.f32 0.0, %v6702
        %v6704 = vpop.f32.mrb[0].mxu0
        %6705 = vmatprep.mubr.bf16.mxu0 0
        %6706 = vmatmul.mubr.bf16.gmra.mrb[0].mxu0 %v6663
        %v6707 = vpop.f32.mrb[0].mxu0
        %v6708 = vadd.f32 0.0, %v6707
        %v6709 = vpop.f32.mrb[0].mxu0
        %v6710 = vpop.f32.mrb[0].mxu0
        %v6711 = vadd.f32 0.0, %v6710
        %v6712 = vpop.f32.mrb[0].mxu0
        %6713 = vdwg.mxu0
        %v6714 = vadd.f32 %v6463, %v6700
        %v6715 = vadd.f32 %v6464, %v6703
        %v6716 = vadd.f32 %v6465, %v6708
        %v6717 = vadd.f32 %v6466, %v6711
        %s6718 = scalar_lea.vmem %s13, 64
        %v6719 = vld [vmem:[%s6718] sm:$0xf]
        %v6720 = vld [vmem:[%s6718 + $0x4] sm:$0xf]
        %v6721 = vld [vmem:[%s6718 + $0x8] sm:$0xf]
        %v6722 = vld [vmem:[%s6718 + $0xc] sm:$0xf]
        %v6723 = vld [vmem:[%s6718 + $0x10] sm:$0xf]
        %v6724 = vld [vmem:[%s6718 + $0x14] sm:$0xf]
        %v6725 = vld [vmem:[%s6718 + $0x18] sm:$0xf]
        %v6726 = vld [vmem:[%s6718 + $0x1c] sm:$0xf]
        %6729 = vrot.lane.b32.xlu0 %v5715, 64
        %v6730 = vpop.permute.xlu0 %6729
        %6731 = vrot.lane.b32.xlu0 %v5717, 64
        %v6732 = vpop.permute.xlu0 %6731
        %v6734 = vsel %vm940, %v5715, 0
        %v6737 = vsel %vm940, %v5717, 0
        %v6740 = vsel %vm940, %v6730, 0
        %v6743 = vsel %vm940, %v6732, 0
        %6745 = vmatprep.subr.bf16.mxu0 0
        %6746 = vmatpush1.bf16.xpose.msra.mxu0 %v6740
        %6747 = vmatprep.subr.bf16.mxu0 0
        %6748 = vmatpush1.bf16.xpose.msra.mxu0 %v6743
        %6749 = vmatprep.subr.bf16.mxu0 0
        %6750 = vmatpush1.bf16.xpose.msra.mxu0 0
        %6751 = vmatprep.subr.bf16.mxu0 0
        %6752 = vmatpush1.bf16.xpose.msra.mxu0 0
        %6753 = vmatprep.subr.bf16.mxu0 0
        %6754 = vmatpush1.bf16.xpose.msra.mxu0 0
        %6755 = vmatprep.subr.bf16.mxu0 0
        %6756 = vmatpush1.bf16.xpose.msra.mxu0 0
        %6757 = vmatprep.subr.bf16.mxu0 0
        %6758 = vmatpush1.bf16.xpose.msra.mxu0 0
        %6759 = vmatprep.subr.bf16.mxu0 0
        %6760 = vmatpush1.bf16.xpose.msra.mxu0 0
        %6761 = vmatprep.subr.bf16.mxu0 0
        %6762 = vmatpush1.bf16.xpose.msra.mxu0 0
        %6763 = vmatprep.subr.bf16.mxu0 0
        %6764 = vmatpush1.bf16.xpose.msra.mxu0 0
        %6765 = vmatprep.subr.bf16.mxu0 0
        %6766 = vmatpush1.bf16.xpose.msra.mxu0 0
        %6767 = vmatprep.subr.bf16.mxu0 0
        %6768 = vmatpush1.bf16.xpose.msra.mxu0 0
        %6769 = vmatprep.subr.bf16.mxu0 0
        %6770 = vmatpush1.bf16.xpose.msra.mxu0 0
        %6771 = vmatprep.subr.bf16.mxu0 0
        %6772 = vmatpush1.bf16.xpose.msra.mxu0 0
        %6773 = vmatprep.subr.bf16.mxu0 0
        %6774 = vmatpush1.bf16.xpose.msra.mxu0 0
        %6775 = vmatprep.subr.bf16.mxu0 0
        %6776 = vmatpush1.bf16.xpose.msra.mxu0 0
        %6777 = vmatprep.mubr.bf16.mxu0 0
        %6778 = vmatmul.mubr.bf16.gmra.mrb[0].mxu0 %v6734
        %v6779 = vpop.f32.mrb[0].mxu0
        %v6780 = vadd.f32 0.0, %v6779
        %v6781 = vpop.f32.mrb[0].mxu0
        %v6782 = vpop.f32.mrb[0].mxu0
        %v6783 = vadd.f32 0.0, %v6782
        %v6784 = vpop.f32.mrb[0].mxu0
        %6785 = vmatprep.mubr.bf16.mxu0 0
        %6786 = vmatmul.mubr.bf16.gmra.mrb[0].mxu0 %v6737
        %v6787 = vpop.f32.mrb[0].mxu0
        %v6788 = vadd.f32 0.0, %v6787
        %v6789 = vpop.f32.mrb[0].mxu0
        %v6790 = vpop.f32.mrb[0].mxu0
        %v6791 = vadd.f32 0.0, %v6790
        %v6792 = vpop.f32.mrb[0].mxu0
        %6793 = vdwg.mxu0
        %v6794 = vmul.f32 %v6780, 0.25
        %v6795 = vmul.f32 %v6783, 0.25
        %v6796 = vmul.f32 %v6788, 0.25
        %v6797 = vmul.f32 %v6791, 0.25
        %v6798 = vadd.f32 %v6794, %v512
        %v6799 = vadd.f32 %v6795, %v513
        %v6800 = vadd.f32 %v6796, %v514
        %v6801 = vadd.f32 %v6797, %v515
        %v6802 = vsel %vm535, %v6798, -inf
        %6803 = vmax.xlane.f32.xlu0 %v6802
        %v6804 = vpop.xlane.xlu0 %6803
        %v6805 = vsel %vm535, %v6799, -inf
        %6806 = vmax.xlane.f32.xlu0 %v6805
        %v6807 = vpop.xlane.xlu0 %6806
        %v6808 = vsel %vm535, %v6800, -inf
        %6809 = vmax.xlane.f32.xlu0 %v6808
        %v6810 = vpop.xlane.xlu0 %6809
        %v6811 = vsel %vm535, %v6801, -inf
        %6812 = vmax.xlane.f32.xlu0 %v6811
        %v6813 = vpop.xlane.xlu0 %6812
        %v6814 = vsub.f32 %v6798, %v6804
        %v6815 = vsub.f32 %v6799, %v6807
        %v6816 = vsub.f32 %v6800, %v6810
        %v6817 = vsub.f32 %v6801, %v6813
        %v6818 = vmul.f32 %v6814, 1.442695
        %v6819 = vpow.pop %v6818
        %v6820 = vmul.f32 %v6815, 1.442695
        %v6821 = vpow.pop %v6820
        %v6822 = vmul.f32 %v6816, 1.442695
        %v6823 = vpow.pop %v6822
        %v6824 = vmul.f32 %v6817, 1.442695
        %v6825 = vpow.pop %v6824
        %v6826 = vsel %vm535, %v6819, 0.0
        %6827 = vadd.xlane.f32.xlu0 %v6826
        %v6828 = vpop.xlane.xlu0 %6827
        %v6829 = vsel %vm535, %v6821, 0.0
        %6830 = vadd.xlane.f32.xlu0 %v6829
        %v6831 = vpop.xlane.xlu0 %6830
        %v6832 = vsel %vm535, %v6823, 0.0
        %6833 = vadd.xlane.f32.xlu0 %v6832
        %v6834 = vpop.xlane.xlu0 %6833
        %v6835 = vsel %vm535, %v6825, 0.0
        %6836 = vadd.xlane.f32.xlu0 %v6835
        %v6837 = vpop.xlane.xlu0 %6836
        %v6838 = vrcp.pop %v6828
        %v6839 = vmul.f32 %v6819, %v6838
        %v6840 = vrcp.pop %v6831
        %v6841 = vmul.f32 %v6821, %v6840
        %v6842 = vrcp.pop %v6834
        %v6843 = vmul.f32 %v6823, %v6842
        %v6844 = vrcp.pop %v6837
        %v6845 = vmul.f32 %v6825, %v6844
        %v6846 = vpack.c.bf16 %v6841, %v6839
        %v6847 = vpack.c.bf16 %v6845, %v6843
        %v6849 = vsel %vm535, %v6846, 0
        %v6852 = vsel %vm535, %v6847, 0
        %6854 = vmatprep.subr.bf16.mxu0 0
        %6855 = vmatpush1.bf16.msra.mxu0 %v5716
        %6856 = vmatprep.subr.bf16.mxu0 0
        %6857 = vmatpush1.bf16.msra.mxu0 %v5718
        %6858 = vmatprep.subr.bf16.mxu0 0
        %6859 = vmatpush1.bf16.msra.mxu0 0
        %6860 = vmatprep.subr.bf16.mxu0 0
        %6861 = vmatpush1.bf16.msra.mxu0 0
        %6862 = vmatprep.subr.bf16.mxu0 0
        %6863 = vmatpush1.bf16.msra.mxu0 0
        %6864 = vmatprep.subr.bf16.mxu0 0
        %6865 = vmatpush1.bf16.msra.mxu0 0
        %6866 = vmatprep.subr.bf16.mxu0 0
        %6867 = vmatpush1.bf16.msra.mxu0 0
        %6868 = vmatprep.subr.bf16.mxu0 0
        %6869 = vmatpush1.bf16.msra.mxu0 0
        %6870 = vmatprep.subr.bf16.mxu0 0
        %6871 = vmatpush1.bf16.msra.mxu0 0
        %6872 = vmatprep.subr.bf16.mxu0 0
        %6873 = vmatpush1.bf16.msra.mxu0 0
        %6874 = vmatprep.subr.bf16.mxu0 0
        %6875 = vmatpush1.bf16.msra.mxu0 0
        %6876 = vmatprep.subr.bf16.mxu0 0
        %6877 = vmatpush1.bf16.msra.mxu0 0
        %6878 = vmatprep.subr.bf16.mxu0 0
        %6879 = vmatpush1.bf16.msra.mxu0 0
        %6880 = vmatprep.subr.bf16.mxu0 0
        %6881 = vmatpush1.bf16.msra.mxu0 0
        %6882 = vmatprep.subr.bf16.mxu0 0
        %6883 = vmatpush1.bf16.msra.mxu0 0
        %6884 = vmatprep.subr.bf16.mxu0 0
        %6885 = vmatpush1.bf16.msra.mxu0 0
        %6886 = vmatprep.mubr.bf16.mxu0 0
        %6887 = vmatmul.mubr.bf16.gmra.mrb[0].mxu0 %v6849
        %v6888 = vpop.f32.mrb[0].mxu0
        %v6889 = vadd.f32 0.0, %v6888
        %v6890 = vpop.f32.mrb[0].mxu0
        %v6891 = vpop.f32.mrb[0].mxu0
        %v6892 = vadd.f32 0.0, %v6891
        %v6893 = vpop.f32.mrb[0].mxu0
        %6894 = vmatprep.mubr.bf16.mxu0 0
        %6895 = vmatmul.mubr.bf16.gmra.mrb[0].mxu0 %v6852
        %v6896 = vpop.f32.mrb[0].mxu0
        %v6897 = vadd.f32 0.0, %v6896
        %v6898 = vpop.f32.mrb[0].mxu0
        %v6899 = vpop.f32.mrb[0].mxu0
        %v6900 = vadd.f32 0.0, %v6899
        %v6901 = vpop.f32.mrb[0].mxu0
        %6902 = vdwg.mxu0
        %v6903 = vpack.c.bf16 %v6892, %v6889
        %v6904 = vpack.c.bf16 %v6900, %v6897
        %v6907 = vunpack.c.l.b16 %v6719
        %v6908 = vunpack.c.l.b16 %v6720
        %v6909 = vpack.c.b16 %v6908, %v6907
        %v6912 = vsel %vm940, %v6903, 0
        %v6915 = vsel %vm940, %v6904, 0
        %6917 = vmatprep.subr.bf16.mxu0 0
        %6918 = vmatpush1.bf16.msra.mxu0 %v6909
        %6919 = vmatprep.subr.bf16.mxu0 0
        %6920 = vmatpush1.bf16.msra.mxu0 0
        %6921 = vmatprep.subr.bf16.mxu0 0
        %6922 = vmatpush1.bf16.msra.mxu0 0
        %6923 = vmatprep.subr.bf16.mxu0 0
        %6924 = vmatpush1.bf16.msra.mxu0 0
        %6925 = vmatprep.subr.bf16.mxu0 0
        %6926 = vmatpush1.bf16.msra.mxu0 0
        %6927 = vmatprep.subr.bf16.mxu0 0
        %6928 = vmatpush1.bf16.msra.mxu0 0
        %6929 = vmatprep.subr.bf16.mxu0 0
        %6930 = vmatpush1.bf16.msra.mxu0 0
        %6931 = vmatprep.subr.bf16.mxu0 0
        %6932 = vmatpush1.bf16.msra.mxu0 0
        %6933 = vmatprep.subr.bf16.mxu0 0
        %6934 = vmatpush1.bf16.msra.mxu0 0
        %6935 = vmatprep.subr.bf16.mxu0 0
        %6936 = vmatpush1.bf16.msra.mxu0 0
        %6937 = vmatprep.subr.bf16.mxu0 0
        %6938 = vmatpush1.bf16.msra.mxu0 0
        %6939 = vmatprep.subr.bf16.mxu0 0
        %6940 = vmatpush1.bf16.msra.mxu0 0
        %6941 = vmatprep.subr.bf16.mxu0 0
        %6942 = vmatpush1.bf16.msra.mxu0 0
        %6943 = vmatprep.subr.bf16.mxu0 0
        %6944 = vmatpush1.bf16.msra.mxu0 0
        %6945 = vmatprep.subr.bf16.mxu0 0
        %6946 = vmatpush1.bf16.msra.mxu0 0
        %6947 = vmatprep.subr.bf16.mxu0 0
        %6948 = vmatpush1.bf16.msra.mxu0 0
        %6949 = vmatprep.mubr.bf16.mxu0 0
        %6950 = vmatmul.mubr.bf16.gmra.mrb[0].mxu0 %v6912
        %v6951 = vpop.f32.mrb[0].mxu0
        %v6952 = vadd.f32 0.0, %v6951
        %v6953 = vpop.f32.mrb[0].mxu0
        %v6954 = vpop.f32.mrb[0].mxu0
        %v6955 = vadd.f32 0.0, %v6954
        %v6956 = vpop.f32.mrb[0].mxu0
        %6957 = vmatprep.mubr.bf16.mxu0 0
        %6958 = vmatmul.mubr.bf16.gmra.mrb[0].mxu0 %v6915
        %v6959 = vpop.f32.mrb[0].mxu0
        %v6960 = vadd.f32 0.0, %v6959
        %v6961 = vpop.f32.mrb[0].mxu0
        %v6962 = vpop.f32.mrb[0].mxu0
        %v6963 = vadd.f32 0.0, %v6962
        %v6964 = vpop.f32.mrb[0].mxu0
        %6965 = vdwg.mxu0
        %v6966 = vadd.f32 %v6714, %v6952
        %v6967 = vadd.f32 %v6715, %v6955
        %v6968 = vadd.f32 %v6716, %v6960
        %v6969 = vadd.f32 %v6717, %v6963
        %6970 = vrot.lane.b32.xlu0 %v5715, 112
        %v6971 = vpop.permute.xlu0 %6970
        %6972 = vrot.lane.b32.xlu0 %v5717, 112
        %v6973 = vpop.permute.xlu0 %6972
        %6974 = vrot.lane.b32.xlu0 %v5715, 48
        %v6975 = vpop.permute.xlu0 %6974
        %6976 = vrot.lane.b32.xlu0 %v5717, 48
        %v6977 = vpop.permute.xlu0 %6976
        %v6979 = vsel %vm940, %v6971, 0
        %v6982 = vsel %vm940, %v6973, 0
        %v6985 = vsel %vm940, %v6975, 0
        %v6988 = vsel %vm940, %v6977, 0
        %6990 = vmatprep.subr.bf16.mxu0 0
        %6991 = vmatpush1.bf16.xpose.msra.mxu0 %v6985
        %6992 = vmatprep.subr.bf16.mxu0 0
        %6993 = vmatpush1.bf16.xpose.msra.mxu0 %v6988
        %6994 = vmatprep.subr.bf16.mxu0 0
        %6995 = vmatpush1.bf16.xpose.msra.mxu0 0
        %6996 = vmatprep.subr.bf16.mxu0 0
        %6997 = vmatpush1.bf16.xpose.msra.mxu0 0
        %6998 = vmatprep.subr.bf16.mxu0 0
        %6999 = vmatpush1.bf16.xpose.msra.mxu0 0
        %7000 = vmatprep.subr.bf16.mxu0 0
        %7001 = vmatpush1.bf16.xpose.msra.mxu0 0
        %7002 = vmatprep.subr.bf16.mxu0 0
        %7003 = vmatpush1.bf16.xpose.msra.mxu0 0
        %7004 = vmatprep.subr.bf16.mxu0 0
        %7005 = vmatpush1.bf16.xpose.msra.mxu0 0
        %7006 = vmatprep.subr.bf16.mxu0 0
        %7007 = vmatpush1.bf16.xpose.msra.mxu0 0
        %7008 = vmatprep.subr.bf16.mxu0 0
        %7009 = vmatpush1.bf16.xpose.msra.mxu0 0
        %7010 = vmatprep.subr.bf16.mxu0 0
        %7011 = vmatpush1.bf16.xpose.msra.mxu0 0
        %7012 = vmatprep.subr.bf16.mxu0 0
        %7013 = vmatpush1.bf16.xpose.msra.mxu0 0
        %7014 = vmatprep.subr.bf16.mxu0 0
        %7015 = vmatpush1.bf16.xpose.msra.mxu0 0
        %7016 = vmatprep.subr.bf16.mxu0 0
        %7017 = vmatpush1.bf16.xpose.msra.mxu0 0
        %7018 = vmatprep.subr.bf16.mxu0 0
        %7019 = vmatpush1.bf16.xpose.msra.mxu0 0
        %7020 = vmatprep.subr.bf16.mxu0 0
        %7021 = vmatpush1.bf16.xpose.msra.mxu0 0
        %7022 = vmatprep.mubr.bf16.mxu0 0
        %7023 = vmatmul.mubr.bf16.gmra.mrb[0].mxu0 %v6979
        %v7024 = vpop.f32.mrb[0].mxu0
        %v7025 = vadd.f32 0.0, %v7024
        %v7026 = vpop.f32.mrb[0].mxu0
        %v7027 = vpop.f32.mrb[0].mxu0
        %v7028 = vadd.f32 0.0, %v7027
        %v7029 = vpop.f32.mrb[0].mxu0
        %7030 = vmatprep.mubr.bf16.mxu0 0
        %7031 = vmatmul.mubr.bf16.gmra.mrb[0].mxu0 %v6982
        %v7032 = vpop.f32.mrb[0].mxu0
        %v7033 = vadd.f32 0.0, %v7032
        %v7034 = vpop.f32.mrb[0].mxu0
        %v7035 = vpop.f32.mrb[0].mxu0
        %v7036 = vadd.f32 0.0, %v7035
        %v7037 = vpop.f32.mrb[0].mxu0
        %7038 = vdwg.mxu0
        %v7039 = vmul.f32 %v7025, 0.25
        %v7040 = vmul.f32 %v7028, 0.25
        %v7041 = vmul.f32 %v7033, 0.25
        %v7042 = vmul.f32 %v7036, 0.25
        %v7043 = vadd.f32 %v7039, %v512
        %v7044 = vadd.f32 %v7040, %v513
        %v7045 = vadd.f32 %v7041, %v514
        %v7046 = vadd.f32 %v7042, %v515
        %v7047 = vsel %vm535, %v7043, -inf
        %7048 = vmax.xlane.f32.xlu0 %v7047
        %v7049 = vpop.xlane.xlu0 %7048
        %v7050 = vsel %vm535, %v7044, -inf
        %7051 = vmax.xlane.f32.xlu0 %v7050
        %v7052 = vpop.xlane.xlu0 %7051
        %v7053 = vsel %vm535, %v7045, -inf
        %7054 = vmax.xlane.f32.xlu0 %v7053
        %v7055 = vpop.xlane.xlu0 %7054
        %v7056 = vsel %vm535, %v7046, -inf
        %7057 = vmax.xlane.f32.xlu0 %v7056
        %v7058 = vpop.xlane.xlu0 %7057
        %v7059 = vsub.f32 %v7043, %v7049
        %v7060 = vsub.f32 %v7044, %v7052
        %v7061 = vsub.f32 %v7045, %v7055
        %v7062 = vsub.f32 %v7046, %v7058
        %v7063 = vmul.f32 %v7059, 1.442695
        %v7064 = vpow.pop %v7063
        %v7065 = vmul.f32 %v7060, 1.442695
        %v7066 = vpow.pop %v7065
        %v7067 = vmul.f32 %v7061, 1.442695
        %v7068 = vpow.pop %v7067
        %v7069 = vmul.f32 %v7062, 1.442695
        %v7070 = vpow.pop %v7069
        %v7071 = vsel %vm535, %v7064, 0.0
        %7072 = vadd.xlane.f32.xlu0 %v7071
        %v7073 = vpop.xlane.xlu0 %7072
        %v7074 = vsel %vm535, %v7066, 0.0
        %7075 = vadd.xlane.f32.xlu0 %v7074
        %v7076 = vpop.xlane.xlu0 %7075
        %v7077 = vsel %vm535, %v7068, 0.0
        %7078 = vadd.xlane.f32.xlu0 %v7077
        %v7079 = vpop.xlane.xlu0 %7078
        %v7080 = vsel %vm535, %v7070, 0.0
        %7081 = vadd.xlane.f32.xlu0 %v7080
        %v7082 = vpop.xlane.xlu0 %7081
        %v7083 = vrcp.pop %v7073
        %v7084 = vmul.f32 %v7064, %v7083
        %v7085 = vrcp.pop %v7076
        %v7086 = vmul.f32 %v7066, %v7085
        %v7087 = vrcp.pop %v7079
        %v7088 = vmul.f32 %v7068, %v7087
        %v7089 = vrcp.pop %v7082
        %v7090 = vmul.f32 %v7070, %v7089
        %v7091 = vpack.c.bf16 %v7086, %v7084
        %v7092 = vpack.c.bf16 %v7090, %v7088
        %7095 = vrot.lane.b32.xlu0 %v5716, 112
        %v7096 = vpop.permute.xlu0 %7095
        %7097 = vrot.lane.b32.xlu0 %v5718, 112
        %v7098 = vpop.permute.xlu0 %7097
        %v7102 = vsel %vm535, %v7091, 0
        %v7105 = vsel %vm535, %v7092, 0
        %7107 = vmatprep.subr.bf16.mxu0 0
        %7108 = vmatpush1.bf16.msra.mxu0 %v7096
        %7109 = vmatprep.subr.bf16.mxu0 0
        %7110 = vmatpush1.bf16.msra.mxu0 %v7098
        %7111 = vmatprep.subr.bf16.mxu0 0
        %7112 = vmatpush1.bf16.msra.mxu0 0
        %7113 = vmatprep.subr.bf16.mxu0 0
        %7114 = vmatpush1.bf16.msra.mxu0 0
        %7115 = vmatprep.subr.bf16.mxu0 0
        %7116 = vmatpush1.bf16.msra.mxu0 0
        %7117 = vmatprep.subr.bf16.mxu0 0
        %7118 = vmatpush1.bf16.msra.mxu0 0
        %7119 = vmatprep.subr.bf16.mxu0 0
        %7120 = vmatpush1.bf16.msra.mxu0 0
        %7121 = vmatprep.subr.bf16.mxu0 0
        %7122 = vmatpush1.bf16.msra.mxu0 0
        %7123 = vmatprep.subr.bf16.mxu0 0
        %7124 = vmatpush1.bf16.msra.mxu0 0
        %7125 = vmatprep.subr.bf16.mxu0 0
        %7126 = vmatpush1.bf16.msra.mxu0 0
        %7127 = vmatprep.subr.bf16.mxu0 0
        %7128 = vmatpush1.bf16.msra.mxu0 0
        %7129 = vmatprep.subr.bf16.mxu0 0
        %7130 = vmatpush1.bf16.msra.mxu0 0
        %7131 = vmatprep.subr.bf16.mxu0 0
        %7132 = vmatpush1.bf16.msra.mxu0 0
        %7133 = vmatprep.subr.bf16.mxu0 0
        %7134 = vmatpush1.bf16.msra.mxu0 0
        %7135 = vmatprep.subr.bf16.mxu0 0
        %7136 = vmatpush1.bf16.msra.mxu0 0
        %7137 = vmatprep.subr.bf16.mxu0 0
        %7138 = vmatpush1.bf16.msra.mxu0 0
        %7139 = vmatprep.mubr.bf16.mxu0 0
        %7140 = vmatmul.mubr.bf16.gmra.mrb[0].mxu0 %v7102
        %v7141 = vpop.f32.mrb[0].mxu0
        %v7142 = vadd.f32 0.0, %v7141
        %v7143 = vpop.f32.mrb[0].mxu0
        %v7144 = vpop.f32.mrb[0].mxu0
        %v7145 = vadd.f32 0.0, %v7144
        %v7146 = vpop.f32.mrb[0].mxu0
        %7147 = vmatprep.mubr.bf16.mxu0 0
        %7148 = vmatmul.mubr.bf16.gmra.mrb[0].mxu0 %v7105
        %v7149 = vpop.f32.mrb[0].mxu0
        %v7150 = vadd.f32 0.0, %v7149
        %v7151 = vpop.f32.mrb[0].mxu0
        %v7152 = vpop.f32.mrb[0].mxu0
        %v7153 = vadd.f32 0.0, %v7152
        %v7154 = vpop.f32.mrb[0].mxu0
        %7155 = vdwg.mxu0
        %v7156 = vpack.c.bf16 %v7145, %v7142
        %v7157 = vpack.c.bf16 %v7153, %v7150
        %v7160 = vunpack.c.l.b16 %v6721
        %v7161 = vunpack.c.l.b16 %v6722
        %v7162 = vpack.c.b16 %v7161, %v7160
        %v7165 = vsel %vm940, %v7156, 0
        %v7168 = vsel %vm940, %v7157, 0
        %7170 = vmatprep.subr.bf16.mxu0 0
        %7171 = vmatpush1.bf16.msra.mxu0 %v7162
        %7172 = vmatprep.subr.bf16.mxu0 0
        %7173 = vmatpush1.bf16.msra.mxu0 0
        %7174 = vmatprep.subr.bf16.mxu0 0
        %7175 = vmatpush1.bf16.msra.mxu0 0
        %7176 = vmatprep.subr.bf16.mxu0 0
        %7177 = vmatpush1.bf16.msra.mxu0 0
        %7178 = vmatprep.subr.bf16.mxu0 0
        %7179 = vmatpush1.bf16.msra.mxu0 0
        %7180 = vmatprep.subr.bf16.mxu0 0
        %7181 = vmatpush1.bf16.msra.mxu0 0
        %7182 = vmatprep.subr.bf16.mxu0 0
        %7183 = vmatpush1.bf16.msra.mxu0 0
        %7184 = vmatprep.subr.bf16.mxu0 0
        %7185 = vmatpush1.bf16.msra.mxu0 0
        %7186 = vmatprep.subr.bf16.mxu0 0
        %7187 = vmatpush1.bf16.msra.mxu0 0
        %7188 = vmatprep.subr.bf16.mxu0 0
        %7189 = vmatpush1.bf16.msra.mxu0 0
        %7190 = vmatprep.subr.bf16.mxu0 0
        %7191 = vmatpush1.bf16.msra.mxu0 0
        %7192 = vmatprep.subr.bf16.mxu0 0
        %7193 = vmatpush1.bf16.msra.mxu0 0
        %7194 = vmatprep.subr.bf16.mxu0 0
        %7195 = vmatpush1.bf16.msra.mxu0 0
        %7196 = vmatprep.subr.bf16.mxu0 0
        %7197 = vmatpush1.bf16.msra.mxu0 0
        %7198 = vmatprep.subr.bf16.mxu0 0
        %7199 = vmatpush1.bf16.msra.mxu0 0
        %7200 = vmatprep.subr.bf16.mxu0 0
        %7201 = vmatpush1.bf16.msra.mxu0 0
        %7202 = vmatprep.mubr.bf16.mxu0 0
        %7203 = vmatmul.mubr.bf16.gmra.mrb[0].mxu0 %v7165
        %v7204 = vpop.f32.mrb[0].mxu0
        %v7205 = vadd.f32 0.0, %v7204
        %v7206 = vpop.f32.mrb[0].mxu0
        %v7207 = vpop.f32.mrb[0].mxu0
        %v7208 = vadd.f32 0.0, %v7207
        %v7209 = vpop.f32.mrb[0].mxu0
        %7210 = vmatprep.mubr.bf16.mxu0 0
        %7211 = vmatmul.mubr.bf16.gmra.mrb[0].mxu0 %v7168
        %v7212 = vpop.f32.mrb[0].mxu0
        %v7213 = vadd.f32 0.0, %v7212
        %v7214 = vpop.f32.mrb[0].mxu0
        %v7215 = vpop.f32.mrb[0].mxu0
        %v7216 = vadd.f32 0.0, %v7215
        %v7217 = vpop.f32.mrb[0].mxu0
        %7218 = vdwg.mxu0
        %v7219 = vadd.f32 %v6966, %v7205
        %v7220 = vadd.f32 %v6967, %v7208
        %v7221 = vadd.f32 %v6968, %v7213
        %v7222 = vadd.f32 %v6969, %v7216
        %7223 = vrot.lane.b32.xlu0 %v5715, 96
        %v7224 = vpop.permute.xlu0 %7223
        %7225 = vrot.lane.b32.xlu0 %v5717, 96
        %v7226 = vpop.permute.xlu0 %7225
        %7227 = vrot.lane.b32.xlu0 %v5715, 32
        %v7228 = vpop.permute.xlu0 %7227
        %7229 = vrot.lane.b32.xlu0 %v5717, 32
        %v7230 = vpop.permute.xlu0 %7229
        %v7232 = vsel %vm940, %v7224, 0
        %v7235 = vsel %vm940, %v7226, 0
        %v7238 = vsel %vm940, %v7228, 0
        %v7241 = vsel %vm940, %v7230, 0
        %7243 = vmatprep.subr.bf16.mxu0 0
        %7244 = vmatpush1.bf16.xpose.msra.mxu0 %v7238
        %7245 = vmatprep.subr.bf16.mxu0 0
        %7246 = vmatpush1.bf16.xpose.msra.mxu0 %v7241
        %7247 = vmatprep.subr.bf16.mxu0 0
        %7248 = vmatpush1.bf16.xpose.msra.mxu0 0
        %7249 = vmatprep.subr.bf16.mxu0 0
        %7250 = vmatpush1.bf16.xpose.msra.mxu0 0
        %7251 = vmatprep.subr.bf16.mxu0 0
        %7252 = vmatpush1.bf16.xpose.msra.mxu0 0
        %7253 = vmatprep.subr.bf16.mxu0 0
        %7254 = vmatpush1.bf16.xpose.msra.mxu0 0
        %7255 = vmatprep.subr.bf16.mxu0 0
        %7256 = vmatpush1.bf16.xpose.msra.mxu0 0
        %7257 = vmatprep.subr.bf16.mxu0 0
        %7258 = vmatpush1.bf16.xpose.msra.mxu0 0
        %7259 = vmatprep.subr.bf16.mxu0 0
        %7260 = vmatpush1.bf16.xpose.msra.mxu0 0
        %7261 = vmatprep.subr.bf16.mxu0 0
        %7262 = vmatpush1.bf16.xpose.msra.mxu0 0
        %7263 = vmatprep.subr.bf16.mxu0 0
        %7264 = vmatpush1.bf16.xpose.msra.mxu0 0
        %7265 = vmatprep.subr.bf16.mxu0 0
        %7266 = vmatpush1.bf16.xpose.msra.mxu0 0
        %7267 = vmatprep.subr.bf16.mxu0 0
        %7268 = vmatpush1.bf16.xpose.msra.mxu0 0
        %7269 = vmatprep.subr.bf16.mxu0 0
        %7270 = vmatpush1.bf16.xpose.msra.mxu0 0
        %7271 = vmatprep.subr.bf16.mxu0 0
        %7272 = vmatpush1.bf16.xpose.msra.mxu0 0
        %7273 = vmatprep.subr.bf16.mxu0 0
        %7274 = vmatpush1.bf16.xpose.msra.mxu0 0
        %7275 = vmatprep.mubr.bf16.mxu0 0
        %7276 = vmatmul.mubr.bf16.gmra.mrb[0].mxu0 %v7232
        %v7277 = vpop.f32.mrb[0].mxu0
        %v7278 = vadd.f32 0.0, %v7277
        %v7279 = vpop.f32.mrb[0].mxu0
        %v7280 = vpop.f32.mrb[0].mxu0
        %v7281 = vadd.f32 0.0, %v7280
        %v7282 = vpop.f32.mrb[0].mxu0
        %7283 = vmatprep.mubr.bf16.mxu0 0
        %7284 = vmatmul.mubr.bf16.gmra.mrb[0].mxu0 %v7235
        %v7285 = vpop.f32.mrb[0].mxu0
        %v7286 = vadd.f32 0.0, %v7285
        %v7287 = vpop.f32.mrb[0].mxu0
        %v7288 = vpop.f32.mrb[0].mxu0
        %v7289 = vadd.f32 0.0, %v7288
        %v7290 = vpop.f32.mrb[0].mxu0
        %7291 = vdwg.mxu0
        %v7292 = vmul.f32 %v7278, 0.25
        %v7293 = vmul.f32 %v7281, 0.25
        %v7294 = vmul.f32 %v7286, 0.25
        %v7295 = vmul.f32 %v7289, 0.25
        %v7296 = vadd.f32 %v7292, %v512
        %v7297 = vadd.f32 %v7293, %v513
        %v7298 = vadd.f32 %v7294, %v514
        %v7299 = vadd.f32 %v7295, %v515
        %v7300 = vsel %vm535, %v7296, -inf
        %7301 = vmax.xlane.f32.xlu0 %v7300
        %v7302 = vpop.xlane.xlu0 %7301
        %v7303 = vsel %vm535, %v7297, -inf
        %7304 = vmax.xlane.f32.xlu0 %v7303
        %v7305 = vpop.xlane.xlu0 %7304
        %v7306 = vsel %vm535, %v7298, -inf
        %7307 = vmax.xlane.f32.xlu0 %v7306
        %v7308 = vpop.xlane.xlu0 %7307
        %v7309 = vsel %vm535, %v7299, -inf
        %7310 = vmax.xlane.f32.xlu0 %v7309
        %v7311 = vpop.xlane.xlu0 %7310
        %v7312 = vsub.f32 %v7296, %v7302
        %v7313 = vsub.f32 %v7297, %v7305
        %v7314 = vsub.f32 %v7298, %v7308
        %v7315 = vsub.f32 %v7299, %v7311
        %v7316 = vmul.f32 %v7312, 1.442695
        %v7317 = vpow.pop %v7316
        %v7318 = vmul.f32 %v7313, 1.442695
        %v7319 = vpow.pop %v7318
        %v7320 = vmul.f32 %v7314, 1.442695
        %v7321 = vpow.pop %v7320
        %v7322 = vmul.f32 %v7315, 1.442695
        %v7323 = vpow.pop %v7322
        %v7324 = vsel %vm535, %v7317, 0.0
        %7325 = vadd.xlane.f32.xlu0 %v7324
        %v7326 = vpop.xlane.xlu0 %7325
        %v7327 = vsel %vm535, %v7319, 0.0
        %7328 = vadd.xlane.f32.xlu0 %v7327
        %v7329 = vpop.xlane.xlu0 %7328
        %v7330 = vsel %vm535, %v7321, 0.0
        %7331 = vadd.xlane.f32.xlu0 %v7330
        %v7332 = vpop.xlane.xlu0 %7331
        %v7333 = vsel %vm535, %v7323, 0.0
        %7334 = vadd.xlane.f32.xlu0 %v7333
        %v7335 = vpop.xlane.xlu0 %7334
        %v7336 = vrcp.pop %v7326
        %v7337 = vmul.f32 %v7317, %v7336
        %v7338 = vrcp.pop %v7329
        %v7339 = vmul.f32 %v7319, %v7338
        %v7340 = vrcp.pop %v7332
        %v7341 = vmul.f32 %v7321, %v7340
        %v7342 = vrcp.pop %v7335
        %v7343 = vmul.f32 %v7323, %v7342
        %v7344 = vpack.c.bf16 %v7339, %v7337
        %v7345 = vpack.c.bf16 %v7343, %v7341
        %7346 = vrot.lane.b32.xlu0 %v5716, 96
        %v7347 = vpop.permute.xlu0 %7346
        %7348 = vrot.lane.b32.xlu0 %v5718, 96
        %v7349 = vpop.permute.xlu0 %7348
        %v7353 = vsel %vm535, %v7344, 0
        %v7356 = vsel %vm535, %v7345, 0
        %7358 = vmatprep.subr.bf16.mxu0 0
        %7359 = vmatpush1.bf16.msra.mxu0 %v7347
        %7360 = vmatprep.subr.bf16.mxu0 0
        %7361 = vmatpush1.bf16.msra.mxu0 %v7349
        %7362 = vmatprep.subr.bf16.mxu0 0
        %7363 = vmatpush1.bf16.msra.mxu0 0
        %7364 = vmatprep.subr.bf16.mxu0 0
        %7365 = vmatpush1.bf16.msra.mxu0 0
        %7366 = vmatprep.subr.bf16.mxu0 0
        %7367 = vmatpush1.bf16.msra.mxu0 0
        %7368 = vmatprep.subr.bf16.mxu0 0
        %7369 = vmatpush1.bf16.msra.mxu0 0
        %7370 = vmatprep.subr.bf16.mxu0 0
        %7371 = vmatpush1.bf16.msra.mxu0 0
        %7372 = vmatprep.subr.bf16.mxu0 0
        %7373 = vmatpush1.bf16.msra.mxu0 0
        %7374 = vmatprep.subr.bf16.mxu0 0
        %7375 = vmatpush1.bf16.msra.mxu0 0
        %7376 = vmatprep.subr.bf16.mxu0 0
        %7377 = vmatpush1.bf16.msra.mxu0 0
        %7378 = vmatprep.subr.bf16.mxu0 0
        %7379 = vmatpush1.bf16.msra.mxu0 0
        %7380 = vmatprep.subr.bf16.mxu0 0
        %7381 = vmatpush1.bf16.msra.mxu0 0
        %7382 = vmatprep.subr.bf16.mxu0 0
        %7383 = vmatpush1.bf16.msra.mxu0 0
        %7384 = vmatprep.subr.bf16.mxu0 0
        %7385 = vmatpush1.bf16.msra.mxu0 0
        %7386 = vmatprep.subr.bf16.mxu0 0
        %7387 = vmatpush1.bf16.msra.mxu0 0
        %7388 = vmatprep.subr.bf16.mxu0 0
        %7389 = vmatpush1.bf16.msra.mxu0 0
        %7390 = vmatprep.mubr.bf16.mxu0 0
        %7391 = vmatmul.mubr.bf16.gmra.mrb[0].mxu0 %v7353
        %v7392 = vpop.f32.mrb[0].mxu0
        %v7393 = vadd.f32 0.0, %v7392
        %v7394 = vpop.f32.mrb[0].mxu0
        %v7395 = vpop.f32.mrb[0].mxu0
        %v7396 = vadd.f32 0.0, %v7395
        %v7397 = vpop.f32.mrb[0].mxu0
        %7398 = vmatprep.mubr.bf16.mxu0 0
        %7399 = vmatmul.mubr.bf16.gmra.mrb[0].mxu0 %v7356
        %v7400 = vpop.f32.mrb[0].mxu0
        %v7401 = vadd.f32 0.0, %v7400
        %v7402 = vpop.f32.mrb[0].mxu0
        %v7403 = vpop.f32.mrb[0].mxu0
        %v7404 = vadd.f32 0.0, %v7403
        %v7405 = vpop.f32.mrb[0].mxu0
        %7406 = vdwg.mxu0
        %v7407 = vpack.c.bf16 %v7396, %v7393
        %v7408 = vpack.c.bf16 %v7404, %v7401
        %v7411 = vunpack.c.l.b16 %v6723
        %v7412 = vunpack.c.l.b16 %v6724
        %v7413 = vpack.c.b16 %v7412, %v7411
        %v7416 = vsel %vm940, %v7407, 0
        %v7419 = vsel %vm940, %v7408, 0
        %7421 = vmatprep.subr.bf16.mxu0 0
        %7422 = vmatpush1.bf16.msra.mxu0 %v7413
        %7423 = vmatprep.subr.bf16.mxu0 0
        %7424 = vmatpush1.bf16.msra.mxu0 0
        %7425 = vmatprep.subr.bf16.mxu0 0
        %7426 = vmatpush1.bf16.msra.mxu0 0
        %7427 = vmatprep.subr.bf16.mxu0 0
        %7428 = vmatpush1.bf16.msra.mxu0 0
        %7429 = vmatprep.subr.bf16.mxu0 0
        %7430 = vmatpush1.bf16.msra.mxu0 0
        %7431 = vmatprep.subr.bf16.mxu0 0
        %7432 = vmatpush1.bf16.msra.mxu0 0
        %7433 = vmatprep.subr.bf16.mxu0 0
        %7434 = vmatpush1.bf16.msra.mxu0 0
        %7435 = vmatprep.subr.bf16.mxu0 0
        %7436 = vmatpush1.bf16.msra.mxu0 0
        %7437 = vmatprep.subr.bf16.mxu0 0
        %7438 = vmatpush1.bf16.msra.mxu0 0
        %7439 = vmatprep.subr.bf16.mxu0 0
        %7440 = vmatpush1.bf16.msra.mxu0 0
        %7441 = vmatprep.subr.bf16.mxu0 0
        %7442 = vmatpush1.bf16.msra.mxu0 0
        %7443 = vmatprep.subr.bf16.mxu0 0
        %7444 = vmatpush1.bf16.msra.mxu0 0
        %7445 = vmatprep.subr.bf16.mxu0 0
        %7446 = vmatpush1.bf16.msra.mxu0 0
        %7447 = vmatprep.subr.bf16.mxu0 0
        %7448 = vmatpush1.bf16.msra.mxu0 0
        %7449 = vmatprep.subr.bf16.mxu0 0
        %7450 = vmatpush1.bf16.msra.mxu0 0
        %7451 = vmatprep.subr.bf16.mxu0 0
        %7452 = vmatpush1.bf16.msra.mxu0 0
        %7453 = vmatprep.mubr.bf16.mxu0 0
        %7454 = vmatmul.mubr.bf16.gmra.mrb[0].mxu0 %v7416
        %v7455 = vpop.f32.mrb[0].mxu0
        %v7456 = vadd.f32 0.0, %v7455
        %v7457 = vpop.f32.mrb[0].mxu0
        %v7458 = vpop.f32.mrb[0].mxu0
        %v7459 = vadd.f32 0.0, %v7458
        %v7460 = vpop.f32.mrb[0].mxu0
        %7461 = vmatprep.mubr.bf16.mxu0 0
        %7462 = vmatmul.mubr.bf16.gmra.mrb[0].mxu0 %v7419
        %v7463 = vpop.f32.mrb[0].mxu0
        %v7464 = vadd.f32 0.0, %v7463
        %v7465 = vpop.f32.mrb[0].mxu0
        %v7466 = vpop.f32.mrb[0].mxu0
        %v7467 = vadd.f32 0.0, %v7466
        %v7468 = vpop.f32.mrb[0].mxu0
        %7469 = vdwg.mxu0
        %v7470 = vadd.f32 %v7219, %v7456
        %v7471 = vadd.f32 %v7220, %v7459
        %v7472 = vadd.f32 %v7221, %v7464
        %v7473 = vadd.f32 %v7222, %v7467
        %7474 = vrot.lane.b32.xlu0 %v5715, 80
        %v7475 = vpop.permute.xlu0 %7474
        %7476 = vrot.lane.b32.xlu0 %v5717, 80
        %v7477 = vpop.permute.xlu0 %7476
        %7478 = vrot.lane.b32.xlu0 %v5715, 16
        %v7479 = vpop.permute.xlu0 %7478
        %7480 = vrot.lane.b32.xlu0 %v5717, 16
        %v7481 = vpop.permute.xlu0 %7480
        %v7483 = vsel %vm940, %v7475, 0
        %v7486 = vsel %vm940, %v7477, 0
        %v7489 = vsel %vm940, %v7479, 0
        %v7492 = vsel %vm940, %v7481, 0
        %7494 = vmatprep.subr.bf16.mxu0 0
        %7495 = vmatpush1.bf16.xpose.msra.mxu0 %v7489
        %7496 = vmatprep.subr.bf16.mxu0 0
        %7497 = vmatpush1.bf16.xpose.msra.mxu0 %v7492
        %7498 = vmatprep.subr.bf16.mxu0 0
        %7499 = vmatpush1.bf16.xpose.msra.mxu0 0
        %7500 = vmatprep.subr.bf16.mxu0 0
        %7501 = vmatpush1.bf16.xpose.msra.mxu0 0
        %7502 = vmatprep.subr.bf16.mxu0 0
        %7503 = vmatpush1.bf16.xpose.msra.mxu0 0
        %7504 = vmatprep.subr.bf16.mxu0 0
        %7505 = vmatpush1.bf16.xpose.msra.mxu0 0
        %7506 = vmatprep.subr.bf16.mxu0 0
        %7507 = vmatpush1.bf16.xpose.msra.mxu0 0
        %7508 = vmatprep.subr.bf16.mxu0 0
        %7509 = vmatpush1.bf16.xpose.msra.mxu0 0
        %7510 = vmatprep.subr.bf16.mxu0 0
        %7511 = vmatpush1.bf16.xpose.msra.mxu0 0
        %7512 = vmatprep.subr.bf16.mxu0 0
        %7513 = vmatpush1.bf16.xpose.msra.mxu0 0
        %7514 = vmatprep.subr.bf16.mxu0 0
        %7515 = vmatpush1.bf16.xpose.msra.mxu0 0
        %7516 = vmatprep.subr.bf16.mxu0 0
        %7517 = vmatpush1.bf16.xpose.msra.mxu0 0
        %7518 = vmatprep.subr.bf16.mxu0 0
        %7519 = vmatpush1.bf16.xpose.msra.mxu0 0
        %7520 = vmatprep.subr.bf16.mxu0 0
        %7521 = vmatpush1.bf16.xpose.msra.mxu0 0
        %7522 = vmatprep.subr.bf16.mxu0 0
        %7523 = vmatpush1.bf16.xpose.msra.mxu0 0
        %7524 = vmatprep.subr.bf16.mxu0 0
        %7525 = vmatpush1.bf16.xpose.msra.mxu0 0
        %7526 = vmatprep.mubr.bf16.mxu0 0
        %7527 = vmatmul.mubr.bf16.gmra.mrb[0].mxu0 %v7483
        %v7528 = vpop.f32.mrb[0].mxu0
        %v7529 = vadd.f32 0.0, %v7528
        %v7530 = vpop.f32.mrb[0].mxu0
        %v7531 = vpop.f32.mrb[0].mxu0
        %v7532 = vadd.f32 0.0, %v7531
        %v7533 = vpop.f32.mrb[0].mxu0
        %7534 = vmatprep.mubr.bf16.mxu0 0
        %7535 = vmatmul.mubr.bf16.gmra.mrb[0].mxu0 %v7486
        %v7536 = vpop.f32.mrb[0].mxu0
        %v7537 = vadd.f32 0.0, %v7536
        %v7538 = vpop.f32.mrb[0].mxu0
        %v7539 = vpop.f32.mrb[0].mxu0
        %v7540 = vadd.f32 0.0, %v7539
        %v7541 = vpop.f32.mrb[0].mxu0
        %7542 = vdwg.mxu0
        %v7543 = vmul.f32 %v7529, 0.25
        %v7544 = vmul.f32 %v7532, 0.25
        %v7545 = vmul.f32 %v7537, 0.25
        %v7546 = vmul.f32 %v7540, 0.25
        %v7547 = vadd.f32 %v7543, %v512
        %v7548 = vadd.f32 %v7544, %v513
        %v7549 = vadd.f32 %v7545, %v514
        %v7550 = vadd.f32 %v7546, %v515
        %v7551 = vsel %vm535, %v7547, -inf
        %7552 = vmax.xlane.f32.xlu0 %v7551
        %v7553 = vpop.xlane.xlu0 %7552
        %v7554 = vsel %vm535, %v7548, -inf
        %7555 = vmax.xlane.f32.xlu0 %v7554
        %v7556 = vpop.xlane.xlu0 %7555
        %v7557 = vsel %vm535, %v7549, -inf
        %7558 = vmax.xlane.f32.xlu0 %v7557
        %v7559 = vpop.xlane.xlu0 %7558
        %v7560 = vsel %vm535, %v7550, -inf
        %7561 = vmax.xlane.f32.xlu0 %v7560
        %v7562 = vpop.xlane.xlu0 %7561
        %v7563 = vsub.f32 %v7547, %v7553
        %v7564 = vsub.f32 %v7548, %v7556
        %v7565 = vsub.f32 %v7549, %v7559
        %v7566 = vsub.f32 %v7550, %v7562
        %v7567 = vmul.f32 %v7563, 1.442695
        %v7568 = vpow.pop %v7567
        %v7569 = vmul.f32 %v7564, 1.442695
        %v7570 = vpow.pop %v7569
        %v7571 = vmul.f32 %v7565, 1.442695
        %v7572 = vpow.pop %v7571
        %v7573 = vmul.f32 %v7566, 1.442695
        %v7574 = vpow.pop %v7573
        %v7575 = vsel %vm535, %v7568, 0.0
        %7576 = vadd.xlane.f32.xlu0 %v7575
        %v7577 = vpop.xlane.xlu0 %7576
        %v7578 = vsel %vm535, %v7570, 0.0
        %7579 = vadd.xlane.f32.xlu0 %v7578
        %v7580 = vpop.xlane.xlu0 %7579
        %v7581 = vsel %vm535, %v7572, 0.0
        %7582 = vadd.xlane.f32.xlu0 %v7581
        %v7583 = vpop.xlane.xlu0 %7582
        %v7584 = vsel %vm535, %v7574, 0.0
        %7585 = vadd.xlane.f32.xlu0 %v7584
        %v7586 = vpop.xlane.xlu0 %7585
        %v7587 = vrcp.pop %v7577
        %v7588 = vmul.f32 %v7568, %v7587
        %v7589 = vrcp.pop %v7580
        %v7590 = vmul.f32 %v7570, %v7589
        %v7591 = vrcp.pop %v7583
        %v7592 = vmul.f32 %v7572, %v7591
        %v7593 = vrcp.pop %v7586
        %v7594 = vmul.f32 %v7574, %v7593
        %v7595 = vpack.c.bf16 %v7590, %v7588
        %v7596 = vpack.c.bf16 %v7594, %v7592
        %7597 = vrot.lane.b32.xlu0 %v5716, 80
        %v7598 = vpop.permute.xlu0 %7597
        %7599 = vrot.lane.b32.xlu0 %v5718, 80
        %v7600 = vpop.permute.xlu0 %7599
        %v7604 = vsel %vm535, %v7595, 0
        %v7607 = vsel %vm535, %v7596, 0
        %7609 = vmatprep.subr.bf16.mxu0 0
        %7610 = vmatpush1.bf16.msra.mxu0 %v7598
        %7611 = vmatprep.subr.bf16.mxu0 0
        %7612 = vmatpush1.bf16.msra.mxu0 %v7600
        %7613 = vmatprep.subr.bf16.mxu0 0
        %7614 = vmatpush1.bf16.msra.mxu0 0
        %7615 = vmatprep.subr.bf16.mxu0 0
        %7616 = vmatpush1.bf16.msra.mxu0 0
        %7617 = vmatprep.subr.bf16.mxu0 0
        %7618 = vmatpush1.bf16.msra.mxu0 0
        %7619 = vmatprep.subr.bf16.mxu0 0
        %7620 = vmatpush1.bf16.msra.mxu0 0
        %7621 = vmatprep.subr.bf16.mxu0 0
        %7622 = vmatpush1.bf16.msra.mxu0 0
        %7623 = vmatprep.subr.bf16.mxu0 0
        %7624 = vmatpush1.bf16.msra.mxu0 0
        %7625 = vmatprep.subr.bf16.mxu0 0
        %7626 = vmatpush1.bf16.msra.mxu0 0
        %7627 = vmatprep.subr.bf16.mxu0 0
        %7628 = vmatpush1.bf16.msra.mxu0 0
        %7629 = vmatprep.subr.bf16.mxu0 0
        %7630 = vmatpush1.bf16.msra.mxu0 0
        %7631 = vmatprep.subr.bf16.mxu0 0
        %7632 = vmatpush1.bf16.msra.mxu0 0
        %7633 = vmatprep.subr.bf16.mxu0 0
        %7634 = vmatpush1.bf16.msra.mxu0 0
        %7635 = vmatprep.subr.bf16.mxu0 0
        %7636 = vmatpush1.bf16.msra.mxu0 0
        %7637 = vmatprep.subr.bf16.mxu0 0
        %7638 = vmatpush1.bf16.msra.mxu0 0
        %7639 = vmatprep.subr.bf16.mxu0 0
        %7640 = vmatpush1.bf16.msra.mxu0 0
        %7641 = vmatprep.mubr.bf16.mxu0 0
        %7642 = vmatmul.mubr.bf16.gmra.mrb[0].mxu0 %v7604
        %v7643 = vpop.f32.mrb[0].mxu0
        %v7644 = vadd.f32 0.0, %v7643
        %v7645 = vpop.f32.mrb[0].mxu0
        %v7646 = vpop.f32.mrb[0].mxu0
        %v7647 = vadd.f32 0.0, %v7646
        %v7648 = vpop.f32.mrb[0].mxu0
        %7649 = vmatprep.mubr.bf16.mxu0 0
        %7650 = vmatmul.mubr.bf16.gmra.mrb[0].mxu0 %v7607
        %v7651 = vpop.f32.mrb[0].mxu0
        %v7652 = vadd.f32 0.0, %v7651
        %v7653 = vpop.f32.mrb[0].mxu0
        %v7654 = vpop.f32.mrb[0].mxu0
        %v7655 = vadd.f32 0.0, %v7654
        %v7656 = vpop.f32.mrb[0].mxu0
        %7657 = vdwg.mxu0
        %v7658 = vpack.c.bf16 %v7647, %v7644
        %v7659 = vpack.c.bf16 %v7655, %v7652
        %v7662 = vunpack.c.l.b16 %v6725
        %v7663 = vunpack.c.l.b16 %v6726
        %v7664 = vpack.c.b16 %v7663, %v7662
        %v7667 = vsel %vm940, %v7658, 0
        %v7670 = vsel %vm940, %v7659, 0
        %7672 = vmatprep.subr.bf16.mxu0 0
        %7673 = vmatpush1.bf16.msra.mxu0 %v7664
        %7674 = vmatprep.subr.bf16.mxu0 0
        %7675 = vmatpush1.bf16.msra.mxu0 0
        %7676 = vmatprep.subr.bf16.mxu0 0
        %7677 = vmatpush1.bf16.msra.mxu0 0
        %7678 = vmatprep.subr.bf16.mxu0 0
        %7679 = vmatpush1.bf16.msra.mxu0 0
        %7680 = vmatprep.subr.bf16.mxu0 0
        %7681 = vmatpush1.bf16.msra.mxu0 0
        %7682 = vmatprep.subr.bf16.mxu0 0
        %7683 = vmatpush1.bf16.msra.mxu0 0
        %7684 = vmatprep.subr.bf16.mxu0 0
        %7685 = vmatpush1.bf16.msra.mxu0 0
        %7686 = vmatprep.subr.bf16.mxu0 0
        %7687 = vmatpush1.bf16.msra.mxu0 0
        %7688 = vmatprep.subr.bf16.mxu0 0
        %7689 = vmatpush1.bf16.msra.mxu0 0
        %7690 = vmatprep.subr.bf16.mxu0 0
        %7691 = vmatpush1.bf16.msra.mxu0 0
        %7692 = vmatprep.subr.bf16.mxu0 0
        %7693 = vmatpush1.bf16.msra.mxu0 0
        %7694 = vmatprep.subr.bf16.mxu0 0
        %7695 = vmatpush1.bf16.msra.mxu0 0
        %7696 = vmatprep.subr.bf16.mxu0 0
        %7697 = vmatpush1.bf16.msra.mxu0 0
        %7698 = vmatprep.subr.bf16.mxu0 0
        %7699 = vmatpush1.bf16.msra.mxu0 0
        %7700 = vmatprep.subr.bf16.mxu0 0
        %7701 = vmatpush1.bf16.msra.mxu0 0
        %7702 = vmatprep.subr.bf16.mxu0 0
        %7703 = vmatpush1.bf16.msra.mxu0 0
        %7704 = vmatprep.mubr.bf16.mxu0 0
        %7705 = vmatmul.mubr.bf16.gmra.mrb[0].mxu0 %v7667
        %v7706 = vpop.f32.mrb[0].mxu0
        %v7707 = vadd.f32 0.0, %v7706
        %v7708 = vpop.f32.mrb[0].mxu0
        %v7709 = vpop.f32.mrb[0].mxu0
        %v7710 = vadd.f32 0.0, %v7709
        %v7711 = vpop.f32.mrb[0].mxu0
        %7712 = vmatprep.mubr.bf16.mxu0 0
        %7713 = vmatmul.mubr.bf16.gmra.mrb[0].mxu0 %v7670
        %v7714 = vpop.f32.mrb[0].mxu0
        %v7715 = vadd.f32 0.0, %v7714
        %v7716 = vpop.f32.mrb[0].mxu0
        %v7717 = vpop.f32.mrb[0].mxu0
        %v7718 = vadd.f32 0.0, %v7717
        %v7719 = vpop.f32.mrb[0].mxu0
        %7720 = vdwg.mxu0
        %v7721 = vadd.f32 %v7470, %v7707
        %v7722 = vadd.f32 %v7471, %v7710
        %v7723 = vadd.f32 %v7472, %v7715
        %v7724 = vadd.f32 %v7473, %v7718
        %s7725 = scalar_lea.vmem %s14, 2
        %v7726 = vld [vmem:[%s7725] sm:$0x1]
        %v7728 = vlaneseq
        %v7729 = vshrl.u32 %v7728, 7
        %v7730 = vsub.s32 0, %v7729
        %v7731 = vrot.slane %v7726, %v7730
        %v7733 = vadd.f32 %v7721, %v7731
        %v7734 = vadd.f32 %v7722, %v7731
        %v7735 = vadd.f32 %v7723, %v7731
        %v7736 = vadd.f32 %v7724, %v7731
        %v7737 = vmul.f32 %v7733, 0.5
        %v7738 = vmul.f32 %v7734, 0.5
        %v7739 = vmul.f32 %v7735, 0.5
        %v7740 = vmul.f32 %v7736, 0.5
        %v7741 = vmul.f32 %v7733, 0.70710677
        %v7742 = vmul.f32 %v7734, 0.70710677
        %v7743 = vmul.f32 %v7735, 0.70710677
        %v7744 = vmul.f32 %v7736, 0.70710677
        %v7745 = verf.f32.pop %v7741
        %v7746 = verf.f32.pop %v7742
        %v7747 = verf.f32.pop %v7743
        %v7748 = verf.f32.pop %v7744
        %v7749 = vadd.f32 %v7745, 1.0
        %v7750 = vadd.f32 %v7746, 1.0
        %v7751 = vadd.f32 %v7747, 1.0
        %v7752 = vadd.f32 %v7748, 1.0
        %v7753 = vmul.f32 %v7737, %v7749
        %v7754 = vmul.f32 %v7738, %v7750
        %v7755 = vmul.f32 %v7739, %v7751
        %v7756 = vmul.f32 %v7740, %v7752
        %v7757 = vadd.f32 %v5368, %v7753
        %v7758 = vadd.f32 %v5369, %v7754
        %v7759 = vadd.f32 %v5370, %v7755
        %v7760 = vadd.f32 %v5371, %v7756
        %7765 = vrot.lane.b32.xlu0 %v7757, 96
        %v7766 = vpop.permute.xlu0 %7765
        %7767 = vrot.lane.b32.xlu0 %v7758, 96
        %v7768 = vpop.permute.xlu0 %7767
        %7769 = vrot.lane.b32.xlu0 %v7759, 96
        %v7770 = vpop.permute.xlu0 %7769
        %7771 = vrot.lane.b32.xlu0 %v7760, 96
        %v7772 = vpop.permute.xlu0 %7771
        %7777 = vst.msk [vmem:[%s498] sm:$0xff] %vm535, %v7766
        %7778 = vst.msk [vmem:[%s498 + $0x8] sm:$0xff] %vm535, %v7768
        %7779 = vst.msk [vmem:[%s498 + $0x10] sm:$0xff] %vm535, %v7770
        %7780 = vst.msk [vmem:[%s498 + $0x18] sm:$0xff] %vm535, %v7772
        %s7781 = sand.u32 %s362, 1
        %s7782 = scalar_lea.sflag [#allocation3], %s7781
        %s7783 = sand.u32 %s362, 1
        %s7784 = smul.addr %s7783, 32
        %s7785 = scalar_lea.vmem [#allocation2], %s7784
        // Predicated region
        $region81: #{_lambda_.1} parent=79 // pred_check
          %p7786 = pneg %p372
        $region82: #{_lambda_.1} parent=79 // pred_check_branch
          %7788 = sbr.rel (%p7786) target = $region84
        $region83: #{_lambda_.1} parent=79 // pred_region
          %s7790 = ssub.s32 512, 512
          %7791 = vsyncadd %s7782, %s7790
          %s7792 = smul.addr %s29, 4
          %s7793 = smul.addr %s7792, 128
          %s7794 = scalar_lea.hbm %s15, %s7793
          %s7795 = sshll.u32 %s7785, 4
          %s7796 = int_to_ptr.vmem [resolvable:$true] %s7795
          %7801 = dma.vmem_to_hbm [thread:$0]  %s7796, 512, %s7794, %s7782, 128, 128, 8
        $region84: #{_lambda_.1} parent=79 // pred_fallthru
          _
      $region80: #{_lambda_.1} parent=5 // pred_fallthru
        _
      %p7802 = scmp.le.s32.totalorder 2, %s24
      // Predicated region
      $region85: #{_lambda_.1} parent=5 // pred_check
        %p7803 = pneg %p7802
      $region86: #{_lambda_.1} parent=5 // pred_check_branch
        %7805 = sbr.rel (%p7803) target = $region88
      $region87: #{_lambda_.1} parent=5 // pred_region
        %s7806 = ssub.s32 %s24, 2
        // Predicated region
        $region89: #{_lambda_.1} parent=87 // pred_check
          %p7807 = pneg %p378
        $region90: #{_lambda_.1} parent=87 // pred_check_branch
          %7809 = sbr.rel (%p7807) target = $region92
        $region91: #{_lambda_.1} parent=87 // pred_region
          %s7810 = sand.u32 %s363, 1
          %s7811 = scalar_lea.sflag [#allocation3], %s7810
          %s7812 = sand.u32 %s363, 1
          %s7813 = smul.addr %s7812, 32
          %s7814 = scalar_lea.vmem [#allocation2], %s7813
          %7815 = dma.done %s7811, 512
        $region92: #{_lambda_.1} parent=87 // pred_fallthru
          _
      $region88: #{_lambda_.1} parent=5 // pred_fallthru
        _
    $region6: #{_lambda_.1} parent=1 // loop_footer
      %s28 = sadd.s32 1, %s24
    $region7: #{_lambda_.1} parent=1 // loop_footer_branch
      %23 = sbr.rel target = $region3
    $region8: #{_lambda_.1} parent=1 // loop_exit
      _
    %7816 = vsyncpa [#allocation3], 1
    %s7817 = scalar_lea.sflag [#allocation3], 1
    %7818 = vsyncpa %s7817, 1

</llo_original>
